<compile_context>
chip_gen: v7x
topology: tpu7x:2x2x1
jax: 0.10.0
libtpu: 0.0.40
codegen_flags: <defaults>
</compile_context>

<pallas_src>
import jax
import jax.numpy as jnp
from jax.experimental import pallas as pl
from jax.experimental.pallas import tpu as pltpu


# ----------------------------------------------------------------------------
# Pallas kernels
# ----------------------------------------------------------------------------
def _conv_mm_kernel(w_ref, p_ref, b_ref, o_ref):
    """out(Cout, M) = relu(W(Cout, K) @ patches(K, M) + b(Cout, 1)). Lane-dense."""
    acc = jnp.dot(w_ref[...], p_ref[...], preferred_element_type=jnp.float32)
    acc = acc + b_ref[...]                          # broadcast along lanes
    o_ref[...] = jnp.maximum(acc, 0.0).astype(o_ref.dtype)


def _tail_kernel(x_ref, w5_ref, b5_ref, w6_ref, b6_ref, w7_ref, b7_ref, o_ref):
    """Fused conv5-as-linear + ReLU + fc1 + fc2, all resident in VMEM."""
    h = jnp.dot(x_ref[...], w5_ref[...], preferred_element_type=jnp.float32) + b5_ref[...]
    h = jnp.maximum(h, 0.0)                         # ReLU after conv5
    h = jnp.dot(h, w6_ref[...], preferred_element_type=jnp.float32) + b6_ref[...]
    h = jnp.dot(h, w7_ref[...], preferred_element_type=jnp.float32) + b7_ref[...]
    o_ref[...] = h.astype(o_ref.dtype)


# ----------------------------------------------------------------------------
# XLA glue (cheap slicing only; no transposes of big tensors)
# ----------------------------------------------------------------------------
def _im2col_cf(x_cf, kd, kh, kw):
    """x_cf: (C, N, D, H, W) -> patches (C*kd*kh*kw, N*Do*Ho*Wo), PyTorch K order."""
    C, N, D, H, W = x_cf.shape
    Do, Ho, Wo = D - kd + 1, H - kh + 1, W - kw + 1
    views = []
    for dz in range(kd):
        for dy in range(kh):
            for dx in range(kw):
                views.append(x_cf[:, :, dz:dz + Do, dy:dy + Ho, dx:dx + Wo])
    p = jnp.stack(views, axis=1)                      # (C, taps, N, Do, Ho, Wo)
    return p.reshape(C * kd * kh * kw, N * Do * Ho * Wo), (Do, Ho, Wo)


def maxpool_1x2x2_cf(a_cf):
    """MaxPool3d((1,2,2), stride (1,2,2)) on channel-first (C, N, D, H, W).
    The module's ReLU after the pool is redundant (inputs already >= 0)."""
    C, N, D, H, W = a_cf.shape
    Ho, Wo = H // 2, W // 2
    a = a_cf[:, :, :, : 2 * Ho, : 2 * Wo]
    return jnp.maximum(jnp.maximum(a[..., 0::2, 0::2], a[..., 0::2, 1::2]),
                       jnp.maximum(a[..., 1::2, 0::2], a[..., 1::2, 1::2]))


# ----------------------------------------------------------------------------
# Layer wrappers
# ----------------------------------------------------------------------------
def conv3d_cf(x_cf, w, b, *, out_dtype=jnp.bfloat16):
    """Conv3d (valid, stride 1) + bias + ReLU as one lane-dense Pallas matmul.

    x_cf: (Cin, N, D, H, W); w: (Cout, Cin, kd, kh, kw); b: (Cout,)
    returns: (Cout, N, Do, Ho, Wo)
    """
    Cout, Cin, kd, kh, kw = w.shape
    C, N, D, H, W = x_cf.shape
    assert C == Cin
    patches, (Do, Ho, Wo) = _im2col_cf(x_cf, kd, kh, kw)
    K, M = patches.shape
    wmat = w.reshape(Cout, K).astype(jnp.bfloat16)
    out = pl.pallas_call(
        _conv_mm_kernel,
        out_shape=jax.ShapeDtypeStruct((Cout, M), out_dtype),
        grid=(1,),
        in_specs=[
            pl.BlockSpec((Cout, K), lambda i: (0, 0)),   # full weight block
            pl.BlockSpec((K, M), lambda i: (0, 0)),      # full patch block
            pl.BlockSpec((Cout, 1), lambda i: (0, 0)),   # bias column
        ],
        out_specs=pl.BlockSpec((Cout, M), lambda i: (0, 0)),
        compiler_params=pltpu.CompilerParams(dimension_semantics=("arbitrary",)),
    )(wmat, patches.astype(jnp.bfloat16), b.reshape(Cout, 1).astype(jnp.float32))
    return out.reshape(Cout, N, Do, Ho, Wo)


def classifier_tail(x4_cf, params):
    """conv5(1,4,4) + ReLU + flatten + fc1 + fc2, fused in one Pallas kernel.

    x4_cf: (64, N, 1, 4, 4) channel-first conv4 output.
    """
    C, N = x4_cf.shape[0], x4_cf.shape[1]
    S = x4_cf.shape[2] * x4_cf.shape[3] * x4_cf.shape[4]                 # 16
    # per-sample flatten in PyTorch (ci, dz, dy, dx) order — tiny (8 KB) transpose
    feat = jnp.transpose(x4_cf.reshape(C, N, S), (1, 0, 2)).reshape(N, C * S)
    feat = feat.astype(jnp.float32)
    w5 = params["c5w"].reshape(64, C * S).T.astype(jnp.float32)          # (1024, 64)
    b5 = params["c5b"].reshape(1, 64).astype(jnp.float32)
    w6 = params["fc1w"].T.astype(jnp.float32)                            # (64, 128)
    b6 = params["fc1b"].reshape(1, 128).astype(jnp.float32)
    w7 = params["fc2w"].T.astype(jnp.float32)                            # (128, 2)
    b7 = params["fc2b"].reshape(1, 2).astype(jnp.float32)
    return pl.pallas_call(
        _tail_kernel,
        out_shape=jax.ShapeDtypeStruct((N, 2), jnp.float32),
        grid=(1,),
        in_specs=[
            pl.BlockSpec(feat.shape, lambda i: (0, 0)),
            pl.BlockSpec(w5.shape, lambda i: (0, 0)),
            pl.BlockSpec(b5.shape, lambda i: (0, 0)),
            pl.BlockSpec(w6.shape, lambda i: (0, 0)),
            pl.BlockSpec(b6.shape, lambda i: (0, 0)),
            pl.BlockSpec(w7.shape, lambda i: (0, 0)),
            pl.BlockSpec(b7.shape, lambda i: (0, 0)),
        ],
        out_specs=pl.BlockSpec((N, 2), lambda i: (0, 0)),
        compiler_params=pltpu.CompilerParams(dimension_semantics=("arbitrary",)),
    )(feat, w5, b5, w6, b6, w7, b7)


# ----------------------------------------------------------------------------
# NetModel forward
# ----------------------------------------------------------------------------
def net_forward(x, params):
    # channels-first (C, N, D, H, W): the (Cout, M) matmul output of each conv
    # is already this layout for the next layer.
    a = jnp.transpose(x, (1, 0, 2, 3, 4)).astype(jnp.float32)       # (1, N, 7, 32, 32)
    a = conv3d_cf(a, params["c1w"], params["c1b"])                  # (12, N, 5, 30, 30)
    a = conv3d_cf(a, params["c2w"], params["c2b"])                  # (24, N, 5, 28, 28)
    a = maxpool_1x2x2_cf(a)                                         # (24, N, 5, 14, 14)
    a = conv3d_cf(a, params["c3w"], params["c3b"])                  # (48, N, 3, 12, 12)
    a = maxpool_1x2x2_cf(a)                                         # (48, N, 3, 6, 6)
    a = conv3d_cf(a, params["c4w"], params["c4b"])                  # (64, N, 1, 4, 4)
    return classifier_tail(a, params)                               # (N, 2)


# ----------------------------------------------------------------------------
# Deterministic parameter init (PyTorch-style uniform(-1/sqrt(fan_in), ...))
# ----------------------------------------------------------------------------
def _init_conv(key, cout, cin, kd, kh, kw):
    kw_, kb_ = jax.random.split(key)
    fan_in = cin * kd * kh * kw
    bound = 1.0 / jnp.sqrt(fan_in)
    w = jax.random.uniform(kw_, (cout, cin, kd, kh, kw), jnp.float32, -bound, bound)
    b = jax.random.uniform(kb_, (cout,), jnp.float32, -bound, bound)
    return w, b


def _init_linear(key, cout, cin):
    kw_, kb_ = jax.random.split(key)
    bound = 1.0 / jnp.sqrt(cin)
    w = jax.random.uniform(kw_, (cout, cin), jnp.float32, -bound, bound)
    b = jax.random.uniform(kb_, (cout,), jnp.float32, -bound, bound)
    return w, b


def init_params(key):
    keys = jax.random.split(key, 7)
    p = {}
    p["c1w"], p["c1b"] = _init_conv(keys[0], 12, 1, 3, 3, 3)
    p["c2w"], p["c2b"] = _init_conv(keys[1], 24, 12, 1, 3, 3)
    p["c3w"], p["c3b"] = _init_conv(keys[2], 48, 24, 3, 3, 3)
    p["c4w"], p["c4b"] = _init_conv(keys[3], 64, 48, 3, 3, 3)
    p["c5w"], p["c5b"] = _init_conv(keys[4], 64, 64, 1, 4, 4)
    p["fc1w"], p["fc1b"] = _init_linear(keys[5], 128, 64)
    p["fc2w"], p["fc2b"] = _init_linear(keys[6], 2, 128)
    return p


if __name__ == "__main__":
    key = jax.random.PRNGKey(0)
    k_params, k_x = jax.random.split(key)
    params = init_params(k_params)
    # SVOI input: batch=2, 1 channel, depth=7, 32x32 spatial
    x = jax.random.normal(k_x, (2, 1, 7, 32, 32), dtype=jnp.float32)

    out = jax.jit(net_forward)(x, params)
    out = jax.block_until_ready(out)
    assert out.shape == (2, 2), out.shape
    assert bool(jnp.all(jnp.isfinite(out)))
    print("KERNEL_OK")
</pallas_src>

<mosaic_0001>
module attributes {stable_mosaic.version = 11 : i64} {
  func.func @_conv_mm_kernel(%arg0: i32, %arg1: memref<12x27xbf16, #tpu.memory_space<vmem>>, %arg2: memref<27x9000xbf16, #tpu.memory_space<vmem>>, %arg3: memref<12x1xf32, #tpu.memory_space<vmem>>, %arg4: memref<12x9000xbf16, #tpu.memory_space<vmem>>) attributes {dimension_semantics = [#tpu.dimension_semantics<arbitrary>], iteration_bounds = array<i64: 1>, scalar_prefetch = 0 : i64, scratch_operands = 0 : i64, tpu.core_type = #tpu.core_type<tc>, window_params = [{pipeline_mode = #tpu.pipeline_mode<synchronous>, transform_indices = @transform_0, window_bounds = array<i64: 12, 27>}, {pipeline_mode = #tpu.pipeline_mode<synchronous>, transform_indices = @transform_1, window_bounds = array<i64: 27, 9000>}, {pipeline_mode = #tpu.pipeline_mode<synchronous>, transform_indices = @transform_2, window_bounds = array<i64: 12, 1>}, {pipeline_mode = #tpu.pipeline_mode<synchronous>, transform_indices = @transform_3, window_bounds = array<i64: 12, 9000>}]} {
    %c0 = arith.constant 0 : index
    %c0_0 = arith.constant 0 : index
    %0 = vector.load %arg1[%c0, %c0_0] : memref<12x27xbf16, #tpu.memory_space<vmem>>, vector<12x27xbf16>
    %c0_1 = arith.constant 0 : index
    %c0_2 = arith.constant 0 : index
    %1 = vector.load %arg2[%c0_1, %c0_2] : memref<27x9000xbf16, #tpu.memory_space<vmem>>, vector<27x9000xbf16>
    %cst = arith.constant dense<0.000000e+00> : vector<12x9000xf32>
    %2 = tpu.matmul %0, %1, %cst {dimension_numbers = #tpu.dot_dimension_numbers<[1], [0], [0], [1], [0, 0, 1, 1], [], []>} : vector<12x27xbf16>, vector<27x9000xbf16>, vector<12x9000xf32> -> vector<12x9000xf32>
    %c0_3 = arith.constant 0 : index
    %c0_4 = arith.constant 0 : index
    %3 = vector.load %arg3[%c0_3, %c0_4] : memref<12x1xf32, #tpu.memory_space<vmem>>, vector<12x1xf32>
    %4 = vector.broadcast %3 : vector<12x1xf32> to vector<12x9000xf32>
    %5 = arith.addf %2, %4 : vector<12x9000xf32>
    %cst_5 = arith.constant 0.000000e+00 : f32
    %6 = vector.broadcast %cst_5 : f32 to vector<12x9000xf32>
    %7 = arith.maximumf %5, %6 : vector<12x9000xf32>
    %8 = arith.truncf %7 : vector<12x9000xf32> to vector<12x9000xbf16>
    %c0_6 = arith.constant 0 : index
    %c0_7 = arith.constant 0 : index
    %9 = vector.load %arg4[%c0_6, %c0_7] : memref<12x9000xbf16, #tpu.memory_space<vmem>>, vector<12x9000xbf16>
    tpu.vector_store %arg4[%c0_6, %c0_7], %8 {strides = array<i32>} : memref<12x9000xbf16, #tpu.memory_space<vmem>>, vector<12x9000xbf16>,
    return
  }
  func.func @transform_0(%arg0: i32) -> (i32, i32) {
    %c0_i32 = arith.constant 0 : i32
    %c0_i32_0 = arith.constant 0 : i32
    %c0_i32_1 = arith.constant 0 : i32
    return %c0_i32, %c0_i32_0 : i32, i32
  }
  func.func @transform_1(%arg0: i32) -> (i32, i32) {
    %c0_i32 = arith.constant 0 : i32
    %c0_i32_0 = arith.constant 0 : i32
    %c0_i32_1 = arith.constant 0 : i32
    return %c0_i32, %c0_i32_0 : i32, i32
  }
  func.func @transform_2(%arg0: i32) -> (i32, i32) {
    %c0_i32 = arith.constant 0 : i32
    %c0_i32_0 = arith.constant 0 : i32
    %c0_i32_1 = arith.constant 0 : i32
    return %c0_i32, %c0_i32_0 : i32, i32
  }
  func.func @transform_3(%arg0: i32) -> (i32, i32) {
    %c0_i32 = arith.constant 0 : i32
    %c0_i32_0 = arith.constant 0 : i32
    %c0_i32_1 = arith.constant 0 : i32
    return %c0_i32, %c0_i32_0 : i32, i32
  }
}

module attributes {stable_mosaic.version = 11 : i64} {
  func.func @_conv_mm_kernel(%arg0: i32, %arg1: memref<24x108xbf16, #tpu.memory_space<vmem>>, %arg2: memref<108x7840xbf16, #tpu.memory_space<vmem>>, %arg3: memref<24x1xf32, #tpu.memory_space<vmem>>, %arg4: memref<24x7840xbf16, #tpu.memory_space<vmem>>) attributes {dimension_semantics = [#tpu.dimension_semantics<arbitrary>], iteration_bounds = array<i64: 1>, scalar_prefetch = 0 : i64, scratch_operands = 0 : i64, tpu.core_type = #tpu.core_type<tc>, window_params = [{pipeline_mode = #tpu.pipeline_mode<synchronous>, transform_indices = @transform_0, window_bounds = array<i64: 24, 108>}, {pipeline_mode = #tpu.pipeline_mode<synchronous>, transform_indices = @transform_1, window_bounds = array<i64: 108, 7840>}, {pipeline_mode = #tpu.pipeline_mode<synchronous>, transform_indices = @transform_2, window_bounds = array<i64: 24, 1>}, {pipeline_mode = #tpu.pipeline_mode<synchronous>, transform_indices = @transform_3, window_bounds = array<i64: 24, 7840>}]} {
    %c0 = arith.constant 0 : index
    %c0_0 = arith.constant 0 : index
    %0 = vector.load %arg1[%c0, %c0_0] : memref<24x108xbf16, #tpu.memory_space<vmem>>, vector<24x108xbf16>
    %c0_1 = arith.constant 0 : index
    %c0_2 = arith.constant 0 : index
    %1 = vector.load %arg2[%c0_1, %c0_2] : memref<108x7840xbf16, #tpu.memory_space<vmem>>, vector<108x7840xbf16>
    %cst = arith.constant dense<0.000000e+00> : vector<24x7840xf32>
    %2 = tpu.matmul %0, %1, %cst {dimension_numbers = #tpu.dot_dimension_numbers<[1], [0], [0], [1], [0, 0, 1, 1], [], []>} : vector<24x108xbf16>, vector<108x7840xbf16>, vector<24x7840xf32> -> vector<24x7840xf32>
    %c0_3 = arith.constant 0 : index
    %c0_4 = arith.constant 0 : index
    %3 = vector.load %arg3[%c0_3, %c0_4] : memref<24x1xf32, #tpu.memory_space<vmem>>, vector<24x1xf32>
    %4 = vector.broadcast %3 : vector<24x1xf32> to vector<24x7840xf32>
    %5 = arith.addf %2, %4 : vector<24x7840xf32>
    %cst_5 = arith.constant 0.000000e+00 : f32
    %6 = vector.broadcast %cst_5 : f32 to vector<24x7840xf32>
    %7 = arith.maximumf %5, %6 : vector<24x7840xf32>
    %8 = arith.truncf %7 : vector<24x7840xf32> to vector<24x7840xbf16>
    %c0_6 = arith.constant 0 : index
    %c0_7 = arith.constant 0 : index
    %9 = vector.load %arg4[%c0_6, %c0_7] : memref<24x7840xbf16, #tpu.memory_space<vmem>>, vector<24x7840xbf16>
    tpu.vector_store %arg4[%c0_6, %c0_7], %8 {strides = array<i32>} : memref<24x7840xbf16, #tpu.memory_space<vmem>>, vector<24x7840xbf16>,
    return
  }
  func.func @transform_0(%arg0: i32) -> (i32, i32) {
    %c0_i32 = arith.constant 0 : i32
    %c0_i32_0 = arith.constant 0 : i32
    %c0_i32_1 = arith.constant 0 : i32
    return %c0_i32, %c0_i32_0 : i32, i32
  }
  func.func @transform_1(%arg0: i32) -> (i32, i32) {
    %c0_i32 = arith.constant 0 : i32
    %c0_i32_0 = arith.constant 0 : i32
    %c0_i32_1 = arith.constant 0 : i32
    return %c0_i32, %c0_i32_0 : i32, i32
  }
  func.func @transform_2(%arg0: i32) -> (i32, i32) {
    %c0_i32 = arith.constant 0 : i32
    %c0_i32_0 = arith.constant 0 : i32
    %c0_i32_1 = arith.constant 0 : i32
    return %c0_i32, %c0_i32_0 : i32, i32
  }
  func.func @transform_3(%arg0: i32) -> (i32, i32) {
    %c0_i32 = arith.constant 0 : i32
    %c0_i32_0 = arith.constant 0 : i32
    %c0_i32_1 = arith.constant 0 : i32
    return %c0_i32, %c0_i32_0 : i32, i32
  }
}

module attributes {stable_mosaic.version = 11 : i64} {
  func.func @_conv_mm_kernel(%arg0: i32, %arg1: memref<48x648xbf16, #tpu.memory_space<vmem>>, %arg2: memref<648x864xbf16, #tpu.memory_space<vmem>>, %arg3: memref<48x1xf32, #tpu.memory_space<vmem>>, %arg4: memref<48x864xbf16, #tpu.memory_space<vmem>>) attributes {dimension_semantics = [#tpu.dimension_semantics<arbitrary>], iteration_bounds = array<i64: 1>, scalar_prefetch = 0 : i64, scratch_operands = 0 : i64, tpu.core_type = #tpu.core_type<tc>, window_params = [{pipeline_mode = #tpu.pipeline_mode<synchronous>, transform_indices = @transform_0, window_bounds = array<i64: 48, 648>}, {pipeline_mode = #tpu.pipeline_mode<synchronous>, transform_indices = @transform_1, window_bounds = array<i64: 648, 864>}, {pipeline_mode = #tpu.pipeline_mode<synchronous>, transform_indices = @transform_2, window_bounds = array<i64: 48, 1>}, {pipeline_mode = #tpu.pipeline_mode<synchronous>, transform_indices = @transform_3, window_bounds = array<i64: 48, 864>}]} {
    %c0 = arith.constant 0 : index
    %c0_0 = arith.constant 0 : index
    %0 = vector.load %arg1[%c0, %c0_0] : memref<48x648xbf16, #tpu.memory_space<vmem>>, vector<48x648xbf16>
    %c0_1 = arith.constant 0 : index
    %c0_2 = arith.constant 0 : index
    %1 = vector.load %arg2[%c0_1, %c0_2] : memref<648x864xbf16, #tpu.memory_space<vmem>>, vector<648x864xbf16>
    %cst = arith.constant dense<0.000000e+00> : vector<48x864xf32>
    %2 = tpu.matmul %0, %1, %cst {dimension_numbers = #tpu.dot_dimension_numbers<[1], [0], [0], [1], [0, 0, 1, 1], [], []>} : vector<48x648xbf16>, vector<648x864xbf16>, vector<48x864xf32> -> vector<48x864xf32>
    %c0_3 = arith.constant 0 : index
    %c0_4 = arith.constant 0 : index
    %3 = vector.load %arg3[%c0_3, %c0_4] : memref<48x1xf32, #tpu.memory_space<vmem>>, vector<48x1xf32>
    %4 = vector.broadcast %3 : vector<48x1xf32> to vector<48x864xf32>
    %5 = arith.addf %2, %4 : vector<48x864xf32>
    %cst_5 = arith.constant 0.000000e+00 : f32
    %6 = vector.broadcast %cst_5 : f32 to vector<48x864xf32>
    %7 = arith.maximumf %5, %6 : vector<48x864xf32>
    %8 = arith.truncf %7 : vector<48x864xf32> to vector<48x864xbf16>
    %c0_6 = arith.constant 0 : index
    %c0_7 = arith.constant 0 : index
    %9 = vector.load %arg4[%c0_6, %c0_7] : memref<48x864xbf16, #tpu.memory_space<vmem>>, vector<48x864xbf16>
    tpu.vector_store %arg4[%c0_6, %c0_7], %8 {strides = array<i32>} : memref<48x864xbf16, #tpu.memory_space<vmem>>, vector<48x864xbf16>,
    return
  }
  func.func @transform_0(%arg0: i32) -> (i32, i32) {
    %c0_i32 = arith.constant 0 : i32
    %c0_i32_0 = arith.constant 0 : i32
    %c0_i32_1 = arith.constant 0 : i32
    return %c0_i32, %c0_i32_0 : i32, i32
  }
  func.func @transform_1(%arg0: i32) -> (i32, i32) {
    %c0_i32 = arith.constant 0 : i32
    %c0_i32_0 = arith.constant 0 : i32
    %c0_i32_1 = arith.constant 0 : i32
    return %c0_i32, %c0_i32_0 : i32, i32
  }
  func.func @transform_2(%arg0: i32) -> (i32, i32) {
    %c0_i32 = arith.constant 0 : i32
    %c0_i32_0 = arith.constant 0 : i32
    %c0_i32_1 = arith.constant 0 : i32
    return %c0_i32, %c0_i32_0 : i32, i32
  }
  func.func @transform_3(%arg0: i32) -> (i32, i32) {
    %c0_i32 = arith.constant 0 : i32
    %c0_i32_0 = arith.constant 0 : i32
    %c0_i32_1 = arith.constant 0 : i32
    return %c0_i32, %c0_i32_0 : i32, i32
  }
}

module attributes {stable_mosaic.version = 11 : i64} {
  func.func @_conv_mm_kernel(%arg0: i32, %arg1: memref<64x1296xbf16, #tpu.memory_space<vmem>>, %arg2: memref<1296x32xbf16, #tpu.memory_space<vmem>>, %arg3: memref<64x1xf32, #tpu.memory_space<vmem>>, %arg4: memref<64x32xbf16, #tpu.memory_space<vmem>>) attributes {dimension_semantics = [#tpu.dimension_semantics<arbitrary>], iteration_bounds = array<i64: 1>, scalar_prefetch = 0 : i64, scratch_operands = 0 : i64, tpu.core_type = #tpu.core_type<tc>, window_params = [{pipeline_mode = #tpu.pipeline_mode<synchronous>, transform_indices = @transform_0, window_bounds = array<i64: 64, 1296>}, {pipeline_mode = #tpu.pipeline_mode<synchronous>, transform_indices = @transform_1, window_bounds = array<i64: 1296, 32>}, {pipeline_mode = #tpu.pipeline_mode<synchronous>, transform_indices = @transform_2, window_bounds = array<i64: 64, 1>}, {pipeline_mode = #tpu.pipeline_mode<synchronous>, transform_indices = @transform_3, window_bounds = array<i64: 64, 32>}]} {
    %c0 = arith.constant 0 : index
    %c0_0 = arith.constant 0 : index
    %0 = vector.load %arg1[%c0, %c0_0] : memref<64x1296xbf16, #tpu.memory_space<vmem>>, vector<64x1296xbf16>
    %c0_1 = arith.constant 0 : index
    %c0_2 = arith.constant 0 : index
    %1 = vector.load %arg2[%c0_1, %c0_2] : memref<1296x32xbf16, #tpu.memory_space<vmem>>, vector<1296x32xbf16>
    %cst = arith.constant dense<0.000000e+00> : vector<64x32xf32>
    %2 = tpu.matmul %0, %1, %cst {dimension_numbers = #tpu.dot_dimension_numbers<[1], [0], [0], [1], [0, 0, 1, 1], [], []>} : vector<64x1296xbf16>, vector<1296x32xbf16>, vector<64x32xf32> -> vector<64x32xf32>
    %c0_3 = arith.constant 0 : index
    %c0_4 = arith.constant 0 : index
    %3 = vector.load %arg3[%c0_3, %c0_4] : memref<64x1xf32, #tpu.memory_space<vmem>>, vector<64x1xf32>
    %4 = vector.broadcast %3 : vector<64x1xf32> to vector<64x32xf32>
    %5 = arith.addf %2, %4 : vector<64x32xf32>
    %cst_5 = arith.constant 0.000000e+00 : f32
    %6 = vector.broadcast %cst_5 : f32 to vector<64x32xf32>
    %7 = arith.maximumf %5, %6 : vector<64x32xf32>
    %8 = arith.truncf %7 : vector<64x32xf32> to vector<64x32xbf16>
    %c0_6 = arith.constant 0 : index
    %c0_7 = arith.constant 0 : index
    %9 = vector.load %arg4[%c0_6, %c0_7] : memref<64x32xbf16, #tpu.memory_space<vmem>>, vector<64x32xbf16>
    tpu.vector_store %arg4[%c0_6, %c0_7], %8 {strides = array<i32>} : memref<64x32xbf16, #tpu.memory_space<vmem>>, vector<64x32xbf16>,
    return
  }
  func.func @transform_0(%arg0: i32) -> (i32, i32) {
    %c0_i32 = arith.constant 0 : i32
    %c0_i32_0 = arith.constant 0 : i32
    %c0_i32_1 = arith.constant 0 : i32
    return %c0_i32, %c0_i32_0 : i32, i32
  }
  func.func @transform_1(%arg0: i32) -> (i32, i32) {
    %c0_i32 = arith.constant 0 : i32
    %c0_i32_0 = arith.constant 0 : i32
    %c0_i32_1 = arith.constant 0 : i32
    return %c0_i32, %c0_i32_0 : i32, i32
  }
  func.func @transform_2(%arg0: i32) -> (i32, i32) {
    %c0_i32 = arith.constant 0 : i32
    %c0_i32_0 = arith.constant 0 : i32
    %c0_i32_1 = arith.constant 0 : i32
    return %c0_i32, %c0_i32_0 : i32, i32
  }
  func.func @transform_3(%arg0: i32) -> (i32, i32) {
    %c0_i32 = arith.constant 0 : i32
    %c0_i32_0 = arith.constant 0 : i32
    %c0_i32_1 = arith.constant 0 : i32
    return %c0_i32, %c0_i32_0 : i32, i32
  }
}

module attributes {stable_mosaic.version = 11 : i64} {
  func.func @_tail_kernel(%arg0: i32, %arg1: memref<2x1024xf32, #tpu.memory_space<vmem>>, %arg2: memref<1024x64xf32, #tpu.memory_space<vmem>>, %arg3: memref<1x64xf32, #tpu.memory_space<vmem>>, %arg4: memref<64x128xf32, #tpu.memory_space<vmem>>, %arg5: memref<1x128xf32, #tpu.memory_space<vmem>>, %arg6: memref<128x2xf32, #tpu.memory_space<vmem>>, %arg7: memref<1x2xf32, #tpu.memory_space<vmem>>, %arg8: memref<2x2xf32, #tpu.memory_space<vmem>>) attributes {dimension_semantics = [#tpu.dimension_semantics<arbitrary>], iteration_bounds = array<i64: 1>, scalar_prefetch = 0 : i64, scratch_operands = 0 : i64, tpu.core_type = #tpu.core_type<tc>, window_params = [{pipeline_mode = #tpu.pipeline_mode<synchronous>, transform_indices = @transform_0, window_bounds = array<i64: 2, 1024>}, {pipeline_mode = #tpu.pipeline_mode<synchronous>, transform_indices = @transform_1, window_bounds = array<i64: 1024, 64>}, {pipeline_mode = #tpu.pipeline_mode<synchronous>, transform_indices = @transform_2, window_bounds = array<i64: 1, 64>}, {pipeline_mode = #tpu.pipeline_mode<synchronous>, transform_indices = @transform_3, window_bounds = array<i64: 64, 128>}, {pipeline_mode = #tpu.pipeline_mode<synchronous>, transform_indices = @transform_4, window_bounds = array<i64: 1, 128>}, {pipeline_mode = #tpu.pipeline_mode<synchronous>, transform_indices = @transform_5, window_bounds = array<i64: 128, 2>}, {pipeline_mode = #tpu.pipeline_mode<synchronous>, transform_indices = @transform_6, window_bounds = array<i64: 1, 2>}, {pipeline_mode = #tpu.pipeline_mode<synchronous>, transform_indices = @transform_7, window_bounds = array<i64: 2, 2>}]} {
    %c0 = arith.constant 0 : index
    %c0_0 = arith.constant 0 : index
    %0 = vector.load %arg1[%c0, %c0_0] : memref<2x1024xf32, #tpu.memory_space<vmem>>, vector<2x1024xf32>
    %c0_1 = arith.constant 0 : index
    %c0_2 = arith.constant 0 : index
    %1 = vector.load %arg2[%c0_1, %c0_2] : memref<1024x64xf32, #tpu.memory_space<vmem>>, vector<1024x64xf32>
    %cst = arith.constant dense<0.000000e+00> : vector<2x64xf32>
    %2 = tpu.matmul %0, %1, %cst {dimension_numbers = #tpu.dot_dimension_numbers<[1], [0], [0], [1], [0, 0, 1, 1], [], []>} : vector<2x1024xf32>, vector<1024x64xf32>, vector<2x64xf32> -> vector<2x64xf32>
    %c0_3 = arith.constant 0 : index
    %c0_4 = arith.constant 0 : index
    %3 = vector.load %arg3[%c0_3, %c0_4] : memref<1x64xf32, #tpu.memory_space<vmem>>, vector<1x64xf32>
    %4 = vector.broadcast %3 : vector<1x64xf32> to vector<2x64xf32>
    %5 = arith.addf %2, %4 : vector<2x64xf32>
    %cst_5 = arith.constant 0.000000e+00 : f32
    %6 = vector.broadcast %cst_5 : f32 to vector<2x64xf32>
    %7 = arith.maximumf %5, %6 : vector<2x64xf32>
    %c0_6 = arith.constant 0 : index
    %c0_7 = arith.constant 0 : index
    %8 = vector.load %arg4[%c0_6, %c0_7] : memref<64x128xf32, #tpu.memory_space<vmem>>, vector<64x128xf32>
    %cst_8 = arith.constant dense<0.000000e+00> : vector<2x128xf32>
    %9 = tpu.matmul %7, %8, %cst_8 {dimension_numbers = #tpu.dot_dimension_numbers<[1], [0], [0], [1], [0, 0, 1, 1], [], []>} : vector<2x64xf32>, vector<64x128xf32>, vector<2x128xf32> -> vector<2x128xf32>
    %c0_9 = arith.constant 0 : index
    %c0_10 = arith.constant 0 : index
    %10 = vector.load %arg5[%c0_9, %c0_10] : memref<1x128xf32, #tpu.memory_space<vmem>>, vector<1x128xf32>
    %11 = vector.broadcast %10 : vector<1x128xf32> to vector<2x128xf32>
    %12 = arith.addf %9, %11 : vector<2x128xf32>
    %c0_11 = arith.constant 0 : index
    %c0_12 = arith.constant 0 : index
    %13 = vector.load %arg6[%c0_11, %c0_12] : memref<128x2xf32, #tpu.memory_space<vmem>>, vector<128x2xf32>
    %cst_13 = arith.constant dense<0.000000e+00> : vector<2x2xf32>
    %14 = tpu.matmul %12, %13, %cst_13 {dimension_numbers = #tpu.dot_dimension_numbers<[1], [0], [0], [1], [0, 0, 1, 1], [], []>} : vector<2x128xf32>, vector<128x2xf32>, vector<2x2xf32> -> vector<2x2xf32>
    %c0_14 = arith.constant 0 : index
    %c0_15 = arith.constant 0 : index
    %15 = vector.load %arg7[%c0_14, %c0_15] : memref<1x2xf32, #tpu.memory_space<vmem>>, vector<1x2xf32>
    %16 = vector.broadcast %15 : vector<1x2xf32> to vector<2x2xf32>
    %17 = arith.addf %14, %16 : vector<2x2xf32>
    %c0_16 = arith.constant 0 : index
    %c0_17 = arith.constant 0 : index
    %18 = vector.load %arg8[%c0_16, %c0_17] : memref<2x2xf32, #tpu.memory_space<vmem>>, vector<2x2xf32>
    tpu.vector_store %arg8[%c0_16, %c0_17], %17 {strides = array<i32>} : memref<2x2xf32, #tpu.memory_space<vmem>>, vector<2x2xf32>,
    return
  }
  func.func @transform_0(%arg0: i32) -> (i32, i32) {
    %c0_i32 = arith.constant 0 : i32
    %c0_i32_0 = arith.constant 0 : i32
    %c0_i32_1 = arith.constant 0 : i32
    return %c0_i32, %c0_i32_0 : i32, i32
  }
  func.func @transform_1(%arg0: i32) -> (i32, i32) {
    %c0_i32 = arith.constant 0 : i32
    %c0_i32_0 = arith.constant 0 : i32
    %c0_i32_1 = arith.constant 0 : i32
    return %c0_i32, %c0_i32_0 : i32, i32
  }
  func.func @transform_2(%arg0: i32) -> (i32, i32) {
    %c0_i32 = arith.constant 0 : i32
    %c0_i32_0 = arith.constant 0 : i32
    %c0_i32_1 = arith.constant 0 : i32
    return %c0_i32, %c0_i32_0 : i32, i32
  }
  func.func @transform_3(%arg0: i32) -> (i32, i32) {
    %c0_i32 = arith.constant 0 : i32
    %c0_i32_0 = arith.constant 0 : i32
    %c0_i32_1 = arith.constant 0 : i32
    return %c0_i32, %c0_i32_0 : i32, i32
  }
  func.func @transform_4(%arg0: i32) -> (i32, i32) {
    %c0_i32 = arith.constant 0 : i32
    %c0_i32_0 = arith.constant 0 : i32
    %c0_i32_1 = arith.constant 0 : i32
    return %c0_i32, %c0_i32_0 : i32, i32
  }
  func.func @transform_5(%arg0: i32) -> (i32, i32) {
    %c0_i32 = arith.constant 0 : i32
    %c0_i32_0 = arith.constant 0 : i32
    %c0_i32_1 = arith.constant 0 : i32
    return %c0_i32, %c0_i32_0 : i32, i32
  }
  func.func @transform_6(%arg0: i32) -> (i32, i32) {
    %c0_i32 = arith.constant 0 : i32
    %c0_i32_0 = arith.constant 0 : i32
    %c0_i32_1 = arith.constant 0 : i32
    return %c0_i32, %c0_i32_0 : i32, i32
  }
  func.func @transform_7(%arg0: i32) -> (i32, i32) {
    %c0_i32 = arith.constant 0 : i32
    %c0_i32_0 = arith.constant 0 : i32
    %c0_i32_1 = arith.constant 0 : i32
    return %c0_i32, %c0_i32_0 : i32, i32
  }
}

</mosaic_0001>

<llo_original>
// kernel: net_forward.5
$region0: #{net_forward.5}
  #allocation0 [shape = 'u32[]', space=smem, size = 0x4, offset = 0x4, fixed_abs, tag = 'smem constant byte address 0x4 - core index']
  #allocation1 [shape = 'u32[144,128]{1,0:T(1,128)}', space=vmem, size = 0x12000, scoped, tag = 'internal scratch']
  %s0 = inlined_call_operand.vmem [shape: bf16[12,27], index: 0, kind: input, shape index: {}]
  %s1 = inlined_call_operand.vmem [shape: bf16[27,9000], index: 1, kind: input, shape index: {}]
  %s2 = inlined_call_operand.vmem [shape: f32[12,1], index: 2, kind: input, shape index: {}]
  %s3 = inlined_call_operand.vmem [shape: bf16[12,9000], index: 3, kind: output, shape index: {}]
  %s4 = sld [smem:[#allocation0]]
  $region22: #{net_forward.5} parent=0
    _
  %s6 = ssub.s32 1, %s4
  %s7 = scalar_select 0, %s6, %s4
  // Predicated region
  $region2: #{net_forward.5} parent=0 // pred_check
    _
  $region3: #{net_forward.5} parent=0 // pred_check_branch
    %9 = sbr.rel (0) target = $region5
  $region4: #{net_forward.5} parent=0 // pred_region
    _
  $region5: #{net_forward.5} parent=0 // pred_fallthru
    _
  // Predicated region
  $region6: #{net_forward.5} parent=0 // pred_check
    _
  $region7: #{net_forward.5} parent=0 // pred_check_branch
    %11 = sbr.rel (0) target = $region9
  $region8: #{net_forward.5} parent=0 // pred_region
    _
  $region9: #{net_forward.5} parent=0 // pred_fallthru
    _
  // Predicated region
  $region10: #{net_forward.5} parent=0 // pred_check
    _
  $region11: #{net_forward.5} parent=0 // pred_check_branch
    %13 = sbr.rel (0) target = $region13
  $region12: #{net_forward.5} parent=0 // pred_region
    _
  $region13: #{net_forward.5} parent=0 // pred_fallthru
    _
  %v15 = vld [vmem:[%s0] sm:$0xf]
  %v16 = vld [vmem:[%s0 + $0x4] sm:$0x3]
  %v17 = vld [vmem:[%s1] sm:$0xff]
  %v18 = vld [vmem:[%s1 + $0x8] sm:$0xff]
  %v19 = vld [vmem:[%s1 + $0x10] sm:$0xff]
  %v20 = vld [vmem:[%s1 + $0x18] sm:$0xff]
  %v21 = vld [vmem:[%s1 + $0x20] sm:$0xff]
  %v22 = vld [vmem:[%s1 + $0x28] sm:$0xff]
  %v23 = vld [vmem:[%s1 + $0x30] sm:$0xff]
  %v24 = vld [vmem:[%s1 + $0x38] sm:$0xff]
  %v25 = vld [vmem:[%s1 + $0x40] sm:$0xff]
  %v26 = vld [vmem:[%s1 + $0x48] sm:$0xff]
  %v27 = vld [vmem:[%s1 + $0x50] sm:$0xff]
  %v28 = vld [vmem:[%s1 + $0x58] sm:$0xff]
  %v29 = vld [vmem:[%s1 + $0x60] sm:$0xff]
  %v30 = vld [vmem:[%s1 + $0x68] sm:$0xff]
  %v31 = vld [vmem:[%s1 + $0x70] sm:$0xff]
  %v32 = vld [vmem:[%s1 + $0x78] sm:$0xff]
  %v33 = vld [vmem:[%s1 + $0x80] sm:$0xff]
  %v34 = vld [vmem:[%s1 + $0x88] sm:$0xff]
  %v35 = vld [vmem:[%s1 + $0x90] sm:$0xff]
  %v36 = vld [vmem:[%s1 + $0x98] sm:$0xff]
  %v37 = vld [vmem:[%s1 + $0xa0] sm:$0xff]
  %v38 = vld [vmem:[%s1 + $0xa8] sm:$0xff]
  %v39 = vld [vmem:[%s1 + $0xb0] sm:$0xff]
  %v40 = vld [vmem:[%s1 + $0xb8] sm:$0xff]
  %v41 = vld [vmem:[%s1 + $0xc0] sm:$0xff]
  %v42 = vld [vmem:[%s1 + $0xc8] sm:$0xff]
  %v43 = vld [vmem:[%s1 + $0xd0] sm:$0xff]
  %v44 = vld [vmem:[%s1 + $0xd8] sm:$0xff]
  %v45 = vld [vmem:[%s1 + $0xe0] sm:$0xff]
  %v46 = vld [vmem:[%s1 + $0xe8] sm:$0xff]
  %v47 = vld [vmem:[%s1 + $0xf0] sm:$0xff]
  %v48 = vld [vmem:[%s1 + $0xf8] sm:$0xff]
  %v49 = vld [vmem:[%s1 + $0x100] sm:$0xff]
  %v50 = vld [vmem:[%s1 + $0x108] sm:$0xff]
  %v51 = vld [vmem:[%s1 + $0x110] sm:$0xff]
  %v52 = vld [vmem:[%s1 + $0x118] sm:$0xf]
  %v53 = vld [vmem:[%s1 + $0x11c] sm:$0xff]
  %v54 = vld [vmem:[%s1 + $0x124] sm:$0xff]
  %v55 = vld [vmem:[%s1 + $0x12c] sm:$0xff]
  %v56 = vld [vmem:[%s1 + $0x134] sm:$0xff]
  %v57 = vld [vmem:[%s1 + $0x13c] sm:$0xff]
  %v58 = vld [vmem:[%s1 + $0x144] sm:$0xff]
  %v59 = vld [vmem:[%s1 + $0x14c] sm:$0xff]
  %v60 = vld [vmem:[%s1 + $0x154] sm:$0xff]
  %v61 = vld [vmem:[%s1 + $0x15c] sm:$0xff]
  %v62 = vld [vmem:[%s1 + $0x164] sm:$0xff]
  %v63 = vld [vmem:[%s1 + $0x16c] sm:$0xff]
  %v64 = vld [vmem:[%s1 + $0x174] sm:$0xff]
  %v65 = vld [vmem:[%s1 + $0x17c] sm:$0xff]
  %v66 = vld [vmem:[%s1 + $0x184] sm:$0xff]
  %v67 = vld [vmem:[%s1 + $0x18c] sm:$0xff]
  %v68 = vld [vmem:[%s1 + $0x194] sm:$0xff]
  %v69 = vld [vmem:[%s1 + $0x19c] sm:$0xff]
  %v70 = vld [vmem:[%s1 + $0x1a4] sm:$0xff]
  %v71 = vld [vmem:[%s1 + $0x1ac] sm:$0xff]
  %v72 = vld [vmem:[%s1 + $0x1b4] sm:$0xff]
  %v73 = vld [vmem:[%s1 + $0x1bc] sm:$0xff]
  %v74 = vld [vmem:[%s1 + $0x1c4] sm:$0xff]
  %v75 = vld [vmem:[%s1 + $0x1cc] sm:$0xff]
  %v76 = vld [vmem:[%s1 + $0x1d4] sm:$0xff]
  %v77 = vld [vmem:[%s1 + $0x1dc] sm:$0xff]
  %v78 = vld [vmem:[%s1 + $0x1e4] sm:$0xff]
  %v79 = vld [vmem:[%s1 + $0x1ec] sm:$0xff]
  %v80 = vld [vmem:[%s1 + $0x1f4] sm:$0xff]
  %v81 = vld [vmem:[%s1 + $0x1fc] sm:$0xff]
  %v82 = vld [vmem:[%s1 + $0x204] sm:$0xff]
  %v83 = vld [vmem:[%s1 + $0x20c] sm:$0xff]
  %v84 = vld [vmem:[%s1 + $0x214] sm:$0xff]
  %v85 = vld [vmem:[%s1 + $0x21c] sm:$0xff]
  %v86 = vld [vmem:[%s1 + $0x224] sm:$0xff]
  %v87 = vld [vmem:[%s1 + $0x22c] sm:$0xff]
  %v88 = vld [vmem:[%s1 + $0x234] sm:$0xf]
  %v89 = vld [vmem:[%s1 + $0x238] sm:$0xff]
  %v90 = vld [vmem:[%s1 + $0x240] sm:$0xff]
  %v91 = vld [vmem:[%s1 + $0x248] sm:$0xff]
  %v92 = vld [vmem:[%s1 + $0x250] sm:$0xff]
  %v93 = vld [vmem:[%s1 + $0x258] sm:$0xff]
  %v94 = vld [vmem:[%s1 + $0x260] sm:$0xff]
  %v95 = vld [vmem:[%s1 + $0x268] sm:$0xff]
  %v96 = vld [vmem:[%s1 + $0x270] sm:$0xff]
  %v97 = vld [vmem:[%s1 + $0x278] sm:$0xff]
  %v98 = vld [vmem:[%s1 + $0x280] sm:$0xff]
  %v99 = vld [vmem:[%s1 + $0x288] sm:$0xff]
  %v100 = vld [vmem:[%s1 + $0x290] sm:$0xff]
  %v101 = vld [vmem:[%s1 + $0x298] sm:$0xff]
  %v102 = vld [vmem:[%s1 + $0x2a0] sm:$0xff]
  %v103 = vld [vmem:[%s1 + $0x2a8] sm:$0xff]
  %v104 = vld [vmem:[%s1 + $0x2b0] sm:$0xff]
  %v105 = vld [vmem:[%s1 + $0x2b8] sm:$0xff]
  %v106 = vld [vmem:[%s1 + $0x2c0] sm:$0xff]
  %v107 = vld [vmem:[%s1 + $0x2c8] sm:$0xff]
  %v108 = vld [vmem:[%s1 + $0x2d0] sm:$0xff]
  %v109 = vld [vmem:[%s1 + $0x2d8] sm:$0xff]
  %v110 = vld [vmem:[%s1 + $0x2e0] sm:$0xff]
  %v111 = vld [vmem:[%s1 + $0x2e8] sm:$0xff]
  %v112 = vld [vmem:[%s1 + $0x2f0] sm:$0xff]
  %v113 = vld [vmem:[%s1 + $0x2f8] sm:$0xff]
  %v114 = vld [vmem:[%s1 + $0x300] sm:$0xff]
  %v115 = vld [vmem:[%s1 + $0x308] sm:$0xff]
  %v116 = vld [vmem:[%s1 + $0x310] sm:$0xff]
  %v117 = vld [vmem:[%s1 + $0x318] sm:$0xff]
  %v118 = vld [vmem:[%s1 + $0x320] sm:$0xff]
  %v119 = vld [vmem:[%s1 + $0x328] sm:$0xff]
  %v120 = vld [vmem:[%s1 + $0x330] sm:$0xff]
  %v121 = vld [vmem:[%s1 + $0x338] sm:$0xff]
  %v122 = vld [vmem:[%s1 + $0x340] sm:$0xff]
  %v123 = vld [vmem:[%s1 + $0x348] sm:$0xff]
  %v124 = vld [vmem:[%s1 + $0x350] sm:$0xf]
  %v125 = vld [vmem:[%s1 + $0x354] sm:$0x33]
  %v126 = vld [vmem:[%s1 + $0x35c] sm:$0x33]
  %v127 = vld [vmem:[%s1 + $0x364] sm:$0x33]
  %v128 = vld [vmem:[%s1 + $0x36c] sm:$0x33]
  %v129 = vld [vmem:[%s1 + $0x374] sm:$0x33]
  %v130 = vld [vmem:[%s1 + $0x37c] sm:$0x33]
  %v131 = vld [vmem:[%s1 + $0x384] sm:$0x33]
  %v132 = vld [vmem:[%s1 + $0x38c] sm:$0x33]
  %v133 = vld [vmem:[%s1 + $0x394] sm:$0x33]
  %v134 = vld [vmem:[%s1 + $0x39c] sm:$0x33]
  %v135 = vld [vmem:[%s1 + $0x3a4] sm:$0x33]
  %v136 = vld [vmem:[%s1 + $0x3ac] sm:$0x33]
  %v137 = vld [vmem:[%s1 + $0x3b4] sm:$0x33]
  %v138 = vld [vmem:[%s1 + $0x3bc] sm:$0x33]
  %v139 = vld [vmem:[%s1 + $0x3c4] sm:$0x33]
  %v140 = vld [vmem:[%s1 + $0x3cc] sm:$0x33]
  %v141 = vld [vmem:[%s1 + $0x3d4] sm:$0x33]
  %v142 = vld [vmem:[%s1 + $0x3dc] sm:$0x33]
  %v143 = vld [vmem:[%s1 + $0x3e4] sm:$0x33]
  %v144 = vld [vmem:[%s1 + $0x3ec] sm:$0x33]
  %v145 = vld [vmem:[%s1 + $0x3f4] sm:$0x33]
  %v146 = vld [vmem:[%s1 + $0x3fc] sm:$0x33]
  %v147 = vld [vmem:[%s1 + $0x404] sm:$0x33]
  %v148 = vld [vmem:[%s1 + $0x40c] sm:$0x33]
  %v149 = vld [vmem:[%s1 + $0x414] sm:$0x33]
  %v150 = vld [vmem:[%s1 + $0x41c] sm:$0x33]
  %v151 = vld [vmem:[%s1 + $0x424] sm:$0x33]
  %v152 = vld [vmem:[%s1 + $0x42c] sm:$0x33]
  %v153 = vld [vmem:[%s1 + $0x434] sm:$0x33]
  %v154 = vld [vmem:[%s1 + $0x43c] sm:$0x33]
  %v155 = vld [vmem:[%s1 + $0x444] sm:$0x33]
  %v156 = vld [vmem:[%s1 + $0x44c] sm:$0x33]
  %v157 = vld [vmem:[%s1 + $0x454] sm:$0x33]
  %v158 = vld [vmem:[%s1 + $0x45c] sm:$0x33]
  %v159 = vld [vmem:[%s1 + $0x464] sm:$0x33]
  %v160 = vld [vmem:[%s1 + $0x46c] sm:$0x3]
  %v161 = vld [vmem:[%s2] sm:$0xff]
  %v162 = vld [vmem:[%s2 + $0x8] sm:$0xf]
  %164 = vset.pattern.permute.xlu0 0
  %165 = vperm.xlu0 %164, %v161
  %v166 = vpop.permute.xlu0 %165
  %169 = vset.pattern.permute.xlu0 0
  %170 = vperm.xlu0 %169, %v162
  %v171 = vpop.permute.xlu0 %170
  %v175 = vunpack.c.l.b16 %v15
  %v176 = vunpack.c.l.b16 %v16
  %v177 = vpack.c.b16 %v176, %v175
  %v322 = vunpack.c.l.b16 %v17
  %v323 = vunpack.c.h.b16 %v17
  %v324 = vunpack.c.l.b16 %v18
  %v325 = vunpack.c.h.b16 %v18
  %v326 = vunpack.c.l.b16 %v19
  %v327 = vunpack.c.h.b16 %v19
  %v328 = vunpack.c.l.b16 %v20
  %v329 = vunpack.c.h.b16 %v20
  %v330 = vunpack.c.l.b16 %v21
  %v331 = vunpack.c.h.b16 %v21
  %v332 = vunpack.c.l.b16 %v22
  %v333 = vunpack.c.h.b16 %v22
  %v334 = vunpack.c.l.b16 %v23
  %v335 = vunpack.c.h.b16 %v23
  %v336 = vunpack.c.l.b16 %v24
  %v337 = vunpack.c.h.b16 %v24
  %v338 = vunpack.c.l.b16 %v25
  %v339 = vunpack.c.h.b16 %v25
  %v340 = vunpack.c.l.b16 %v26
  %v341 = vunpack.c.h.b16 %v26
  %v342 = vunpack.c.l.b16 %v27
  %v343 = vunpack.c.h.b16 %v27
  %v344 = vunpack.c.l.b16 %v28
  %v345 = vunpack.c.h.b16 %v28
  %v346 = vunpack.c.l.b16 %v29
  %v347 = vunpack.c.h.b16 %v29
  %v348 = vunpack.c.l.b16 %v30
  %v349 = vunpack.c.h.b16 %v30
  %v350 = vunpack.c.l.b16 %v31
  %v351 = vunpack.c.h.b16 %v31
  %v352 = vunpack.c.l.b16 %v32
  %v353 = vunpack.c.h.b16 %v32
  %v354 = vunpack.c.l.b16 %v33
  %v355 = vunpack.c.h.b16 %v33
  %v356 = vunpack.c.l.b16 %v34
  %v357 = vunpack.c.h.b16 %v34
  %v358 = vunpack.c.l.b16 %v35
  %v359 = vunpack.c.h.b16 %v35
  %v360 = vunpack.c.l.b16 %v36
  %v361 = vunpack.c.h.b16 %v36
  %v362 = vunpack.c.l.b16 %v37
  %v363 = vunpack.c.h.b16 %v37
  %v364 = vunpack.c.l.b16 %v38
  %v365 = vunpack.c.h.b16 %v38
  %v366 = vunpack.c.l.b16 %v39
  %v367 = vunpack.c.h.b16 %v39
  %v368 = vunpack.c.l.b16 %v40
  %v369 = vunpack.c.h.b16 %v40
  %v370 = vunpack.c.l.b16 %v41
  %v371 = vunpack.c.h.b16 %v41
  %v372 = vunpack.c.l.b16 %v42
  %v373 = vunpack.c.h.b16 %v42
  %v374 = vunpack.c.l.b16 %v43
  %v375 = vunpack.c.h.b16 %v43
  %v376 = vunpack.c.l.b16 %v44
  %v377 = vunpack.c.h.b16 %v44
  %v378 = vunpack.c.l.b16 %v45
  %v379 = vunpack.c.h.b16 %v45
  %v380 = vunpack.c.l.b16 %v46
  %v381 = vunpack.c.h.b16 %v46
  %v382 = vunpack.c.l.b16 %v47
  %v383 = vunpack.c.h.b16 %v47
  %v384 = vunpack.c.l.b16 %v48
  %v385 = vunpack.c.h.b16 %v48
  %v386 = vunpack.c.l.b16 %v49
  %v387 = vunpack.c.h.b16 %v49
  %v388 = vunpack.c.l.b16 %v50
  %v389 = vunpack.c.h.b16 %v50
  %v390 = vunpack.c.l.b16 %v51
  %v391 = vunpack.c.h.b16 %v51
  %v392 = vunpack.c.l.b16 %v52
  %v393 = vunpack.c.l.b16 %v53
  %v394 = vunpack.c.h.b16 %v53
  %v395 = vunpack.c.l.b16 %v54
  %v396 = vunpack.c.h.b16 %v54
  %v397 = vunpack.c.l.b16 %v55
  %v398 = vunpack.c.h.b16 %v55
  %v399 = vunpack.c.l.b16 %v56
  %v400 = vunpack.c.h.b16 %v56
  %v401 = vunpack.c.l.b16 %v57
  %v402 = vunpack.c.h.b16 %v57
  %v403 = vunpack.c.l.b16 %v58
  %v404 = vunpack.c.h.b16 %v58
  %v405 = vunpack.c.l.b16 %v59
  %v406 = vunpack.c.h.b16 %v59
  %v407 = vunpack.c.l.b16 %v60
  %v408 = vunpack.c.h.b16 %v60
  %v409 = vunpack.c.l.b16 %v61
  %v410 = vunpack.c.h.b16 %v61
  %v411 = vunpack.c.l.b16 %v62
  %v412 = vunpack.c.h.b16 %v62
  %v413 = vunpack.c.l.b16 %v63
  %v414 = vunpack.c.h.b16 %v63
  %v415 = vunpack.c.l.b16 %v64
  %v416 = vunpack.c.h.b16 %v64
  %v417 = vunpack.c.l.b16 %v65
  %v418 = vunpack.c.h.b16 %v65
  %v419 = vunpack.c.l.b16 %v66
  %v420 = vunpack.c.h.b16 %v66
  %v421 = vunpack.c.l.b16 %v67
  %v422 = vunpack.c.h.b16 %v67
  %v423 = vunpack.c.l.b16 %v68
  %v424 = vunpack.c.h.b16 %v68
  %v425 = vunpack.c.l.b16 %v69
  %v426 = vunpack.c.h.b16 %v69
  %v427 = vunpack.c.l.b16 %v70
  %v428 = vunpack.c.h.b16 %v70
  %v429 = vunpack.c.l.b16 %v71
  %v430 = vunpack.c.h.b16 %v71
  %v431 = vunpack.c.l.b16 %v72
  %v432 = vunpack.c.h.b16 %v72
  %v433 = vunpack.c.l.b16 %v73
  %v434 = vunpack.c.h.b16 %v73
  %v435 = vunpack.c.l.b16 %v74
  %v436 = vunpack.c.h.b16 %v74
  %v437 = vunpack.c.l.b16 %v75
  %v438 = vunpack.c.h.b16 %v75
  %v439 = vunpack.c.l.b16 %v76
  %v440 = vunpack.c.h.b16 %v76
  %v441 = vunpack.c.l.b16 %v77
  %v442 = vunpack.c.h.b16 %v77
  %v443 = vunpack.c.l.b16 %v78
  %v444 = vunpack.c.h.b16 %v78
  %v445 = vunpack.c.l.b16 %v79
  %v446 = vunpack.c.h.b16 %v79
  %v447 = vunpack.c.l.b16 %v80
  %v448 = vunpack.c.h.b16 %v80
  %v449 = vunpack.c.l.b16 %v81
  %v450 = vunpack.c.h.b16 %v81
  %v451 = vunpack.c.l.b16 %v82
  %v452 = vunpack.c.h.b16 %v82
  %v453 = vunpack.c.l.b16 %v83
  %v454 = vunpack.c.h.b16 %v83
  %v455 = vunpack.c.l.b16 %v84
  %v456 = vunpack.c.h.b16 %v84
  %v457 = vunpack.c.l.b16 %v85
  %v458 = vunpack.c.h.b16 %v85
  %v459 = vunpack.c.l.b16 %v86
  %v460 = vunpack.c.h.b16 %v86
  %v461 = vunpack.c.l.b16 %v87
  %v462 = vunpack.c.h.b16 %v87
  %v463 = vunpack.c.l.b16 %v88
  %v464 = vunpack.c.l.b16 %v89
  %v465 = vunpack.c.h.b16 %v89
  %v466 = vunpack.c.l.b16 %v90
  %v467 = vunpack.c.h.b16 %v90
  %v468 = vunpack.c.l.b16 %v91
  %v469 = vunpack.c.h.b16 %v91
  %v470 = vunpack.c.l.b16 %v92
  %v471 = vunpack.c.h.b16 %v92
  %v472 = vunpack.c.l.b16 %v93
  %v473 = vunpack.c.h.b16 %v93
  %v474 = vunpack.c.l.b16 %v94
  %v475 = vunpack.c.h.b16 %v94
  %v476 = vunpack.c.l.b16 %v95
  %v477 = vunpack.c.h.b16 %v95
  %v478 = vunpack.c.l.b16 %v96
  %v479 = vunpack.c.h.b16 %v96
  %v480 = vunpack.c.l.b16 %v97
  %v481 = vunpack.c.h.b16 %v97
  %v482 = vunpack.c.l.b16 %v98
  %v483 = vunpack.c.h.b16 %v98
  %v484 = vunpack.c.l.b16 %v99
  %v485 = vunpack.c.h.b16 %v99
  %v486 = vunpack.c.l.b16 %v100
  %v487 = vunpack.c.h.b16 %v100
  %v488 = vunpack.c.l.b16 %v101
  %v489 = vunpack.c.h.b16 %v101
  %v490 = vunpack.c.l.b16 %v102
  %v491 = vunpack.c.h.b16 %v102
  %v492 = vunpack.c.l.b16 %v103
  %v493 = vunpack.c.h.b16 %v103
  %v494 = vunpack.c.l.b16 %v104
  %v495 = vunpack.c.h.b16 %v104
  %v496 = vunpack.c.l.b16 %v105
  %v497 = vunpack.c.h.b16 %v105
  %v498 = vunpack.c.l.b16 %v106
  %v499 = vunpack.c.h.b16 %v106
  %v500 = vunpack.c.l.b16 %v107
  %v501 = vunpack.c.h.b16 %v107
  %v502 = vunpack.c.l.b16 %v108
  %v503 = vunpack.c.h.b16 %v108
  %v504 = vunpack.c.l.b16 %v109
  %v505 = vunpack.c.h.b16 %v109
  %v506 = vunpack.c.l.b16 %v110
  %v507 = vunpack.c.h.b16 %v110
  %v508 = vunpack.c.l.b16 %v111
  %v509 = vunpack.c.h.b16 %v111
  %v510 = vunpack.c.l.b16 %v112
  %v511 = vunpack.c.h.b16 %v112
  %v512 = vunpack.c.l.b16 %v113
  %v513 = vunpack.c.h.b16 %v113
  %v514 = vunpack.c.l.b16 %v114
  %v515 = vunpack.c.h.b16 %v114
  %v516 = vunpack.c.l.b16 %v115
  %v517 = vunpack.c.h.b16 %v115
  %v518 = vunpack.c.l.b16 %v116
  %v519 = vunpack.c.h.b16 %v116
  %v520 = vunpack.c.l.b16 %v117
  %v521 = vunpack.c.h.b16 %v117
  %v522 = vunpack.c.l.b16 %v118
  %v523 = vunpack.c.h.b16 %v118
  %v524 = vunpack.c.l.b16 %v119
  %v525 = vunpack.c.h.b16 %v119
  %v526 = vunpack.c.l.b16 %v120
  %v527 = vunpack.c.h.b16 %v120
  %v528 = vunpack.c.l.b16 %v121
  %v529 = vunpack.c.h.b16 %v121
  %v530 = vunpack.c.l.b16 %v122
  %v531 = vunpack.c.h.b16 %v122
  %v532 = vunpack.c.l.b16 %v123
  %v533 = vunpack.c.h.b16 %v123
  %v534 = vunpack.c.l.b16 %v124
  %v535 = vunpack.c.l.b16 %v125
  %v536 = vunpack.c.h.b16 %v125
  %v537 = vunpack.c.l.b16 %v126
  %v538 = vunpack.c.h.b16 %v126
  %v539 = vunpack.c.l.b16 %v127
  %v540 = vunpack.c.h.b16 %v127
  %v541 = vunpack.c.l.b16 %v128
  %v542 = vunpack.c.h.b16 %v128
  %v543 = vunpack.c.l.b16 %v129
  %v544 = vunpack.c.h.b16 %v129
  %v545 = vunpack.c.l.b16 %v130
  %v546 = vunpack.c.h.b16 %v130
  %v547 = vunpack.c.l.b16 %v131
  %v548 = vunpack.c.h.b16 %v131
  %v549 = vunpack.c.l.b16 %v132
  %v550 = vunpack.c.h.b16 %v132
  %v551 = vunpack.c.l.b16 %v133
  %v552 = vunpack.c.h.b16 %v133
  %v553 = vunpack.c.l.b16 %v134
  %v554 = vunpack.c.h.b16 %v134
  %v555 = vunpack.c.l.b16 %v135
  %v556 = vunpack.c.h.b16 %v135
  %v557 = vunpack.c.l.b16 %v136
  %v558 = vunpack.c.h.b16 %v136
  %v559 = vunpack.c.l.b16 %v137
  %v560 = vunpack.c.h.b16 %v137
  %v561 = vunpack.c.l.b16 %v138
  %v562 = vunpack.c.h.b16 %v138
  %v563 = vunpack.c.l.b16 %v139
  %v564 = vunpack.c.h.b16 %v139
  %v565 = vunpack.c.l.b16 %v140
  %v566 = vunpack.c.h.b16 %v140
  %v567 = vunpack.c.l.b16 %v141
  %v568 = vunpack.c.h.b16 %v141
  %v569 = vunpack.c.l.b16 %v142
  %v570 = vunpack.c.h.b16 %v142
  %v571 = vunpack.c.l.b16 %v143
  %v572 = vunpack.c.h.b16 %v143
  %v573 = vunpack.c.l.b16 %v144
  %v574 = vunpack.c.h.b16 %v144
  %v575 = vunpack.c.l.b16 %v145
  %v576 = vunpack.c.h.b16 %v145
  %v577 = vunpack.c.l.b16 %v146
  %v578 = vunpack.c.h.b16 %v146
  %v579 = vunpack.c.l.b16 %v147
  %v580 = vunpack.c.h.b16 %v147
  %v581 = vunpack.c.l.b16 %v148
  %v582 = vunpack.c.h.b16 %v148
  %v583 = vunpack.c.l.b16 %v149
  %v584 = vunpack.c.h.b16 %v149
  %v585 = vunpack.c.l.b16 %v150
  %v586 = vunpack.c.h.b16 %v150
  %v587 = vunpack.c.l.b16 %v151
  %v588 = vunpack.c.h.b16 %v151
  %v589 = vunpack.c.l.b16 %v152
  %v590 = vunpack.c.h.b16 %v152
  %v591 = vunpack.c.l.b16 %v153
  %v592 = vunpack.c.h.b16 %v153
  %v593 = vunpack.c.l.b16 %v154
  %v594 = vunpack.c.h.b16 %v154
  %v595 = vunpack.c.l.b16 %v155
  %v596 = vunpack.c.h.b16 %v155
  %v597 = vunpack.c.l.b16 %v156
  %v598 = vunpack.c.h.b16 %v156
  %v599 = vunpack.c.l.b16 %v157
  %v600 = vunpack.c.h.b16 %v157
  %v601 = vunpack.c.l.b16 %v158
  %v602 = vunpack.c.h.b16 %v158
  %v603 = vunpack.c.l.b16 %v159
  %v604 = vunpack.c.h.b16 %v159
  %v605 = vunpack.c.l.b16 %v160
  %v606 = vpack.c.b16 %v393, %v322
  %v607 = vpack.c.b16 %v394, %v323
  %v608 = vpack.c.b16 %v395, %v324
  %v609 = vpack.c.b16 %v396, %v325
  %v610 = vpack.c.b16 %v397, %v326
  %v611 = vpack.c.b16 %v398, %v327
  %v612 = vpack.c.b16 %v399, %v328
  %v613 = vpack.c.b16 %v400, %v329
  %v614 = vpack.c.b16 %v401, %v330
  %v615 = vpack.c.b16 %v402, %v331
  %v616 = vpack.c.b16 %v403, %v332
  %v617 = vpack.c.b16 %v404, %v333
  %v618 = vpack.c.b16 %v405, %v334
  %v619 = vpack.c.b16 %v406, %v335
  %v620 = vpack.c.b16 %v407, %v336
  %v621 = vpack.c.b16 %v408, %v337
  %v622 = vpack.c.b16 %v409, %v338
  %v623 = vpack.c.b16 %v410, %v339
  %v624 = vpack.c.b16 %v411, %v340
  %v625 = vpack.c.b16 %v412, %v341
  %v626 = vpack.c.b16 %v413, %v342
  %v627 = vpack.c.b16 %v414, %v343
  %v628 = vpack.c.b16 %v415, %v344
  %v629 = vpack.c.b16 %v416, %v345
  %v630 = vpack.c.b16 %v417, %v346
  %v631 = vpack.c.b16 %v418, %v347
  %v632 = vpack.c.b16 %v419, %v348
  %v633 = vpack.c.b16 %v420, %v349
  %v634 = vpack.c.b16 %v421, %v350
  %v635 = vpack.c.b16 %v422, %v351
  %v636 = vpack.c.b16 %v423, %v352
  %v637 = vpack.c.b16 %v424, %v353
  %v638 = vpack.c.b16 %v425, %v354
  %v639 = vpack.c.b16 %v426, %v355
  %v640 = vpack.c.b16 %v427, %v356
  %v641 = vpack.c.b16 %v428, %v357
  %v642 = vpack.c.b16 %v429, %v358
  %v643 = vpack.c.b16 %v430, %v359
  %v644 = vpack.c.b16 %v431, %v360
  %v645 = vpack.c.b16 %v432, %v361
  %v646 = vpack.c.b16 %v433, %v362
  %v647 = vpack.c.b16 %v434, %v363
  %v648 = vpack.c.b16 %v435, %v364
  %v649 = vpack.c.b16 %v436, %v365
  %v650 = vpack.c.b16 %v437, %v366
  %v651 = vpack.c.b16 %v438, %v367
  %v652 = vpack.c.b16 %v439, %v368
  %v653 = vpack.c.b16 %v440, %v369
  %v654 = vpack.c.b16 %v441, %v370
  %v655 = vpack.c.b16 %v442, %v371
  %v656 = vpack.c.b16 %v443, %v372
  %v657 = vpack.c.b16 %v444, %v373
  %v658 = vpack.c.b16 %v445, %v374
  %v659 = vpack.c.b16 %v446, %v375
  %v660 = vpack.c.b16 %v447, %v376
  %v661 = vpack.c.b16 %v448, %v377
  %v662 = vpack.c.b16 %v449, %v378
  %v663 = vpack.c.b16 %v450, %v379
  %v664 = vpack.c.b16 %v451, %v380
  %v665 = vpack.c.b16 %v452, %v381
  %v666 = vpack.c.b16 %v453, %v382
  %v667 = vpack.c.b16 %v454, %v383
  %v668 = vpack.c.b16 %v455, %v384
  %v669 = vpack.c.b16 %v456, %v385
  %v670 = vpack.c.b16 %v457, %v386
  %v671 = vpack.c.b16 %v458, %v387
  %v672 = vpack.c.b16 %v459, %v388
  %v673 = vpack.c.b16 %v460, %v389
  %v674 = vpack.c.b16 %v461, %v390
  %v675 = vpack.c.b16 %v462, %v391
  %v676 = vpack.c.b16 %v463, %v392
  %v677 = vpack.c.b16 %v535, %v464
  %v678 = vpack.c.b16 %v536, %v465
  %v679 = vpack.c.b16 %v537, %v466
  %v680 = vpack.c.b16 %v538, %v467
  %v681 = vpack.c.b16 %v539, %v468
  %v682 = vpack.c.b16 %v540, %v469
  %v683 = vpack.c.b16 %v541, %v470
  %v684 = vpack.c.b16 %v542, %v471
  %v685 = vpack.c.b16 %v543, %v472
  %v686 = vpack.c.b16 %v544, %v473
  %v687 = vpack.c.b16 %v545, %v474
  %v688 = vpack.c.b16 %v546, %v475
  %v689 = vpack.c.b16 %v547, %v476
  %v690 = vpack.c.b16 %v548, %v477
  %v691 = vpack.c.b16 %v549, %v478
  %v692 = vpack.c.b16 %v550, %v479
  %v693 = vpack.c.b16 %v551, %v480
  %v694 = vpack.c.b16 %v552, %v481
  %v695 = vpack.c.b16 %v553, %v482
  %v696 = vpack.c.b16 %v554, %v483
  %v697 = vpack.c.b16 %v555, %v484
  %v698 = vpack.c.b16 %v556, %v485
  %v699 = vpack.c.b16 %v557, %v486
  %v700 = vpack.c.b16 %v558, %v487
  %v701 = vpack.c.b16 %v559, %v488
  %v702 = vpack.c.b16 %v560, %v489
  %v703 = vpack.c.b16 %v561, %v490
  %v704 = vpack.c.b16 %v562, %v491
  %v705 = vpack.c.b16 %v563, %v492
  %v706 = vpack.c.b16 %v564, %v493
  %v707 = vpack.c.b16 %v565, %v494
  %v708 = vpack.c.b16 %v566, %v495
  %v709 = vpack.c.b16 %v567, %v496
  %v710 = vpack.c.b16 %v568, %v497
  %v711 = vpack.c.b16 %v569, %v498
  %v712 = vpack.c.b16 %v570, %v499
  %v713 = vpack.c.b16 %v571, %v500
  %v714 = vpack.c.b16 %v572, %v501
  %v715 = vpack.c.b16 %v573, %v502
  %v716 = vpack.c.b16 %v574, %v503
  %v717 = vpack.c.b16 %v575, %v504
  %v718 = vpack.c.b16 %v576, %v505
  %v719 = vpack.c.b16 %v577, %v506
  %v720 = vpack.c.b16 %v578, %v507
  %v721 = vpack.c.b16 %v579, %v508
  %v722 = vpack.c.b16 %v580, %v509
  %v723 = vpack.c.b16 %v581, %v510
  %v724 = vpack.c.b16 %v582, %v511
  %v725 = vpack.c.b16 %v583, %v512
  %v726 = vpack.c.b16 %v584, %v513
  %v727 = vpack.c.b16 %v585, %v514
  %v728 = vpack.c.b16 %v586, %v515
  %v729 = vpack.c.b16 %v587, %v516
  %v730 = vpack.c.b16 %v588, %v517
  %v731 = vpack.c.b16 %v589, %v518
  %v732 = vpack.c.b16 %v590, %v519
  %v733 = vpack.c.b16 %v591, %v520
  %v734 = vpack.c.b16 %v592, %v521
  %v735 = vpack.c.b16 %v593, %v522
  %v736 = vpack.c.b16 %v594, %v523
  %v737 = vpack.c.b16 %v595, %v524
  %v738 = vpack.c.b16 %v596, %v525
  %v739 = vpack.c.b16 %v597, %v526
  %v740 = vpack.c.b16 %v598, %v527
  %v741 = vpack.c.b16 %v599, %v528
  %v742 = vpack.c.b16 %v600, %v529
  %v743 = vpack.c.b16 %v601, %v530
  %v744 = vpack.c.b16 %v602, %v531
  %v745 = vpack.c.b16 %v603, %v532
  %v746 = vpack.c.b16 %v604, %v533
  %v747 = vpack.c.b16 %v605, %v534
  %vm819 = vcmask 220160
  %v821 = vsel %vm819, %v177, 0
  %vm823 = vcmask 1044480
  %vm824 = vcmask 1045504
  %v825 = vsel %vm823, 4294967295, 65535
  %v826 = vsel %vm824, %v825, 0
  %v828 = vand.u32 %v677, %v826
  %v831 = vand.u32 %v678, %v826
  %v834 = vand.u32 %v679, %v826
  %v837 = vand.u32 %v680, %v826
  %v840 = vand.u32 %v681, %v826
  %v843 = vand.u32 %v682, %v826
  %v846 = vand.u32 %v683, %v826
  %v849 = vand.u32 %v684, %v826
  %v852 = vand.u32 %v685, %v826
  %v855 = vand.u32 %v686, %v826
  %v858 = vand.u32 %v687, %v826
  %v861 = vand.u32 %v688, %v826
  %v864 = vand.u32 %v689, %v826
  %v867 = vand.u32 %v690, %v826
  %v870 = vand.u32 %v691, %v826
  %v873 = vand.u32 %v692, %v826
  %v876 = vand.u32 %v693, %v826
  %v879 = vand.u32 %v694, %v826
  %v882 = vand.u32 %v695, %v826
  %v885 = vand.u32 %v696, %v826
  %v888 = vand.u32 %v697, %v826
  %v891 = vand.u32 %v698, %v826
  %v894 = vand.u32 %v699, %v826
  %v897 = vand.u32 %v700, %v826
  %v900 = vand.u32 %v701, %v826
  %v903 = vand.u32 %v702, %v826
  %v906 = vand.u32 %v703, %v826
  %v909 = vand.u32 %v704, %v826
  %v912 = vand.u32 %v705, %v826
  %v915 = vand.u32 %v706, %v826
  %v918 = vand.u32 %v707, %v826
  %v921 = vand.u32 %v708, %v826
  %v924 = vand.u32 %v709, %v826
  %v927 = vand.u32 %v710, %v826
  %v930 = vand.u32 %v711, %v826
  %v933 = vand.u32 %v712, %v826
  %v936 = vand.u32 %v713, %v826
  %v939 = vand.u32 %v714, %v826
  %v942 = vand.u32 %v715, %v826
  %v945 = vand.u32 %v716, %v826
  %v948 = vand.u32 %v717, %v826
  %v951 = vand.u32 %v718, %v826
  %v954 = vand.u32 %v719, %v826
  %v957 = vand.u32 %v720, %v826
  %v960 = vand.u32 %v721, %v826
  %v963 = vand.u32 %v722, %v826
  %v966 = vand.u32 %v723, %v826
  %v969 = vand.u32 %v724, %v826
  %v972 = vand.u32 %v725, %v826
  %v975 = vand.u32 %v726, %v826
  %v978 = vand.u32 %v727, %v826
  %v981 = vand.u32 %v728, %v826
  %v984 = vand.u32 %v729, %v826
  %v987 = vand.u32 %v730, %v826
  %v990 = vand.u32 %v731, %v826
  %v993 = vand.u32 %v732, %v826
  %v996 = vand.u32 %v733, %v826
  %v999 = vand.u32 %v734, %v826
  %v1002 = vand.u32 %v735, %v826
  %v1005 = vand.u32 %v736, %v826
  %v1008 = vand.u32 %v737, %v826
  %v1011 = vand.u32 %v738, %v826
  %v1014 = vand.u32 %v739, %v826
  %v1017 = vand.u32 %v740, %v826
  %v1020 = vand.u32 %v741, %v826
  %v1023 = vand.u32 %v742, %v826
  %v1026 = vand.u32 %v743, %v826
  %v1029 = vand.u32 %v744, %v826
  %v1032 = vand.u32 %v745, %v826
  %v1035 = vand.u32 %v746, %v826
  %v1038 = vand.u32 %v747, %v826
  %1040 = vmatprep.subr.bf16.mxu0 %v607
  %1041 = vmatpush1.bf16.msra.mxu0 %v606
  %1042 = vmatprep.subr.bf16.mxu0 %v831
  %1043 = vmatpush1.bf16.msra.mxu0 %v828
  %1044 = vmatprep.subr.bf16.mxu0 0
  %1045 = vmatpush1.bf16.msra.mxu0 0
  %1046 = vmatprep.subr.bf16.mxu0 0
  %1047 = vmatpush1.bf16.msra.mxu0 0
  %1048 = vmatprep.subr.bf16.mxu0 0
  %1049 = vmatpush1.bf16.msra.mxu0 0
  %1050 = vmatprep.subr.bf16.mxu0 0
  %1051 = vmatpush1.bf16.msra.mxu0 0
  %1052 = vmatprep.subr.bf16.mxu0 0
  %1053 = vmatpush1.bf16.msra.mxu0 0
  %1054 = vmatprep.subr.bf16.mxu0 0
  %1055 = vmatpush1.bf16.msra.mxu0 0
  %1056 = vmatprep.subr.bf16.mxu0 0
  %1057 = vmatpush1.bf16.msra.mxu0 0
  %1058 = vmatprep.subr.bf16.mxu0 0
  %1059 = vmatpush1.bf16.msra.mxu0 0
  %1060 = vmatprep.subr.bf16.mxu0 0
  %1061 = vmatpush1.bf16.msra.mxu0 0
  %1062 = vmatprep.subr.bf16.mxu0 0
  %1063 = vmatpush1.bf16.msra.mxu0 0
  %1064 = vmatprep.subr.bf16.mxu0 0
  %1065 = vmatpush1.bf16.msra.mxu0 0
  %1066 = vmatprep.subr.bf16.mxu0 0
  %1067 = vmatpush1.bf16.msra.mxu0 0
  %1068 = vmatprep.subr.bf16.mxu0 0
  %1069 = vmatpush1.bf16.msra.mxu0 0
  %1070 = vmatprep.subr.bf16.mxu0 0
  %1071 = vmatpush1.bf16.msra.mxu0 0
  %1072 = vmatprep.mubr.bf16.mxu0 0
  %1073 = vmatmul.mubr.bf16.gmra.mrb[0].mxu0 %v821
  %v1074 = vpop.f32.mrb[0].mxu0
  %v1075 = vadd.f32 %v166, %v1074
  %v1076 = vpop.f32.mrb[0].mxu0
  %v1077 = vadd.f32 %v166, %v1076
  %v1078 = vpop.f32.mrb[0].mxu0
  %v1079 = vadd.f32 %v171, %v1078
  %v1080 = vpop.f32.mrb[0].mxu0
  %v1081 = vadd.f32 %v171, %v1080
  %1082 = vdwg.mxu0
  %1083 = vmatprep.subr.bf16.mxu0 %v609
  %1084 = vmatpush1.bf16.msra.mxu0 %v608
  %1085 = vmatprep.subr.bf16.mxu0 %v837
  %1086 = vmatpush1.bf16.msra.mxu0 %v834
  %1087 = vmatprep.subr.bf16.mxu0 0
  %1088 = vmatpush1.bf16.msra.mxu0 0
  %1089 = vmatprep.subr.bf16.mxu0 0
  %1090 = vmatpush1.bf16.msra.mxu0 0
  %1091 = vmatprep.subr.bf16.mxu0 0
  %1092 = vmatpush1.bf16.msra.mxu0 0
  %1093 = vmatprep.subr.bf16.mxu0 0
  %1094 = vmatpush1.bf16.msra.mxu0 0
  %1095 = vmatprep.subr.bf16.mxu0 0
  %1096 = vmatpush1.bf16.msra.mxu0 0
  %1097 = vmatprep.subr.bf16.mxu0 0
  %1098 = vmatpush1.bf16.msra.mxu0 0
  %1099 = vmatprep.subr.bf16.mxu0 0
  %1100 = vmatpush1.bf16.msra.mxu0 0
  %1101 = vmatprep.subr.bf16.mxu0 0
  %1102 = vmatpush1.bf16.msra.mxu0 0
  %1103 = vmatprep.subr.bf16.mxu0 0
  %1104 = vmatpush1.bf16.msra.mxu0 0
  %1105 = vmatprep.subr.bf16.mxu0 0
  %1106 = vmatpush1.bf16.msra.mxu0 0
  %1107 = vmatprep.subr.bf16.mxu0 0
  %1108 = vmatpush1.bf16.msra.mxu0 0
  %1109 = vmatprep.subr.bf16.mxu0 0
  %1110 = vmatpush1.bf16.msra.mxu0 0
  %1111 = vmatprep.subr.bf16.mxu0 0
  %1112 = vmatpush1.bf16.msra.mxu0 0
  %1113 = vmatprep.subr.bf16.mxu0 0
  %1114 = vmatpush1.bf16.msra.mxu0 0
  %1115 = vmatprep.mubr.bf16.mxu0 0
  %1116 = vmatmul.mubr.bf16.gmra.mrb[0].mxu0 %v821
  %v1117 = vpop.f32.mrb[0].mxu0
  %v1118 = vadd.f32 %v166, %v1117
  %v1119 = vpop.f32.mrb[0].mxu0
  %v1120 = vadd.f32 %v166, %v1119
  %v1121 = vpop.f32.mrb[0].mxu0
  %v1122 = vadd.f32 %v171, %v1121
  %v1123 = vpop.f32.mrb[0].mxu0
  %v1124 = vadd.f32 %v171, %v1123
  %1125 = vdwg.mxu0
  %1126 = vmatprep.subr.bf16.mxu0 %v611
  %1127 = vmatpush1.bf16.msra.mxu0 %v610
  %1128 = vmatprep.subr.bf16.mxu0 %v843
  %1129 = vmatpush1.bf16.msra.mxu0 %v840
  %1130 = vmatprep.subr.bf16.mxu0 0
  %1131 = vmatpush1.bf16.msra.mxu0 0
  %1132 = vmatprep.subr.bf16.mxu0 0
  %1133 = vmatpush1.bf16.msra.mxu0 0
  %1134 = vmatprep.subr.bf16.mxu0 0
  %1135 = vmatpush1.bf16.msra.mxu0 0
  %1136 = vmatprep.subr.bf16.mxu0 0
  %1137 = vmatpush1.bf16.msra.mxu0 0
  %1138 = vmatprep.subr.bf16.mxu0 0
  %1139 = vmatpush1.bf16.msra.mxu0 0
  %1140 = vmatprep.subr.bf16.mxu0 0
  %1141 = vmatpush1.bf16.msra.mxu0 0
  %1142 = vmatprep.subr.bf16.mxu0 0
  %1143 = vmatpush1.bf16.msra.mxu0 0
  %1144 = vmatprep.subr.bf16.mxu0 0
  %1145 = vmatpush1.bf16.msra.mxu0 0
  %1146 = vmatprep.subr.bf16.mxu0 0
  %1147 = vmatpush1.bf16.msra.mxu0 0
  %1148 = vmatprep.subr.bf16.mxu0 0
  %1149 = vmatpush1.bf16.msra.mxu0 0
  %1150 = vmatprep.subr.bf16.mxu0 0
  %1151 = vmatpush1.bf16.msra.mxu0 0
  %1152 = vmatprep.subr.bf16.mxu0 0
  %1153 = vmatpush1.bf16.msra.mxu0 0
  %1154 = vmatprep.subr.bf16.mxu0 0
  %1155 = vmatpush1.bf16.msra.mxu0 0
  %1156 = vmatprep.subr.bf16.mxu0 0
  %1157 = vmatpush1.bf16.msra.mxu0 0
  %1158 = vmatprep.mubr.bf16.mxu0 0
  %1159 = vmatmul.mubr.bf16.gmra.mrb[0].mxu0 %v821
  %v1160 = vpop.f32.mrb[0].mxu0
  %v1161 = vadd.f32 %v166, %v1160
  %v1162 = vpop.f32.mrb[0].mxu0
  %v1163 = vadd.f32 %v166, %v1162
  %v1164 = vpop.f32.mrb[0].mxu0
  %v1165 = vadd.f32 %v171, %v1164
  %v1166 = vpop.f32.mrb[0].mxu0
  %v1167 = vadd.f32 %v171, %v1166
  %1168 = vdwg.mxu0
  %1169 = vmatprep.subr.bf16.mxu0 %v613
  %1170 = vmatpush1.bf16.msra.mxu0 %v612
  %1171 = vmatprep.subr.bf16.mxu0 %v849
  %1172 = vmatpush1.bf16.msra.mxu0 %v846
  %1173 = vmatprep.subr.bf16.mxu0 0
  %1174 = vmatpush1.bf16.msra.mxu0 0
  %1175 = vmatprep.subr.bf16.mxu0 0
  %1176 = vmatpush1.bf16.msra.mxu0 0
  %1177 = vmatprep.subr.bf16.mxu0 0
  %1178 = vmatpush1.bf16.msra.mxu0 0
  %1179 = vmatprep.subr.bf16.mxu0 0
  %1180 = vmatpush1.bf16.msra.mxu0 0
  %1181 = vmatprep.subr.bf16.mxu0 0
  %1182 = vmatpush1.bf16.msra.mxu0 0
  %1183 = vmatprep.subr.bf16.mxu0 0
  %1184 = vmatpush1.bf16.msra.mxu0 0
  %1185 = vmatprep.subr.bf16.mxu0 0
  %1186 = vmatpush1.bf16.msra.mxu0 0
  %1187 = vmatprep.subr.bf16.mxu0 0
  %1188 = vmatpush1.bf16.msra.mxu0 0
  %1189 = vmatprep.subr.bf16.mxu0 0
  %1190 = vmatpush1.bf16.msra.mxu0 0
  %1191 = vmatprep.subr.bf16.mxu0 0
  %1192 = vmatpush1.bf16.msra.mxu0 0
  %1193 = vmatprep.subr.bf16.mxu0 0
  %1194 = vmatpush1.bf16.msra.mxu0 0
  %1195 = vmatprep.subr.bf16.mxu0 0
  %1196 = vmatpush1.bf16.msra.mxu0 0
  %1197 = vmatprep.subr.bf16.mxu0 0
  %1198 = vmatpush1.bf16.msra.mxu0 0
  %1199 = vmatprep.subr.bf16.mxu0 0
  %1200 = vmatpush1.bf16.msra.mxu0 0
  %1201 = vmatprep.mubr.bf16.mxu0 0
  %1202 = vmatmul.mubr.bf16.gmra.mrb[0].mxu0 %v821
  %v1203 = vpop.f32.mrb[0].mxu0
  %v1204 = vadd.f32 %v166, %v1203
  %v1205 = vpop.f32.mrb[0].mxu0
  %v1206 = vadd.f32 %v166, %v1205
  %v1207 = vpop.f32.mrb[0].mxu0
  %v1208 = vadd.f32 %v171, %v1207
  %v1209 = vpop.f32.mrb[0].mxu0
  %v1210 = vadd.f32 %v171, %v1209
  %1211 = vdwg.mxu0
  %1212 = vmatprep.subr.bf16.mxu0 %v615
  %1213 = vmatpush1.bf16.msra.mxu0 %v614
  %1214 = vmatprep.subr.bf16.mxu0 %v855
  %1215 = vmatpush1.bf16.msra.mxu0 %v852
  %1216 = vmatprep.subr.bf16.mxu0 0
  %1217 = vmatpush1.bf16.msra.mxu0 0
  %1218 = vmatprep.subr.bf16.mxu0 0
  %1219 = vmatpush1.bf16.msra.mxu0 0
  %1220 = vmatprep.subr.bf16.mxu0 0
  %1221 = vmatpush1.bf16.msra.mxu0 0
  %1222 = vmatprep.subr.bf16.mxu0 0
  %1223 = vmatpush1.bf16.msra.mxu0 0
  %1224 = vmatprep.subr.bf16.mxu0 0
  %1225 = vmatpush1.bf16.msra.mxu0 0
  %1226 = vmatprep.subr.bf16.mxu0 0
  %1227 = vmatpush1.bf16.msra.mxu0 0
  %1228 = vmatprep.subr.bf16.mxu0 0
  %1229 = vmatpush1.bf16.msra.mxu0 0
  %1230 = vmatprep.subr.bf16.mxu0 0
  %1231 = vmatpush1.bf16.msra.mxu0 0
  %1232 = vmatprep.subr.bf16.mxu0 0
  %1233 = vmatpush1.bf16.msra.mxu0 0
  %1234 = vmatprep.subr.bf16.mxu0 0
  %1235 = vmatpush1.bf16.msra.mxu0 0
  %1236 = vmatprep.subr.bf16.mxu0 0
  %1237 = vmatpush1.bf16.msra.mxu0 0
  %1238 = vmatprep.subr.bf16.mxu0 0
  %1239 = vmatpush1.bf16.msra.mxu0 0
  %1240 = vmatprep.subr.bf16.mxu0 0
  %1241 = vmatpush1.bf16.msra.mxu0 0
  %1242 = vmatprep.subr.bf16.mxu0 0
  %1243 = vmatpush1.bf16.msra.mxu0 0
  %1244 = vmatprep.mubr.bf16.mxu0 0
  %1245 = vmatmul.mubr.bf16.gmra.mrb[0].mxu0 %v821
  %v1246 = vpop.f32.mrb[0].mxu0
  %v1247 = vadd.f32 %v166, %v1246
  %v1248 = vpop.f32.mrb[0].mxu0
  %v1249 = vadd.f32 %v166, %v1248
  %v1250 = vpop.f32.mrb[0].mxu0
  %v1251 = vadd.f32 %v171, %v1250
  %v1252 = vpop.f32.mrb[0].mxu0
  %v1253 = vadd.f32 %v171, %v1252
  %1254 = vdwg.mxu0
  %1255 = vmatprep.subr.bf16.mxu0 %v617
  %1256 = vmatpush1.bf16.msra.mxu0 %v616
  %1257 = vmatprep.subr.bf16.mxu0 %v861
  %1258 = vmatpush1.bf16.msra.mxu0 %v858
  %1259 = vmatprep.subr.bf16.mxu0 0
  %1260 = vmatpush1.bf16.msra.mxu0 0
  %1261 = vmatprep.subr.bf16.mxu0 0
  %1262 = vmatpush1.bf16.msra.mxu0 0
  %1263 = vmatprep.subr.bf16.mxu0 0
  %1264 = vmatpush1.bf16.msra.mxu0 0
  %1265 = vmatprep.subr.bf16.mxu0 0
  %1266 = vmatpush1.bf16.msra.mxu0 0
  %1267 = vmatprep.subr.bf16.mxu0 0
  %1268 = vmatpush1.bf16.msra.mxu0 0
  %1269 = vmatprep.subr.bf16.mxu0 0
  %1270 = vmatpush1.bf16.msra.mxu0 0
  %1271 = vmatprep.subr.bf16.mxu0 0
  %1272 = vmatpush1.bf16.msra.mxu0 0
  %1273 = vmatprep.subr.bf16.mxu0 0
  %1274 = vmatpush1.bf16.msra.mxu0 0
  %1275 = vmatprep.subr.bf16.mxu0 0
  %1276 = vmatpush1.bf16.msra.mxu0 0
  %1277 = vmatprep.subr.bf16.mxu0 0
  %1278 = vmatpush1.bf16.msra.mxu0 0
  %1279 = vmatprep.subr.bf16.mxu0 0
  %1280 = vmatpush1.bf16.msra.mxu0 0
  %1281 = vmatprep.subr.bf16.mxu0 0
  %1282 = vmatpush1.bf16.msra.mxu0 0
  %1283 = vmatprep.subr.bf16.mxu0 0
  %1284 = vmatpush1.bf16.msra.mxu0 0
  %1285 = vmatprep.subr.bf16.mxu0 0
  %1286 = vmatpush1.bf16.msra.mxu0 0
  %1287 = vmatprep.mubr.bf16.mxu0 0
  %1288 = vmatmul.mubr.bf16.gmra.mrb[0].mxu0 %v821
  %v1289 = vpop.f32.mrb[0].mxu0
  %v1290 = vadd.f32 %v166, %v1289
  %v1291 = vpop.f32.mrb[0].mxu0
  %v1292 = vadd.f32 %v166, %v1291
  %v1293 = vpop.f32.mrb[0].mxu0
  %v1294 = vadd.f32 %v171, %v1293
  %v1295 = vpop.f32.mrb[0].mxu0
  %v1296 = vadd.f32 %v171, %v1295
  %1297 = vdwg.mxu0
  %1298 = vmatprep.subr.bf16.mxu0 %v619
  %1299 = vmatpush1.bf16.msra.mxu0 %v618
  %1300 = vmatprep.subr.bf16.mxu0 %v867
  %1301 = vmatpush1.bf16.msra.mxu0 %v864
  %1302 = vmatprep.subr.bf16.mxu0 0
  %1303 = vmatpush1.bf16.msra.mxu0 0
  %1304 = vmatprep.subr.bf16.mxu0 0
  %1305 = vmatpush1.bf16.msra.mxu0 0
  %1306 = vmatprep.subr.bf16.mxu0 0
  %1307 = vmatpush1.bf16.msra.mxu0 0
  %1308 = vmatprep.subr.bf16.mxu0 0
  %1309 = vmatpush1.bf16.msra.mxu0 0
  %1310 = vmatprep.subr.bf16.mxu0 0
  %1311 = vmatpush1.bf16.msra.mxu0 0
  %1312 = vmatprep.subr.bf16.mxu0 0
  %1313 = vmatpush1.bf16.msra.mxu0 0
  %1314 = vmatprep.subr.bf16.mxu0 0
  %1315 = vmatpush1.bf16.msra.mxu0 0
  %1316 = vmatprep.subr.bf16.mxu0 0
  %1317 = vmatpush1.bf16.msra.mxu0 0
  %1318 = vmatprep.subr.bf16.mxu0 0
  %1319 = vmatpush1.bf16.msra.mxu0 0
  %1320 = vmatprep.subr.bf16.mxu0 0
  %1321 = vmatpush1.bf16.msra.mxu0 0
  %1322 = vmatprep.subr.bf16.mxu0 0
  %1323 = vmatpush1.bf16.msra.mxu0 0
  %1324 = vmatprep.subr.bf16.mxu0 0
  %1325 = vmatpush1.bf16.msra.mxu0 0
  %1326 = vmatprep.subr.bf16.mxu0 0
  %1327 = vmatpush1.bf16.msra.mxu0 0
  %1328 = vmatprep.subr.bf16.mxu0 0
  %1329 = vmatpush1.bf16.msra.mxu0 0
  %1330 = vmatprep.mubr.bf16.mxu0 0
  %1331 = vmatmul.mubr.bf16.gmra.mrb[0].mxu0 %v821
  %v1332 = vpop.f32.mrb[0].mxu0
  %v1333 = vadd.f32 %v166, %v1332
  %v1334 = vpop.f32.mrb[0].mxu0
  %v1335 = vadd.f32 %v166, %v1334
  %v1336 = vpop.f32.mrb[0].mxu0
  %v1337 = vadd.f32 %v171, %v1336
  %v1338 = vpop.f32.mrb[0].mxu0
  %v1339 = vadd.f32 %v171, %v1338
  %1340 = vdwg.mxu0
  %1341 = vmatprep.subr.bf16.mxu0 %v621
  %1342 = vmatpush1.bf16.msra.mxu0 %v620
  %1343 = vmatprep.subr.bf16.mxu0 %v873
  %1344 = vmatpush1.bf16.msra.mxu0 %v870
  %1345 = vmatprep.subr.bf16.mxu0 0
  %1346 = vmatpush1.bf16.msra.mxu0 0
  %1347 = vmatprep.subr.bf16.mxu0 0
  %1348 = vmatpush1.bf16.msra.mxu0 0
  %1349 = vmatprep.subr.bf16.mxu0 0
  %1350 = vmatpush1.bf16.msra.mxu0 0
  %1351 = vmatprep.subr.bf16.mxu0 0
  %1352 = vmatpush1.bf16.msra.mxu0 0
  %1353 = vmatprep.subr.bf16.mxu0 0
  %1354 = vmatpush1.bf16.msra.mxu0 0
  %1355 = vmatprep.subr.bf16.mxu0 0
  %1356 = vmatpush1.bf16.msra.mxu0 0
  %1357 = vmatprep.subr.bf16.mxu0 0
  %1358 = vmatpush1.bf16.msra.mxu0 0
  %1359 = vmatprep.subr.bf16.mxu0 0
  %1360 = vmatpush1.bf16.msra.mxu0 0
  %1361 = vmatprep.subr.bf16.mxu0 0
  %1362 = vmatpush1.bf16.msra.mxu0 0
  %1363 = vmatprep.subr.bf16.mxu0 0
  %1364 = vmatpush1.bf16.msra.mxu0 0
  %1365 = vmatprep.subr.bf16.mxu0 0
  %1366 = vmatpush1.bf16.msra.mxu0 0
  %1367 = vmatprep.subr.bf16.mxu0 0
  %1368 = vmatpush1.bf16.msra.mxu0 0
  %1369 = vmatprep.subr.bf16.mxu0 0
  %1370 = vmatpush1.bf16.msra.mxu0 0
  %1371 = vmatprep.subr.bf16.mxu0 0
  %1372 = vmatpush1.bf16.msra.mxu0 0
  %1373 = vmatprep.mubr.bf16.mxu0 0
  %1374 = vmatmul.mubr.bf16.gmra.mrb[0].mxu0 %v821
  %v1375 = vpop.f32.mrb[0].mxu0
  %v1376 = vadd.f32 %v166, %v1375
  %v1377 = vpop.f32.mrb[0].mxu0
  %v1378 = vadd.f32 %v166, %v1377
  %v1379 = vpop.f32.mrb[0].mxu0
  %v1380 = vadd.f32 %v171, %v1379
  %v1381 = vpop.f32.mrb[0].mxu0
  %v1382 = vadd.f32 %v171, %v1381
  %1383 = vdwg.mxu0
  %1384 = vmatprep.subr.bf16.mxu0 %v623
  %1385 = vmatpush1.bf16.msra.mxu0 %v622
  %1386 = vmatprep.subr.bf16.mxu0 %v879
  %1387 = vmatpush1.bf16.msra.mxu0 %v876
  %1388 = vmatprep.subr.bf16.mxu0 0
  %1389 = vmatpush1.bf16.msra.mxu0 0
  %1390 = vmatprep.subr.bf16.mxu0 0
  %1391 = vmatpush1.bf16.msra.mxu0 0
  %1392 = vmatprep.subr.bf16.mxu0 0
  %1393 = vmatpush1.bf16.msra.mxu0 0
  %1394 = vmatprep.subr.bf16.mxu0 0
  %1395 = vmatpush1.bf16.msra.mxu0 0
  %1396 = vmatprep.subr.bf16.mxu0 0
  %1397 = vmatpush1.bf16.msra.mxu0 0
  %1398 = vmatprep.subr.bf16.mxu0 0
  %1399 = vmatpush1.bf16.msra.mxu0 0
  %1400 = vmatprep.subr.bf16.mxu0 0
  %1401 = vmatpush1.bf16.msra.mxu0 0
  %1402 = vmatprep.subr.bf16.mxu0 0
  %1403 = vmatpush1.bf16.msra.mxu0 0
  %1404 = vmatprep.subr.bf16.mxu0 0
  %1405 = vmatpush1.bf16.msra.mxu0 0
  %1406 = vmatprep.subr.bf16.mxu0 0
  %1407 = vmatpush1.bf16.msra.mxu0 0
  %1408 = vmatprep.subr.bf16.mxu0 0
  %1409 = vmatpush1.bf16.msra.mxu0 0
  %1410 = vmatprep.subr.bf16.mxu0 0
  %1411 = vmatpush1.bf16.msra.mxu0 0
  %1412 = vmatprep.subr.bf16.mxu0 0
  %1413 = vmatpush1.bf16.msra.mxu0 0
  %1414 = vmatprep.subr.bf16.mxu0 0
  %1415 = vmatpush1.bf16.msra.mxu0 0
  %1416 = vmatprep.mubr.bf16.mxu0 0
  %1417 = vmatmul.mubr.bf16.gmra.mrb[0].mxu0 %v821
  %v1418 = vpop.f32.mrb[0].mxu0
  %v1419 = vadd.f32 %v166, %v1418
  %v1420 = vpop.f32.mrb[0].mxu0
  %v1421 = vadd.f32 %v166, %v1420
  %v1422 = vpop.f32.mrb[0].mxu0
  %v1423 = vadd.f32 %v171, %v1422
  %v1424 = vpop.f32.mrb[0].mxu0
  %v1425 = vadd.f32 %v171, %v1424
  %1426 = vdwg.mxu0
  %1427 = vmatprep.subr.bf16.mxu0 %v625
  %1428 = vmatpush1.bf16.msra.mxu0 %v624
  %1429 = vmatprep.subr.bf16.mxu0 %v885
  %1430 = vmatpush1.bf16.msra.mxu0 %v882
  %1431 = vmatprep.subr.bf16.mxu0 0
  %1432 = vmatpush1.bf16.msra.mxu0 0
  %1433 = vmatprep.subr.bf16.mxu0 0
  %1434 = vmatpush1.bf16.msra.mxu0 0
  %1435 = vmatprep.subr.bf16.mxu0 0
  %1436 = vmatpush1.bf16.msra.mxu0 0
  %1437 = vmatprep.subr.bf16.mxu0 0
  %1438 = vmatpush1.bf16.msra.mxu0 0
  %1439 = vmatprep.subr.bf16.mxu0 0
  %1440 = vmatpush1.bf16.msra.mxu0 0
  %1441 = vmatprep.subr.bf16.mxu0 0
  %1442 = vmatpush1.bf16.msra.mxu0 0
  %1443 = vmatprep.subr.bf16.mxu0 0
  %1444 = vmatpush1.bf16.msra.mxu0 0
  %1445 = vmatprep.subr.bf16.mxu0 0
  %1446 = vmatpush1.bf16.msra.mxu0 0
  %1447 = vmatprep.subr.bf16.mxu0 0
  %1448 = vmatpush1.bf16.msra.mxu0 0
  %1449 = vmatprep.subr.bf16.mxu0 0
  %1450 = vmatpush1.bf16.msra.mxu0 0
  %1451 = vmatprep.subr.bf16.mxu0 0
  %1452 = vmatpush1.bf16.msra.mxu0 0
  %1453 = vmatprep.subr.bf16.mxu0 0
  %1454 = vmatpush1.bf16.msra.mxu0 0
  %1455 = vmatprep.subr.bf16.mxu0 0
  %1456 = vmatpush1.bf16.msra.mxu0 0
  %1457 = vmatprep.subr.bf16.mxu0 0
  %1458 = vmatpush1.bf16.msra.mxu0 0
  %1459 = vmatprep.mubr.bf16.mxu0 0
  %1460 = vmatmul.mubr.bf16.gmra.mrb[0].mxu0 %v821
  %v1461 = vpop.f32.mrb[0].mxu0
  %v1462 = vadd.f32 %v166, %v1461
  %v1463 = vpop.f32.mrb[0].mxu0
  %v1464 = vadd.f32 %v166, %v1463
  %v1465 = vpop.f32.mrb[0].mxu0
  %v1466 = vadd.f32 %v171, %v1465
  %v1467 = vpop.f32.mrb[0].mxu0
  %v1468 = vadd.f32 %v171, %v1467
  %1469 = vdwg.mxu0
  %1470 = vmatprep.subr.bf16.mxu0 %v627
  %1471 = vmatpush1.bf16.msra.mxu0 %v626
  %1472 = vmatprep.subr.bf16.mxu0 %v891
  %1473 = vmatpush1.bf16.msra.mxu0 %v888
  %1474 = vmatprep.subr.bf16.mxu0 0
  %1475 = vmatpush1.bf16.msra.mxu0 0
  %1476 = vmatprep.subr.bf16.mxu0 0
  %1477 = vmatpush1.bf16.msra.mxu0 0
  %1478 = vmatprep.subr.bf16.mxu0 0
  %1479 = vmatpush1.bf16.msra.mxu0 0
  %1480 = vmatprep.subr.bf16.mxu0 0
  %1481 = vmatpush1.bf16.msra.mxu0 0
  %1482 = vmatprep.subr.bf16.mxu0 0
  %1483 = vmatpush1.bf16.msra.mxu0 0
  %1484 = vmatprep.subr.bf16.mxu0 0
  %1485 = vmatpush1.bf16.msra.mxu0 0
  %1486 = vmatprep.subr.bf16.mxu0 0
  %1487 = vmatpush1.bf16.msra.mxu0 0
  %1488 = vmatprep.subr.bf16.mxu0 0
  %1489 = vmatpush1.bf16.msra.mxu0 0
  %1490 = vmatprep.subr.bf16.mxu0 0
  %1491 = vmatpush1.bf16.msra.mxu0 0
  %1492 = vmatprep.subr.bf16.mxu0 0
  %1493 = vmatpush1.bf16.msra.mxu0 0
  %1494 = vmatprep.subr.bf16.mxu0 0
  %1495 = vmatpush1.bf16.msra.mxu0 0
  %1496 = vmatprep.subr.bf16.mxu0 0
  %1497 = vmatpush1.bf16.msra.mxu0 0
  %1498 = vmatprep.subr.bf16.mxu0 0
  %1499 = vmatpush1.bf16.msra.mxu0 0
  %1500 = vmatprep.subr.bf16.mxu0 0
  %1501 = vmatpush1.bf16.msra.mxu0 0
  %1502 = vmatprep.mubr.bf16.mxu0 0
  %1503 = vmatmul.mubr.bf16.gmra.mrb[0].mxu0 %v821
  %v1504 = vpop.f32.mrb[0].mxu0
  %v1505 = vadd.f32 %v166, %v1504
  %v1506 = vpop.f32.mrb[0].mxu0
  %v1507 = vadd.f32 %v166, %v1506
  %v1508 = vpop.f32.mrb[0].mxu0
  %v1509 = vadd.f32 %v171, %v1508
  %v1510 = vpop.f32.mrb[0].mxu0
  %v1511 = vadd.f32 %v171, %v1510
  %1512 = vdwg.mxu0
  %1513 = vmatprep.subr.bf16.mxu0 %v629
  %1514 = vmatpush1.bf16.msra.mxu0 %v628
  %1515 = vmatprep.subr.bf16.mxu0 %v897
  %1516 = vmatpush1.bf16.msra.mxu0 %v894
  %1517 = vmatprep.subr.bf16.mxu0 0
  %1518 = vmatpush1.bf16.msra.mxu0 0
  %1519 = vmatprep.subr.bf16.mxu0 0
  %1520 = vmatpush1.bf16.msra.mxu0 0
  %1521 = vmatprep.subr.bf16.mxu0 0
  %1522 = vmatpush1.bf16.msra.mxu0 0
  %1523 = vmatprep.subr.bf16.mxu0 0
  %1524 = vmatpush1.bf16.msra.mxu0 0
  %1525 = vmatprep.subr.bf16.mxu0 0
  %1526 = vmatpush1.bf16.msra.mxu0 0
  %1527 = vmatprep.subr.bf16.mxu0 0
  %1528 = vmatpush1.bf16.msra.mxu0 0
  %1529 = vmatprep.subr.bf16.mxu0 0
  %1530 = vmatpush1.bf16.msra.mxu0 0
  %1531 = vmatprep.subr.bf16.mxu0 0
  %1532 = vmatpush1.bf16.msra.mxu0 0
  %1533 = vmatprep.subr.bf16.mxu0 0
  %1534 = vmatpush1.bf16.msra.mxu0 0
  %1535 = vmatprep.subr.bf16.mxu0 0
  %1536 = vmatpush1.bf16.msra.mxu0 0
  %1537 = vmatprep.subr.bf16.mxu0 0
  %1538 = vmatpush1.bf16.msra.mxu0 0
  %1539 = vmatprep.subr.bf16.mxu0 0
  %1540 = vmatpush1.bf16.msra.mxu0 0
  %1541 = vmatprep.subr.bf16.mxu0 0
  %1542 = vmatpush1.bf16.msra.mxu0 0
  %1543 = vmatprep.subr.bf16.mxu0 0
  %1544 = vmatpush1.bf16.msra.mxu0 0
  %1545 = vmatprep.mubr.bf16.mxu0 0
  %1546 = vmatmul.mubr.bf16.gmra.mrb[0].mxu0 %v821
  %v1547 = vpop.f32.mrb[0].mxu0
  %v1548 = vadd.f32 %v166, %v1547
  %v1549 = vpop.f32.mrb[0].mxu0
  %v1550 = vadd.f32 %v166, %v1549
  %v1551 = vpop.f32.mrb[0].mxu0
  %v1552 = vadd.f32 %v171, %v1551
  %v1553 = vpop.f32.mrb[0].mxu0
  %v1554 = vadd.f32 %v171, %v1553
  %1555 = vdwg.mxu0
  %1556 = vmatprep.subr.bf16.mxu0 %v631
  %1557 = vmatpush1.bf16.msra.mxu0 %v630
  %1558 = vmatprep.subr.bf16.mxu0 %v903
  %1559 = vmatpush1.bf16.msra.mxu0 %v900
  %1560 = vmatprep.subr.bf16.mxu0 0
  %1561 = vmatpush1.bf16.msra.mxu0 0
  %1562 = vmatprep.subr.bf16.mxu0 0
  %1563 = vmatpush1.bf16.msra.mxu0 0
  %1564 = vmatprep.subr.bf16.mxu0 0
  %1565 = vmatpush1.bf16.msra.mxu0 0
  %1566 = vmatprep.subr.bf16.mxu0 0
  %1567 = vmatpush1.bf16.msra.mxu0 0
  %1568 = vmatprep.subr.bf16.mxu0 0
  %1569 = vmatpush1.bf16.msra.mxu0 0
  %1570 = vmatprep.subr.bf16.mxu0 0
  %1571 = vmatpush1.bf16.msra.mxu0 0
  %1572 = vmatprep.subr.bf16.mxu0 0
  %1573 = vmatpush1.bf16.msra.mxu0 0
  %1574 = vmatprep.subr.bf16.mxu0 0
  %1575 = vmatpush1.bf16.msra.mxu0 0
  %1576 = vmatprep.subr.bf16.mxu0 0
  %1577 = vmatpush1.bf16.msra.mxu0 0
  %1578 = vmatprep.subr.bf16.mxu0 0
  %1579 = vmatpush1.bf16.msra.mxu0 0
  %1580 = vmatprep.subr.bf16.mxu0 0
  %1581 = vmatpush1.bf16.msra.mxu0 0
  %1582 = vmatprep.subr.bf16.mxu0 0
  %1583 = vmatpush1.bf16.msra.mxu0 0
  %1584 = vmatprep.subr.bf16.mxu0 0
  %1585 = vmatpush1.bf16.msra.mxu0 0
  %1586 = vmatprep.subr.bf16.mxu0 0
  %1587 = vmatpush1.bf16.msra.mxu0 0
  %1588 = vmatprep.mubr.bf16.mxu0 0
  %1589 = vmatmul.mubr.bf16.gmra.mrb[0].mxu0 %v821
  %v1590 = vpop.f32.mrb[0].mxu0
  %v1591 = vadd.f32 %v166, %v1590
  %v1592 = vpop.f32.mrb[0].mxu0
  %v1593 = vadd.f32 %v166, %v1592
  %v1594 = vpop.f32.mrb[0].mxu0
  %v1595 = vadd.f32 %v171, %v1594
  %v1596 = vpop.f32.mrb[0].mxu0
  %v1597 = vadd.f32 %v171, %v1596
  %1598 = vdwg.mxu0
  %1599 = vmatprep.subr.bf16.mxu0 %v633
  %1600 = vmatpush1.bf16.msra.mxu0 %v632
  %1601 = vmatprep.subr.bf16.mxu0 %v909
  %1602 = vmatpush1.bf16.msra.mxu0 %v906
  %1603 = vmatprep.subr.bf16.mxu0 0
  %1604 = vmatpush1.bf16.msra.mxu0 0
  %1605 = vmatprep.subr.bf16.mxu0 0
  %1606 = vmatpush1.bf16.msra.mxu0 0
  %1607 = vmatprep.subr.bf16.mxu0 0
  %1608 = vmatpush1.bf16.msra.mxu0 0
  %1609 = vmatprep.subr.bf16.mxu0 0
  %1610 = vmatpush1.bf16.msra.mxu0 0
  %1611 = vmatprep.subr.bf16.mxu0 0
  %1612 = vmatpush1.bf16.msra.mxu0 0
  %1613 = vmatprep.subr.bf16.mxu0 0
  %1614 = vmatpush1.bf16.msra.mxu0 0
  %1615 = vmatprep.subr.bf16.mxu0 0
  %1616 = vmatpush1.bf16.msra.mxu0 0
  %1617 = vmatprep.subr.bf16.mxu0 0
  %1618 = vmatpush1.bf16.msra.mxu0 0
  %1619 = vmatprep.subr.bf16.mxu0 0
  %1620 = vmatpush1.bf16.msra.mxu0 0
  %1621 = vmatprep.subr.bf16.mxu0 0
  %1622 = vmatpush1.bf16.msra.mxu0 0
  %1623 = vmatprep.subr.bf16.mxu0 0
  %1624 = vmatpush1.bf16.msra.mxu0 0
  %1625 = vmatprep.subr.bf16.mxu0 0
  %1626 = vmatpush1.bf16.msra.mxu0 0
  %1627 = vmatprep.subr.bf16.mxu0 0
  %1628 = vmatpush1.bf16.msra.mxu0 0
  %1629 = vmatprep.subr.bf16.mxu0 0
  %1630 = vmatpush1.bf16.msra.mxu0 0
  %1631 = vmatprep.mubr.bf16.mxu0 0
  %1632 = vmatmul.mubr.bf16.gmra.mrb[0].mxu0 %v821
  %v1633 = vpop.f32.mrb[0].mxu0
  %v1634 = vadd.f32 %v166, %v1633
  %v1635 = vpop.f32.mrb[0].mxu0
  %v1636 = vadd.f32 %v166, %v1635
  %v1637 = vpop.f32.mrb[0].mxu0
  %v1638 = vadd.f32 %v171, %v1637
  %v1639 = vpop.f32.mrb[0].mxu0
  %v1640 = vadd.f32 %v171, %v1639
  %1641 = vdwg.mxu0
  %1642 = vmatprep.subr.bf16.mxu0 %v635
  %1643 = vmatpush1.bf16.msra.mxu0 %v634
  %1644 = vmatprep.subr.bf16.mxu0 %v915
  %1645 = vmatpush1.bf16.msra.mxu0 %v912
  %1646 = vmatprep.subr.bf16.mxu0 0
  %1647 = vmatpush1.bf16.msra.mxu0 0
  %1648 = vmatprep.subr.bf16.mxu0 0
  %1649 = vmatpush1.bf16.msra.mxu0 0
  %1650 = vmatprep.subr.bf16.mxu0 0
  %1651 = vmatpush1.bf16.msra.mxu0 0
  %1652 = vmatprep.subr.bf16.mxu0 0
  %1653 = vmatpush1.bf16.msra.mxu0 0
  %1654 = vmatprep.subr.bf16.mxu0 0
  %1655 = vmatpush1.bf16.msra.mxu0 0
  %1656 = vmatprep.subr.bf16.mxu0 0
  %1657 = vmatpush1.bf16.msra.mxu0 0
  %1658 = vmatprep.subr.bf16.mxu0 0
  %1659 = vmatpush1.bf16.msra.mxu0 0
  %1660 = vmatprep.subr.bf16.mxu0 0
  %1661 = vmatpush1.bf16.msra.mxu0 0
  %1662 = vmatprep.subr.bf16.mxu0 0
  %1663 = vmatpush1.bf16.msra.mxu0 0
  %1664 = vmatprep.subr.bf16.mxu0 0
  %1665 = vmatpush1.bf16.msra.mxu0 0
  %1666 = vmatprep.subr.bf16.mxu0 0
  %1667 = vmatpush1.bf16.msra.mxu0 0
  %1668 = vmatprep.subr.bf16.mxu0 0
  %1669 = vmatpush1.bf16.msra.mxu0 0
  %1670 = vmatprep.subr.bf16.mxu0 0
  %1671 = vmatpush1.bf16.msra.mxu0 0
  %1672 = vmatprep.subr.bf16.mxu0 0
  %1673 = vmatpush1.bf16.msra.mxu0 0
  %1674 = vmatprep.mubr.bf16.mxu0 0
  %1675 = vmatmul.mubr.bf16.gmra.mrb[0].mxu0 %v821
  %v1676 = vpop.f32.mrb[0].mxu0
  %v1677 = vadd.f32 %v166, %v1676
  %v1678 = vpop.f32.mrb[0].mxu0
  %v1679 = vadd.f32 %v166, %v1678
  %v1680 = vpop.f32.mrb[0].mxu0
  %v1681 = vadd.f32 %v171, %v1680
  %v1682 = vpop.f32.mrb[0].mxu0
  %v1683 = vadd.f32 %v171, %v1682
  %1684 = vdwg.mxu0
  %1685 = vmatprep.subr.bf16.mxu0 %v637
  %1686 = vmatpush1.bf16.msra.mxu0 %v636
  %1687 = vmatprep.subr.bf16.mxu0 %v921
  %1688 = vmatpush1.bf16.msra.mxu0 %v918
  %1689 = vmatprep.subr.bf16.mxu0 0
  %1690 = vmatpush1.bf16.msra.mxu0 0
  %1691 = vmatprep.subr.bf16.mxu0 0
  %1692 = vmatpush1.bf16.msra.mxu0 0
  %1693 = vmatprep.subr.bf16.mxu0 0
  %1694 = vmatpush1.bf16.msra.mxu0 0
  %1695 = vmatprep.subr.bf16.mxu0 0
  %1696 = vmatpush1.bf16.msra.mxu0 0
  %1697 = vmatprep.subr.bf16.mxu0 0
  %1698 = vmatpush1.bf16.msra.mxu0 0
  %1699 = vmatprep.subr.bf16.mxu0 0
  %1700 = vmatpush1.bf16.msra.mxu0 0
  %1701 = vmatprep.subr.bf16.mxu0 0
  %1702 = vmatpush1.bf16.msra.mxu0 0
  %1703 = vmatprep.subr.bf16.mxu0 0
  %1704 = vmatpush1.bf16.msra.mxu0 0
  %1705 = vmatprep.subr.bf16.mxu0 0
  %1706 = vmatpush1.bf16.msra.mxu0 0
  %1707 = vmatprep.subr.bf16.mxu0 0
  %1708 = vmatpush1.bf16.msra.mxu0 0
  %1709 = vmatprep.subr.bf16.mxu0 0
  %1710 = vmatpush1.bf16.msra.mxu0 0
  %1711 = vmatprep.subr.bf16.mxu0 0
  %1712 = vmatpush1.bf16.msra.mxu0 0
  %1713 = vmatprep.subr.bf16.mxu0 0
  %1714 = vmatpush1.bf16.msra.mxu0 0
  %1715 = vmatprep.subr.bf16.mxu0 0
  %1716 = vmatpush1.bf16.msra.mxu0 0
  %1717 = vmatprep.mubr.bf16.mxu0 0
  %1718 = vmatmul.mubr.bf16.gmra.mrb[0].mxu0 %v821
  %v1719 = vpop.f32.mrb[0].mxu0
  %v1720 = vadd.f32 %v166, %v1719
  %v1721 = vpop.f32.mrb[0].mxu0
  %v1722 = vadd.f32 %v166, %v1721
  %v1723 = vpop.f32.mrb[0].mxu0
  %v1724 = vadd.f32 %v171, %v1723
  %v1725 = vpop.f32.mrb[0].mxu0
  %v1726 = vadd.f32 %v171, %v1725
  %1727 = vdwg.mxu0
  %1728 = vmatprep.subr.bf16.mxu0 %v639
  %1729 = vmatpush1.bf16.msra.mxu0 %v638
  %1730 = vmatprep.subr.bf16.mxu0 %v927
  %1731 = vmatpush1.bf16.msra.mxu0 %v924
  %1732 = vmatprep.subr.bf16.mxu0 0
  %1733 = vmatpush1.bf16.msra.mxu0 0
  %1734 = vmatprep.subr.bf16.mxu0 0
  %1735 = vmatpush1.bf16.msra.mxu0 0
  %1736 = vmatprep.subr.bf16.mxu0 0
  %1737 = vmatpush1.bf16.msra.mxu0 0
  %1738 = vmatprep.subr.bf16.mxu0 0
  %1739 = vmatpush1.bf16.msra.mxu0 0
  %1740 = vmatprep.subr.bf16.mxu0 0
  %1741 = vmatpush1.bf16.msra.mxu0 0
  %1742 = vmatprep.subr.bf16.mxu0 0
  %1743 = vmatpush1.bf16.msra.mxu0 0
  %1744 = vmatprep.subr.bf16.mxu0 0
  %1745 = vmatpush1.bf16.msra.mxu0 0
  %1746 = vmatprep.subr.bf16.mxu0 0
  %1747 = vmatpush1.bf16.msra.mxu0 0
  %1748 = vmatprep.subr.bf16.mxu0 0
  %1749 = vmatpush1.bf16.msra.mxu0 0
  %1750 = vmatprep.subr.bf16.mxu0 0
  %1751 = vmatpush1.bf16.msra.mxu0 0
  %1752 = vmatprep.subr.bf16.mxu0 0
  %1753 = vmatpush1.bf16.msra.mxu0 0
  %1754 = vmatprep.subr.bf16.mxu0 0
  %1755 = vmatpush1.bf16.msra.mxu0 0
  %1756 = vmatprep.subr.bf16.mxu0 0
  %1757 = vmatpush1.bf16.msra.mxu0 0
  %1758 = vmatprep.subr.bf16.mxu0 0
  %1759 = vmatpush1.bf16.msra.mxu0 0
  %1760 = vmatprep.mubr.bf16.mxu0 0
  %1761 = vmatmul.mubr.bf16.gmra.mrb[0].mxu0 %v821
  %v1762 = vpop.f32.mrb[0].mxu0
  %v1763 = vadd.f32 %v166, %v1762
  %v1764 = vpop.f32.mrb[0].mxu0
  %v1765 = vadd.f32 %v166, %v1764
  %v1766 = vpop.f32.mrb[0].mxu0
  %v1767 = vadd.f32 %v171, %v1766
  %v1768 = vpop.f32.mrb[0].mxu0
  %v1769 = vadd.f32 %v171, %v1768
  %1770 = vdwg.mxu0
  %1771 = vmatprep.subr.bf16.mxu0 %v641
  %1772 = vmatpush1.bf16.msra.mxu0 %v640
  %1773 = vmatprep.subr.bf16.mxu0 %v933
  %1774 = vmatpush1.bf16.msra.mxu0 %v930
  %1775 = vmatprep.subr.bf16.mxu0 0
  %1776 = vmatpush1.bf16.msra.mxu0 0
  %1777 = vmatprep.subr.bf16.mxu0 0
  %1778 = vmatpush1.bf16.msra.mxu0 0
  %1779 = vmatprep.subr.bf16.mxu0 0
  %1780 = vmatpush1.bf16.msra.mxu0 0
  %1781 = vmatprep.subr.bf16.mxu0 0
  %1782 = vmatpush1.bf16.msra.mxu0 0
  %1783 = vmatprep.subr.bf16.mxu0 0
  %1784 = vmatpush1.bf16.msra.mxu0 0
  %1785 = vmatprep.subr.bf16.mxu0 0
  %1786 = vmatpush1.bf16.msra.mxu0 0
  %1787 = vmatprep.subr.bf16.mxu0 0
  %1788 = vmatpush1.bf16.msra.mxu0 0
  %1789 = vmatprep.subr.bf16.mxu0 0
  %1790 = vmatpush1.bf16.msra.mxu0 0
  %1791 = vmatprep.subr.bf16.mxu0 0
  %1792 = vmatpush1.bf16.msra.mxu0 0
  %1793 = vmatprep.subr.bf16.mxu0 0
  %1794 = vmatpush1.bf16.msra.mxu0 0
  %1795 = vmatprep.subr.bf16.mxu0 0
  %1796 = vmatpush1.bf16.msra.mxu0 0
  %1797 = vmatprep.subr.bf16.mxu0 0
  %1798 = vmatpush1.bf16.msra.mxu0 0
  %1799 = vmatprep.subr.bf16.mxu0 0
  %1800 = vmatpush1.bf16.msra.mxu0 0
  %1801 = vmatprep.subr.bf16.mxu0 0
  %1802 = vmatpush1.bf16.msra.mxu0 0
  %1803 = vmatprep.mubr.bf16.mxu0 0
  %1804 = vmatmul.mubr.bf16.gmra.mrb[0].mxu0 %v821
  %v1805 = vpop.f32.mrb[0].mxu0
  %v1806 = vadd.f32 %v166, %v1805
  %v1807 = vpop.f32.mrb[0].mxu0
  %v1808 = vadd.f32 %v166, %v1807
  %v1809 = vpop.f32.mrb[0].mxu0
  %v1810 = vadd.f32 %v171, %v1809
  %v1811 = vpop.f32.mrb[0].mxu0
  %v1812 = vadd.f32 %v171, %v1811
  %1813 = vdwg.mxu0
  %1814 = vmatprep.subr.bf16.mxu0 %v643
  %1815 = vmatpush1.bf16.msra.mxu0 %v642
  %1816 = vmatprep.subr.bf16.mxu0 %v939
  %1817 = vmatpush1.bf16.msra.mxu0 %v936
  %1818 = vmatprep.subr.bf16.mxu0 0
  %1819 = vmatpush1.bf16.msra.mxu0 0
  %1820 = vmatprep.subr.bf16.mxu0 0
  %1821 = vmatpush1.bf16.msra.mxu0 0
  %1822 = vmatprep.subr.bf16.mxu0 0
  %1823 = vmatpush1.bf16.msra.mxu0 0
  %1824 = vmatprep.subr.bf16.mxu0 0
  %1825 = vmatpush1.bf16.msra.mxu0 0
  %1826 = vmatprep.subr.bf16.mxu0 0
  %1827 = vmatpush1.bf16.msra.mxu0 0
  %1828 = vmatprep.subr.bf16.mxu0 0
  %1829 = vmatpush1.bf16.msra.mxu0 0
  %1830 = vmatprep.subr.bf16.mxu0 0
  %1831 = vmatpush1.bf16.msra.mxu0 0
  %1832 = vmatprep.subr.bf16.mxu0 0
  %1833 = vmatpush1.bf16.msra.mxu0 0
  %1834 = vmatprep.subr.bf16.mxu0 0
  %1835 = vmatpush1.bf16.msra.mxu0 0
  %1836 = vmatprep.subr.bf16.mxu0 0
  %1837 = vmatpush1.bf16.msra.mxu0 0
  %1838 = vmatprep.subr.bf16.mxu0 0
  %1839 = vmatpush1.bf16.msra.mxu0 0
  %1840 = vmatprep.subr.bf16.mxu0 0
  %1841 = vmatpush1.bf16.msra.mxu0 0
  %1842 = vmatprep.subr.bf16.mxu0 0
  %1843 = vmatpush1.bf16.msra.mxu0 0
  %1844 = vmatprep.subr.bf16.mxu0 0
  %1845 = vmatpush1.bf16.msra.mxu0 0
  %1846 = vmatprep.mubr.bf16.mxu0 0
  %1847 = vmatmul.mubr.bf16.gmra.mrb[0].mxu0 %v821
  %v1848 = vpop.f32.mrb[0].mxu0
  %v1849 = vadd.f32 %v166, %v1848
  %v1850 = vpop.f32.mrb[0].mxu0
  %v1851 = vadd.f32 %v166, %v1850
  %v1852 = vpop.f32.mrb[0].mxu0
  %v1853 = vadd.f32 %v171, %v1852
  %v1854 = vpop.f32.mrb[0].mxu0
  %v1855 = vadd.f32 %v171, %v1854
  %1856 = vdwg.mxu0
  %1857 = vmatprep.subr.bf16.mxu0 %v645
  %1858 = vmatpush1.bf16.msra.mxu0 %v644
  %1859 = vmatprep.subr.bf16.mxu0 %v945
  %1860 = vmatpush1.bf16.msra.mxu0 %v942
  %1861 = vmatprep.subr.bf16.mxu0 0
  %1862 = vmatpush1.bf16.msra.mxu0 0
  %1863 = vmatprep.subr.bf16.mxu0 0
  %1864 = vmatpush1.bf16.msra.mxu0 0
  %1865 = vmatprep.subr.bf16.mxu0 0
  %1866 = vmatpush1.bf16.msra.mxu0 0
  %1867 = vmatprep.subr.bf16.mxu0 0
  %1868 = vmatpush1.bf16.msra.mxu0 0
  %1869 = vmatprep.subr.bf16.mxu0 0
  %1870 = vmatpush1.bf16.msra.mxu0 0
  %1871 = vmatprep.subr.bf16.mxu0 0
  %1872 = vmatpush1.bf16.msra.mxu0 0
  %1873 = vmatprep.subr.bf16.mxu0 0
  %1874 = vmatpush1.bf16.msra.mxu0 0
  %1875 = vmatprep.subr.bf16.mxu0 0
  %1876 = vmatpush1.bf16.msra.mxu0 0
  %1877 = vmatprep.subr.bf16.mxu0 0
  %1878 = vmatpush1.bf16.msra.mxu0 0
  %1879 = vmatprep.subr.bf16.mxu0 0
  %1880 = vmatpush1.bf16.msra.mxu0 0
  %1881 = vmatprep.subr.bf16.mxu0 0
  %1882 = vmatpush1.bf16.msra.mxu0 0
  %1883 = vmatprep.subr.bf16.mxu0 0
  %1884 = vmatpush1.bf16.msra.mxu0 0
  %1885 = vmatprep.subr.bf16.mxu0 0
  %1886 = vmatpush1.bf16.msra.mxu0 0
  %1887 = vmatprep.subr.bf16.mxu0 0
  %1888 = vmatpush1.bf16.msra.mxu0 0
  %1889 = vmatprep.mubr.bf16.mxu0 0
  %1890 = vmatmul.mubr.bf16.gmra.mrb[0].mxu0 %v821
  %v1891 = vpop.f32.mrb[0].mxu0
  %v1892 = vadd.f32 %v166, %v1891
  %v1893 = vpop.f32.mrb[0].mxu0
  %v1894 = vadd.f32 %v166, %v1893
  %v1895 = vpop.f32.mrb[0].mxu0
  %v1896 = vadd.f32 %v171, %v1895
  %v1897 = vpop.f32.mrb[0].mxu0
  %v1898 = vadd.f32 %v171, %v1897
  %1899 = vdwg.mxu0
  %1900 = vmatprep.subr.bf16.mxu0 %v647
  %1901 = vmatpush1.bf16.msra.mxu0 %v646
  %1902 = vmatprep.subr.bf16.mxu0 %v951
  %1903 = vmatpush1.bf16.msra.mxu0 %v948
  %1904 = vmatprep.subr.bf16.mxu0 0
  %1905 = vmatpush1.bf16.msra.mxu0 0
  %1906 = vmatprep.subr.bf16.mxu0 0
  %1907 = vmatpush1.bf16.msra.mxu0 0
  %1908 = vmatprep.subr.bf16.mxu0 0
  %1909 = vmatpush1.bf16.msra.mxu0 0
  %1910 = vmatprep.subr.bf16.mxu0 0
  %1911 = vmatpush1.bf16.msra.mxu0 0
  %1912 = vmatprep.subr.bf16.mxu0 0
  %1913 = vmatpush1.bf16.msra.mxu0 0
  %1914 = vmatprep.subr.bf16.mxu0 0
  %1915 = vmatpush1.bf16.msra.mxu0 0
  %1916 = vmatprep.subr.bf16.mxu0 0
  %1917 = vmatpush1.bf16.msra.mxu0 0
  %1918 = vmatprep.subr.bf16.mxu0 0
  %1919 = vmatpush1.bf16.msra.mxu0 0
  %1920 = vmatprep.subr.bf16.mxu0 0
  %1921 = vmatpush1.bf16.msra.mxu0 0
  %1922 = vmatprep.subr.bf16.mxu0 0
  %1923 = vmatpush1.bf16.msra.mxu0 0
  %1924 = vmatprep.subr.bf16.mxu0 0
  %1925 = vmatpush1.bf16.msra.mxu0 0
  %1926 = vmatprep.subr.bf16.mxu0 0
  %1927 = vmatpush1.bf16.msra.mxu0 0
  %1928 = vmatprep.subr.bf16.mxu0 0
  %1929 = vmatpush1.bf16.msra.mxu0 0
  %1930 = vmatprep.subr.bf16.mxu0 0
  %1931 = vmatpush1.bf16.msra.mxu0 0
  %1932 = vmatprep.mubr.bf16.mxu0 0
  %1933 = vmatmul.mubr.bf16.gmra.mrb[0].mxu0 %v821
  %v1934 = vpop.f32.mrb[0].mxu0
  %v1935 = vadd.f32 %v166, %v1934
  %v1936 = vpop.f32.mrb[0].mxu0
  %v1937 = vadd.f32 %v166, %v1936
  %v1938 = vpop.f32.mrb[0].mxu0
  %v1939 = vadd.f32 %v171, %v1938
  %v1940 = vpop.f32.mrb[0].mxu0
  %v1941 = vadd.f32 %v171, %v1940
  %1942 = vdwg.mxu0
  %1943 = vmatprep.subr.bf16.mxu0 %v649
  %1944 = vmatpush1.bf16.msra.mxu0 %v648
  %1945 = vmatprep.subr.bf16.mxu0 %v957
  %1946 = vmatpush1.bf16.msra.mxu0 %v954
  %1947 = vmatprep.subr.bf16.mxu0 0
  %1948 = vmatpush1.bf16.msra.mxu0 0
  %1949 = vmatprep.subr.bf16.mxu0 0
  %1950 = vmatpush1.bf16.msra.mxu0 0
  %1951 = vmatprep.subr.bf16.mxu0 0
  %1952 = vmatpush1.bf16.msra.mxu0 0
  %1953 = vmatprep.subr.bf16.mxu0 0
  %1954 = vmatpush1.bf16.msra.mxu0 0
  %1955 = vmatprep.subr.bf16.mxu0 0
  %1956 = vmatpush1.bf16.msra.mxu0 0
  %1957 = vmatprep.subr.bf16.mxu0 0
  %1958 = vmatpush1.bf16.msra.mxu0 0
  %1959 = vmatprep.subr.bf16.mxu0 0
  %1960 = vmatpush1.bf16.msra.mxu0 0
  %1961 = vmatprep.subr.bf16.mxu0 0
  %1962 = vmatpush1.bf16.msra.mxu0 0
  %1963 = vmatprep.subr.bf16.mxu0 0
  %1964 = vmatpush1.bf16.msra.mxu0 0
  %1965 = vmatprep.subr.bf16.mxu0 0
  %1966 = vmatpush1.bf16.msra.mxu0 0
  %1967 = vmatprep.subr.bf16.mxu0 0
  %1968 = vmatpush1.bf16.msra.mxu0 0
  %1969 = vmatprep.subr.bf16.mxu0 0
  %1970 = vmatpush1.bf16.msra.mxu0 0
  %1971 = vmatprep.subr.bf16.mxu0 0
  %1972 = vmatpush1.bf16.msra.mxu0 0
  %1973 = vmatprep.subr.bf16.mxu0 0
  %1974 = vmatpush1.bf16.msra.mxu0 0
  %1975 = vmatprep.mubr.bf16.mxu0 0
  %1976 = vmatmul.mubr.bf16.gmra.mrb[0].mxu0 %v821
  %v1977 = vpop.f32.mrb[0].mxu0
  %v1978 = vadd.f32 %v166, %v1977
  %v1979 = vpop.f32.mrb[0].mxu0
  %v1980 = vadd.f32 %v166, %v1979
  %v1981 = vpop.f32.mrb[0].mxu0
  %v1982 = vadd.f32 %v171, %v1981
  %v1983 = vpop.f32.mrb[0].mxu0
  %v1984 = vadd.f32 %v171, %v1983
  %1985 = vdwg.mxu0
  %1986 = vmatprep.subr.bf16.mxu0 %v651
  %1987 = vmatpush1.bf16.msra.mxu0 %v650
  %1988 = vmatprep.subr.bf16.mxu0 %v963
  %1989 = vmatpush1.bf16.msra.mxu0 %v960
  %1990 = vmatprep.subr.bf16.mxu0 0
  %1991 = vmatpush1.bf16.msra.mxu0 0
  %1992 = vmatprep.subr.bf16.mxu0 0
  %1993 = vmatpush1.bf16.msra.mxu0 0
  %1994 = vmatprep.subr.bf16.mxu0 0
  %1995 = vmatpush1.bf16.msra.mxu0 0
  %1996 = vmatprep.subr.bf16.mxu0 0
  %1997 = vmatpush1.bf16.msra.mxu0 0
  %1998 = vmatprep.subr.bf16.mxu0 0
  %1999 = vmatpush1.bf16.msra.mxu0 0
  %2000 = vmatprep.subr.bf16.mxu0 0
  %2001 = vmatpush1.bf16.msra.mxu0 0
  %2002 = vmatprep.subr.bf16.mxu0 0
  %2003 = vmatpush1.bf16.msra.mxu0 0
  %2004 = vmatprep.subr.bf16.mxu0 0
  %2005 = vmatpush1.bf16.msra.mxu0 0
  %2006 = vmatprep.subr.bf16.mxu0 0
  %2007 = vmatpush1.bf16.msra.mxu0 0
  %2008 = vmatprep.subr.bf16.mxu0 0
  %2009 = vmatpush1.bf16.msra.mxu0 0
  %2010 = vmatprep.subr.bf16.mxu0 0
  %2011 = vmatpush1.bf16.msra.mxu0 0
  %2012 = vmatprep.subr.bf16.mxu0 0
  %2013 = vmatpush1.bf16.msra.mxu0 0
  %2014 = vmatprep.subr.bf16.mxu0 0
  %2015 = vmatpush1.bf16.msra.mxu0 0
  %2016 = vmatprep.subr.bf16.mxu0 0
  %2017 = vmatpush1.bf16.msra.mxu0 0
  %2018 = vmatprep.mubr.bf16.mxu0 0
  %2019 = vmatmul.mubr.bf16.gmra.mrb[0].mxu0 %v821
  %v2020 = vpop.f32.mrb[0].mxu0
  %v2021 = vadd.f32 %v166, %v2020
  %v2022 = vpop.f32.mrb[0].mxu0
  %v2023 = vadd.f32 %v166, %v2022
  %v2024 = vpop.f32.mrb[0].mxu0
  %v2025 = vadd.f32 %v171, %v2024
  %v2026 = vpop.f32.mrb[0].mxu0
  %v2027 = vadd.f32 %v171, %v2026
  %2028 = vdwg.mxu0
  %2029 = vmatprep.subr.bf16.mxu0 %v653
  %2030 = vmatpush1.bf16.msra.mxu0 %v652
  %2031 = vmatprep.subr.bf16.mxu0 %v969
  %2032 = vmatpush1.bf16.msra.mxu0 %v966
  %2033 = vmatprep.subr.bf16.mxu0 0
  %2034 = vmatpush1.bf16.msra.mxu0 0
  %2035 = vmatprep.subr.bf16.mxu0 0
  %2036 = vmatpush1.bf16.msra.mxu0 0
  %2037 = vmatprep.subr.bf16.mxu0 0
  %2038 = vmatpush1.bf16.msra.mxu0 0
  %2039 = vmatprep.subr.bf16.mxu0 0
  %2040 = vmatpush1.bf16.msra.mxu0 0
  %2041 = vmatprep.subr.bf16.mxu0 0
  %2042 = vmatpush1.bf16.msra.mxu0 0
  %2043 = vmatprep.subr.bf16.mxu0 0
  %2044 = vmatpush1.bf16.msra.mxu0 0
  %2045 = vmatprep.subr.bf16.mxu0 0
  %2046 = vmatpush1.bf16.msra.mxu0 0
  %2047 = vmatprep.subr.bf16.mxu0 0
  %2048 = vmatpush1.bf16.msra.mxu0 0
  %2049 = vmatprep.subr.bf16.mxu0 0
  %2050 = vmatpush1.bf16.msra.mxu0 0
  %2051 = vmatprep.subr.bf16.mxu0 0
  %2052 = vmatpush1.bf16.msra.mxu0 0
  %2053 = vmatprep.subr.bf16.mxu0 0
  %2054 = vmatpush1.bf16.msra.mxu0 0
  %2055 = vmatprep.subr.bf16.mxu0 0
  %2056 = vmatpush1.bf16.msra.mxu0 0
  %2057 = vmatprep.subr.bf16.mxu0 0
  %2058 = vmatpush1.bf16.msra.mxu0 0
  %2059 = vmatprep.subr.bf16.mxu0 0
  %2060 = vmatpush1.bf16.msra.mxu0 0
  %2061 = vmatprep.mubr.bf16.mxu0 0
  %2062 = vmatmul.mubr.bf16.gmra.mrb[0].mxu0 %v821
  %v2063 = vpop.f32.mrb[0].mxu0
  %v2064 = vadd.f32 %v166, %v2063
  %v2065 = vpop.f32.mrb[0].mxu0
  %v2066 = vadd.f32 %v166, %v2065
  %v2067 = vpop.f32.mrb[0].mxu0
  %v2068 = vadd.f32 %v171, %v2067
  %v2069 = vpop.f32.mrb[0].mxu0
  %v2070 = vadd.f32 %v171, %v2069
  %2071 = vdwg.mxu0
  %2072 = vmatprep.subr.bf16.mxu0 %v655
  %2073 = vmatpush1.bf16.msra.mxu0 %v654
  %2074 = vmatprep.subr.bf16.mxu0 %v975
  %2075 = vmatpush1.bf16.msra.mxu0 %v972
  %2076 = vmatprep.subr.bf16.mxu0 0
  %2077 = vmatpush1.bf16.msra.mxu0 0
  %2078 = vmatprep.subr.bf16.mxu0 0
  %2079 = vmatpush1.bf16.msra.mxu0 0
  %2080 = vmatprep.subr.bf16.mxu0 0
  %2081 = vmatpush1.bf16.msra.mxu0 0
  %2082 = vmatprep.subr.bf16.mxu0 0
  %2083 = vmatpush1.bf16.msra.mxu0 0
  %2084 = vmatprep.subr.bf16.mxu0 0
  %2085 = vmatpush1.bf16.msra.mxu0 0
  %2086 = vmatprep.subr.bf16.mxu0 0
  %2087 = vmatpush1.bf16.msra.mxu0 0
  %2088 = vmatprep.subr.bf16.mxu0 0
  %2089 = vmatpush1.bf16.msra.mxu0 0
  %2090 = vmatprep.subr.bf16.mxu0 0
  %2091 = vmatpush1.bf16.msra.mxu0 0
  %2092 = vmatprep.subr.bf16.mxu0 0
  %2093 = vmatpush1.bf16.msra.mxu0 0
  %2094 = vmatprep.subr.bf16.mxu0 0
  %2095 = vmatpush1.bf16.msra.mxu0 0
  %2096 = vmatprep.subr.bf16.mxu0 0
  %2097 = vmatpush1.bf16.msra.mxu0 0
  %2098 = vmatprep.subr.bf16.mxu0 0
  %2099 = vmatpush1.bf16.msra.mxu0 0
  %2100 = vmatprep.subr.bf16.mxu0 0
  %2101 = vmatpush1.bf16.msra.mxu0 0
  %2102 = vmatprep.subr.bf16.mxu0 0
  %2103 = vmatpush1.bf16.msra.mxu0 0
  %2104 = vmatprep.mubr.bf16.mxu0 0
  %2105 = vmatmul.mubr.bf16.gmra.mrb[0].mxu0 %v821
  %v2106 = vpop.f32.mrb[0].mxu0
  %v2107 = vadd.f32 %v166, %v2106
  %v2108 = vpop.f32.mrb[0].mxu0
  %v2109 = vadd.f32 %v166, %v2108
  %v2110 = vpop.f32.mrb[0].mxu0
  %v2111 = vadd.f32 %v171, %v2110
  %v2112 = vpop.f32.mrb[0].mxu0
  %v2113 = vadd.f32 %v171, %v2112
  %2114 = vdwg.mxu0
  %2115 = vmatprep.subr.bf16.mxu0 %v657
  %2116 = vmatpush1.bf16.msra.mxu0 %v656
  %2117 = vmatprep.subr.bf16.mxu0 %v981
  %2118 = vmatpush1.bf16.msra.mxu0 %v978
  %2119 = vmatprep.subr.bf16.mxu0 0
  %2120 = vmatpush1.bf16.msra.mxu0 0
  %2121 = vmatprep.subr.bf16.mxu0 0
  %2122 = vmatpush1.bf16.msra.mxu0 0
  %2123 = vmatprep.subr.bf16.mxu0 0
  %2124 = vmatpush1.bf16.msra.mxu0 0
  %2125 = vmatprep.subr.bf16.mxu0 0
  %2126 = vmatpush1.bf16.msra.mxu0 0
  %2127 = vmatprep.subr.bf16.mxu0 0
  %2128 = vmatpush1.bf16.msra.mxu0 0
  %2129 = vmatprep.subr.bf16.mxu0 0
  %2130 = vmatpush1.bf16.msra.mxu0 0
  %2131 = vmatprep.subr.bf16.mxu0 0
  %2132 = vmatpush1.bf16.msra.mxu0 0
  %2133 = vmatprep.subr.bf16.mxu0 0
  %2134 = vmatpush1.bf16.msra.mxu0 0
  %2135 = vmatprep.subr.bf16.mxu0 0
  %2136 = vmatpush1.bf16.msra.mxu0 0
  %2137 = vmatprep.subr.bf16.mxu0 0
  %2138 = vmatpush1.bf16.msra.mxu0 0
  %2139 = vmatprep.subr.bf16.mxu0 0
  %2140 = vmatpush1.bf16.msra.mxu0 0
  %2141 = vmatprep.subr.bf16.mxu0 0
  %2142 = vmatpush1.bf16.msra.mxu0 0
  %2143 = vmatprep.subr.bf16.mxu0 0
  %2144 = vmatpush1.bf16.msra.mxu0 0
  %2145 = vmatprep.subr.bf16.mxu0 0
  %2146 = vmatpush1.bf16.msra.mxu0 0
  %2147 = vmatprep.mubr.bf16.mxu0 0
  %2148 = vmatmul.mubr.bf16.gmra.mrb[0].mxu0 %v821
  %v2149 = vpop.f32.mrb[0].mxu0
  %v2150 = vadd.f32 %v166, %v2149
  %v2151 = vpop.f32.mrb[0].mxu0
  %v2152 = vadd.f32 %v166, %v2151
  %v2153 = vpop.f32.mrb[0].mxu0
  %v2154 = vadd.f32 %v171, %v2153
  %v2155 = vpop.f32.mrb[0].mxu0
  %v2156 = vadd.f32 %v171, %v2155
  %2157 = vdwg.mxu0
  %2158 = vmatprep.subr.bf16.mxu0 %v659
  %2159 = vmatpush1.bf16.msra.mxu0 %v658
  %2160 = vmatprep.subr.bf16.mxu0 %v987
  %2161 = vmatpush1.bf16.msra.mxu0 %v984
  %2162 = vmatprep.subr.bf16.mxu0 0
  %2163 = vmatpush1.bf16.msra.mxu0 0
  %2164 = vmatprep.subr.bf16.mxu0 0
  %2165 = vmatpush1.bf16.msra.mxu0 0
  %2166 = vmatprep.subr.bf16.mxu0 0
  %2167 = vmatpush1.bf16.msra.mxu0 0
  %2168 = vmatprep.subr.bf16.mxu0 0
  %2169 = vmatpush1.bf16.msra.mxu0 0
  %2170 = vmatprep.subr.bf16.mxu0 0
  %2171 = vmatpush1.bf16.msra.mxu0 0
  %2172 = vmatprep.subr.bf16.mxu0 0
  %2173 = vmatpush1.bf16.msra.mxu0 0
  %2174 = vmatprep.subr.bf16.mxu0 0
  %2175 = vmatpush1.bf16.msra.mxu0 0
  %2176 = vmatprep.subr.bf16.mxu0 0
  %2177 = vmatpush1.bf16.msra.mxu0 0
  %2178 = vmatprep.subr.bf16.mxu0 0
  %2179 = vmatpush1.bf16.msra.mxu0 0
  %2180 = vmatprep.subr.bf16.mxu0 0
  %2181 = vmatpush1.bf16.msra.mxu0 0
  %2182 = vmatprep.subr.bf16.mxu0 0
  %2183 = vmatpush1.bf16.msra.mxu0 0
  %2184 = vmatprep.subr.bf16.mxu0 0
  %2185 = vmatpush1.bf16.msra.mxu0 0
  %2186 = vmatprep.subr.bf16.mxu0 0
  %2187 = vmatpush1.bf16.msra.mxu0 0
  %2188 = vmatprep.subr.bf16.mxu0 0
  %2189 = vmatpush1.bf16.msra.mxu0 0
  %2190 = vmatprep.mubr.bf16.mxu0 0
  %2191 = vmatmul.mubr.bf16.gmra.mrb[0].mxu0 %v821
  %v2192 = vpop.f32.mrb[0].mxu0
  %v2193 = vadd.f32 %v166, %v2192
  %v2194 = vpop.f32.mrb[0].mxu0
  %v2195 = vadd.f32 %v166, %v2194
  %v2196 = vpop.f32.mrb[0].mxu0
  %v2197 = vadd.f32 %v171, %v2196
  %v2198 = vpop.f32.mrb[0].mxu0
  %v2199 = vadd.f32 %v171, %v2198
  %2200 = vdwg.mxu0
  %2201 = vmatprep.subr.bf16.mxu0 %v661
  %2202 = vmatpush1.bf16.msra.mxu0 %v660
  %2203 = vmatprep.subr.bf16.mxu0 %v993
  %2204 = vmatpush1.bf16.msra.mxu0 %v990
  %2205 = vmatprep.subr.bf16.mxu0 0
  %2206 = vmatpush1.bf16.msra.mxu0 0
  %2207 = vmatprep.subr.bf16.mxu0 0
  %2208 = vmatpush1.bf16.msra.mxu0 0
  %2209 = vmatprep.subr.bf16.mxu0 0
  %2210 = vmatpush1.bf16.msra.mxu0 0
  %2211 = vmatprep.subr.bf16.mxu0 0
  %2212 = vmatpush1.bf16.msra.mxu0 0
  %2213 = vmatprep.subr.bf16.mxu0 0
  %2214 = vmatpush1.bf16.msra.mxu0 0
  %2215 = vmatprep.subr.bf16.mxu0 0
  %2216 = vmatpush1.bf16.msra.mxu0 0
  %2217 = vmatprep.subr.bf16.mxu0 0
  %2218 = vmatpush1.bf16.msra.mxu0 0
  %2219 = vmatprep.subr.bf16.mxu0 0
  %2220 = vmatpush1.bf16.msra.mxu0 0
  %2221 = vmatprep.subr.bf16.mxu0 0
  %2222 = vmatpush1.bf16.msra.mxu0 0
  %2223 = vmatprep.subr.bf16.mxu0 0
  %2224 = vmatpush1.bf16.msra.mxu0 0
  %2225 = vmatprep.subr.bf16.mxu0 0
  %2226 = vmatpush1.bf16.msra.mxu0 0
  %2227 = vmatprep.subr.bf16.mxu0 0
  %2228 = vmatpush1.bf16.msra.mxu0 0
  %2229 = vmatprep.subr.bf16.mxu0 0
  %2230 = vmatpush1.bf16.msra.mxu0 0
  %2231 = vmatprep.subr.bf16.mxu0 0
  %2232 = vmatpush1.bf16.msra.mxu0 0
  %2233 = vmatprep.mubr.bf16.mxu0 0
  %2234 = vmatmul.mubr.bf16.gmra.mrb[0].mxu0 %v821
  %v2235 = vpop.f32.mrb[0].mxu0
  %v2236 = vadd.f32 %v166, %v2235
  %v2237 = vpop.f32.mrb[0].mxu0
  %v2238 = vadd.f32 %v166, %v2237
  %v2239 = vpop.f32.mrb[0].mxu0
  %v2240 = vadd.f32 %v171, %v2239
  %v2241 = vpop.f32.mrb[0].mxu0
  %v2242 = vadd.f32 %v171, %v2241
  %2243 = vdwg.mxu0
  %2244 = vmatprep.subr.bf16.mxu0 %v663
  %2245 = vmatpush1.bf16.msra.mxu0 %v662
  %2246 = vmatprep.subr.bf16.mxu0 %v999
  %2247 = vmatpush1.bf16.msra.mxu0 %v996
  %2248 = vmatprep.subr.bf16.mxu0 0
  %2249 = vmatpush1.bf16.msra.mxu0 0
  %2250 = vmatprep.subr.bf16.mxu0 0
  %2251 = vmatpush1.bf16.msra.mxu0 0
  %2252 = vmatprep.subr.bf16.mxu0 0
  %2253 = vmatpush1.bf16.msra.mxu0 0
  %2254 = vmatprep.subr.bf16.mxu0 0
  %2255 = vmatpush1.bf16.msra.mxu0 0
  %2256 = vmatprep.subr.bf16.mxu0 0
  %2257 = vmatpush1.bf16.msra.mxu0 0
  %2258 = vmatprep.subr.bf16.mxu0 0
  %2259 = vmatpush1.bf16.msra.mxu0 0
  %2260 = vmatprep.subr.bf16.mxu0 0
  %2261 = vmatpush1.bf16.msra.mxu0 0
  %2262 = vmatprep.subr.bf16.mxu0 0
  %2263 = vmatpush1.bf16.msra.mxu0 0
  %2264 = vmatprep.subr.bf16.mxu0 0
  %2265 = vmatpush1.bf16.msra.mxu0 0
  %2266 = vmatprep.subr.bf16.mxu0 0
  %2267 = vmatpush1.bf16.msra.mxu0 0
  %2268 = vmatprep.subr.bf16.mxu0 0
  %2269 = vmatpush1.bf16.msra.mxu0 0
  %2270 = vmatprep.subr.bf16.mxu0 0
  %2271 = vmatpush1.bf16.msra.mxu0 0
  %2272 = vmatprep.subr.bf16.mxu0 0
  %2273 = vmatpush1.bf16.msra.mxu0 0
  %2274 = vmatprep.subr.bf16.mxu0 0
  %2275 = vmatpush1.bf16.msra.mxu0 0
  %2276 = vmatprep.mubr.bf16.mxu0 0
  %2277 = vmatmul.mubr.bf16.gmra.mrb[0].mxu0 %v821
  %v2278 = vpop.f32.mrb[0].mxu0
  %v2279 = vadd.f32 %v166, %v2278
  %v2280 = vpop.f32.mrb[0].mxu0
  %v2281 = vadd.f32 %v166, %v2280
  %v2282 = vpop.f32.mrb[0].mxu0
  %v2283 = vadd.f32 %v171, %v2282
  %v2284 = vpop.f32.mrb[0].mxu0
  %v2285 = vadd.f32 %v171, %v2284
  %2286 = vdwg.mxu0
  %2287 = vmatprep.subr.bf16.mxu0 %v665
  %2288 = vmatpush1.bf16.msra.mxu0 %v664
  %2289 = vmatprep.subr.bf16.mxu0 %v1005
  %2290 = vmatpush1.bf16.msra.mxu0 %v1002
  %2291 = vmatprep.subr.bf16.mxu0 0
  %2292 = vmatpush1.bf16.msra.mxu0 0
  %2293 = vmatprep.subr.bf16.mxu0 0
  %2294 = vmatpush1.bf16.msra.mxu0 0
  %2295 = vmatprep.subr.bf16.mxu0 0
  %2296 = vmatpush1.bf16.msra.mxu0 0
  %2297 = vmatprep.subr.bf16.mxu0 0
  %2298 = vmatpush1.bf16.msra.mxu0 0
  %2299 = vmatprep.subr.bf16.mxu0 0
  %2300 = vmatpush1.bf16.msra.mxu0 0
  %2301 = vmatprep.subr.bf16.mxu0 0
  %2302 = vmatpush1.bf16.msra.mxu0 0
  %2303 = vmatprep.subr.bf16.mxu0 0
  %2304 = vmatpush1.bf16.msra.mxu0 0
  %2305 = vmatprep.subr.bf16.mxu0 0
  %2306 = vmatpush1.bf16.msra.mxu0 0
  %2307 = vmatprep.subr.bf16.mxu0 0
  %2308 = vmatpush1.bf16.msra.mxu0 0
  %2309 = vmatprep.subr.bf16.mxu0 0
  %2310 = vmatpush1.bf16.msra.mxu0 0
  %2311 = vmatprep.subr.bf16.mxu0 0
  %2312 = vmatpush1.bf16.msra.mxu0 0
  %2313 = vmatprep.subr.bf16.mxu0 0
  %2314 = vmatpush1.bf16.msra.mxu0 0
  %2315 = vmatprep.subr.bf16.mxu0 0
  %2316 = vmatpush1.bf16.msra.mxu0 0
  %2317 = vmatprep.subr.bf16.mxu0 0
  %2318 = vmatpush1.bf16.msra.mxu0 0
  %2319 = vmatprep.mubr.bf16.mxu0 0
  %2320 = vmatmul.mubr.bf16.gmra.mrb[0].mxu0 %v821
  %v2321 = vpop.f32.mrb[0].mxu0
  %v2322 = vadd.f32 %v166, %v2321
  %v2323 = vpop.f32.mrb[0].mxu0
  %v2324 = vadd.f32 %v166, %v2323
  %v2325 = vpop.f32.mrb[0].mxu0
  %v2326 = vadd.f32 %v171, %v2325
  %v2327 = vpop.f32.mrb[0].mxu0
  %v2328 = vadd.f32 %v171, %v2327
  %2329 = vdwg.mxu0
  %2330 = vmatprep.subr.bf16.mxu0 %v667
  %2331 = vmatpush1.bf16.msra.mxu0 %v666
  %2332 = vmatprep.subr.bf16.mxu0 %v1011
  %2333 = vmatpush1.bf16.msra.mxu0 %v1008
  %2334 = vmatprep.subr.bf16.mxu0 0
  %2335 = vmatpush1.bf16.msra.mxu0 0
  %2336 = vmatprep.subr.bf16.mxu0 0
  %2337 = vmatpush1.bf16.msra.mxu0 0
  %2338 = vmatprep.subr.bf16.mxu0 0
  %2339 = vmatpush1.bf16.msra.mxu0 0
  %2340 = vmatprep.subr.bf16.mxu0 0
  %2341 = vmatpush1.bf16.msra.mxu0 0
  %2342 = vmatprep.subr.bf16.mxu0 0
  %2343 = vmatpush1.bf16.msra.mxu0 0
  %2344 = vmatprep.subr.bf16.mxu0 0
  %2345 = vmatpush1.bf16.msra.mxu0 0
  %2346 = vmatprep.subr.bf16.mxu0 0
  %2347 = vmatpush1.bf16.msra.mxu0 0
  %2348 = vmatprep.subr.bf16.mxu0 0
  %2349 = vmatpush1.bf16.msra.mxu0 0
  %2350 = vmatprep.subr.bf16.mxu0 0
  %2351 = vmatpush1.bf16.msra.mxu0 0
  %2352 = vmatprep.subr.bf16.mxu0 0
  %2353 = vmatpush1.bf16.msra.mxu0 0
  %2354 = vmatprep.subr.bf16.mxu0 0
  %2355 = vmatpush1.bf16.msra.mxu0 0
  %2356 = vmatprep.subr.bf16.mxu0 0
  %2357 = vmatpush1.bf16.msra.mxu0 0
  %2358 = vmatprep.subr.bf16.mxu0 0
  %2359 = vmatpush1.bf16.msra.mxu0 0
  %2360 = vmatprep.subr.bf16.mxu0 0
  %2361 = vmatpush1.bf16.msra.mxu0 0
  %2362 = vmatprep.mubr.bf16.mxu0 0
  %2363 = vmatmul.mubr.bf16.gmra.mrb[0].mxu0 %v821
  %v2364 = vpop.f32.mrb[0].mxu0
  %v2365 = vadd.f32 %v166, %v2364
  %v2366 = vpop.f32.mrb[0].mxu0
  %v2367 = vadd.f32 %v166, %v2366
  %v2368 = vpop.f32.mrb[0].mxu0
  %v2369 = vadd.f32 %v171, %v2368
  %v2370 = vpop.f32.mrb[0].mxu0
  %v2371 = vadd.f32 %v171, %v2370
  %2372 = vdwg.mxu0
  %2373 = vmatprep.subr.bf16.mxu0 %v669
  %2374 = vmatpush1.bf16.msra.mxu0 %v668
  %2375 = vmatprep.subr.bf16.mxu0 %v1017
  %2376 = vmatpush1.bf16.msra.mxu0 %v1014
  %2377 = vmatprep.subr.bf16.mxu0 0
  %2378 = vmatpush1.bf16.msra.mxu0 0
  %2379 = vmatprep.subr.bf16.mxu0 0
  %2380 = vmatpush1.bf16.msra.mxu0 0
  %2381 = vmatprep.subr.bf16.mxu0 0
  %2382 = vmatpush1.bf16.msra.mxu0 0
  %2383 = vmatprep.subr.bf16.mxu0 0
  %2384 = vmatpush1.bf16.msra.mxu0 0
  %2385 = vmatprep.subr.bf16.mxu0 0
  %2386 = vmatpush1.bf16.msra.mxu0 0
  %2387 = vmatprep.subr.bf16.mxu0 0
  %2388 = vmatpush1.bf16.msra.mxu0 0
  %2389 = vmatprep.subr.bf16.mxu0 0
  %2390 = vmatpush1.bf16.msra.mxu0 0
  %2391 = vmatprep.subr.bf16.mxu0 0
  %2392 = vmatpush1.bf16.msra.mxu0 0
  %2393 = vmatprep.subr.bf16.mxu0 0
  %2394 = vmatpush1.bf16.msra.mxu0 0
  %2395 = vmatprep.subr.bf16.mxu0 0
  %2396 = vmatpush1.bf16.msra.mxu0 0
  %2397 = vmatprep.subr.bf16.mxu0 0
  %2398 = vmatpush1.bf16.msra.mxu0 0
  %2399 = vmatprep.subr.bf16.mxu0 0
  %2400 = vmatpush1.bf16.msra.mxu0 0
  %2401 = vmatprep.subr.bf16.mxu0 0
  %2402 = vmatpush1.bf16.msra.mxu0 0
  %2403 = vmatprep.subr.bf16.mxu0 0
  %2404 = vmatpush1.bf16.msra.mxu0 0
  %2405 = vmatprep.mubr.bf16.mxu0 0
  %2406 = vmatmul.mubr.bf16.gmra.mrb[0].mxu0 %v821
  %v2407 = vpop.f32.mrb[0].mxu0
  %v2408 = vadd.f32 %v166, %v2407
  %v2409 = vpop.f32.mrb[0].mxu0
  %v2410 = vadd.f32 %v166, %v2409
  %v2411 = vpop.f32.mrb[0].mxu0
  %v2412 = vadd.f32 %v171, %v2411
  %v2413 = vpop.f32.mrb[0].mxu0
  %v2414 = vadd.f32 %v171, %v2413
  %2415 = vdwg.mxu0
  %2416 = vmatprep.subr.bf16.mxu0 %v671
  %2417 = vmatpush1.bf16.msra.mxu0 %v670
  %2418 = vmatprep.subr.bf16.mxu0 %v1023
  %2419 = vmatpush1.bf16.msra.mxu0 %v1020
  %2420 = vmatprep.subr.bf16.mxu0 0
  %2421 = vmatpush1.bf16.msra.mxu0 0
  %2422 = vmatprep.subr.bf16.mxu0 0
  %2423 = vmatpush1.bf16.msra.mxu0 0
  %2424 = vmatprep.subr.bf16.mxu0 0
  %2425 = vmatpush1.bf16.msra.mxu0 0
  %2426 = vmatprep.subr.bf16.mxu0 0
  %2427 = vmatpush1.bf16.msra.mxu0 0
  %2428 = vmatprep.subr.bf16.mxu0 0
  %2429 = vmatpush1.bf16.msra.mxu0 0
  %2430 = vmatprep.subr.bf16.mxu0 0
  %2431 = vmatpush1.bf16.msra.mxu0 0
  %2432 = vmatprep.subr.bf16.mxu0 0
  %2433 = vmatpush1.bf16.msra.mxu0 0
  %2434 = vmatprep.subr.bf16.mxu0 0
  %2435 = vmatpush1.bf16.msra.mxu0 0
  %2436 = vmatprep.subr.bf16.mxu0 0
  %2437 = vmatpush1.bf16.msra.mxu0 0
  %2438 = vmatprep.subr.bf16.mxu0 0
  %2439 = vmatpush1.bf16.msra.mxu0 0
  %2440 = vmatprep.subr.bf16.mxu0 0
  %2441 = vmatpush1.bf16.msra.mxu0 0
  %2442 = vmatprep.subr.bf16.mxu0 0
  %2443 = vmatpush1.bf16.msra.mxu0 0
  %2444 = vmatprep.subr.bf16.mxu0 0
  %2445 = vmatpush1.bf16.msra.mxu0 0
  %2446 = vmatprep.subr.bf16.mxu0 0
  %2447 = vmatpush1.bf16.msra.mxu0 0
  %2448 = vmatprep.mubr.bf16.mxu0 0
  %2449 = vmatmul.mubr.bf16.gmra.mrb[0].mxu0 %v821
  %v2450 = vpop.f32.mrb[0].mxu0
  %v2451 = vadd.f32 %v166, %v2450
  %v2452 = vpop.f32.mrb[0].mxu0
  %v2453 = vadd.f32 %v166, %v2452
  %v2454 = vpop.f32.mrb[0].mxu0
  %v2455 = vadd.f32 %v171, %v2454
  %v2456 = vpop.f32.mrb[0].mxu0
  %v2457 = vadd.f32 %v171, %v2456
  %2458 = vdwg.mxu0
  %2459 = vmatprep.subr.bf16.mxu0 %v673
  %2460 = vmatpush1.bf16.msra.mxu0 %v672
  %2461 = vmatprep.subr.bf16.mxu0 %v1029
  %2462 = vmatpush1.bf16.msra.mxu0 %v1026
  %2463 = vmatprep.subr.bf16.mxu0 0
  %2464 = vmatpush1.bf16.msra.mxu0 0
  %2465 = vmatprep.subr.bf16.mxu0 0
  %2466 = vmatpush1.bf16.msra.mxu0 0
  %2467 = vmatprep.subr.bf16.mxu0 0
  %2468 = vmatpush1.bf16.msra.mxu0 0
  %2469 = vmatprep.subr.bf16.mxu0 0
  %2470 = vmatpush1.bf16.msra.mxu0 0
  %2471 = vmatprep.subr.bf16.mxu0 0
  %2472 = vmatpush1.bf16.msra.mxu0 0
  %2473 = vmatprep.subr.bf16.mxu0 0
  %2474 = vmatpush1.bf16.msra.mxu0 0
  %2475 = vmatprep.subr.bf16.mxu0 0
  %2476 = vmatpush1.bf16.msra.mxu0 0
  %2477 = vmatprep.subr.bf16.mxu0 0
  %2478 = vmatpush1.bf16.msra.mxu0 0
  %2479 = vmatprep.subr.bf16.mxu0 0
  %2480 = vmatpush1.bf16.msra.mxu0 0
  %2481 = vmatprep.subr.bf16.mxu0 0
  %2482 = vmatpush1.bf16.msra.mxu0 0
  %2483 = vmatprep.subr.bf16.mxu0 0
  %2484 = vmatpush1.bf16.msra.mxu0 0
  %2485 = vmatprep.subr.bf16.mxu0 0
  %2486 = vmatpush1.bf16.msra.mxu0 0
  %2487 = vmatprep.subr.bf16.mxu0 0
  %2488 = vmatpush1.bf16.msra.mxu0 0
  %2489 = vmatprep.subr.bf16.mxu0 0
  %2490 = vmatpush1.bf16.msra.mxu0 0
  %2491 = vmatprep.mubr.bf16.mxu0 0
  %2492 = vmatmul.mubr.bf16.gmra.mrb[0].mxu0 %v821
  %v2493 = vpop.f32.mrb[0].mxu0
  %v2494 = vadd.f32 %v166, %v2493
  %v2495 = vpop.f32.mrb[0].mxu0
  %v2496 = vadd.f32 %v166, %v2495
  %v2497 = vpop.f32.mrb[0].mxu0
  %v2498 = vadd.f32 %v171, %v2497
  %v2499 = vpop.f32.mrb[0].mxu0
  %v2500 = vadd.f32 %v171, %v2499
  %2501 = vdwg.mxu0
  %2502 = vmatprep.subr.bf16.mxu0 %v675
  %2503 = vmatpush1.bf16.msra.mxu0 %v674
  %2504 = vmatprep.subr.bf16.mxu0 %v1035
  %2505 = vmatpush1.bf16.msra.mxu0 %v1032
  %2506 = vmatprep.subr.bf16.mxu0 0
  %2507 = vmatpush1.bf16.msra.mxu0 0
  %2508 = vmatprep.subr.bf16.mxu0 0
  %2509 = vmatpush1.bf16.msra.mxu0 0
  %2510 = vmatprep.subr.bf16.mxu0 0
  %2511 = vmatpush1.bf16.msra.mxu0 0
  %2512 = vmatprep.subr.bf16.mxu0 0
  %2513 = vmatpush1.bf16.msra.mxu0 0
  %2514 = vmatprep.subr.bf16.mxu0 0
  %2515 = vmatpush1.bf16.msra.mxu0 0
  %2516 = vmatprep.subr.bf16.mxu0 0
  %2517 = vmatpush1.bf16.msra.mxu0 0
  %2518 = vmatprep.subr.bf16.mxu0 0
  %2519 = vmatpush1.bf16.msra.mxu0 0
  %2520 = vmatprep.subr.bf16.mxu0 0
  %2521 = vmatpush1.bf16.msra.mxu0 0
  %2522 = vmatprep.subr.bf16.mxu0 0
  %2523 = vmatpush1.bf16.msra.mxu0 0
  %2524 = vmatprep.subr.bf16.mxu0 0
  %2525 = vmatpush1.bf16.msra.mxu0 0
  %2526 = vmatprep.subr.bf16.mxu0 0
  %2527 = vmatpush1.bf16.msra.mxu0 0
  %2528 = vmatprep.subr.bf16.mxu0 0
  %2529 = vmatpush1.bf16.msra.mxu0 0
  %2530 = vmatprep.subr.bf16.mxu0 0
  %2531 = vmatpush1.bf16.msra.mxu0 0
  %2532 = vmatprep.subr.bf16.mxu0 0
  %2533 = vmatpush1.bf16.msra.mxu0 0
  %2534 = vmatprep.mubr.bf16.mxu0 0
  %2535 = vmatmul.mubr.bf16.gmra.mrb[0].mxu0 %v821
  %v2536 = vpop.f32.mrb[0].mxu0
  %v2537 = vadd.f32 %v166, %v2536
  %v2538 = vpop.f32.mrb[0].mxu0
  %v2539 = vadd.f32 %v166, %v2538
  %v2540 = vpop.f32.mrb[0].mxu0
  %v2541 = vadd.f32 %v171, %v2540
  %v2542 = vpop.f32.mrb[0].mxu0
  %v2543 = vadd.f32 %v171, %v2542
  %2544 = vdwg.mxu0
  %2545 = vmatprep.subr.bf16.mxu0 0
  %2546 = vmatpush1.bf16.msra.mxu0 %v676
  %2547 = vmatprep.subr.bf16.mxu0 0
  %2548 = vmatpush1.bf16.msra.mxu0 %v1038
  %2549 = vmatprep.subr.bf16.mxu0 0
  %2550 = vmatpush1.bf16.msra.mxu0 0
  %2551 = vmatprep.subr.bf16.mxu0 0
  %2552 = vmatpush1.bf16.msra.mxu0 0
  %2553 = vmatprep.subr.bf16.mxu0 0
  %2554 = vmatpush1.bf16.msra.mxu0 0
  %2555 = vmatprep.subr.bf16.mxu0 0
  %2556 = vmatpush1.bf16.msra.mxu0 0
  %2557 = vmatprep.subr.bf16.mxu0 0
  %2558 = vmatpush1.bf16.msra.mxu0 0
  %2559 = vmatprep.subr.bf16.mxu0 0
  %2560 = vmatpush1.bf16.msra.mxu0 0
  %2561 = vmatprep.subr.bf16.mxu0 0
  %2562 = vmatpush1.bf16.msra.mxu0 0
  %2563 = vmatprep.subr.bf16.mxu0 0
  %2564 = vmatpush1.bf16.msra.mxu0 0
  %2565 = vmatprep.subr.bf16.mxu0 0
  %2566 = vmatpush1.bf16.msra.mxu0 0
  %2567 = vmatprep.subr.bf16.mxu0 0
  %2568 = vmatpush1.bf16.msra.mxu0 0
  %2569 = vmatprep.subr.bf16.mxu0 0
  %2570 = vmatpush1.bf16.msra.mxu0 0
  %2571 = vmatprep.subr.bf16.mxu0 0
  %2572 = vmatpush1.bf16.msra.mxu0 0
  %2573 = vmatprep.subr.bf16.mxu0 0
  %2574 = vmatpush1.bf16.msra.mxu0 0
  %2575 = vmatprep.subr.bf16.mxu0 0
  %2576 = vmatpush1.bf16.msra.mxu0 0
  %2577 = vmatprep.mubr.bf16.mxu0 0
  %2578 = vmatmul.mubr.bf16.gmra.mrb[0].mxu0 %v821
  %v2579 = vpop.f32.mrb[0].mxu0
  %v2580 = vadd.f32 %v166, %v2579
  %v2581 = vpop.f32.mrb[0].mxu0
  %v2582 = vpop.f32.mrb[0].mxu0
  %v2583 = vadd.f32 %v171, %v2582
  %v2584 = vpop.f32.mrb[0].mxu0
  %2585 = vdwg.mxu0
  %v2586 = vmax.f32 %v1075, 0.0
  %v2587 = vmax.f32 %v1077, 0.0
  %v2588 = vmax.f32 %v1118, 0.0
  %v2589 = vmax.f32 %v1120, 0.0
  %v2590 = vmax.f32 %v1161, 0.0
  %v2591 = vmax.f32 %v1163, 0.0
  %v2592 = vmax.f32 %v1204, 0.0
  %v2593 = vmax.f32 %v1206, 0.0
  %v2594 = vmax.f32 %v1247, 0.0
  %v2595 = vmax.f32 %v1249, 0.0
  %v2596 = vmax.f32 %v1290, 0.0
  %v2597 = vmax.f32 %v1292, 0.0
  %v2598 = vmax.f32 %v1333, 0.0
  %v2599 = vmax.f32 %v1335, 0.0
  %v2600 = vmax.f32 %v1376, 0.0
  %v2601 = vmax.f32 %v1378, 0.0
  %v2602 = vmax.f32 %v1419, 0.0
  %v2603 = vmax.f32 %v1421, 0.0
  %v2604 = vmax.f32 %v1462, 0.0
  %v2605 = vmax.f32 %v1464, 0.0
  %v2606 = vmax.f32 %v1505, 0.0
  %v2607 = vmax.f32 %v1507, 0.0
  %v2608 = vmax.f32 %v1548, 0.0
  %v2609 = vmax.f32 %v1550, 0.0
  %v2610 = vmax.f32 %v1591, 0.0
  %v2611 = vmax.f32 %v1593, 0.0
  %v2612 = vmax.f32 %v1634, 0.0
  %v2613 = vmax.f32 %v1636, 0.0
  %v2614 = vmax.f32 %v1677, 0.0
  %v2615 = vmax.f32 %v1679, 0.0
  %v2616 = vmax.f32 %v1720, 0.0
  %v2617 = vmax.f32 %v1722, 0.0
  %v2618 = vmax.f32 %v1763, 0.0
  %v2619 = vmax.f32 %v1765, 0.0
  %v2620 = vmax.f32 %v1806, 0.0
  %v2621 = vmax.f32 %v1808, 0.0
  %v2622 = vmax.f32 %v1849, 0.0
  %v2623 = vmax.f32 %v1851, 0.0
  %v2624 = vmax.f32 %v1892, 0.0
  %v2625 = vmax.f32 %v1894, 0.0
  %v2626 = vmax.f32 %v1935, 0.0
  %v2627 = vmax.f32 %v1937, 0.0
  %v2628 = vmax.f32 %v1978, 0.0
  %v2629 = vmax.f32 %v1980, 0.0
  %v2630 = vmax.f32 %v2021, 0.0
  %v2631 = vmax.f32 %v2023, 0.0
  %v2632 = vmax.f32 %v2064, 0.0
  %v2633 = vmax.f32 %v2066, 0.0
  %v2634 = vmax.f32 %v2107, 0.0
  %v2635 = vmax.f32 %v2109, 0.0
  %v2636 = vmax.f32 %v2150, 0.0
  %v2637 = vmax.f32 %v2152, 0.0
  %v2638 = vmax.f32 %v2193, 0.0
  %v2639 = vmax.f32 %v2195, 0.0
  %v2640 = vmax.f32 %v2236, 0.0
  %v2641 = vmax.f32 %v2238, 0.0
  %v2642 = vmax.f32 %v2279, 0.0
  %v2643 = vmax.f32 %v2281, 0.0
  %v2644 = vmax.f32 %v2322, 0.0
  %v2645 = vmax.f32 %v2324, 0.0
  %v2646 = vmax.f32 %v2365, 0.0
  %v2647 = vmax.f32 %v2367, 0.0
  %v2648 = vmax.f32 %v2408, 0.0
  %v2649 = vmax.f32 %v2410, 0.0
  %v2650 = vmax.f32 %v2451, 0.0
  %v2651 = vmax.f32 %v2453, 0.0
  %v2652 = vmax.f32 %v2494, 0.0
  %v2653 = vmax.f32 %v2496, 0.0
  %v2654 = vmax.f32 %v2537, 0.0
  %v2655 = vmax.f32 %v2539, 0.0
  %v2656 = vmax.f32 %v2580, 0.0
  %v2657 = vmax.f32 %v1079, 0.0
  %v2658 = vmax.f32 %v1081, 0.0
  %v2659 = vmax.f32 %v1122, 0.0
  %v2660 = vmax.f32 %v1124, 0.0
  %v2661 = vmax.f32 %v1165, 0.0
  %v2662 = vmax.f32 %v1167, 0.0
  %v2663 = vmax.f32 %v1208, 0.0
  %v2664 = vmax.f32 %v1210, 0.0
  %v2665 = vmax.f32 %v1251, 0.0
  %v2666 = vmax.f32 %v1253, 0.0
  %v2667 = vmax.f32 %v1294, 0.0
  %v2668 = vmax.f32 %v1296, 0.0
  %v2669 = vmax.f32 %v1337, 0.0
  %v2670 = vmax.f32 %v1339, 0.0
  %v2671 = vmax.f32 %v1380, 0.0
  %v2672 = vmax.f32 %v1382, 0.0
  %v2673 = vmax.f32 %v1423, 0.0
  %v2674 = vmax.f32 %v1425, 0.0
  %v2675 = vmax.f32 %v1466, 0.0
  %v2676 = vmax.f32 %v1468, 0.0
  %v2677 = vmax.f32 %v1509, 0.0
  %v2678 = vmax.f32 %v1511, 0.0
  %v2679 = vmax.f32 %v1552, 0.0
  %v2680 = vmax.f32 %v1554, 0.0
  %v2681 = vmax.f32 %v1595, 0.0
  %v2682 = vmax.f32 %v1597, 0.0
  %v2683 = vmax.f32 %v1638, 0.0
  %v2684 = vmax.f32 %v1640, 0.0
  %v2685 = vmax.f32 %v1681, 0.0
  %v2686 = vmax.f32 %v1683, 0.0
  %v2687 = vmax.f32 %v1724, 0.0
  %v2688 = vmax.f32 %v1726, 0.0
  %v2689 = vmax.f32 %v1767, 0.0
  %v2690 = vmax.f32 %v1769, 0.0
  %v2691 = vmax.f32 %v1810, 0.0
  %v2692 = vmax.f32 %v1812, 0.0
  %v2693 = vmax.f32 %v1853, 0.0
  %v2694 = vmax.f32 %v1855, 0.0
  %v2695 = vmax.f32 %v1896, 0.0
  %v2696 = vmax.f32 %v1898, 0.0
  %v2697 = vmax.f32 %v1939, 0.0
  %v2698 = vmax.f32 %v1941, 0.0
  %v2699 = vmax.f32 %v1982, 0.0
  %v2700 = vmax.f32 %v1984, 0.0
  %v2701 = vmax.f32 %v2025, 0.0
  %v2702 = vmax.f32 %v2027, 0.0
  %v2703 = vmax.f32 %v2068, 0.0
  %v2704 = vmax.f32 %v2070, 0.0
  %v2705 = vmax.f32 %v2111, 0.0
  %v2706 = vmax.f32 %v2113, 0.0
  %v2707 = vmax.f32 %v2154, 0.0
  %v2708 = vmax.f32 %v2156, 0.0
  %v2709 = vmax.f32 %v2197, 0.0
  %v2710 = vmax.f32 %v2199, 0.0
  %v2711 = vmax.f32 %v2240, 0.0
  %v2712 = vmax.f32 %v2242, 0.0
  %v2713 = vmax.f32 %v2283, 0.0
  %v2714 = vmax.f32 %v2285, 0.0
  %v2715 = vmax.f32 %v2326, 0.0
  %v2716 = vmax.f32 %v2328, 0.0
  %v2717 = vmax.f32 %v2369, 0.0
  %v2718 = vmax.f32 %v2371, 0.0
  %v2719 = vmax.f32 %v2412, 0.0
  %v2720 = vmax.f32 %v2414, 0.0
  %v2721 = vmax.f32 %v2455, 0.0
  %v2722 = vmax.f32 %v2457, 0.0
  %v2723 = vmax.f32 %v2498, 0.0
  %v2724 = vmax.f32 %v2500, 0.0
  %v2725 = vmax.f32 %v2541, 0.0
  %v2726 = vmax.f32 %v2543, 0.0
  %v2727 = vmax.f32 %v2583, 0.0
  %v2728 = vpack.c.bf16 %v2657, %v2586
  %v2729 = vpack.c.bf16 %v2658, %v2587
  %v2730 = vpack.c.bf16 %v2659, %v2588
  %v2731 = vpack.c.bf16 %v2660, %v2589
  %v2732 = vpack.c.bf16 %v2661, %v2590
  %v2733 = vpack.c.bf16 %v2662, %v2591
  %v2734 = vpack.c.bf16 %v2663, %v2592
  %v2735 = vpack.c.bf16 %v2664, %v2593
  %v2736 = vpack.c.bf16 %v2665, %v2594
  %v2737 = vpack.c.bf16 %v2666, %v2595
  %v2738 = vpack.c.bf16 %v2667, %v2596
  %v2739 = vpack.c.bf16 %v2668, %v2597
  %v2740 = vpack.c.bf16 %v2669, %v2598
  %v2741 = vpack.c.bf16 %v2670, %v2599
  %v2742 = vpack.c.bf16 %v2671, %v2600
  %v2743 = vpack.c.bf16 %v2672, %v2601
  %v2744 = vpack.c.bf16 %v2673, %v2602
  %v2745 = vpack.c.bf16 %v2674, %v2603
  %v2746 = vpack.c.bf16 %v2675, %v2604
  %v2747 = vpack.c.bf16 %v2676, %v2605
  %v2748 = vpack.c.bf16 %v2677, %v2606
  %v2749 = vpack.c.bf16 %v2678, %v2607
  %v2750 = vpack.c.bf16 %v2679, %v2608
  %v2751 = vpack.c.bf16 %v2680, %v2609
  %v2752 = vpack.c.bf16 %v2681, %v2610
  %v2753 = vpack.c.bf16 %v2682, %v2611
  %v2754 = vpack.c.bf16 %v2683, %v2612
  %v2755 = vpack.c.bf16 %v2684, %v2613
  %v2756 = vpack.c.bf16 %v2685, %v2614
  %v2757 = vpack.c.bf16 %v2686, %v2615
  %v2758 = vpack.c.bf16 %v2687, %v2616
  %v2759 = vpack.c.bf16 %v2688, %v2617
  %v2760 = vpack.c.bf16 %v2689, %v2618
  %v2761 = vpack.c.bf16 %v2690, %v2619
  %v2762 = vpack.c.bf16 %v2691, %v2620
  %v2763 = vpack.c.bf16 %v2692, %v2621
  %v2764 = vpack.c.bf16 %v2693, %v2622
  %v2765 = vpack.c.bf16 %v2694, %v2623
  %v2766 = vpack.c.bf16 %v2695, %v2624
  %v2767 = vpack.c.bf16 %v2696, %v2625
  %v2768 = vpack.c.bf16 %v2697, %v2626
  %v2769 = vpack.c.bf16 %v2698, %v2627
  %v2770 = vpack.c.bf16 %v2699, %v2628
  %v2771 = vpack.c.bf16 %v2700, %v2629
  %v2772 = vpack.c.bf16 %v2701, %v2630
  %v2773 = vpack.c.bf16 %v2702, %v2631
  %v2774 = vpack.c.bf16 %v2703, %v2632
  %v2775 = vpack.c.bf16 %v2704, %v2633
  %v2776 = vpack.c.bf16 %v2705, %v2634
  %v2777 = vpack.c.bf16 %v2706, %v2635
  %v2778 = vpack.c.bf16 %v2707, %v2636
  %v2779 = vpack.c.bf16 %v2708, %v2637
  %v2780 = vpack.c.bf16 %v2709, %v2638
  %v2781 = vpack.c.bf16 %v2710, %v2639
  %v2782 = vpack.c.bf16 %v2711, %v2640
  %v2783 = vpack.c.bf16 %v2712, %v2641
  %v2784 = vpack.c.bf16 %v2713, %v2642
  %v2785 = vpack.c.bf16 %v2714, %v2643
  %v2786 = vpack.c.bf16 %v2715, %v2644
  %v2787 = vpack.c.bf16 %v2716, %v2645
  %v2788 = vpack.c.bf16 %v2717, %v2646
  %v2789 = vpack.c.bf16 %v2718, %v2647
  %v2790 = vpack.c.bf16 %v2719, %v2648
  %v2791 = vpack.c.bf16 %v2720, %v2649
  %v2792 = vpack.c.bf16 %v2721, %v2650
  %v2793 = vpack.c.bf16 %v2722, %v2651
  %v2794 = vpack.c.bf16 %v2723, %v2652
  %v2795 = vpack.c.bf16 %v2724, %v2653
  %v2796 = vpack.c.bf16 %v2725, %v2654
  %v2797 = vpack.c.bf16 %v2726, %v2655
  %v2798 = vpack.c.bf16 %v2727, %v2656
  %v2870 = vunpack.c.l.b16 %v2728
  %v2871 = vunpack.c.l.b16 %v2729
  %v2872 = vunpack.c.l.b16 %v2730
  %v2873 = vunpack.c.l.b16 %v2731
  %v2874 = vunpack.c.l.b16 %v2732
  %v2875 = vunpack.c.l.b16 %v2733
  %v2876 = vunpack.c.l.b16 %v2734
  %v2877 = vunpack.c.l.b16 %v2735
  %v2878 = vunpack.c.l.b16 %v2736
  %v2879 = vunpack.c.l.b16 %v2737
  %v2880 = vunpack.c.l.b16 %v2738
  %v2881 = vunpack.c.l.b16 %v2739
  %v2882 = vunpack.c.l.b16 %v2740
  %v2883 = vunpack.c.l.b16 %v2741
  %v2884 = vunpack.c.l.b16 %v2742
  %v2885 = vunpack.c.l.b16 %v2743
  %v2886 = vunpack.c.l.b16 %v2744
  %v2887 = vunpack.c.l.b16 %v2745
  %v2888 = vunpack.c.l.b16 %v2746
  %v2889 = vunpack.c.l.b16 %v2747
  %v2890 = vunpack.c.l.b16 %v2748
  %v2891 = vunpack.c.l.b16 %v2749
  %v2892 = vunpack.c.l.b16 %v2750
  %v2893 = vunpack.c.l.b16 %v2751
  %v2894 = vunpack.c.l.b16 %v2752
  %v2895 = vunpack.c.l.b16 %v2753
  %v2896 = vunpack.c.l.b16 %v2754
  %v2897 = vunpack.c.l.b16 %v2755
  %v2898 = vunpack.c.l.b16 %v2756
  %v2899 = vunpack.c.l.b16 %v2757
  %v2900 = vunpack.c.l.b16 %v2758
  %v2901 = vunpack.c.l.b16 %v2759
  %v2902 = vunpack.c.l.b16 %v2760
  %v2903 = vunpack.c.l.b16 %v2761
  %v2904 = vunpack.c.l.b16 %v2762
  %v2905 = vunpack.c.l.b16 %v2763
  %v2906 = vunpack.c.l.b16 %v2764
  %v2907 = vunpack.c.l.b16 %v2765
  %v2908 = vunpack.c.l.b16 %v2766
  %v2909 = vunpack.c.l.b16 %v2767
  %v2910 = vunpack.c.l.b16 %v2768
  %v2911 = vunpack.c.l.b16 %v2769
  %v2912 = vunpack.c.l.b16 %v2770
  %v2913 = vunpack.c.l.b16 %v2771
  %v2914 = vunpack.c.l.b16 %v2772
  %v2915 = vunpack.c.l.b16 %v2773
  %v2916 = vunpack.c.l.b16 %v2774
  %v2917 = vunpack.c.l.b16 %v2775
  %v2918 = vunpack.c.l.b16 %v2776
  %v2919 = vunpack.c.l.b16 %v2777
  %v2920 = vunpack.c.l.b16 %v2778
  %v2921 = vunpack.c.l.b16 %v2779
  %v2922 = vunpack.c.l.b16 %v2780
  %v2923 = vunpack.c.l.b16 %v2781
  %v2924 = vunpack.c.l.b16 %v2782
  %v2925 = vunpack.c.l.b16 %v2783
  %v2926 = vunpack.c.l.b16 %v2784
  %v2927 = vunpack.c.l.b16 %v2785
  %v2928 = vunpack.c.l.b16 %v2786
  %v2929 = vunpack.c.l.b16 %v2787
  %v2930 = vunpack.c.l.b16 %v2788
  %v2931 = vunpack.c.l.b16 %v2789
  %v2932 = vunpack.c.l.b16 %v2790
  %v2933 = vunpack.c.l.b16 %v2791
  %v2934 = vunpack.c.l.b16 %v2792
  %v2935 = vunpack.c.l.b16 %v2793
  %v2936 = vunpack.c.l.b16 %v2794
  %v2937 = vunpack.c.l.b16 %v2795
  %v2938 = vunpack.c.l.b16 %v2796
  %v2939 = vunpack.c.l.b16 %v2797
  %v2940 = vunpack.c.l.b16 %v2798
  %v2941 = vunpack.c.h.b16 %v2728
  %v2942 = vunpack.c.h.b16 %v2729
  %v2943 = vunpack.c.h.b16 %v2730
  %v2944 = vunpack.c.h.b16 %v2731
  %v2945 = vunpack.c.h.b16 %v2732
  %v2946 = vunpack.c.h.b16 %v2733
  %v2947 = vunpack.c.h.b16 %v2734
  %v2948 = vunpack.c.h.b16 %v2735
  %v2949 = vunpack.c.h.b16 %v2736
  %v2950 = vunpack.c.h.b16 %v2737
  %v2951 = vunpack.c.h.b16 %v2738
  %v2952 = vunpack.c.h.b16 %v2739
  %v2953 = vunpack.c.h.b16 %v2740
  %v2954 = vunpack.c.h.b16 %v2741
  %v2955 = vunpack.c.h.b16 %v2742
  %v2956 = vunpack.c.h.b16 %v2743
  %v2957 = vunpack.c.h.b16 %v2744
  %v2958 = vunpack.c.h.b16 %v2745
  %v2959 = vunpack.c.h.b16 %v2746
  %v2960 = vunpack.c.h.b16 %v2747
  %v2961 = vunpack.c.h.b16 %v2748
  %v2962 = vunpack.c.h.b16 %v2749
  %v2963 = vunpack.c.h.b16 %v2750
  %v2964 = vunpack.c.h.b16 %v2751
  %v2965 = vunpack.c.h.b16 %v2752
  %v2966 = vunpack.c.h.b16 %v2753
  %v2967 = vunpack.c.h.b16 %v2754
  %v2968 = vunpack.c.h.b16 %v2755
  %v2969 = vunpack.c.h.b16 %v2756
  %v2970 = vunpack.c.h.b16 %v2757
  %v2971 = vunpack.c.h.b16 %v2758
  %v2972 = vunpack.c.h.b16 %v2759
  %v2973 = vunpack.c.h.b16 %v2760
  %v2974 = vunpack.c.h.b16 %v2761
  %v2975 = vunpack.c.h.b16 %v2762
  %v2976 = vunpack.c.h.b16 %v2763
  %v2977 = vunpack.c.h.b16 %v2764
  %v2978 = vunpack.c.h.b16 %v2765
  %v2979 = vunpack.c.h.b16 %v2766
  %v2980 = vunpack.c.h.b16 %v2767
  %v2981 = vunpack.c.h.b16 %v2768
  %v2982 = vunpack.c.h.b16 %v2769
  %v2983 = vunpack.c.h.b16 %v2770
  %v2984 = vunpack.c.h.b16 %v2771
  %v2985 = vunpack.c.h.b16 %v2772
  %v2986 = vunpack.c.h.b16 %v2773
  %v2987 = vunpack.c.h.b16 %v2774
  %v2988 = vunpack.c.h.b16 %v2775
  %v2989 = vunpack.c.h.b16 %v2776
  %v2990 = vunpack.c.h.b16 %v2777
  %v2991 = vunpack.c.h.b16 %v2778
  %v2992 = vunpack.c.h.b16 %v2779
  %v2993 = vunpack.c.h.b16 %v2780
  %v2994 = vunpack.c.h.b16 %v2781
  %v2995 = vunpack.c.h.b16 %v2782
  %v2996 = vunpack.c.h.b16 %v2783
  %v2997 = vunpack.c.h.b16 %v2784
  %v2998 = vunpack.c.h.b16 %v2785
  %v2999 = vunpack.c.h.b16 %v2786
  %v3000 = vunpack.c.h.b16 %v2787
  %v3001 = vunpack.c.h.b16 %v2788
  %v3002 = vunpack.c.h.b16 %v2789
  %v3003 = vunpack.c.h.b16 %v2790
  %v3004 = vunpack.c.h.b16 %v2791
  %v3005 = vunpack.c.h.b16 %v2792
  %v3006 = vunpack.c.h.b16 %v2793
  %v3007 = vunpack.c.h.b16 %v2794
  %v3008 = vunpack.c.h.b16 %v2795
  %v3009 = vunpack.c.h.b16 %v2796
  %v3010 = vunpack.c.h.b16 %v2797
  %v3011 = vunpack.c.h.b16 %v2798
  %v3012 = vpack.c.b16 %v2871, %v2870
  %v3013 = vpack.c.b16 %v2873, %v2872
  %v3014 = vpack.c.b16 %v2875, %v2874
  %v3015 = vpack.c.b16 %v2877, %v2876
  %v3016 = vpack.c.b16 %v2879, %v2878
  %v3017 = vpack.c.b16 %v2881, %v2880
  %v3018 = vpack.c.b16 %v2883, %v2882
  %v3019 = vpack.c.b16 %v2885, %v2884
  %v3020 = vpack.c.b16 %v2887, %v2886
  %v3021 = vpack.c.b16 %v2889, %v2888
  %v3022 = vpack.c.b16 %v2891, %v2890
  %v3023 = vpack.c.b16 %v2893, %v2892
  %v3024 = vpack.c.b16 %v2895, %v2894
  %v3025 = vpack.c.b16 %v2897, %v2896
  %v3026 = vpack.c.b16 %v2899, %v2898
  %v3027 = vpack.c.b16 %v2901, %v2900
  %v3028 = vpack.c.b16 %v2903, %v2902
  %v3029 = vpack.c.b16 %v2905, %v2904
  %v3030 = vpack.c.b16 %v2907, %v2906
  %v3031 = vpack.c.b16 %v2909, %v2908
  %v3032 = vpack.c.b16 %v2911, %v2910
  %v3033 = vpack.c.b16 %v2913, %v2912
  %v3034 = vpack.c.b16 %v2915, %v2914
  %v3035 = vpack.c.b16 %v2917, %v2916
  %v3036 = vpack.c.b16 %v2919, %v2918
  %v3037 = vpack.c.b16 %v2921, %v2920
  %v3038 = vpack.c.b16 %v2923, %v2922
  %v3039 = vpack.c.b16 %v2925, %v2924
  %v3040 = vpack.c.b16 %v2927, %v2926
  %v3041 = vpack.c.b16 %v2929, %v2928
  %v3042 = vpack.c.b16 %v2931, %v2930
  %v3043 = vpack.c.b16 %v2933, %v2932
  %v3044 = vpack.c.b16 %v2935, %v2934
  %v3045 = vpack.c.b16 %v2937, %v2936
  %v3046 = vpack.c.b16 %v2939, %v2938
  %v3047 = vpack.c.b16 %v2940, %v2940
  %v3048 = vpack.c.b16 %v2942, %v2941
  %v3049 = vpack.c.b16 %v2944, %v2943
  %v3050 = vpack.c.b16 %v2946, %v2945
  %v3051 = vpack.c.b16 %v2948, %v2947
  %v3052 = vpack.c.b16 %v2950, %v2949
  %v3053 = vpack.c.b16 %v2952, %v2951
  %v3054 = vpack.c.b16 %v2954, %v2953
  %v3055 = vpack.c.b16 %v2956, %v2955
  %v3056 = vpack.c.b16 %v2958, %v2957
  %v3057 = vpack.c.b16 %v2960, %v2959
  %v3058 = vpack.c.b16 %v2962, %v2961
  %v3059 = vpack.c.b16 %v2964, %v2963
  %v3060 = vpack.c.b16 %v2966, %v2965
  %v3061 = vpack.c.b16 %v2968, %v2967
  %v3062 = vpack.c.b16 %v2970, %v2969
  %v3063 = vpack.c.b16 %v2972, %v2971
  %v3064 = vpack.c.b16 %v2974, %v2973
  %v3065 = vpack.c.b16 %v2976, %v2975
  %v3066 = vpack.c.b16 %v2978, %v2977
  %v3067 = vpack.c.b16 %v2980, %v2979
  %v3068 = vpack.c.b16 %v2982, %v2981
  %v3069 = vpack.c.b16 %v2984, %v2983
  %v3070 = vpack.c.b16 %v2986, %v2985
  %v3071 = vpack.c.b16 %v2988, %v2987
  %v3072 = vpack.c.b16 %v2990, %v2989
  %v3073 = vpack.c.b16 %v2992, %v2991
  %v3074 = vpack.c.b16 %v2994, %v2993
  %v3075 = vpack.c.b16 %v2996, %v2995
  %v3076 = vpack.c.b16 %v2998, %v2997
  %v3077 = vpack.c.b16 %v3000, %v2999
  %v3078 = vpack.c.b16 %v3002, %v3001
  %v3079 = vpack.c.b16 %v3004, %v3003
  %v3080 = vpack.c.b16 %v3006, %v3005
  %v3081 = vpack.c.b16 %v3008, %v3007
  %v3082 = vpack.c.b16 %v3010, %v3009
  %v3083 = vpack.c.b16 %v3011, %v3011
  %3156 = vst [vmem:[%s3] sm:$0xff] %v3012
  %3157 = vst [vmem:[%s3 + $0x8] sm:$0xff] %v3013
  %3158 = vst [vmem:[%s3 + $0x10] sm:$0xff] %v3014
  %3159 = vst [vmem:[%s3 + $0x18] sm:$0xff] %v3015
  %3160 = vst [vmem:[%s3 + $0x20] sm:$0xff] %v3016
  %3161 = vst [vmem:[%s3 + $0x28] sm:$0xff] %v3017
  %3162 = vst [vmem:[%s3 + $0x30] sm:$0xff] %v3018
  %3163 = vst [vmem:[%s3 + $0x38] sm:$0xff] %v3019
  %3164 = vst [vmem:[%s3 + $0x40] sm:$0xff] %v3020
  %3165 = vst [vmem:[%s3 + $0x48] sm:$0xff] %v3021
  %3166 = vst [vmem:[%s3 + $0x50] sm:$0xff] %v3022
  %3167 = vst [vmem:[%s3 + $0x58] sm:$0xff] %v3023
  %3168 = vst [vmem:[%s3 + $0x60] sm:$0xff] %v3024
  %3169 = vst [vmem:[%s3 + $0x68] sm:$0xff] %v3025
  %3170 = vst [vmem:[%s3 + $0x70] sm:$0xff] %v3026
  %3171 = vst [vmem:[%s3 + $0x78] sm:$0xff] %v3027
  %3172 = vst [vmem:[%s3 + $0x80] sm:$0xff] %v3028
  %3173 = vst [vmem:[%s3 + $0x88] sm:$0xff] %v3029
  %3174 = vst [vmem:[%s3 + $0x90] sm:$0xff] %v3030
  %3175 = vst [vmem:[%s3 + $0x98] sm:$0xff] %v3031
  %3176 = vst [vmem:[%s3 + $0xa0] sm:$0xff] %v3032
  %3177 = vst [vmem:[%s3 + $0xa8] sm:$0xff] %v3033
  %3178 = vst [vmem:[%s3 + $0xb0] sm:$0xff] %v3034
  %3179 = vst [vmem:[%s3 + $0xb8] sm:$0xff] %v3035
  %3180 = vst [vmem:[%s3 + $0xc0] sm:$0xff] %v3036
  %3181 = vst [vmem:[%s3 + $0xc8] sm:$0xff] %v3037
  %3182 = vst [vmem:[%s3 + $0xd0] sm:$0xff] %v3038
  %3183 = vst [vmem:[%s3 + $0xd8] sm:$0xff] %v3039
  %3184 = vst [vmem:[%s3 + $0xe0] sm:$0xff] %v3040
  %3185 = vst [vmem:[%s3 + $0xe8] sm:$0xff] %v3041
  %3186 = vst [vmem:[%s3 + $0xf0] sm:$0xff] %v3042
  %3187 = vst [vmem:[%s3 + $0xf8] sm:$0xff] %v3043
  %3188 = vst [vmem:[%s3 + $0x100] sm:$0xff] %v3044
  %3189 = vst [vmem:[%s3 + $0x108] sm:$0xff] %v3045
  %3190 = vst [vmem:[%s3 + $0x110] sm:$0xff] %v3046
  %vm3191 = vcmask 322560
  %3192 = vst.msk [vmem:[%s3 + $0x118] sm:$0xf] %vm3191, %v3047
  %3193 = vst [vmem:[%s3 + $0x11c] sm:$0x33] %v3048
  %3194 = vst [vmem:[%s3 + $0x124] sm:$0x33] %v3049
  %3195 = vst [vmem:[%s3 + $0x12c] sm:$0x33] %v3050
  %3196 = vst [vmem:[%s3 + $0x134] sm:$0x33] %v3051
  %3197 = vst [vmem:[%s3 + $0x13c] sm:$0x33] %v3052
  %3198 = vst [vmem:[%s3 + $0x144] sm:$0x33] %v3053
  %3199 = vst [vmem:[%s3 + $0x14c] sm:$0x33] %v3054
  %3200 = vst [vmem:[%s3 + $0x154] sm:$0x33] %v3055
  %3201 = vst [vmem:[%s3 + $0x15c] sm:$0x33] %v3056
  %3202 = vst [vmem:[%s3 + $0x164] sm:$0x33] %v3057
  %3203 = vst [vmem:[%s3 + $0x16c] sm:$0x33] %v3058
  %3204 = vst [vmem:[%s3 + $0x174] sm:$0x33] %v3059
  %3205 = vst [vmem:[%s3 + $0x17c] sm:$0x33] %v3060
  %3206 = vst [vmem:[%s3 + $0x184] sm:$0x33] %v3061
  %3207 = vst [vmem:[%s3 + $0x18c] sm:$0x33] %v3062
  %3208 = vst [vmem:[%s3 + $0x194] sm:$0x33] %v3063
  %3209 = vst [vmem:[%s3 + $0x19c] sm:$0x33] %v3064
  %3210 = vst [vmem:[%s3 + $0x1a4] sm:$0x33] %v3065
  %3211 = vst [vmem:[%s3 + $0x1ac] sm:$0x33] %v3066
  %3212 = vst [vmem:[%s3 + $0x1b4] sm:$0x33] %v3067
  %3213 = vst [vmem:[%s3 + $0x1bc] sm:$0x33] %v3068
  %3214 = vst [vmem:[%s3 + $0x1c4] sm:$0x33] %v3069
  %3215 = vst [vmem:[%s3 + $0x1cc] sm:$0x33] %v3070
  %3216 = vst [vmem:[%s3 + $0x1d4] sm:$0x33] %v3071
  %3217 = vst [vmem:[%s3 + $0x1dc] sm:$0x33] %v3072
  %3218 = vst [vmem:[%s3 + $0x1e4] sm:$0x33] %v3073
  %3219 = vst [vmem:[%s3 + $0x1ec] sm:$0x33] %v3074
  %3220 = vst [vmem:[%s3 + $0x1f4] sm:$0x33] %v3075
  %3221 = vst [vmem:[%s3 + $0x1fc] sm:$0x33] %v3076
  %3222 = vst [vmem:[%s3 + $0x204] sm:$0x33] %v3077
  %3223 = vst [vmem:[%s3 + $0x20c] sm:$0x33] %v3078
  %3224 = vst [vmem:[%s3 + $0x214] sm:$0x33] %v3079
  %3225 = vst [vmem:[%s3 + $0x21c] sm:$0x33] %v3080
  %3226 = vst [vmem:[%s3 + $0x224] sm:$0x33] %v3081
  %3227 = vst [vmem:[%s3 + $0x22c] sm:$0x33] %v3082
  %vm3228 = vcmask 320512
  %3229 = vst.msk [vmem:[%s3 + $0x234] sm:$0x3] %vm3228, %v3083
  // Predicated region
  $region14: #{net_forward.5} parent=0 // pred_check
    _
  $region15: #{net_forward.5} parent=0 // pred_check_branch
    %3231 = sbr.rel (0) target = $region17
  $region16: #{net_forward.5} parent=0 // pred_region
    _
  $region17: #{net_forward.5} parent=0 // pred_fallthru
    _
  // Predicated region
  $region18: #{net_forward.5} parent=0 // pred_check
    _
  $region19: #{net_forward.5} parent=0 // pred_check_branch
    %3233 = sbr.rel (0) target = $region21
  $region20: #{net_forward.5} parent=0 // pred_region
    _
  $region21: #{net_forward.5} parent=0 // pred_fallthru
    _

// kernel: net_forward.6
$region0: #{net_forward.6}
  #allocation0 [shape = 'u32[]', space=smem, size = 0x4, offset = 0x4, fixed_abs, tag = 'smem constant byte address 0x4 - core index']
  #allocation1 [shape = 'u32[144,128]{1,0:T(1,128)}', space=vmem, size = 0x12000, scoped, tag = 'internal scratch']
  %s0 = inlined_call_operand.vmem [shape: bf16[24,108], index: 0, kind: input, shape index: {}]
  %s1 = inlined_call_operand.vmem [shape: bf16[108,7840], index: 1, kind: input, shape index: {}]
  %s2 = inlined_call_operand.vmem [shape: f32[24,1], index: 2, kind: input, shape index: {}]
  %s3 = inlined_call_operand.vmem [shape: bf16[24,7840], index: 3, kind: output, shape index: {}]
  %s4 = sld [smem:[#allocation0]]
  $region22: #{net_forward.6} parent=0
    _
  %s6 = ssub.s32 1, %s4
  %s7 = scalar_select 0, %s6, %s4
  // Predicated region
  $region2: #{net_forward.6} parent=0 // pred_check
    _
  $region3: #{net_forward.6} parent=0 // pred_check_branch
    %9 = sbr.rel (0) target = $region5
  $region4: #{net_forward.6} parent=0 // pred_region
    _
  $region5: #{net_forward.6} parent=0 // pred_fallthru
    _
  // Predicated region
  $region6: #{net_forward.6} parent=0 // pred_check
    _
  $region7: #{net_forward.6} parent=0 // pred_check_branch
    %11 = sbr.rel (0) target = $region9
  $region8: #{net_forward.6} parent=0 // pred_region
    _
  $region9: #{net_forward.6} parent=0 // pred_fallthru
    _
  // Predicated region
  $region10: #{net_forward.6} parent=0 // pred_check
    _
  $region11: #{net_forward.6} parent=0 // pred_check_branch
    %13 = sbr.rel (0) target = $region13
  $region12: #{net_forward.6} parent=0 // pred_region
    _
  $region13: #{net_forward.6} parent=0 // pred_fallthru
    _
  %v15 = vld [vmem:[%s0] sm:$0xf]
  %v16 = vld [vmem:[%s0 + $0x4] sm:$0xf]
  %v17 = vld [vmem:[%s0 + $0x8] sm:$0xf]
  %v18 = vld [vmem:[%s1] sm:$0xff]
  %v19 = vld [vmem:[%s1 + $0x8] sm:$0xff]
  %v20 = vld [vmem:[%s1 + $0x10] sm:$0xff]
  %v21 = vld [vmem:[%s1 + $0x18] sm:$0xff]
  %v22 = vld [vmem:[%s1 + $0x20] sm:$0xff]
  %v23 = vld [vmem:[%s1 + $0x28] sm:$0xff]
  %v24 = vld [vmem:[%s1 + $0x30] sm:$0xff]
  %v25 = vld [vmem:[%s1 + $0x38] sm:$0xff]
  %v26 = vld [vmem:[%s1 + $0x40] sm:$0xff]
  %v27 = vld [vmem:[%s1 + $0x48] sm:$0xff]
  %v28 = vld [vmem:[%s1 + $0x50] sm:$0xff]
  %v29 = vld [vmem:[%s1 + $0x58] sm:$0xff]
  %v30 = vld [vmem:[%s1 + $0x60] sm:$0xff]
  %v31 = vld [vmem:[%s1 + $0x68] sm:$0xff]
  %v32 = vld [vmem:[%s1 + $0x70] sm:$0xff]
  %v33 = vld [vmem:[%s1 + $0x78] sm:$0xff]
  %v34 = vld [vmem:[%s1 + $0x80] sm:$0xff]
  %v35 = vld [vmem:[%s1 + $0x88] sm:$0xff]
  %v36 = vld [vmem:[%s1 + $0x90] sm:$0xff]
  %v37 = vld [vmem:[%s1 + $0x98] sm:$0xff]
  %v38 = vld [vmem:[%s1 + $0xa0] sm:$0xff]
  %v39 = vld [vmem:[%s1 + $0xa8] sm:$0xff]
  %v40 = vld [vmem:[%s1 + $0xb0] sm:$0xff]
  %v41 = vld [vmem:[%s1 + $0xb8] sm:$0xff]
  %v42 = vld [vmem:[%s1 + $0xc0] sm:$0xff]
  %v43 = vld [vmem:[%s1 + $0xc8] sm:$0xff]
  %v44 = vld [vmem:[%s1 + $0xd0] sm:$0xff]
  %v45 = vld [vmem:[%s1 + $0xd8] sm:$0xff]
  %v46 = vld [vmem:[%s1 + $0xe0] sm:$0xff]
  %v47 = vld [vmem:[%s1 + $0xe8] sm:$0xff]
  %v48 = vld [vmem:[%s1 + $0xf0] sm:$0xff]
  %v49 = vld [vmem:[%s1 + $0xf8] sm:$0xff]
  %v50 = vld [vmem:[%s1 + $0x100] sm:$0xff]
  %v51 = vld [vmem:[%s1 + $0x108] sm:$0xff]
  %v52 = vld [vmem:[%s1 + $0x110] sm:$0xff]
  %v53 = vld [vmem:[%s1 + $0x118] sm:$0xff]
  %v54 = vld [vmem:[%s1 + $0x120] sm:$0xff]
  %v55 = vld [vmem:[%s1 + $0x128] sm:$0xff]
  %v56 = vld [vmem:[%s1 + $0x130] sm:$0xff]
  %v57 = vld [vmem:[%s1 + $0x138] sm:$0xff]
  %v58 = vld [vmem:[%s1 + $0x140] sm:$0xff]
  %v59 = vld [vmem:[%s1 + $0x148] sm:$0xff]
  %v60 = vld [vmem:[%s1 + $0x150] sm:$0xff]
  %v61 = vld [vmem:[%s1 + $0x158] sm:$0xff]
  %v62 = vld [vmem:[%s1 + $0x160] sm:$0xff]
  %v63 = vld [vmem:[%s1 + $0x168] sm:$0xff]
  %v64 = vld [vmem:[%s1 + $0x170] sm:$0xff]
  %v65 = vld [vmem:[%s1 + $0x178] sm:$0xff]
  %v66 = vld [vmem:[%s1 + $0x180] sm:$0xff]
  %v67 = vld [vmem:[%s1 + $0x188] sm:$0xff]
  %v68 = vld [vmem:[%s1 + $0x190] sm:$0xff]
  %v69 = vld [vmem:[%s1 + $0x198] sm:$0xff]
  %v70 = vld [vmem:[%s1 + $0x1a0] sm:$0xff]
  %v71 = vld [vmem:[%s1 + $0x1a8] sm:$0xff]
  %v72 = vld [vmem:[%s1 + $0x1b0] sm:$0xff]
  %v73 = vld [vmem:[%s1 + $0x1b8] sm:$0xff]
  %v74 = vld [vmem:[%s1 + $0x1c0] sm:$0xff]
  %v75 = vld [vmem:[%s1 + $0x1c8] sm:$0xff]
  %v76 = vld [vmem:[%s1 + $0x1d0] sm:$0xff]
  %v77 = vld [vmem:[%s1 + $0x1d8] sm:$0xff]
  %v78 = vld [vmem:[%s1 + $0x1e0] sm:$0xff]
  %v79 = vld [vmem:[%s1 + $0x1e8] sm:$0xff]
  %v80 = vld [vmem:[%s1 + $0x1f0] sm:$0xff]
  %v81 = vld [vmem:[%s1 + $0x1f8] sm:$0xff]
  %v82 = vld [vmem:[%s1 + $0x200] sm:$0xff]
  %v83 = vld [vmem:[%s1 + $0x208] sm:$0xff]
  %v84 = vld [vmem:[%s1 + $0x210] sm:$0xff]
  %v85 = vld [vmem:[%s1 + $0x218] sm:$0xff]
  %v86 = vld [vmem:[%s1 + $0x220] sm:$0xff]
  %v87 = vld [vmem:[%s1 + $0x228] sm:$0xff]
  %v88 = vld [vmem:[%s1 + $0x230] sm:$0xff]
  %v89 = vld [vmem:[%s1 + $0x238] sm:$0xff]
  %v90 = vld [vmem:[%s1 + $0x240] sm:$0xff]
  %v91 = vld [vmem:[%s1 + $0x248] sm:$0xff]
  %v92 = vld [vmem:[%s1 + $0x250] sm:$0xff]
  %v93 = vld [vmem:[%s1 + $0x258] sm:$0xff]
  %v94 = vld [vmem:[%s1 + $0x260] sm:$0xff]
  %v95 = vld [vmem:[%s1 + $0x268] sm:$0xff]
  %v96 = vld [vmem:[%s1 + $0x270] sm:$0xff]
  %v97 = vld [vmem:[%s1 + $0x278] sm:$0xff]
  %v98 = vld [vmem:[%s1 + $0x280] sm:$0xff]
  %v99 = vld [vmem:[%s1 + $0x288] sm:$0xff]
  %v100 = vld [vmem:[%s1 + $0x290] sm:$0xff]
  %v101 = vld [vmem:[%s1 + $0x298] sm:$0xff]
  %v102 = vld [vmem:[%s1 + $0x2a0] sm:$0xff]
  %v103 = vld [vmem:[%s1 + $0x2a8] sm:$0xff]
  %v104 = vld [vmem:[%s1 + $0x2b0] sm:$0xff]
  %v105 = vld [vmem:[%s1 + $0x2b8] sm:$0xff]
  %v106 = vld [vmem:[%s1 + $0x2c0] sm:$0xff]
  %v107 = vld [vmem:[%s1 + $0x2c8] sm:$0xff]
  %v108 = vld [vmem:[%s1 + $0x2d0] sm:$0xff]
  %v109 = vld [vmem:[%s1 + $0x2d8] sm:$0xff]
  %v110 = vld [vmem:[%s1 + $0x2e0] sm:$0xff]
  %v111 = vld [vmem:[%s1 + $0x2e8] sm:$0xff]
  %v112 = vld [vmem:[%s1 + $0x2f0] sm:$0xff]
  %v113 = vld [vmem:[%s1 + $0x2f8] sm:$0xff]
  %v114 = vld [vmem:[%s1 + $0x300] sm:$0xff]
  %v115 = vld [vmem:[%s1 + $0x308] sm:$0xff]
  %v116 = vld [vmem:[%s1 + $0x310] sm:$0xff]
  %v117 = vld [vmem:[%s1 + $0x318] sm:$0xff]
  %v118 = vld [vmem:[%s1 + $0x320] sm:$0xff]
  %v119 = vld [vmem:[%s1 + $0x328] sm:$0xff]
  %v120 = vld [vmem:[%s1 + $0x330] sm:$0xff]
  %v121 = vld [vmem:[%s1 + $0x338] sm:$0xff]
  %v122 = vld [vmem:[%s1 + $0x340] sm:$0xff]
  %v123 = vld [vmem:[%s1 + $0x348] sm:$0xff]
  %v124 = vld [vmem:[%s1 + $0x350] sm:$0xff]
  %v125 = vld [vmem:[%s1 + $0x358] sm:$0xff]
  %v126 = vld [vmem:[%s1 + $0x360] sm:$0xff]
  %v127 = vld [vmem:[%s1 + $0x368] sm:$0xff]
  %v128 = vld [vmem:[%s1 + $0x370] sm:$0xff]
  %v129 = vld [vmem:[%s1 + $0x378] sm:$0xff]
  %v130 = vld [vmem:[%s1 + $0x380] sm:$0xff]
  %v131 = vld [vmem:[%s1 + $0x388] sm:$0xff]
  %v132 = vld [vmem:[%s1 + $0x390] sm:$0xff]
  %v133 = vld [vmem:[%s1 + $0x398] sm:$0xff]
  %v134 = vld [vmem:[%s1 + $0x3a0] sm:$0xff]
  %v135 = vld [vmem:[%s1 + $0x3a8] sm:$0xff]
  %v136 = vld [vmem:[%s1 + $0x3b0] sm:$0xff]
  %v137 = vld [vmem:[%s1 + $0x3b8] sm:$0xff]
  %v138 = vld [vmem:[%s1 + $0x3c0] sm:$0xff]
  %v139 = vld [vmem:[%s1 + $0x3c8] sm:$0xff]
  %v140 = vld [vmem:[%s1 + $0x3d0] sm:$0xff]
  %v141 = vld [vmem:[%s1 + $0x3d8] sm:$0xff]
  %v142 = vld [vmem:[%s1 + $0x3e0] sm:$0xff]
  %v143 = vld [vmem:[%s1 + $0x3e8] sm:$0xff]
  %v144 = vld [vmem:[%s1 + $0x3f0] sm:$0xff]
  %v145 = vld [vmem:[%s1 + $0x3f8] sm:$0xff]
  %v146 = vld [vmem:[%s1 + $0x400] sm:$0xff]
  %v147 = vld [vmem:[%s1 + $0x408] sm:$0xff]
  %v148 = vld [vmem:[%s1 + $0x410] sm:$0xff]
  %v149 = vld [vmem:[%s1 + $0x418] sm:$0xff]
  %v150 = vld [vmem:[%s1 + $0x420] sm:$0xff]
  %v151 = vld [vmem:[%s1 + $0x428] sm:$0xff]
  %v152 = vld [vmem:[%s1 + $0x430] sm:$0xff]
  %v153 = vld [vmem:[%s1 + $0x438] sm:$0xff]
  %v154 = vld [vmem:[%s1 + $0x440] sm:$0xff]
  %v155 = vld [vmem:[%s1 + $0x448] sm:$0xff]
  %v156 = vld [vmem:[%s1 + $0x450] sm:$0xff]
  %v157 = vld [vmem:[%s1 + $0x458] sm:$0xff]
  %v158 = vld [vmem:[%s1 + $0x460] sm:$0xff]
  %v159 = vld [vmem:[%s1 + $0x468] sm:$0xff]
  %v160 = vld [vmem:[%s1 + $0x470] sm:$0xff]
  %v161 = vld [vmem:[%s1 + $0x478] sm:$0xff]
  %v162 = vld [vmem:[%s1 + $0x480] sm:$0xff]
  %v163 = vld [vmem:[%s1 + $0x488] sm:$0xff]
  %v164 = vld [vmem:[%s1 + $0x490] sm:$0xff]
  %v165 = vld [vmem:[%s1 + $0x498] sm:$0xff]
  %v166 = vld [vmem:[%s1 + $0x4a0] sm:$0xff]
  %v167 = vld [vmem:[%s1 + $0x4a8] sm:$0xff]
  %v168 = vld [vmem:[%s1 + $0x4b0] sm:$0xff]
  %v169 = vld [vmem:[%s1 + $0x4b8] sm:$0xff]
  %v170 = vld [vmem:[%s1 + $0x4c0] sm:$0xff]
  %v171 = vld [vmem:[%s1 + $0x4c8] sm:$0xff]
  %v172 = vld [vmem:[%s1 + $0x4d0] sm:$0xff]
  %v173 = vld [vmem:[%s1 + $0x4d8] sm:$0xff]
  %v174 = vld [vmem:[%s1 + $0x4e0] sm:$0xff]
  %v175 = vld [vmem:[%s1 + $0x4e8] sm:$0xff]
  %v176 = vld [vmem:[%s1 + $0x4f0] sm:$0xff]
  %v177 = vld [vmem:[%s1 + $0x4f8] sm:$0xff]
  %v178 = vld [vmem:[%s1 + $0x500] sm:$0xff]
  %v179 = vld [vmem:[%s1 + $0x508] sm:$0xff]
  %v180 = vld [vmem:[%s1 + $0x510] sm:$0xff]
  %v181 = vld [vmem:[%s1 + $0x518] sm:$0xff]
  %v182 = vld [vmem:[%s1 + $0x520] sm:$0xff]
  %v183 = vld [vmem:[%s1 + $0x528] sm:$0xff]
  %v184 = vld [vmem:[%s1 + $0x530] sm:$0xff]
  %v185 = vld [vmem:[%s1 + $0x538] sm:$0xff]
  %v186 = vld [vmem:[%s1 + $0x540] sm:$0xff]
  %v187 = vld [vmem:[%s1 + $0x548] sm:$0xff]
  %v188 = vld [vmem:[%s1 + $0x550] sm:$0xff]
  %v189 = vld [vmem:[%s1 + $0x558] sm:$0xff]
  %v190 = vld [vmem:[%s1 + $0x560] sm:$0xff]
  %v191 = vld [vmem:[%s1 + $0x568] sm:$0xff]
  %v192 = vld [vmem:[%s1 + $0x570] sm:$0xff]
  %v193 = vld [vmem:[%s1 + $0x578] sm:$0xff]
  %v194 = vld [vmem:[%s1 + $0x580] sm:$0xff]
  %v195 = vld [vmem:[%s1 + $0x588] sm:$0xff]
  %v196 = vld [vmem:[%s1 + $0x590] sm:$0xff]
  %v197 = vld [vmem:[%s1 + $0x598] sm:$0xff]
  %v198 = vld [vmem:[%s1 + $0x5a0] sm:$0xff]
  %v199 = vld [vmem:[%s1 + $0x5a8] sm:$0xff]
  %v200 = vld [vmem:[%s1 + $0x5b0] sm:$0xff]
  %v201 = vld [vmem:[%s1 + $0x5b8] sm:$0xff]
  %v202 = vld [vmem:[%s1 + $0x5c0] sm:$0xff]
  %v203 = vld [vmem:[%s1 + $0x5c8] sm:$0xff]
  %v204 = vld [vmem:[%s1 + $0x5d0] sm:$0xff]
  %v205 = vld [vmem:[%s1 + $0x5d8] sm:$0xff]
  %v206 = vld [vmem:[%s1 + $0x5e0] sm:$0xff]
  %v207 = vld [vmem:[%s1 + $0x5e8] sm:$0xff]
  %v208 = vld [vmem:[%s1 + $0x5f0] sm:$0xff]
  %v209 = vld [vmem:[%s1 + $0x5f8] sm:$0xff]
  %v210 = vld [vmem:[%s1 + $0x600] sm:$0xff]
  %v211 = vld [vmem:[%s1 + $0x608] sm:$0xff]
  %v212 = vld [vmem:[%s1 + $0x610] sm:$0xff]
  %v213 = vld [vmem:[%s1 + $0x618] sm:$0xff]
  %v214 = vld [vmem:[%s1 + $0x620] sm:$0xff]
  %v215 = vld [vmem:[%s1 + $0x628] sm:$0xff]
  %v216 = vld [vmem:[%s1 + $0x630] sm:$0xff]
  %v217 = vld [vmem:[%s1 + $0x638] sm:$0xff]
  %v218 = vld [vmem:[%s1 + $0x640] sm:$0xff]
  %v219 = vld [vmem:[%s1 + $0x648] sm:$0xff]
  %v220 = vld [vmem:[%s1 + $0x650] sm:$0xff]
  %v221 = vld [vmem:[%s1 + $0x658] sm:$0xff]
  %v222 = vld [vmem:[%s1 + $0x660] sm:$0xff]
  %v223 = vld [vmem:[%s1 + $0x668] sm:$0xff]
  %v224 = vld [vmem:[%s1 + $0x670] sm:$0xff]
  %v225 = vld [vmem:[%s1 + $0x678] sm:$0xff]
  %v226 = vld [vmem:[%s1 + $0x680] sm:$0xff]
  %v227 = vld [vmem:[%s1 + $0x688] sm:$0xff]
  %v228 = vld [vmem:[%s1 + $0x690] sm:$0xff]
  %v229 = vld [vmem:[%s1 + $0x698] sm:$0xff]
  %v230 = vld [vmem:[%s1 + $0x6a0] sm:$0xff]
  %v231 = vld [vmem:[%s1 + $0x6a8] sm:$0xff]
  %v232 = vld [vmem:[%s1 + $0x6b0] sm:$0xff]
  %v233 = vld [vmem:[%s1 + $0x6b8] sm:$0xff]
  %v234 = vld [vmem:[%s1 + $0x6c0] sm:$0xff]
  %v235 = vld [vmem:[%s1 + $0x6c8] sm:$0xff]
  %v236 = vld [vmem:[%s1 + $0x6d0] sm:$0xff]
  %v237 = vld [vmem:[%s1 + $0x6d8] sm:$0xff]
  %v238 = vld [vmem:[%s1 + $0x6e0] sm:$0xff]
  %v239 = vld [vmem:[%s1 + $0x6e8] sm:$0xff]
  %v240 = vld [vmem:[%s1 + $0x6f0] sm:$0xff]
  %v241 = vld [vmem:[%s1 + $0x6f8] sm:$0xff]
  %v242 = vld [vmem:[%s1 + $0x700] sm:$0xff]
  %v243 = vld [vmem:[%s1 + $0x708] sm:$0xff]
  %v244 = vld [vmem:[%s1 + $0x710] sm:$0xff]
  %v245 = vld [vmem:[%s1 + $0x718] sm:$0xff]
  %v246 = vld [vmem:[%s1 + $0x720] sm:$0xff]
  %v247 = vld [vmem:[%s1 + $0x728] sm:$0xff]
  %v248 = vld [vmem:[%s1 + $0x730] sm:$0xff]
  %v249 = vld [vmem:[%s1 + $0x738] sm:$0xff]
  %v250 = vld [vmem:[%s1 + $0x740] sm:$0xff]
  %v251 = vld [vmem:[%s1 + $0x748] sm:$0xff]
  %v252 = vld [vmem:[%s1 + $0x750] sm:$0xff]
  %v253 = vld [vmem:[%s1 + $0x758] sm:$0xff]
  %v254 = vld [vmem:[%s1 + $0x760] sm:$0xff]
  %v255 = vld [vmem:[%s1 + $0x768] sm:$0xff]
  %v256 = vld [vmem:[%s1 + $0x770] sm:$0xff]
  %v257 = vld [vmem:[%s1 + $0x778] sm:$0xff]
  %v258 = vld [vmem:[%s1 + $0x780] sm:$0xff]
  %v259 = vld [vmem:[%s1 + $0x788] sm:$0xff]
  %v260 = vld [vmem:[%s1 + $0x790] sm:$0xff]
  %v261 = vld [vmem:[%s1 + $0x798] sm:$0xff]
  %v262 = vld [vmem:[%s1 + $0x7a0] sm:$0xff]
  %v263 = vld [vmem:[%s1 + $0x7a8] sm:$0xff]
  %v264 = vld [vmem:[%s1 + $0x7b0] sm:$0xff]
  %v265 = vld [vmem:[%s1 + $0x7b8] sm:$0xff]
  %v266 = vld [vmem:[%s1 + $0x7c0] sm:$0xff]
  %v267 = vld [vmem:[%s1 + $0x7c8] sm:$0xff]
  %v268 = vld [vmem:[%s1 + $0x7d0] sm:$0xff]
  %v269 = vld [vmem:[%s1 + $0x7d8] sm:$0xff]
  %v270 = vld [vmem:[%s1 + $0x7e0] sm:$0xff]
  %v271 = vld [vmem:[%s1 + $0x7e8] sm:$0xff]
  %v272 = vld [vmem:[%s1 + $0x7f0] sm:$0xff]
  %v273 = vld [vmem:[%s1 + $0x7f8] sm:$0xff]
  %v274 = vld [vmem:[%s1 + $0x800] sm:$0xff]
  %v275 = vld [vmem:[%s1 + $0x808] sm:$0xff]
  %v276 = vld [vmem:[%s1 + $0x810] sm:$0xff]
  %v277 = vld [vmem:[%s1 + $0x818] sm:$0xff]
  %v278 = vld [vmem:[%s1 + $0x820] sm:$0xff]
  %v279 = vld [vmem:[%s1 + $0x828] sm:$0xff]
  %v280 = vld [vmem:[%s1 + $0x830] sm:$0xff]
  %v281 = vld [vmem:[%s1 + $0x838] sm:$0xff]
  %v282 = vld [vmem:[%s1 + $0x840] sm:$0xff]
  %v283 = vld [vmem:[%s1 + $0x848] sm:$0xff]
  %v284 = vld [vmem:[%s1 + $0x850] sm:$0xff]
  %v285 = vld [vmem:[%s1 + $0x858] sm:$0xff]
  %v286 = vld [vmem:[%s1 + $0x860] sm:$0xff]
  %v287 = vld [vmem:[%s1 + $0x868] sm:$0xff]
  %v288 = vld [vmem:[%s1 + $0x870] sm:$0xff]
  %v289 = vld [vmem:[%s1 + $0x878] sm:$0xff]
  %v290 = vld [vmem:[%s1 + $0x880] sm:$0xff]
  %v291 = vld [vmem:[%s1 + $0x888] sm:$0xff]
  %v292 = vld [vmem:[%s1 + $0x890] sm:$0xff]
  %v293 = vld [vmem:[%s1 + $0x898] sm:$0xff]
  %v294 = vld [vmem:[%s1 + $0x8a0] sm:$0xff]
  %v295 = vld [vmem:[%s1 + $0x8a8] sm:$0xff]
  %v296 = vld [vmem:[%s1 + $0x8b0] sm:$0xff]
  %v297 = vld [vmem:[%s1 + $0x8b8] sm:$0xff]
  %v298 = vld [vmem:[%s1 + $0x8c0] sm:$0xff]
  %v299 = vld [vmem:[%s1 + $0x8c8] sm:$0xff]
  %v300 = vld [vmem:[%s1 + $0x8d0] sm:$0xff]
  %v301 = vld [vmem:[%s1 + $0x8d8] sm:$0xff]
  %v302 = vld [vmem:[%s1 + $0x8e0] sm:$0xff]
  %v303 = vld [vmem:[%s1 + $0x8e8] sm:$0xff]
  %v304 = vld [vmem:[%s1 + $0x8f0] sm:$0xff]
  %v305 = vld [vmem:[%s1 + $0x8f8] sm:$0xff]
  %v306 = vld [vmem:[%s1 + $0x900] sm:$0xff]
  %v307 = vld [vmem:[%s1 + $0x908] sm:$0xff]
  %v308 = vld [vmem:[%s1 + $0x910] sm:$0xff]
  %v309 = vld [vmem:[%s1 + $0x918] sm:$0xff]
  %v310 = vld [vmem:[%s1 + $0x920] sm:$0xff]
  %v311 = vld [vmem:[%s1 + $0x928] sm:$0xff]
  %v312 = vld [vmem:[%s1 + $0x930] sm:$0xff]
  %v313 = vld [vmem:[%s1 + $0x938] sm:$0xff]
  %v314 = vld [vmem:[%s1 + $0x940] sm:$0xff]
  %v315 = vld [vmem:[%s1 + $0x948] sm:$0xff]
  %v316 = vld [vmem:[%s1 + $0x950] sm:$0xff]
  %v317 = vld [vmem:[%s1 + $0x958] sm:$0xff]
  %v318 = vld [vmem:[%s1 + $0x960] sm:$0xff]
  %v319 = vld [vmem:[%s1 + $0x968] sm:$0xff]
  %v320 = vld [vmem:[%s1 + $0x970] sm:$0xff]
  %v321 = vld [vmem:[%s1 + $0x978] sm:$0xff]
  %v322 = vld [vmem:[%s1 + $0x980] sm:$0xff]
  %v323 = vld [vmem:[%s1 + $0x988] sm:$0xff]
  %v324 = vld [vmem:[%s1 + $0x990] sm:$0xff]
  %v325 = vld [vmem:[%s1 + $0x998] sm:$0xff]
  %v326 = vld [vmem:[%s1 + $0x9a0] sm:$0xff]
  %v327 = vld [vmem:[%s1 + $0x9a8] sm:$0xff]
  %v328 = vld [vmem:[%s1 + $0x9b0] sm:$0xff]
  %v329 = vld [vmem:[%s1 + $0x9b8] sm:$0xff]
  %v330 = vld [vmem:[%s1 + $0x9c0] sm:$0xff]
  %v331 = vld [vmem:[%s1 + $0x9c8] sm:$0xff]
  %v332 = vld [vmem:[%s1 + $0x9d0] sm:$0xff]
  %v333 = vld [vmem:[%s1 + $0x9d8] sm:$0xff]
  %v334 = vld [vmem:[%s1 + $0x9e0] sm:$0xff]
  %v335 = vld [vmem:[%s1 + $0x9e8] sm:$0xff]
  %v336 = vld [vmem:[%s1 + $0x9f0] sm:$0xff]
  %v337 = vld [vmem:[%s1 + $0x9f8] sm:$0xff]
  %v338 = vld [vmem:[%s1 + $0xa00] sm:$0xff]
  %v339 = vld [vmem:[%s1 + $0xa08] sm:$0xff]
  %v340 = vld [vmem:[%s1 + $0xa10] sm:$0xff]
  %v341 = vld [vmem:[%s1 + $0xa18] sm:$0xff]
  %v342 = vld [vmem:[%s1 + $0xa20] sm:$0xff]
  %v343 = vld [vmem:[%s1 + $0xa28] sm:$0xff]
  %v344 = vld [vmem:[%s1 + $0xa30] sm:$0xff]
  %v345 = vld [vmem:[%s1 + $0xa38] sm:$0xff]
  %v346 = vld [vmem:[%s1 + $0xa40] sm:$0xff]
  %v347 = vld [vmem:[%s1 + $0xa48] sm:$0xff]
  %v348 = vld [vmem:[%s1 + $0xa50] sm:$0xff]
  %v349 = vld [vmem:[%s1 + $0xa58] sm:$0xff]
  %v350 = vld [vmem:[%s1 + $0xa60] sm:$0xff]
  %v351 = vld [vmem:[%s1 + $0xa68] sm:$0xff]
  %v352 = vld [vmem:[%s1 + $0xa70] sm:$0xff]
  %v353 = vld [vmem:[%s1 + $0xa78] sm:$0xff]
  %v354 = vld [vmem:[%s1 + $0xa80] sm:$0xff]
  %v355 = vld [vmem:[%s1 + $0xa88] sm:$0xff]
  %v356 = vld [vmem:[%s1 + $0xa90] sm:$0xff]
  %v357 = vld [vmem:[%s1 + $0xa98] sm:$0xff]
  %v358 = vld [vmem:[%s1 + $0xaa0] sm:$0xff]
  %v359 = vld [vmem:[%s1 + $0xaa8] sm:$0xff]
  %v360 = vld [vmem:[%s1 + $0xab0] sm:$0xff]
  %v361 = vld [vmem:[%s1 + $0xab8] sm:$0xff]
  %v362 = vld [vmem:[%s1 + $0xac0] sm:$0xff]
  %v363 = vld [vmem:[%s1 + $0xac8] sm:$0xff]
  %v364 = vld [vmem:[%s1 + $0xad0] sm:$0xff]
  %v365 = vld [vmem:[%s1 + $0xad8] sm:$0xff]
  %v366 = vld [vmem:[%s1 + $0xae0] sm:$0xff]
  %v367 = vld [vmem:[%s1 + $0xae8] sm:$0xff]
  %v368 = vld [vmem:[%s1 + $0xaf0] sm:$0xff]
  %v369 = vld [vmem:[%s1 + $0xaf8] sm:$0xff]
  %v370 = vld [vmem:[%s1 + $0xb00] sm:$0xff]
  %v371 = vld [vmem:[%s1 + $0xb08] sm:$0xff]
  %v372 = vld [vmem:[%s1 + $0xb10] sm:$0xff]
  %v373 = vld [vmem:[%s1 + $0xb18] sm:$0xff]
  %v374 = vld [vmem:[%s1 + $0xb20] sm:$0xff]
  %v375 = vld [vmem:[%s1 + $0xb28] sm:$0xff]
  %v376 = vld [vmem:[%s1 + $0xb30] sm:$0xff]
  %v377 = vld [vmem:[%s1 + $0xb38] sm:$0xff]
  %v378 = vld [vmem:[%s1 + $0xb40] sm:$0xff]
  %v379 = vld [vmem:[%s1 + $0xb48] sm:$0xff]
  %v380 = vld [vmem:[%s1 + $0xb50] sm:$0xff]
  %v381 = vld [vmem:[%s1 + $0xb58] sm:$0xff]
  %v382 = vld [vmem:[%s1 + $0xb60] sm:$0xff]
  %v383 = vld [vmem:[%s1 + $0xb68] sm:$0xff]
  %v384 = vld [vmem:[%s1 + $0xb70] sm:$0xff]
  %v385 = vld [vmem:[%s1 + $0xb78] sm:$0xff]
  %v386 = vld [vmem:[%s1 + $0xb80] sm:$0xff]
  %v387 = vld [vmem:[%s1 + $0xb88] sm:$0xff]
  %v388 = vld [vmem:[%s1 + $0xb90] sm:$0xff]
  %v389 = vld [vmem:[%s1 + $0xb98] sm:$0xff]
  %v390 = vld [vmem:[%s1 + $0xba0] sm:$0xff]
  %v391 = vld [vmem:[%s1 + $0xba8] sm:$0xff]
  %v392 = vld [vmem:[%s1 + $0xbb0] sm:$0xff]
  %v393 = vld [vmem:[%s1 + $0xbb8] sm:$0xff]
  %v394 = vld [vmem:[%s1 + $0xbc0] sm:$0xff]
  %v395 = vld [vmem:[%s1 + $0xbc8] sm:$0xff]
  %v396 = vld [vmem:[%s1 + $0xbd0] sm:$0xff]
  %v397 = vld [vmem:[%s1 + $0xbd8] sm:$0xff]
  %v398 = vld [vmem:[%s1 + $0xbe0] sm:$0xff]
  %v399 = vld [vmem:[%s1 + $0xbe8] sm:$0xff]
  %v400 = vld [vmem:[%s1 + $0xbf0] sm:$0xff]
  %v401 = vld [vmem:[%s1 + $0xbf8] sm:$0xff]
  %v402 = vld [vmem:[%s1 + $0xc00] sm:$0xff]
  %v403 = vld [vmem:[%s1 + $0xc08] sm:$0xff]
  %v404 = vld [vmem:[%s1 + $0xc10] sm:$0xff]
  %v405 = vld [vmem:[%s1 + $0xc18] sm:$0xff]
  %v406 = vld [vmem:[%s1 + $0xc20] sm:$0xff]
  %v407 = vld [vmem:[%s1 + $0xc28] sm:$0xff]
  %v408 = vld [vmem:[%s1 + $0xc30] sm:$0xff]
  %v409 = vld [vmem:[%s1 + $0xc38] sm:$0xff]
  %v410 = vld [vmem:[%s1 + $0xc40] sm:$0xff]
  %v411 = vld [vmem:[%s1 + $0xc48] sm:$0xff]
  %v412 = vld [vmem:[%s1 + $0xc50] sm:$0xff]
  %v413 = vld [vmem:[%s1 + $0xc58] sm:$0xff]
  %v414 = vld [vmem:[%s1 + $0xc60] sm:$0xff]
  %v415 = vld [vmem:[%s1 + $0xc68] sm:$0xff]
  %v416 = vld [vmem:[%s1 + $0xc70] sm:$0xff]
  %v417 = vld [vmem:[%s1 + $0xc78] sm:$0xff]
  %v418 = vld [vmem:[%s1 + $0xc80] sm:$0xff]
  %v419 = vld [vmem:[%s1 + $0xc88] sm:$0xff]
  %v420 = vld [vmem:[%s1 + $0xc90] sm:$0xff]
  %v421 = vld [vmem:[%s1 + $0xc98] sm:$0x33]
  %v422 = vld [vmem:[%s1 + $0xca0] sm:$0x33]
  %v423 = vld [vmem:[%s1 + $0xca8] sm:$0x33]
  %v424 = vld [vmem:[%s1 + $0xcb0] sm:$0x33]
  %v425 = vld [vmem:[%s1 + $0xcb8] sm:$0x33]
  %v426 = vld [vmem:[%s1 + $0xcc0] sm:$0x33]
  %v427 = vld [vmem:[%s1 + $0xcc8] sm:$0x33]
  %v428 = vld [vmem:[%s1 + $0xcd0] sm:$0x33]
  %v429 = vld [vmem:[%s1 + $0xcd8] sm:$0x33]
  %v430 = vld [vmem:[%s1 + $0xce0] sm:$0x33]
  %v431 = vld [vmem:[%s1 + $0xce8] sm:$0x33]
  %v432 = vld [vmem:[%s1 + $0xcf0] sm:$0x33]
  %v433 = vld [vmem:[%s1 + $0xcf8] sm:$0x33]
  %v434 = vld [vmem:[%s1 + $0xd00] sm:$0x33]
  %v435 = vld [vmem:[%s1 + $0xd08] sm:$0x33]
  %v436 = vld [vmem:[%s1 + $0xd10] sm:$0x33]
  %v437 = vld [vmem:[%s1 + $0xd18] sm:$0x33]
  %v438 = vld [vmem:[%s1 + $0xd20] sm:$0x33]
  %v439 = vld [vmem:[%s1 + $0xd28] sm:$0x33]
  %v440 = vld [vmem:[%s1 + $0xd30] sm:$0x33]
  %v441 = vld [vmem:[%s1 + $0xd38] sm:$0x33]
  %v442 = vld [vmem:[%s1 + $0xd40] sm:$0x33]
  %v443 = vld [vmem:[%s1 + $0xd48] sm:$0x33]
  %v444 = vld [vmem:[%s1 + $0xd50] sm:$0x33]
  %v445 = vld [vmem:[%s1 + $0xd58] sm:$0x33]
  %v446 = vld [vmem:[%s1 + $0xd60] sm:$0x33]
  %v447 = vld [vmem:[%s1 + $0xd68] sm:$0x33]
  %v448 = vld [vmem:[%s1 + $0xd70] sm:$0x33]
  %v449 = vld [vmem:[%s1 + $0xd78] sm:$0x33]
  %v450 = vld [vmem:[%s1 + $0xd80] sm:$0x33]
  %v451 = vld [vmem:[%s1 + $0xd88] sm:$0x33]
  %v452 = vld [vmem:[%s2] sm:$0xff]
  %v453 = vld [vmem:[%s2 + $0x8] sm:$0xff]
  %v454 = vld [vmem:[%s2 + $0x10] sm:$0xff]
  %456 = vset.pattern.permute.xlu0 0
  %457 = vperm.xlu0 %456, %v452
  %v458 = vpop.permute.xlu0 %457
  %461 = vset.pattern.permute.xlu0 0
  %462 = vperm.xlu0 %461, %v453
  %v463 = vpop.permute.xlu0 %462
  %466 = vset.pattern.permute.xlu0 0
  %467 = vperm.xlu0 %466, %v454
  %v468 = vpop.permute.xlu0 %467
  %v473 = vunpack.c.l.b16 %v15
  %v474 = vunpack.c.l.b16 %v16
  %v475 = vunpack.c.l.b16 %v17
  %v476 = vpack.c.b16 %v474, %v473
  %v477 = vpack.c.b16 %v475, %v475
  %v912 = vunpack.c.l.b16 %v18
  %v913 = vunpack.c.h.b16 %v18
  %v914 = vunpack.c.l.b16 %v19
  %v915 = vunpack.c.h.b16 %v19
  %v916 = vunpack.c.l.b16 %v20
  %v917 = vunpack.c.h.b16 %v20
  %v918 = vunpack.c.l.b16 %v21
  %v919 = vunpack.c.h.b16 %v21
  %v920 = vunpack.c.l.b16 %v22
  %v921 = vunpack.c.h.b16 %v22
  %v922 = vunpack.c.l.b16 %v23
  %v923 = vunpack.c.h.b16 %v23
  %v924 = vunpack.c.l.b16 %v24
  %v925 = vunpack.c.h.b16 %v24
  %v926 = vunpack.c.l.b16 %v25
  %v927 = vunpack.c.h.b16 %v25
  %v928 = vunpack.c.l.b16 %v26
  %v929 = vunpack.c.h.b16 %v26
  %v930 = vunpack.c.l.b16 %v27
  %v931 = vunpack.c.h.b16 %v27
  %v932 = vunpack.c.l.b16 %v28
  %v933 = vunpack.c.h.b16 %v28
  %v934 = vunpack.c.l.b16 %v29
  %v935 = vunpack.c.h.b16 %v29
  %v936 = vunpack.c.l.b16 %v30
  %v937 = vunpack.c.h.b16 %v30
  %v938 = vunpack.c.l.b16 %v31
  %v939 = vunpack.c.h.b16 %v31
  %v940 = vunpack.c.l.b16 %v32
  %v941 = vunpack.c.h.b16 %v32
  %v942 = vunpack.c.l.b16 %v33
  %v943 = vunpack.c.h.b16 %v33
  %v944 = vunpack.c.l.b16 %v34
  %v945 = vunpack.c.h.b16 %v34
  %v946 = vunpack.c.l.b16 %v35
  %v947 = vunpack.c.h.b16 %v35
  %v948 = vunpack.c.l.b16 %v36
  %v949 = vunpack.c.h.b16 %v36
  %v950 = vunpack.c.l.b16 %v37
  %v951 = vunpack.c.h.b16 %v37
  %v952 = vunpack.c.l.b16 %v38
  %v953 = vunpack.c.h.b16 %v38
  %v954 = vunpack.c.l.b16 %v39
  %v955 = vunpack.c.h.b16 %v39
  %v956 = vunpack.c.l.b16 %v40
  %v957 = vunpack.c.h.b16 %v40
  %v958 = vunpack.c.l.b16 %v41
  %v959 = vunpack.c.h.b16 %v41
  %v960 = vunpack.c.l.b16 %v42
  %v961 = vunpack.c.h.b16 %v42
  %v962 = vunpack.c.l.b16 %v43
  %v963 = vunpack.c.h.b16 %v43
  %v964 = vunpack.c.l.b16 %v44
  %v965 = vunpack.c.h.b16 %v44
  %v966 = vunpack.c.l.b16 %v45
  %v967 = vunpack.c.h.b16 %v45
  %v968 = vunpack.c.l.b16 %v46
  %v969 = vunpack.c.h.b16 %v46
  %v970 = vunpack.c.l.b16 %v47
  %v971 = vunpack.c.h.b16 %v47
  %v972 = vunpack.c.l.b16 %v48
  %v973 = vunpack.c.h.b16 %v48
  %v974 = vunpack.c.l.b16 %v49
  %v975 = vunpack.c.h.b16 %v49
  %v976 = vunpack.c.l.b16 %v50
  %v977 = vunpack.c.h.b16 %v50
  %v978 = vunpack.c.l.b16 %v51
  %v979 = vunpack.c.h.b16 %v51
  %v980 = vunpack.c.l.b16 %v52
  %v981 = vunpack.c.h.b16 %v52
  %v982 = vunpack.c.l.b16 %v53
  %v983 = vunpack.c.h.b16 %v53
  %v984 = vunpack.c.l.b16 %v54
  %v985 = vunpack.c.h.b16 %v54
  %v986 = vunpack.c.l.b16 %v55
  %v987 = vunpack.c.h.b16 %v55
  %v988 = vunpack.c.l.b16 %v56
  %v989 = vunpack.c.h.b16 %v56
  %v990 = vunpack.c.l.b16 %v57
  %v991 = vunpack.c.h.b16 %v57
  %v992 = vunpack.c.l.b16 %v58
  %v993 = vunpack.c.h.b16 %v58
  %v994 = vunpack.c.l.b16 %v59
  %v995 = vunpack.c.h.b16 %v59
  %v996 = vunpack.c.l.b16 %v60
  %v997 = vunpack.c.h.b16 %v60
  %v998 = vunpack.c.l.b16 %v61
  %v999 = vunpack.c.h.b16 %v61
  %v1000 = vunpack.c.l.b16 %v62
  %v1001 = vunpack.c.h.b16 %v62
  %v1002 = vunpack.c.l.b16 %v63
  %v1003 = vunpack.c.h.b16 %v63
  %v1004 = vunpack.c.l.b16 %v64
  %v1005 = vunpack.c.h.b16 %v64
  %v1006 = vunpack.c.l.b16 %v65
  %v1007 = vunpack.c.h.b16 %v65
  %v1008 = vunpack.c.l.b16 %v66
  %v1009 = vunpack.c.h.b16 %v66
  %v1010 = vunpack.c.l.b16 %v67
  %v1011 = vunpack.c.h.b16 %v67
  %v1012 = vunpack.c.l.b16 %v68
  %v1013 = vunpack.c.h.b16 %v68
  %v1014 = vunpack.c.l.b16 %v69
  %v1015 = vunpack.c.h.b16 %v69
  %v1016 = vunpack.c.l.b16 %v70
  %v1017 = vunpack.c.h.b16 %v70
  %v1018 = vunpack.c.l.b16 %v71
  %v1019 = vunpack.c.h.b16 %v71
  %v1020 = vunpack.c.l.b16 %v72
  %v1021 = vunpack.c.h.b16 %v72
  %v1022 = vunpack.c.l.b16 %v73
  %v1023 = vunpack.c.h.b16 %v73
  %v1024 = vunpack.c.l.b16 %v74
  %v1025 = vunpack.c.h.b16 %v74
  %v1026 = vunpack.c.l.b16 %v75
  %v1027 = vunpack.c.h.b16 %v75
  %v1028 = vunpack.c.l.b16 %v76
  %v1029 = vunpack.c.h.b16 %v76
  %v1030 = vunpack.c.l.b16 %v77
  %v1031 = vunpack.c.h.b16 %v77
  %v1032 = vunpack.c.l.b16 %v78
  %v1033 = vunpack.c.h.b16 %v78
  %v1034 = vunpack.c.l.b16 %v79
  %v1035 = vunpack.c.h.b16 %v79
  %v1036 = vunpack.c.l.b16 %v80
  %v1037 = vunpack.c.h.b16 %v80
  %v1038 = vunpack.c.l.b16 %v81
  %v1039 = vunpack.c.h.b16 %v81
  %v1040 = vunpack.c.l.b16 %v82
  %v1041 = vunpack.c.h.b16 %v82
  %v1042 = vunpack.c.l.b16 %v83
  %v1043 = vunpack.c.h.b16 %v83
  %v1044 = vunpack.c.l.b16 %v84
  %v1045 = vunpack.c.h.b16 %v84
  %v1046 = vunpack.c.l.b16 %v85
  %v1047 = vunpack.c.h.b16 %v85
  %v1048 = vunpack.c.l.b16 %v86
  %v1049 = vunpack.c.h.b16 %v86
  %v1050 = vunpack.c.l.b16 %v87
  %v1051 = vunpack.c.h.b16 %v87
  %v1052 = vunpack.c.l.b16 %v88
  %v1053 = vunpack.c.h.b16 %v88
  %v1054 = vunpack.c.l.b16 %v89
  %v1055 = vunpack.c.h.b16 %v89
  %v1056 = vunpack.c.l.b16 %v90
  %v1057 = vunpack.c.h.b16 %v90
  %v1058 = vunpack.c.l.b16 %v91
  %v1059 = vunpack.c.h.b16 %v91
  %v1060 = vunpack.c.l.b16 %v92
  %v1061 = vunpack.c.h.b16 %v92
  %v1062 = vunpack.c.l.b16 %v93
  %v1063 = vunpack.c.h.b16 %v93
  %v1064 = vunpack.c.l.b16 %v94
  %v1065 = vunpack.c.h.b16 %v94
  %v1066 = vunpack.c.l.b16 %v95
  %v1067 = vunpack.c.h.b16 %v95
  %v1068 = vunpack.c.l.b16 %v96
  %v1069 = vunpack.c.h.b16 %v96
  %v1070 = vunpack.c.l.b16 %v97
  %v1071 = vunpack.c.h.b16 %v97
  %v1072 = vunpack.c.l.b16 %v98
  %v1073 = vunpack.c.h.b16 %v98
  %v1074 = vunpack.c.l.b16 %v99
  %v1075 = vunpack.c.h.b16 %v99
  %v1076 = vunpack.c.l.b16 %v100
  %v1077 = vunpack.c.h.b16 %v100
  %v1078 = vunpack.c.l.b16 %v101
  %v1079 = vunpack.c.h.b16 %v101
  %v1080 = vunpack.c.l.b16 %v102
  %v1081 = vunpack.c.h.b16 %v102
  %v1082 = vunpack.c.l.b16 %v103
  %v1083 = vunpack.c.h.b16 %v103
  %v1084 = vunpack.c.l.b16 %v104
  %v1085 = vunpack.c.h.b16 %v104
  %v1086 = vunpack.c.l.b16 %v105
  %v1087 = vunpack.c.h.b16 %v105
  %v1088 = vunpack.c.l.b16 %v106
  %v1089 = vunpack.c.h.b16 %v106
  %v1090 = vunpack.c.l.b16 %v107
  %v1091 = vunpack.c.h.b16 %v107
  %v1092 = vunpack.c.l.b16 %v108
  %v1093 = vunpack.c.h.b16 %v108
  %v1094 = vunpack.c.l.b16 %v109
  %v1095 = vunpack.c.h.b16 %v109
  %v1096 = vunpack.c.l.b16 %v110
  %v1097 = vunpack.c.h.b16 %v110
  %v1098 = vunpack.c.l.b16 %v111
  %v1099 = vunpack.c.h.b16 %v111
  %v1100 = vunpack.c.l.b16 %v112
  %v1101 = vunpack.c.h.b16 %v112
  %v1102 = vunpack.c.l.b16 %v113
  %v1103 = vunpack.c.h.b16 %v113
  %v1104 = vunpack.c.l.b16 %v114
  %v1105 = vunpack.c.h.b16 %v114
  %v1106 = vunpack.c.l.b16 %v115
  %v1107 = vunpack.c.h.b16 %v115
  %v1108 = vunpack.c.l.b16 %v116
  %v1109 = vunpack.c.h.b16 %v116
  %v1110 = vunpack.c.l.b16 %v117
  %v1111 = vunpack.c.h.b16 %v117
  %v1112 = vunpack.c.l.b16 %v118
  %v1113 = vunpack.c.h.b16 %v118
  %v1114 = vunpack.c.l.b16 %v119
  %v1115 = vunpack.c.h.b16 %v119
  %v1116 = vunpack.c.l.b16 %v120
  %v1117 = vunpack.c.h.b16 %v120
  %v1118 = vunpack.c.l.b16 %v121
  %v1119 = vunpack.c.h.b16 %v121
  %v1120 = vunpack.c.l.b16 %v122
  %v1121 = vunpack.c.h.b16 %v122
  %v1122 = vunpack.c.l.b16 %v123
  %v1123 = vunpack.c.h.b16 %v123
  %v1124 = vunpack.c.l.b16 %v124
  %v1125 = vunpack.c.h.b16 %v124
  %v1126 = vunpack.c.l.b16 %v125
  %v1127 = vunpack.c.h.b16 %v125
  %v1128 = vunpack.c.l.b16 %v126
  %v1129 = vunpack.c.h.b16 %v126
  %v1130 = vunpack.c.l.b16 %v127
  %v1131 = vunpack.c.h.b16 %v127
  %v1132 = vunpack.c.l.b16 %v128
  %v1133 = vunpack.c.h.b16 %v128
  %v1134 = vunpack.c.l.b16 %v129
  %v1135 = vunpack.c.h.b16 %v129
  %v1136 = vunpack.c.l.b16 %v130
  %v1137 = vunpack.c.h.b16 %v130
  %v1138 = vunpack.c.l.b16 %v131
  %v1139 = vunpack.c.h.b16 %v131
  %v1140 = vunpack.c.l.b16 %v132
  %v1141 = vunpack.c.h.b16 %v132
  %v1142 = vunpack.c.l.b16 %v133
  %v1143 = vunpack.c.h.b16 %v133
  %v1144 = vunpack.c.l.b16 %v134
  %v1145 = vunpack.c.h.b16 %v134
  %v1146 = vunpack.c.l.b16 %v135
  %v1147 = vunpack.c.h.b16 %v135
  %v1148 = vunpack.c.l.b16 %v136
  %v1149 = vunpack.c.h.b16 %v136
  %v1150 = vunpack.c.l.b16 %v137
  %v1151 = vunpack.c.h.b16 %v137
  %v1152 = vunpack.c.l.b16 %v138
  %v1153 = vunpack.c.h.b16 %v138
  %v1154 = vunpack.c.l.b16 %v139
  %v1155 = vunpack.c.h.b16 %v139
  %v1156 = vunpack.c.l.b16 %v140
  %v1157 = vunpack.c.h.b16 %v140
  %v1158 = vunpack.c.l.b16 %v141
  %v1159 = vunpack.c.h.b16 %v141
  %v1160 = vunpack.c.l.b16 %v142
  %v1161 = vunpack.c.h.b16 %v142
  %v1162 = vunpack.c.l.b16 %v143
  %v1163 = vunpack.c.h.b16 %v143
  %v1164 = vunpack.c.l.b16 %v144
  %v1165 = vunpack.c.h.b16 %v144
  %v1166 = vunpack.c.l.b16 %v145
  %v1167 = vunpack.c.h.b16 %v145
  %v1168 = vunpack.c.l.b16 %v146
  %v1169 = vunpack.c.h.b16 %v146
  %v1170 = vunpack.c.l.b16 %v147
  %v1171 = vunpack.c.h.b16 %v147
  %v1172 = vunpack.c.l.b16 %v148
  %v1173 = vunpack.c.h.b16 %v148
  %v1174 = vunpack.c.l.b16 %v149
  %v1175 = vunpack.c.h.b16 %v149
  %v1176 = vunpack.c.l.b16 %v150
  %v1177 = vunpack.c.h.b16 %v150
  %v1178 = vunpack.c.l.b16 %v151
  %v1179 = vunpack.c.h.b16 %v151
  %v1180 = vunpack.c.l.b16 %v152
  %v1181 = vunpack.c.h.b16 %v152
  %v1182 = vunpack.c.l.b16 %v153
  %v1183 = vunpack.c.h.b16 %v153
  %v1184 = vunpack.c.l.b16 %v154
  %v1185 = vunpack.c.h.b16 %v154
  %v1186 = vunpack.c.l.b16 %v155
  %v1187 = vunpack.c.h.b16 %v155
  %v1188 = vunpack.c.l.b16 %v156
  %v1189 = vunpack.c.h.b16 %v156
  %v1190 = vunpack.c.l.b16 %v157
  %v1191 = vunpack.c.h.b16 %v157
  %v1192 = vunpack.c.l.b16 %v158
  %v1193 = vunpack.c.h.b16 %v158
  %v1194 = vunpack.c.l.b16 %v159
  %v1195 = vunpack.c.h.b16 %v159
  %v1196 = vunpack.c.l.b16 %v160
  %v1197 = vunpack.c.h.b16 %v160
  %v1198 = vunpack.c.l.b16 %v161
  %v1199 = vunpack.c.h.b16 %v161
  %v1200 = vunpack.c.l.b16 %v162
  %v1201 = vunpack.c.h.b16 %v162
  %v1202 = vunpack.c.l.b16 %v163
  %v1203 = vunpack.c.h.b16 %v163
  %v1204 = vunpack.c.l.b16 %v164
  %v1205 = vunpack.c.h.b16 %v164
  %v1206 = vunpack.c.l.b16 %v165
  %v1207 = vunpack.c.h.b16 %v165
  %v1208 = vunpack.c.l.b16 %v166
  %v1209 = vunpack.c.h.b16 %v166
  %v1210 = vunpack.c.l.b16 %v167
  %v1211 = vunpack.c.h.b16 %v167
  %v1212 = vunpack.c.l.b16 %v168
  %v1213 = vunpack.c.h.b16 %v168
  %v1214 = vunpack.c.l.b16 %v169
  %v1215 = vunpack.c.h.b16 %v169
  %v1216 = vunpack.c.l.b16 %v170
  %v1217 = vunpack.c.h.b16 %v170
  %v1218 = vunpack.c.l.b16 %v171
  %v1219 = vunpack.c.h.b16 %v171
  %v1220 = vunpack.c.l.b16 %v172
  %v1221 = vunpack.c.h.b16 %v172
  %v1222 = vunpack.c.l.b16 %v173
  %v1223 = vunpack.c.h.b16 %v173
  %v1224 = vunpack.c.l.b16 %v174
  %v1225 = vunpack.c.h.b16 %v174
  %v1226 = vunpack.c.l.b16 %v175
  %v1227 = vunpack.c.h.b16 %v175
  %v1228 = vunpack.c.l.b16 %v176
  %v1229 = vunpack.c.h.b16 %v176
  %v1230 = vunpack.c.l.b16 %v177
  %v1231 = vunpack.c.h.b16 %v177
  %v1232 = vunpack.c.l.b16 %v178
  %v1233 = vunpack.c.h.b16 %v178
  %v1234 = vunpack.c.l.b16 %v179
  %v1235 = vunpack.c.h.b16 %v179
  %v1236 = vunpack.c.l.b16 %v180
  %v1237 = vunpack.c.h.b16 %v180
  %v1238 = vunpack.c.l.b16 %v181
  %v1239 = vunpack.c.h.b16 %v181
  %v1240 = vunpack.c.l.b16 %v182
  %v1241 = vunpack.c.h.b16 %v182
  %v1242 = vunpack.c.l.b16 %v183
  %v1243 = vunpack.c.h.b16 %v183
  %v1244 = vunpack.c.l.b16 %v184
  %v1245 = vunpack.c.h.b16 %v184
  %v1246 = vunpack.c.l.b16 %v185
  %v1247 = vunpack.c.h.b16 %v185
  %v1248 = vunpack.c.l.b16 %v186
  %v1249 = vunpack.c.h.b16 %v186
  %v1250 = vunpack.c.l.b16 %v187
  %v1251 = vunpack.c.h.b16 %v187
  %v1252 = vunpack.c.l.b16 %v188
  %v1253 = vunpack.c.h.b16 %v188
  %v1254 = vunpack.c.l.b16 %v189
  %v1255 = vunpack.c.h.b16 %v189
  %v1256 = vunpack.c.l.b16 %v190
  %v1257 = vunpack.c.h.b16 %v190
  %v1258 = vunpack.c.l.b16 %v191
  %v1259 = vunpack.c.h.b16 %v191
  %v1260 = vunpack.c.l.b16 %v192
  %v1261 = vunpack.c.h.b16 %v192
  %v1262 = vunpack.c.l.b16 %v193
  %v1263 = vunpack.c.h.b16 %v193
  %v1264 = vunpack.c.l.b16 %v194
  %v1265 = vunpack.c.h.b16 %v194
  %v1266 = vunpack.c.l.b16 %v195
  %v1267 = vunpack.c.h.b16 %v195
  %v1268 = vunpack.c.l.b16 %v196
  %v1269 = vunpack.c.h.b16 %v196
  %v1270 = vunpack.c.l.b16 %v197
  %v1271 = vunpack.c.h.b16 %v197
  %v1272 = vunpack.c.l.b16 %v198
  %v1273 = vunpack.c.h.b16 %v198
  %v1274 = vunpack.c.l.b16 %v199
  %v1275 = vunpack.c.h.b16 %v199
  %v1276 = vunpack.c.l.b16 %v200
  %v1277 = vunpack.c.h.b16 %v200
  %v1278 = vunpack.c.l.b16 %v201
  %v1279 = vunpack.c.h.b16 %v201
  %v1280 = vunpack.c.l.b16 %v202
  %v1281 = vunpack.c.h.b16 %v202
  %v1282 = vunpack.c.l.b16 %v203
  %v1283 = vunpack.c.h.b16 %v203
  %v1284 = vunpack.c.l.b16 %v204
  %v1285 = vunpack.c.h.b16 %v204
  %v1286 = vunpack.c.l.b16 %v205
  %v1287 = vunpack.c.h.b16 %v205
  %v1288 = vunpack.c.l.b16 %v206
  %v1289 = vunpack.c.h.b16 %v206
  %v1290 = vunpack.c.l.b16 %v207
  %v1291 = vunpack.c.h.b16 %v207
  %v1292 = vunpack.c.l.b16 %v208
  %v1293 = vunpack.c.h.b16 %v208
  %v1294 = vunpack.c.l.b16 %v209
  %v1295 = vunpack.c.h.b16 %v209
  %v1296 = vunpack.c.l.b16 %v210
  %v1297 = vunpack.c.h.b16 %v210
  %v1298 = vunpack.c.l.b16 %v211
  %v1299 = vunpack.c.h.b16 %v211
  %v1300 = vunpack.c.l.b16 %v212
  %v1301 = vunpack.c.h.b16 %v212
  %v1302 = vunpack.c.l.b16 %v213
  %v1303 = vunpack.c.h.b16 %v213
  %v1304 = vunpack.c.l.b16 %v214
  %v1305 = vunpack.c.h.b16 %v214
  %v1306 = vunpack.c.l.b16 %v215
  %v1307 = vunpack.c.h.b16 %v215
  %v1308 = vunpack.c.l.b16 %v216
  %v1309 = vunpack.c.h.b16 %v216
  %v1310 = vunpack.c.l.b16 %v217
  %v1311 = vunpack.c.h.b16 %v217
  %v1312 = vunpack.c.l.b16 %v218
  %v1313 = vunpack.c.h.b16 %v218
  %v1314 = vunpack.c.l.b16 %v219
  %v1315 = vunpack.c.h.b16 %v219
  %v1316 = vunpack.c.l.b16 %v220
  %v1317 = vunpack.c.h.b16 %v220
  %v1318 = vunpack.c.l.b16 %v221
  %v1319 = vunpack.c.h.b16 %v221
  %v1320 = vunpack.c.l.b16 %v222
  %v1321 = vunpack.c.h.b16 %v222
  %v1322 = vunpack.c.l.b16 %v223
  %v1323 = vunpack.c.h.b16 %v223
  %v1324 = vunpack.c.l.b16 %v224
  %v1325 = vunpack.c.h.b16 %v224
  %v1326 = vunpack.c.l.b16 %v225
  %v1327 = vunpack.c.h.b16 %v225
  %v1328 = vunpack.c.l.b16 %v226
  %v1329 = vunpack.c.h.b16 %v226
  %v1330 = vunpack.c.l.b16 %v227
  %v1331 = vunpack.c.h.b16 %v227
  %v1332 = vunpack.c.l.b16 %v228
  %v1333 = vunpack.c.h.b16 %v228
  %v1334 = vunpack.c.l.b16 %v229
  %v1335 = vunpack.c.h.b16 %v229
  %v1336 = vunpack.c.l.b16 %v230
  %v1337 = vunpack.c.h.b16 %v230
  %v1338 = vunpack.c.l.b16 %v231
  %v1339 = vunpack.c.h.b16 %v231
  %v1340 = vunpack.c.l.b16 %v232
  %v1341 = vunpack.c.h.b16 %v232
  %v1342 = vunpack.c.l.b16 %v233
  %v1343 = vunpack.c.h.b16 %v233
  %v1344 = vunpack.c.l.b16 %v234
  %v1345 = vunpack.c.h.b16 %v234
  %v1346 = vunpack.c.l.b16 %v235
  %v1347 = vunpack.c.h.b16 %v235
  %v1348 = vunpack.c.l.b16 %v236
  %v1349 = vunpack.c.h.b16 %v236
  %v1350 = vunpack.c.l.b16 %v237
  %v1351 = vunpack.c.h.b16 %v237
  %v1352 = vunpack.c.l.b16 %v238
  %v1353 = vunpack.c.h.b16 %v238
  %v1354 = vunpack.c.l.b16 %v239
  %v1355 = vunpack.c.h.b16 %v239
  %v1356 = vunpack.c.l.b16 %v240
  %v1357 = vunpack.c.h.b16 %v240
  %v1358 = vunpack.c.l.b16 %v241
  %v1359 = vunpack.c.h.b16 %v241
  %v1360 = vunpack.c.l.b16 %v242
  %v1361 = vunpack.c.h.b16 %v242
  %v1362 = vunpack.c.l.b16 %v243
  %v1363 = vunpack.c.h.b16 %v243
  %v1364 = vunpack.c.l.b16 %v244
  %v1365 = vunpack.c.h.b16 %v244
  %v1366 = vunpack.c.l.b16 %v245
  %v1367 = vunpack.c.h.b16 %v245
  %v1368 = vunpack.c.l.b16 %v246
  %v1369 = vunpack.c.h.b16 %v246
  %v1370 = vunpack.c.l.b16 %v247
  %v1371 = vunpack.c.h.b16 %v247
  %v1372 = vunpack.c.l.b16 %v248
  %v1373 = vunpack.c.h.b16 %v248
  %v1374 = vunpack.c.l.b16 %v249
  %v1375 = vunpack.c.h.b16 %v249
  %v1376 = vunpack.c.l.b16 %v250
  %v1377 = vunpack.c.h.b16 %v250
  %v1378 = vunpack.c.l.b16 %v251
  %v1379 = vunpack.c.h.b16 %v251
  %v1380 = vunpack.c.l.b16 %v252
  %v1381 = vunpack.c.h.b16 %v252
  %v1382 = vunpack.c.l.b16 %v253
  %v1383 = vunpack.c.h.b16 %v253
  %v1384 = vunpack.c.l.b16 %v254
  %v1385 = vunpack.c.h.b16 %v254
  %v1386 = vunpack.c.l.b16 %v255
  %v1387 = vunpack.c.h.b16 %v255
  %v1388 = vunpack.c.l.b16 %v256
  %v1389 = vunpack.c.h.b16 %v256
  %v1390 = vunpack.c.l.b16 %v257
  %v1391 = vunpack.c.h.b16 %v257
  %v1392 = vunpack.c.l.b16 %v258
  %v1393 = vunpack.c.h.b16 %v258
  %v1394 = vunpack.c.l.b16 %v259
  %v1395 = vunpack.c.h.b16 %v259
  %v1396 = vunpack.c.l.b16 %v260
  %v1397 = vunpack.c.h.b16 %v260
  %v1398 = vunpack.c.l.b16 %v261
  %v1399 = vunpack.c.h.b16 %v261
  %v1400 = vunpack.c.l.b16 %v262
  %v1401 = vunpack.c.h.b16 %v262
  %v1402 = vunpack.c.l.b16 %v263
  %v1403 = vunpack.c.h.b16 %v263
  %v1404 = vunpack.c.l.b16 %v264
  %v1405 = vunpack.c.h.b16 %v264
  %v1406 = vunpack.c.l.b16 %v265
  %v1407 = vunpack.c.h.b16 %v265
  %v1408 = vunpack.c.l.b16 %v266
  %v1409 = vunpack.c.h.b16 %v266
  %v1410 = vunpack.c.l.b16 %v267
  %v1411 = vunpack.c.h.b16 %v267
  %v1412 = vunpack.c.l.b16 %v268
  %v1413 = vunpack.c.h.b16 %v268
  %v1414 = vunpack.c.l.b16 %v269
  %v1415 = vunpack.c.h.b16 %v269
  %v1416 = vunpack.c.l.b16 %v270
  %v1417 = vunpack.c.h.b16 %v270
  %v1418 = vunpack.c.l.b16 %v271
  %v1419 = vunpack.c.h.b16 %v271
  %v1420 = vunpack.c.l.b16 %v272
  %v1421 = vunpack.c.h.b16 %v272
  %v1422 = vunpack.c.l.b16 %v273
  %v1423 = vunpack.c.h.b16 %v273
  %v1424 = vunpack.c.l.b16 %v274
  %v1425 = vunpack.c.h.b16 %v274
  %v1426 = vunpack.c.l.b16 %v275
  %v1427 = vunpack.c.h.b16 %v275
  %v1428 = vunpack.c.l.b16 %v276
  %v1429 = vunpack.c.h.b16 %v276
  %v1430 = vunpack.c.l.b16 %v277
  %v1431 = vunpack.c.h.b16 %v277
  %v1432 = vunpack.c.l.b16 %v278
  %v1433 = vunpack.c.h.b16 %v278
  %v1434 = vunpack.c.l.b16 %v279
  %v1435 = vunpack.c.h.b16 %v279
  %v1436 = vunpack.c.l.b16 %v280
  %v1437 = vunpack.c.h.b16 %v280
  %v1438 = vunpack.c.l.b16 %v281
  %v1439 = vunpack.c.h.b16 %v281
  %v1440 = vunpack.c.l.b16 %v282
  %v1441 = vunpack.c.h.b16 %v282
  %v1442 = vunpack.c.l.b16 %v283
  %v1443 = vunpack.c.h.b16 %v283
  %v1444 = vunpack.c.l.b16 %v284
  %v1445 = vunpack.c.h.b16 %v284
  %v1446 = vunpack.c.l.b16 %v285
  %v1447 = vunpack.c.h.b16 %v285
  %v1448 = vunpack.c.l.b16 %v286
  %v1449 = vunpack.c.h.b16 %v286
  %v1450 = vunpack.c.l.b16 %v287
  %v1451 = vunpack.c.h.b16 %v287
  %v1452 = vunpack.c.l.b16 %v288
  %v1453 = vunpack.c.h.b16 %v288
  %v1454 = vunpack.c.l.b16 %v289
  %v1455 = vunpack.c.h.b16 %v289
  %v1456 = vunpack.c.l.b16 %v290
  %v1457 = vunpack.c.h.b16 %v290
  %v1458 = vunpack.c.l.b16 %v291
  %v1459 = vunpack.c.h.b16 %v291
  %v1460 = vunpack.c.l.b16 %v292
  %v1461 = vunpack.c.h.b16 %v292
  %v1462 = vunpack.c.l.b16 %v293
  %v1463 = vunpack.c.h.b16 %v293
  %v1464 = vunpack.c.l.b16 %v294
  %v1465 = vunpack.c.h.b16 %v294
  %v1466 = vunpack.c.l.b16 %v295
  %v1467 = vunpack.c.h.b16 %v295
  %v1468 = vunpack.c.l.b16 %v296
  %v1469 = vunpack.c.h.b16 %v296
  %v1470 = vunpack.c.l.b16 %v297
  %v1471 = vunpack.c.h.b16 %v297
  %v1472 = vunpack.c.l.b16 %v298
  %v1473 = vunpack.c.h.b16 %v298
  %v1474 = vunpack.c.l.b16 %v299
  %v1475 = vunpack.c.h.b16 %v299
  %v1476 = vunpack.c.l.b16 %v300
  %v1477 = vunpack.c.h.b16 %v300
  %v1478 = vunpack.c.l.b16 %v301
  %v1479 = vunpack.c.h.b16 %v301
  %v1480 = vunpack.c.l.b16 %v302
  %v1481 = vunpack.c.h.b16 %v302
  %v1482 = vunpack.c.l.b16 %v303
  %v1483 = vunpack.c.h.b16 %v303
  %v1484 = vunpack.c.l.b16 %v304
  %v1485 = vunpack.c.h.b16 %v304
  %v1486 = vunpack.c.l.b16 %v305
  %v1487 = vunpack.c.h.b16 %v305
  %v1488 = vunpack.c.l.b16 %v306
  %v1489 = vunpack.c.h.b16 %v306
  %v1490 = vunpack.c.l.b16 %v307
  %v1491 = vunpack.c.h.b16 %v307
  %v1492 = vunpack.c.l.b16 %v308
  %v1493 = vunpack.c.h.b16 %v308
  %v1494 = vunpack.c.l.b16 %v309
  %v1495 = vunpack.c.h.b16 %v309
  %v1496 = vunpack.c.l.b16 %v310
  %v1497 = vunpack.c.h.b16 %v310
  %v1498 = vunpack.c.l.b16 %v311
  %v1499 = vunpack.c.h.b16 %v311
  %v1500 = vunpack.c.l.b16 %v312
  %v1501 = vunpack.c.h.b16 %v312
  %v1502 = vunpack.c.l.b16 %v313
  %v1503 = vunpack.c.h.b16 %v313
  %v1504 = vunpack.c.l.b16 %v314
  %v1505 = vunpack.c.h.b16 %v314
  %v1506 = vunpack.c.l.b16 %v315
  %v1507 = vunpack.c.h.b16 %v315
  %v1508 = vunpack.c.l.b16 %v316
  %v1509 = vunpack.c.h.b16 %v316
  %v1510 = vunpack.c.l.b16 %v317
  %v1511 = vunpack.c.h.b16 %v317
  %v1512 = vunpack.c.l.b16 %v318
  %v1513 = vunpack.c.h.b16 %v318
  %v1514 = vunpack.c.l.b16 %v319
  %v1515 = vunpack.c.h.b16 %v319
  %v1516 = vunpack.c.l.b16 %v320
  %v1517 = vunpack.c.h.b16 %v320
  %v1518 = vunpack.c.l.b16 %v321
  %v1519 = vunpack.c.h.b16 %v321
  %v1520 = vunpack.c.l.b16 %v322
  %v1521 = vunpack.c.h.b16 %v322
  %v1522 = vunpack.c.l.b16 %v323
  %v1523 = vunpack.c.h.b16 %v323
  %v1524 = vunpack.c.l.b16 %v324
  %v1525 = vunpack.c.h.b16 %v324
  %v1526 = vunpack.c.l.b16 %v325
  %v1527 = vunpack.c.h.b16 %v325
  %v1528 = vunpack.c.l.b16 %v326
  %v1529 = vunpack.c.h.b16 %v326
  %v1530 = vunpack.c.l.b16 %v327
  %v1531 = vunpack.c.h.b16 %v327
  %v1532 = vunpack.c.l.b16 %v328
  %v1533 = vunpack.c.h.b16 %v328
  %v1534 = vunpack.c.l.b16 %v329
  %v1535 = vunpack.c.h.b16 %v329
  %v1536 = vunpack.c.l.b16 %v330
  %v1537 = vunpack.c.h.b16 %v330
  %v1538 = vunpack.c.l.b16 %v331
  %v1539 = vunpack.c.h.b16 %v331
  %v1540 = vunpack.c.l.b16 %v332
  %v1541 = vunpack.c.h.b16 %v332
  %v1542 = vunpack.c.l.b16 %v333
  %v1543 = vunpack.c.h.b16 %v333
  %v1544 = vunpack.c.l.b16 %v334
  %v1545 = vunpack.c.h.b16 %v334
  %v1546 = vunpack.c.l.b16 %v335
  %v1547 = vunpack.c.h.b16 %v335
  %v1548 = vunpack.c.l.b16 %v336
  %v1549 = vunpack.c.h.b16 %v336
  %v1550 = vunpack.c.l.b16 %v337
  %v1551 = vunpack.c.h.b16 %v337
  %v1552 = vunpack.c.l.b16 %v338
  %v1553 = vunpack.c.h.b16 %v338
  %v1554 = vunpack.c.l.b16 %v339
  %v1555 = vunpack.c.h.b16 %v339
  %v1556 = vunpack.c.l.b16 %v340
  %v1557 = vunpack.c.h.b16 %v340
  %v1558 = vunpack.c.l.b16 %v341
  %v1559 = vunpack.c.h.b16 %v341
  %v1560 = vunpack.c.l.b16 %v342
  %v1561 = vunpack.c.h.b16 %v342
  %v1562 = vunpack.c.l.b16 %v343
  %v1563 = vunpack.c.h.b16 %v343
  %v1564 = vunpack.c.l.b16 %v344
  %v1565 = vunpack.c.h.b16 %v344
  %v1566 = vunpack.c.l.b16 %v345
  %v1567 = vunpack.c.h.b16 %v345
  %v1568 = vunpack.c.l.b16 %v346
  %v1569 = vunpack.c.h.b16 %v346
  %v1570 = vunpack.c.l.b16 %v347
  %v1571 = vunpack.c.h.b16 %v347
  %v1572 = vunpack.c.l.b16 %v348
  %v1573 = vunpack.c.h.b16 %v348
  %v1574 = vunpack.c.l.b16 %v349
  %v1575 = vunpack.c.h.b16 %v349
  %v1576 = vunpack.c.l.b16 %v350
  %v1577 = vunpack.c.h.b16 %v350
  %v1578 = vunpack.c.l.b16 %v351
  %v1579 = vunpack.c.h.b16 %v351
  %v1580 = vunpack.c.l.b16 %v352
  %v1581 = vunpack.c.h.b16 %v352
  %v1582 = vunpack.c.l.b16 %v353
  %v1583 = vunpack.c.h.b16 %v353
  %v1584 = vunpack.c.l.b16 %v354
  %v1585 = vunpack.c.h.b16 %v354
  %v1586 = vunpack.c.l.b16 %v355
  %v1587 = vunpack.c.h.b16 %v355
  %v1588 = vunpack.c.l.b16 %v356
  %v1589 = vunpack.c.h.b16 %v356
  %v1590 = vunpack.c.l.b16 %v357
  %v1591 = vunpack.c.h.b16 %v357
  %v1592 = vunpack.c.l.b16 %v358
  %v1593 = vunpack.c.h.b16 %v358
  %v1594 = vunpack.c.l.b16 %v359
  %v1595 = vunpack.c.h.b16 %v359
  %v1596 = vunpack.c.l.b16 %v360
  %v1597 = vunpack.c.h.b16 %v360
  %v1598 = vunpack.c.l.b16 %v361
  %v1599 = vunpack.c.h.b16 %v361
  %v1600 = vunpack.c.l.b16 %v362
  %v1601 = vunpack.c.h.b16 %v362
  %v1602 = vunpack.c.l.b16 %v363
  %v1603 = vunpack.c.h.b16 %v363
  %v1604 = vunpack.c.l.b16 %v364
  %v1605 = vunpack.c.h.b16 %v364
  %v1606 = vunpack.c.l.b16 %v365
  %v1607 = vunpack.c.h.b16 %v365
  %v1608 = vunpack.c.l.b16 %v366
  %v1609 = vunpack.c.h.b16 %v366
  %v1610 = vunpack.c.l.b16 %v367
  %v1611 = vunpack.c.h.b16 %v367
  %v1612 = vunpack.c.l.b16 %v368
  %v1613 = vunpack.c.h.b16 %v368
  %v1614 = vunpack.c.l.b16 %v369
  %v1615 = vunpack.c.h.b16 %v369
  %v1616 = vunpack.c.l.b16 %v370
  %v1617 = vunpack.c.h.b16 %v370
  %v1618 = vunpack.c.l.b16 %v371
  %v1619 = vunpack.c.h.b16 %v371
  %v1620 = vunpack.c.l.b16 %v372
  %v1621 = vunpack.c.h.b16 %v372
  %v1622 = vunpack.c.l.b16 %v373
  %v1623 = vunpack.c.h.b16 %v373
  %v1624 = vunpack.c.l.b16 %v374
  %v1625 = vunpack.c.h.b16 %v374
  %v1626 = vunpack.c.l.b16 %v375
  %v1627 = vunpack.c.h.b16 %v375
  %v1628 = vunpack.c.l.b16 %v376
  %v1629 = vunpack.c.h.b16 %v376
  %v1630 = vunpack.c.l.b16 %v377
  %v1631 = vunpack.c.h.b16 %v377
  %v1632 = vunpack.c.l.b16 %v378
  %v1633 = vunpack.c.h.b16 %v378
  %v1634 = vunpack.c.l.b16 %v379
  %v1635 = vunpack.c.h.b16 %v379
  %v1636 = vunpack.c.l.b16 %v380
  %v1637 = vunpack.c.h.b16 %v380
  %v1638 = vunpack.c.l.b16 %v381
  %v1639 = vunpack.c.h.b16 %v381
  %v1640 = vunpack.c.l.b16 %v382
  %v1641 = vunpack.c.h.b16 %v382
  %v1642 = vunpack.c.l.b16 %v383
  %v1643 = vunpack.c.h.b16 %v383
  %v1644 = vunpack.c.l.b16 %v384
  %v1645 = vunpack.c.h.b16 %v384
  %v1646 = vunpack.c.l.b16 %v385
  %v1647 = vunpack.c.h.b16 %v385
  %v1648 = vunpack.c.l.b16 %v386
  %v1649 = vunpack.c.h.b16 %v386
  %v1650 = vunpack.c.l.b16 %v387
  %v1651 = vunpack.c.h.b16 %v387
  %v1652 = vunpack.c.l.b16 %v388
  %v1653 = vunpack.c.h.b16 %v388
  %v1654 = vunpack.c.l.b16 %v389
  %v1655 = vunpack.c.h.b16 %v389
  %v1656 = vunpack.c.l.b16 %v390
  %v1657 = vunpack.c.h.b16 %v390
  %v1658 = vunpack.c.l.b16 %v391
  %v1659 = vunpack.c.h.b16 %v391
  %v1660 = vunpack.c.l.b16 %v392
  %v1661 = vunpack.c.h.b16 %v392
  %v1662 = vunpack.c.l.b16 %v393
  %v1663 = vunpack.c.h.b16 %v393
  %v1664 = vunpack.c.l.b16 %v394
  %v1665 = vunpack.c.h.b16 %v394
  %v1666 = vunpack.c.l.b16 %v395
  %v1667 = vunpack.c.h.b16 %v395
  %v1668 = vunpack.c.l.b16 %v396
  %v1669 = vunpack.c.h.b16 %v396
  %v1670 = vunpack.c.l.b16 %v397
  %v1671 = vunpack.c.h.b16 %v397
  %v1672 = vunpack.c.l.b16 %v398
  %v1673 = vunpack.c.h.b16 %v398
  %v1674 = vunpack.c.l.b16 %v399
  %v1675 = vunpack.c.h.b16 %v399
  %v1676 = vunpack.c.l.b16 %v400
  %v1677 = vunpack.c.h.b16 %v400
  %v1678 = vunpack.c.l.b16 %v401
  %v1679 = vunpack.c.h.b16 %v401
  %v1680 = vunpack.c.l.b16 %v402
  %v1681 = vunpack.c.h.b16 %v402
  %v1682 = vunpack.c.l.b16 %v403
  %v1683 = vunpack.c.h.b16 %v403
  %v1684 = vunpack.c.l.b16 %v404
  %v1685 = vunpack.c.h.b16 %v404
  %v1686 = vunpack.c.l.b16 %v405
  %v1687 = vunpack.c.h.b16 %v405
  %v1688 = vunpack.c.l.b16 %v406
  %v1689 = vunpack.c.h.b16 %v406
  %v1690 = vunpack.c.l.b16 %v407
  %v1691 = vunpack.c.h.b16 %v407
  %v1692 = vunpack.c.l.b16 %v408
  %v1693 = vunpack.c.h.b16 %v408
  %v1694 = vunpack.c.l.b16 %v409
  %v1695 = vunpack.c.h.b16 %v409
  %v1696 = vunpack.c.l.b16 %v410
  %v1697 = vunpack.c.h.b16 %v410
  %v1698 = vunpack.c.l.b16 %v411
  %v1699 = vunpack.c.h.b16 %v411
  %v1700 = vunpack.c.l.b16 %v412
  %v1701 = vunpack.c.h.b16 %v412
  %v1702 = vunpack.c.l.b16 %v413
  %v1703 = vunpack.c.h.b16 %v413
  %v1704 = vunpack.c.l.b16 %v414
  %v1705 = vunpack.c.h.b16 %v414
  %v1706 = vunpack.c.l.b16 %v415
  %v1707 = vunpack.c.h.b16 %v415
  %v1708 = vunpack.c.l.b16 %v416
  %v1709 = vunpack.c.h.b16 %v416
  %v1710 = vunpack.c.l.b16 %v417
  %v1711 = vunpack.c.h.b16 %v417
  %v1712 = vunpack.c.l.b16 %v418
  %v1713 = vunpack.c.h.b16 %v418
  %v1714 = vunpack.c.l.b16 %v419
  %v1715 = vunpack.c.h.b16 %v419
  %v1716 = vunpack.c.l.b16 %v420
  %v1717 = vunpack.c.h.b16 %v420
  %v1718 = vunpack.c.l.b16 %v421
  %v1719 = vunpack.c.h.b16 %v421
  %v1720 = vunpack.c.l.b16 %v422
  %v1721 = vunpack.c.h.b16 %v422
  %v1722 = vunpack.c.l.b16 %v423
  %v1723 = vunpack.c.h.b16 %v423
  %v1724 = vunpack.c.l.b16 %v424
  %v1725 = vunpack.c.h.b16 %v424
  %v1726 = vunpack.c.l.b16 %v425
  %v1727 = vunpack.c.h.b16 %v425
  %v1728 = vunpack.c.l.b16 %v426
  %v1729 = vunpack.c.h.b16 %v426
  %v1730 = vunpack.c.l.b16 %v427
  %v1731 = vunpack.c.h.b16 %v427
  %v1732 = vunpack.c.l.b16 %v428
  %v1733 = vunpack.c.h.b16 %v428
  %v1734 = vunpack.c.l.b16 %v429
  %v1735 = vunpack.c.h.b16 %v429
  %v1736 = vunpack.c.l.b16 %v430
  %v1737 = vunpack.c.h.b16 %v430
  %v1738 = vunpack.c.l.b16 %v431
  %v1739 = vunpack.c.h.b16 %v431
  %v1740 = vunpack.c.l.b16 %v432
  %v1741 = vunpack.c.h.b16 %v432
  %v1742 = vunpack.c.l.b16 %v433
  %v1743 = vunpack.c.h.b16 %v433
  %v1744 = vunpack.c.l.b16 %v434
  %v1745 = vunpack.c.h.b16 %v434
  %v1746 = vunpack.c.l.b16 %v435
  %v1747 = vunpack.c.h.b16 %v435
  %v1748 = vunpack.c.l.b16 %v436
  %v1749 = vunpack.c.h.b16 %v436
  %v1750 = vunpack.c.l.b16 %v437
  %v1751 = vunpack.c.h.b16 %v437
  %v1752 = vunpack.c.l.b16 %v438
  %v1753 = vunpack.c.h.b16 %v438
  %v1754 = vunpack.c.l.b16 %v439
  %v1755 = vunpack.c.h.b16 %v439
  %v1756 = vunpack.c.l.b16 %v440
  %v1757 = vunpack.c.h.b16 %v440
  %v1758 = vunpack.c.l.b16 %v441
  %v1759 = vunpack.c.h.b16 %v441
  %v1760 = vunpack.c.l.b16 %v442
  %v1761 = vunpack.c.h.b16 %v442
  %v1762 = vunpack.c.l.b16 %v443
  %v1763 = vunpack.c.h.b16 %v443
  %v1764 = vunpack.c.l.b16 %v444
  %v1765 = vunpack.c.h.b16 %v444
  %v1766 = vunpack.c.l.b16 %v445
  %v1767 = vunpack.c.h.b16 %v445
  %v1768 = vunpack.c.l.b16 %v446
  %v1769 = vunpack.c.h.b16 %v446
  %v1770 = vunpack.c.l.b16 %v447
  %v1771 = vunpack.c.h.b16 %v447
  %v1772 = vunpack.c.l.b16 %v448
  %v1773 = vunpack.c.h.b16 %v448
  %v1774 = vunpack.c.l.b16 %v449
  %v1775 = vunpack.c.h.b16 %v449
  %v1776 = vunpack.c.l.b16 %v450
  %v1777 = vunpack.c.h.b16 %v450
  %v1778 = vunpack.c.l.b16 %v451
  %v1779 = vunpack.c.h.b16 %v451
  %v1780 = vpack.c.b16 %v974, %v912
  %v1781 = vpack.c.b16 %v975, %v913
  %v1782 = vpack.c.b16 %v976, %v914
  %v1783 = vpack.c.b16 %v977, %v915
  %v1784 = vpack.c.b16 %v978, %v916
  %v1785 = vpack.c.b16 %v979, %v917
  %v1786 = vpack.c.b16 %v980, %v918
  %v1787 = vpack.c.b16 %v981, %v919
  %v1788 = vpack.c.b16 %v982, %v920
  %v1789 = vpack.c.b16 %v983, %v921
  %v1790 = vpack.c.b16 %v984, %v922
  %v1791 = vpack.c.b16 %v985, %v923
  %v1792 = vpack.c.b16 %v986, %v924
  %v1793 = vpack.c.b16 %v987, %v925
  %v1794 = vpack.c.b16 %v988, %v926
  %v1795 = vpack.c.b16 %v989, %v927
  %v1796 = vpack.c.b16 %v990, %v928
  %v1797 = vpack.c.b16 %v991, %v929
  %v1798 = vpack.c.b16 %v992, %v930
  %v1799 = vpack.c.b16 %v993, %v931
  %v1800 = vpack.c.b16 %v994, %v932
  %v1801 = vpack.c.b16 %v995, %v933
  %v1802 = vpack.c.b16 %v996, %v934
  %v1803 = vpack.c.b16 %v997, %v935
  %v1804 = vpack.c.b16 %v998, %v936
  %v1805 = vpack.c.b16 %v999, %v937
  %v1806 = vpack.c.b16 %v1000, %v938
  %v1807 = vpack.c.b16 %v1001, %v939
  %v1808 = vpack.c.b16 %v1002, %v940
  %v1809 = vpack.c.b16 %v1003, %v941
  %v1810 = vpack.c.b16 %v1004, %v942
  %v1811 = vpack.c.b16 %v1005, %v943
  %v1812 = vpack.c.b16 %v1006, %v944
  %v1813 = vpack.c.b16 %v1007, %v945
  %v1814 = vpack.c.b16 %v1008, %v946
  %v1815 = vpack.c.b16 %v1009, %v947
  %v1816 = vpack.c.b16 %v1010, %v948
  %v1817 = vpack.c.b16 %v1011, %v949
  %v1818 = vpack.c.b16 %v1012, %v950
  %v1819 = vpack.c.b16 %v1013, %v951
  %v1820 = vpack.c.b16 %v1014, %v952
  %v1821 = vpack.c.b16 %v1015, %v953
  %v1822 = vpack.c.b16 %v1016, %v954
  %v1823 = vpack.c.b16 %v1017, %v955
  %v1824 = vpack.c.b16 %v1018, %v956
  %v1825 = vpack.c.b16 %v1019, %v957
  %v1826 = vpack.c.b16 %v1020, %v958
  %v1827 = vpack.c.b16 %v1021, %v959
  %v1828 = vpack.c.b16 %v1022, %v960
  %v1829 = vpack.c.b16 %v1023, %v961
  %v1830 = vpack.c.b16 %v1024, %v962
  %v1831 = vpack.c.b16 %v1025, %v963
  %v1832 = vpack.c.b16 %v1026, %v964
  %v1833 = vpack.c.b16 %v1027, %v965
  %v1834 = vpack.c.b16 %v1028, %v966
  %v1835 = vpack.c.b16 %v1029, %v967
  %v1836 = vpack.c.b16 %v1030, %v968
  %v1837 = vpack.c.b16 %v1031, %v969
  %v1838 = vpack.c.b16 %v1032, %v970
  %v1839 = vpack.c.b16 %v1033, %v971
  %v1840 = vpack.c.b16 %v1034, %v972
  %v1841 = vpack.c.b16 %v1035, %v973
  %v1842 = vpack.c.b16 %v1098, %v1036
  %v1843 = vpack.c.b16 %v1099, %v1037
  %v1844 = vpack.c.b16 %v1100, %v1038
  %v1845 = vpack.c.b16 %v1101, %v1039
  %v1846 = vpack.c.b16 %v1102, %v1040
  %v1847 = vpack.c.b16 %v1103, %v1041
  %v1848 = vpack.c.b16 %v1104, %v1042
  %v1849 = vpack.c.b16 %v1105, %v1043
  %v1850 = vpack.c.b16 %v1106, %v1044
  %v1851 = vpack.c.b16 %v1107, %v1045
  %v1852 = vpack.c.b16 %v1108, %v1046
  %v1853 = vpack.c.b16 %v1109, %v1047
  %v1854 = vpack.c.b16 %v1110, %v1048
  %v1855 = vpack.c.b16 %v1111, %v1049
  %v1856 = vpack.c.b16 %v1112, %v1050
  %v1857 = vpack.c.b16 %v1113, %v1051
  %v1858 = vpack.c.b16 %v1114, %v1052
  %v1859 = vpack.c.b16 %v1115, %v1053
  %v1860 = vpack.c.b16 %v1116, %v1054
  %v1861 = vpack.c.b16 %v1117, %v1055
  %v1862 = vpack.c.b16 %v1118, %v1056
  %v1863 = vpack.c.b16 %v1119, %v1057
  %v1864 = vpack.c.b16 %v1120, %v1058
  %v1865 = vpack.c.b16 %v1121, %v1059
  %v1866 = vpack.c.b16 %v1122, %v1060
  %v1867 = vpack.c.b16 %v1123, %v1061
  %v1868 = vpack.c.b16 %v1124, %v1062
  %v1869 = vpack.c.b16 %v1125, %v1063
  %v1870 = vpack.c.b16 %v1126, %v1064
  %v1871 = vpack.c.b16 %v1127, %v1065
  %v1872 = vpack.c.b16 %v1128, %v1066
  %v1873 = vpack.c.b16 %v1129, %v1067
  %v1874 = vpack.c.b16 %v1130, %v1068
  %v1875 = vpack.c.b16 %v1131, %v1069
  %v1876 = vpack.c.b16 %v1132, %v1070
  %v1877 = vpack.c.b16 %v1133, %v1071
  %v1878 = vpack.c.b16 %v1134, %v1072
  %v1879 = vpack.c.b16 %v1135, %v1073
  %v1880 = vpack.c.b16 %v1136, %v1074
  %v1881 = vpack.c.b16 %v1137, %v1075
  %v1882 = vpack.c.b16 %v1138, %v1076
  %v1883 = vpack.c.b16 %v1139, %v1077
  %v1884 = vpack.c.b16 %v1140, %v1078
  %v1885 = vpack.c.b16 %v1141, %v1079
  %v1886 = vpack.c.b16 %v1142, %v1080
  %v1887 = vpack.c.b16 %v1143, %v1081
  %v1888 = vpack.c.b16 %v1144, %v1082
  %v1889 = vpack.c.b16 %v1145, %v1083
  %v1890 = vpack.c.b16 %v1146, %v1084
  %v1891 = vpack.c.b16 %v1147, %v1085
  %v1892 = vpack.c.b16 %v1148, %v1086
  %v1893 = vpack.c.b16 %v1149, %v1087
  %v1894 = vpack.c.b16 %v1150, %v1088
  %v1895 = vpack.c.b16 %v1151, %v1089
  %v1896 = vpack.c.b16 %v1152, %v1090
  %v1897 = vpack.c.b16 %v1153, %v1091
  %v1898 = vpack.c.b16 %v1154, %v1092
  %v1899 = vpack.c.b16 %v1155, %v1093
  %v1900 = vpack.c.b16 %v1156, %v1094
  %v1901 = vpack.c.b16 %v1157, %v1095
  %v1902 = vpack.c.b16 %v1158, %v1096
  %v1903 = vpack.c.b16 %v1159, %v1097
  %v1904 = vpack.c.b16 %v1222, %v1160
  %v1905 = vpack.c.b16 %v1223, %v1161
  %v1906 = vpack.c.b16 %v1224, %v1162
  %v1907 = vpack.c.b16 %v1225, %v1163
  %v1908 = vpack.c.b16 %v1226, %v1164
  %v1909 = vpack.c.b16 %v1227, %v1165
  %v1910 = vpack.c.b16 %v1228, %v1166
  %v1911 = vpack.c.b16 %v1229, %v1167
  %v1912 = vpack.c.b16 %v1230, %v1168
  %v1913 = vpack.c.b16 %v1231, %v1169
  %v1914 = vpack.c.b16 %v1232, %v1170
  %v1915 = vpack.c.b16 %v1233, %v1171
  %v1916 = vpack.c.b16 %v1234, %v1172
  %v1917 = vpack.c.b16 %v1235, %v1173
  %v1918 = vpack.c.b16 %v1236, %v1174
  %v1919 = vpack.c.b16 %v1237, %v1175
  %v1920 = vpack.c.b16 %v1238, %v1176
  %v1921 = vpack.c.b16 %v1239, %v1177
  %v1922 = vpack.c.b16 %v1240, %v1178
  %v1923 = vpack.c.b16 %v1241, %v1179
  %v1924 = vpack.c.b16 %v1242, %v1180
  %v1925 = vpack.c.b16 %v1243, %v1181
  %v1926 = vpack.c.b16 %v1244, %v1182
  %v1927 = vpack.c.b16 %v1245, %v1183
  %v1928 = vpack.c.b16 %v1246, %v1184
  %v1929 = vpack.c.b16 %v1247, %v1185
  %v1930 = vpack.c.b16 %v1248, %v1186
  %v1931 = vpack.c.b16 %v1249, %v1187
  %v1932 = vpack.c.b16 %v1250, %v1188
  %v1933 = vpack.c.b16 %v1251, %v1189
  %v1934 = vpack.c.b16 %v1252, %v1190
  %v1935 = vpack.c.b16 %v1253, %v1191
  %v1936 = vpack.c.b16 %v1254, %v1192
  %v1937 = vpack.c.b16 %v1255, %v1193
  %v1938 = vpack.c.b16 %v1256, %v1194
  %v1939 = vpack.c.b16 %v1257, %v1195
  %v1940 = vpack.c.b16 %v1258, %v1196
  %v1941 = vpack.c.b16 %v1259, %v1197
  %v1942 = vpack.c.b16 %v1260, %v1198
  %v1943 = vpack.c.b16 %v1261, %v1199
  %v1944 = vpack.c.b16 %v1262, %v1200
  %v1945 = vpack.c.b16 %v1263, %v1201
  %v1946 = vpack.c.b16 %v1264, %v1202
  %v1947 = vpack.c.b16 %v1265, %v1203
  %v1948 = vpack.c.b16 %v1266, %v1204
  %v1949 = vpack.c.b16 %v1267, %v1205
  %v1950 = vpack.c.b16 %v1268, %v1206
  %v1951 = vpack.c.b16 %v1269, %v1207
  %v1952 = vpack.c.b16 %v1270, %v1208
  %v1953 = vpack.c.b16 %v1271, %v1209
  %v1954 = vpack.c.b16 %v1272, %v1210
  %v1955 = vpack.c.b16 %v1273, %v1211
  %v1956 = vpack.c.b16 %v1274, %v1212
  %v1957 = vpack.c.b16 %v1275, %v1213
  %v1958 = vpack.c.b16 %v1276, %v1214
  %v1959 = vpack.c.b16 %v1277, %v1215
  %v1960 = vpack.c.b16 %v1278, %v1216
  %v1961 = vpack.c.b16 %v1279, %v1217
  %v1962 = vpack.c.b16 %v1280, %v1218
  %v1963 = vpack.c.b16 %v1281, %v1219
  %v1964 = vpack.c.b16 %v1282, %v1220
  %v1965 = vpack.c.b16 %v1283, %v1221
  %v1966 = vpack.c.b16 %v1346, %v1284
  %v1967 = vpack.c.b16 %v1347, %v1285
  %v1968 = vpack.c.b16 %v1348, %v1286
  %v1969 = vpack.c.b16 %v1349, %v1287
  %v1970 = vpack.c.b16 %v1350, %v1288
  %v1971 = vpack.c.b16 %v1351, %v1289
  %v1972 = vpack.c.b16 %v1352, %v1290
  %v1973 = vpack.c.b16 %v1353, %v1291
  %v1974 = vpack.c.b16 %v1354, %v1292
  %v1975 = vpack.c.b16 %v1355, %v1293
  %v1976 = vpack.c.b16 %v1356, %v1294
  %v1977 = vpack.c.b16 %v1357, %v1295
  %v1978 = vpack.c.b16 %v1358, %v1296
  %v1979 = vpack.c.b16 %v1359, %v1297
  %v1980 = vpack.c.b16 %v1360, %v1298
  %v1981 = vpack.c.b16 %v1361, %v1299
  %v1982 = vpack.c.b16 %v1362, %v1300
  %v1983 = vpack.c.b16 %v1363, %v1301
  %v1984 = vpack.c.b16 %v1364, %v1302
  %v1985 = vpack.c.b16 %v1365, %v1303
  %v1986 = vpack.c.b16 %v1366, %v1304
  %v1987 = vpack.c.b16 %v1367, %v1305
  %v1988 = vpack.c.b16 %v1368, %v1306
  %v1989 = vpack.c.b16 %v1369, %v1307
  %v1990 = vpack.c.b16 %v1370, %v1308
  %v1991 = vpack.c.b16 %v1371, %v1309
  %v1992 = vpack.c.b16 %v1372, %v1310
  %v1993 = vpack.c.b16 %v1373, %v1311
  %v1994 = vpack.c.b16 %v1374, %v1312
  %v1995 = vpack.c.b16 %v1375, %v1313
  %v1996 = vpack.c.b16 %v1376, %v1314
  %v1997 = vpack.c.b16 %v1377, %v1315
  %v1998 = vpack.c.b16 %v1378, %v1316
  %v1999 = vpack.c.b16 %v1379, %v1317
  %v2000 = vpack.c.b16 %v1380, %v1318
  %v2001 = vpack.c.b16 %v1381, %v1319
  %v2002 = vpack.c.b16 %v1382, %v1320
  %v2003 = vpack.c.b16 %v1383, %v1321
  %v2004 = vpack.c.b16 %v1384, %v1322
  %v2005 = vpack.c.b16 %v1385, %v1323
  %v2006 = vpack.c.b16 %v1386, %v1324
  %v2007 = vpack.c.b16 %v1387, %v1325
  %v2008 = vpack.c.b16 %v1388, %v1326
  %v2009 = vpack.c.b16 %v1389, %v1327
  %v2010 = vpack.c.b16 %v1390, %v1328
  %v2011 = vpack.c.b16 %v1391, %v1329
  %v2012 = vpack.c.b16 %v1392, %v1330
  %v2013 = vpack.c.b16 %v1393, %v1331
  %v2014 = vpack.c.b16 %v1394, %v1332
  %v2015 = vpack.c.b16 %v1395, %v1333
  %v2016 = vpack.c.b16 %v1396, %v1334
  %v2017 = vpack.c.b16 %v1397, %v1335
  %v2018 = vpack.c.b16 %v1398, %v1336
  %v2019 = vpack.c.b16 %v1399, %v1337
  %v2020 = vpack.c.b16 %v1400, %v1338
  %v2021 = vpack.c.b16 %v1401, %v1339
  %v2022 = vpack.c.b16 %v1402, %v1340
  %v2023 = vpack.c.b16 %v1403, %v1341
  %v2024 = vpack.c.b16 %v1404, %v1342
  %v2025 = vpack.c.b16 %v1405, %v1343
  %v2026 = vpack.c.b16 %v1406, %v1344
  %v2027 = vpack.c.b16 %v1407, %v1345
  %v2028 = vpack.c.b16 %v1470, %v1408
  %v2029 = vpack.c.b16 %v1471, %v1409
  %v2030 = vpack.c.b16 %v1472, %v1410
  %v2031 = vpack.c.b16 %v1473, %v1411
  %v2032 = vpack.c.b16 %v1474, %v1412
  %v2033 = vpack.c.b16 %v1475, %v1413
  %v2034 = vpack.c.b16 %v1476, %v1414
  %v2035 = vpack.c.b16 %v1477, %v1415
  %v2036 = vpack.c.b16 %v1478, %v1416
  %v2037 = vpack.c.b16 %v1479, %v1417
  %v2038 = vpack.c.b16 %v1480, %v1418
  %v2039 = vpack.c.b16 %v1481, %v1419
  %v2040 = vpack.c.b16 %v1482, %v1420
  %v2041 = vpack.c.b16 %v1483, %v1421
  %v2042 = vpack.c.b16 %v1484, %v1422
  %v2043 = vpack.c.b16 %v1485, %v1423
  %v2044 = vpack.c.b16 %v1486, %v1424
  %v2045 = vpack.c.b16 %v1487, %v1425
  %v2046 = vpack.c.b16 %v1488, %v1426
  %v2047 = vpack.c.b16 %v1489, %v1427
  %v2048 = vpack.c.b16 %v1490, %v1428
  %v2049 = vpack.c.b16 %v1491, %v1429
  %v2050 = vpack.c.b16 %v1492, %v1430
  %v2051 = vpack.c.b16 %v1493, %v1431
  %v2052 = vpack.c.b16 %v1494, %v1432
  %v2053 = vpack.c.b16 %v1495, %v1433
  %v2054 = vpack.c.b16 %v1496, %v1434
  %v2055 = vpack.c.b16 %v1497, %v1435
  %v2056 = vpack.c.b16 %v1498, %v1436
  %v2057 = vpack.c.b16 %v1499, %v1437
  %v2058 = vpack.c.b16 %v1500, %v1438
  %v2059 = vpack.c.b16 %v1501, %v1439
  %v2060 = vpack.c.b16 %v1502, %v1440
  %v2061 = vpack.c.b16 %v1503, %v1441
  %v2062 = vpack.c.b16 %v1504, %v1442
  %v2063 = vpack.c.b16 %v1505, %v1443
  %v2064 = vpack.c.b16 %v1506, %v1444
  %v2065 = vpack.c.b16 %v1507, %v1445
  %v2066 = vpack.c.b16 %v1508, %v1446
  %v2067 = vpack.c.b16 %v1509, %v1447
  %v2068 = vpack.c.b16 %v1510, %v1448
  %v2069 = vpack.c.b16 %v1511, %v1449
  %v2070 = vpack.c.b16 %v1512, %v1450
  %v2071 = vpack.c.b16 %v1513, %v1451
  %v2072 = vpack.c.b16 %v1514, %v1452
  %v2073 = vpack.c.b16 %v1515, %v1453
  %v2074 = vpack.c.b16 %v1516, %v1454
  %v2075 = vpack.c.b16 %v1517, %v1455
  %v2076 = vpack.c.b16 %v1518, %v1456
  %v2077 = vpack.c.b16 %v1519, %v1457
  %v2078 = vpack.c.b16 %v1520, %v1458
  %v2079 = vpack.c.b16 %v1521, %v1459
  %v2080 = vpack.c.b16 %v1522, %v1460
  %v2081 = vpack.c.b16 %v1523, %v1461
  %v2082 = vpack.c.b16 %v1524, %v1462
  %v2083 = vpack.c.b16 %v1525, %v1463
  %v2084 = vpack.c.b16 %v1526, %v1464
  %v2085 = vpack.c.b16 %v1527, %v1465
  %v2086 = vpack.c.b16 %v1528, %v1466
  %v2087 = vpack.c.b16 %v1529, %v1467
  %v2088 = vpack.c.b16 %v1530, %v1468
  %v2089 = vpack.c.b16 %v1531, %v1469
  %v2090 = vpack.c.b16 %v1594, %v1532
  %v2091 = vpack.c.b16 %v1595, %v1533
  %v2092 = vpack.c.b16 %v1596, %v1534
  %v2093 = vpack.c.b16 %v1597, %v1535
  %v2094 = vpack.c.b16 %v1598, %v1536
  %v2095 = vpack.c.b16 %v1599, %v1537
  %v2096 = vpack.c.b16 %v1600, %v1538
  %v2097 = vpack.c.b16 %v1601, %v1539
  %v2098 = vpack.c.b16 %v1602, %v1540
  %v2099 = vpack.c.b16 %v1603, %v1541
  %v2100 = vpack.c.b16 %v1604, %v1542
  %v2101 = vpack.c.b16 %v1605, %v1543
  %v2102 = vpack.c.b16 %v1606, %v1544
  %v2103 = vpack.c.b16 %v1607, %v1545
  %v2104 = vpack.c.b16 %v1608, %v1546
  %v2105 = vpack.c.b16 %v1609, %v1547
  %v2106 = vpack.c.b16 %v1610, %v1548
  %v2107 = vpack.c.b16 %v1611, %v1549
  %v2108 = vpack.c.b16 %v1612, %v1550
  %v2109 = vpack.c.b16 %v1613, %v1551
  %v2110 = vpack.c.b16 %v1614, %v1552
  %v2111 = vpack.c.b16 %v1615, %v1553
  %v2112 = vpack.c.b16 %v1616, %v1554
  %v2113 = vpack.c.b16 %v1617, %v1555
  %v2114 = vpack.c.b16 %v1618, %v1556
  %v2115 = vpack.c.b16 %v1619, %v1557
  %v2116 = vpack.c.b16 %v1620, %v1558
  %v2117 = vpack.c.b16 %v1621, %v1559
  %v2118 = vpack.c.b16 %v1622, %v1560
  %v2119 = vpack.c.b16 %v1623, %v1561
  %v2120 = vpack.c.b16 %v1624, %v1562
  %v2121 = vpack.c.b16 %v1625, %v1563
  %v2122 = vpack.c.b16 %v1626, %v1564
  %v2123 = vpack.c.b16 %v1627, %v1565
  %v2124 = vpack.c.b16 %v1628, %v1566
  %v2125 = vpack.c.b16 %v1629, %v1567
  %v2126 = vpack.c.b16 %v1630, %v1568
  %v2127 = vpack.c.b16 %v1631, %v1569
  %v2128 = vpack.c.b16 %v1632, %v1570
  %v2129 = vpack.c.b16 %v1633, %v1571
  %v2130 = vpack.c.b16 %v1634, %v1572
  %v2131 = vpack.c.b16 %v1635, %v1573
  %v2132 = vpack.c.b16 %v1636, %v1574
  %v2133 = vpack.c.b16 %v1637, %v1575
  %v2134 = vpack.c.b16 %v1638, %v1576
  %v2135 = vpack.c.b16 %v1639, %v1577
  %v2136 = vpack.c.b16 %v1640, %v1578
  %v2137 = vpack.c.b16 %v1641, %v1579
  %v2138 = vpack.c.b16 %v1642, %v1580
  %v2139 = vpack.c.b16 %v1643, %v1581
  %v2140 = vpack.c.b16 %v1644, %v1582
  %v2141 = vpack.c.b16 %v1645, %v1583
  %v2142 = vpack.c.b16 %v1646, %v1584
  %v2143 = vpack.c.b16 %v1647, %v1585
  %v2144 = vpack.c.b16 %v1648, %v1586
  %v2145 = vpack.c.b16 %v1649, %v1587
  %v2146 = vpack.c.b16 %v1650, %v1588
  %v2147 = vpack.c.b16 %v1651, %v1589
  %v2148 = vpack.c.b16 %v1652, %v1590
  %v2149 = vpack.c.b16 %v1653, %v1591
  %v2150 = vpack.c.b16 %v1654, %v1592
  %v2151 = vpack.c.b16 %v1655, %v1593
  %v2152 = vpack.c.b16 %v1718, %v1656
  %v2153 = vpack.c.b16 %v1719, %v1657
  %v2154 = vpack.c.b16 %v1720, %v1658
  %v2155 = vpack.c.b16 %v1721, %v1659
  %v2156 = vpack.c.b16 %v1722, %v1660
  %v2157 = vpack.c.b16 %v1723, %v1661
  %v2158 = vpack.c.b16 %v1724, %v1662
  %v2159 = vpack.c.b16 %v1725, %v1663
  %v2160 = vpack.c.b16 %v1726, %v1664
  %v2161 = vpack.c.b16 %v1727, %v1665
  %v2162 = vpack.c.b16 %v1728, %v1666
  %v2163 = vpack.c.b16 %v1729, %v1667
  %v2164 = vpack.c.b16 %v1730, %v1668
  %v2165 = vpack.c.b16 %v1731, %v1669
  %v2166 = vpack.c.b16 %v1732, %v1670
  %v2167 = vpack.c.b16 %v1733, %v1671
  %v2168 = vpack.c.b16 %v1734, %v1672
  %v2169 = vpack.c.b16 %v1735, %v1673
  %v2170 = vpack.c.b16 %v1736, %v1674
  %v2171 = vpack.c.b16 %v1737, %v1675
  %v2172 = vpack.c.b16 %v1738, %v1676
  %v2173 = vpack.c.b16 %v1739, %v1677
  %v2174 = vpack.c.b16 %v1740, %v1678
  %v2175 = vpack.c.b16 %v1741, %v1679
  %v2176 = vpack.c.b16 %v1742, %v1680
  %v2177 = vpack.c.b16 %v1743, %v1681
  %v2178 = vpack.c.b16 %v1744, %v1682
  %v2179 = vpack.c.b16 %v1745, %v1683
  %v2180 = vpack.c.b16 %v1746, %v1684
  %v2181 = vpack.c.b16 %v1747, %v1685
  %v2182 = vpack.c.b16 %v1748, %v1686
  %v2183 = vpack.c.b16 %v1749, %v1687
  %v2184 = vpack.c.b16 %v1750, %v1688
  %v2185 = vpack.c.b16 %v1751, %v1689
  %v2186 = vpack.c.b16 %v1752, %v1690
  %v2187 = vpack.c.b16 %v1753, %v1691
  %v2188 = vpack.c.b16 %v1754, %v1692
  %v2189 = vpack.c.b16 %v1755, %v1693
  %v2190 = vpack.c.b16 %v1756, %v1694
  %v2191 = vpack.c.b16 %v1757, %v1695
  %v2192 = vpack.c.b16 %v1758, %v1696
  %v2193 = vpack.c.b16 %v1759, %v1697
  %v2194 = vpack.c.b16 %v1760, %v1698
  %v2195 = vpack.c.b16 %v1761, %v1699
  %v2196 = vpack.c.b16 %v1762, %v1700
  %v2197 = vpack.c.b16 %v1763, %v1701
  %v2198 = vpack.c.b16 %v1764, %v1702
  %v2199 = vpack.c.b16 %v1765, %v1703
  %v2200 = vpack.c.b16 %v1766, %v1704
  %v2201 = vpack.c.b16 %v1767, %v1705
  %v2202 = vpack.c.b16 %v1768, %v1706
  %v2203 = vpack.c.b16 %v1769, %v1707
  %v2204 = vpack.c.b16 %v1770, %v1708
  %v2205 = vpack.c.b16 %v1771, %v1709
  %v2206 = vpack.c.b16 %v1772, %v1710
  %v2207 = vpack.c.b16 %v1773, %v1711
  %v2208 = vpack.c.b16 %v1774, %v1712
  %v2209 = vpack.c.b16 %v1775, %v1713
  %v2210 = vpack.c.b16 %v1776, %v1714
  %v2211 = vpack.c.b16 %v1777, %v1715
  %v2212 = vpack.c.b16 %v1778, %v1716
  %v2213 = vpack.c.b16 %v1779, %v1717
  %vm2586 = vcmask 883712
  %v2588 = vsel %vm2586, %v476, 0
  %v2591 = vsel %vm2586, %v477, 0
  %vm2593 = vcmask 1045504
  %v2595 = vsel %vm2593, %v2152, 0
  %v2598 = vsel %vm2593, %v2153, 0
  %v2601 = vsel %vm2593, %v2154, 0
  %v2604 = vsel %vm2593, %v2155, 0
  %v2607 = vsel %vm2593, %v2156, 0
  %v2610 = vsel %vm2593, %v2157, 0
  %v2613 = vsel %vm2593, %v2158, 0
  %v2616 = vsel %vm2593, %v2159, 0
  %v2619 = vsel %vm2593, %v2160, 0
  %v2622 = vsel %vm2593, %v2161, 0
  %v2625 = vsel %vm2593, %v2162, 0
  %v2628 = vsel %vm2593, %v2163, 0
  %v2631 = vsel %vm2593, %v2164, 0
  %v2634 = vsel %vm2593, %v2165, 0
  %v2637 = vsel %vm2593, %v2166, 0
  %v2640 = vsel %vm2593, %v2167, 0
  %v2643 = vsel %vm2593, %v2168, 0
  %v2646 = vsel %vm2593, %v2169, 0
  %v2649 = vsel %vm2593, %v2170, 0
  %v2652 = vsel %vm2593, %v2171, 0
  %v2655 = vsel %vm2593, %v2172, 0
  %v2658 = vsel %vm2593, %v2173, 0
  %v2661 = vsel %vm2593, %v2174, 0
  %v2664 = vsel %vm2593, %v2175, 0
  %v2667 = vsel %vm2593, %v2176, 0
  %v2670 = vsel %vm2593, %v2177, 0
  %v2673 = vsel %vm2593, %v2178, 0
  %v2676 = vsel %vm2593, %v2179, 0
  %v2679 = vsel %vm2593, %v2180, 0
  %v2682 = vsel %vm2593, %v2181, 0
  %v2685 = vsel %vm2593, %v2182, 0
  %v2688 = vsel %vm2593, %v2183, 0
  %v2691 = vsel %vm2593, %v2184, 0
  %v2694 = vsel %vm2593, %v2185, 0
  %v2697 = vsel %vm2593, %v2186, 0
  %v2700 = vsel %vm2593, %v2187, 0
  %v2703 = vsel %vm2593, %v2188, 0
  %v2706 = vsel %vm2593, %v2189, 0
  %v2709 = vsel %vm2593, %v2190, 0
  %v2712 = vsel %vm2593, %v2191, 0
  %v2715 = vsel %vm2593, %v2192, 0
  %v2718 = vsel %vm2593, %v2193, 0
  %v2721 = vsel %vm2593, %v2194, 0
  %v2724 = vsel %vm2593, %v2195, 0
  %v2727 = vsel %vm2593, %v2196, 0
  %v2730 = vsel %vm2593, %v2197, 0
  %v2733 = vsel %vm2593, %v2198, 0
  %v2736 = vsel %vm2593, %v2199, 0
  %v2739 = vsel %vm2593, %v2200, 0
  %v2742 = vsel %vm2593, %v2201, 0
  %v2745 = vsel %vm2593, %v2202, 0
  %v2748 = vsel %vm2593, %v2203, 0
  %v2751 = vsel %vm2593, %v2204, 0
  %v2754 = vsel %vm2593, %v2205, 0
  %v2757 = vsel %vm2593, %v2206, 0
  %v2760 = vsel %vm2593, %v2207, 0
  %v2763 = vsel %vm2593, %v2208, 0
  %v2766 = vsel %vm2593, %v2209, 0
  %v2769 = vsel %vm2593, %v2210, 0
  %v2772 = vsel %vm2593, %v2211, 0
  %v2775 = vsel %vm2593, %v2212, 0
  %v2778 = vsel %vm2593, %v2213, 0
  %2780 = vmatprep.subr.bf16.mxu0 %v1781
  %2781 = vmatpush1.bf16.msra.mxu0 %v1780
  %2782 = vmatprep.subr.bf16.mxu0 %v1843
  %2783 = vmatpush1.bf16.msra.mxu0 %v1842
  %2784 = vmatprep.subr.bf16.mxu0 %v1905
  %2785 = vmatpush1.bf16.msra.mxu0 %v1904
  %2786 = vmatprep.subr.bf16.mxu0 %v1967
  %2787 = vmatpush1.bf16.msra.mxu0 %v1966
  %2788 = vmatprep.subr.bf16.mxu0 %v2029
  %2789 = vmatpush1.bf16.msra.mxu0 %v2028
  %2790 = vmatprep.subr.bf16.mxu0 %v2091
  %2791 = vmatpush1.bf16.msra.mxu0 %v2090
  %2792 = vmatprep.subr.bf16.mxu0 %v2598
  %2793 = vmatpush1.bf16.msra.mxu0 %v2595
  %2794 = vmatprep.subr.bf16.mxu0 0
  %2795 = vmatpush1.bf16.msra.mxu0 0
  %2796 = vmatprep.subr.bf16.mxu0 0
  %2797 = vmatpush1.bf16.msra.mxu0 0
  %2798 = vmatprep.subr.bf16.mxu0 0
  %2799 = vmatpush1.bf16.msra.mxu0 0
  %2800 = vmatprep.subr.bf16.mxu0 0
  %2801 = vmatpush1.bf16.msra.mxu0 0
  %2802 = vmatprep.subr.bf16.mxu0 0
  %2803 = vmatpush1.bf16.msra.mxu0 0
  %2804 = vmatprep.subr.bf16.mxu0 0
  %2805 = vmatpush1.bf16.msra.mxu0 0
  %2806 = vmatprep.subr.bf16.mxu0 0
  %2807 = vmatpush1.bf16.msra.mxu0 0
  %2808 = vmatprep.subr.bf16.mxu0 0
  %2809 = vmatpush1.bf16.msra.mxu0 0
  %2810 = vmatprep.subr.bf16.mxu0 0
  %2811 = vmatpush1.bf16.msra.mxu0 0
  %2812 = vmatprep.mubr.bf16.mxu0 0
  %2813 = vmatmul.mubr.bf16.gmra.mrb[0].mxu0 %v2588
  %v2814 = vpop.f32.mrb[0].mxu0
  %v2815 = vadd.f32 %v458, %v2814
  %v2816 = vpop.f32.mrb[0].mxu0
  %v2817 = vadd.f32 %v458, %v2816
  %v2818 = vpop.f32.mrb[0].mxu0
  %v2819 = vadd.f32 %v463, %v2818
  %v2820 = vpop.f32.mrb[0].mxu0
  %v2821 = vadd.f32 %v463, %v2820
  %2822 = vmatprep.mubr.bf16.mxu0 0
  %2823 = vmatmul.mubr.bf16.gmra.mrb[0].mxu0 %v2591
  %v2824 = vpop.f32.mrb[0].mxu0
  %v2825 = vadd.f32 %v468, %v2824
  %v2826 = vpop.f32.mrb[0].mxu0
  %v2827 = vadd.f32 %v468, %v2826
  %v2828 = vpop.f32.mrb[0].mxu0
  %v2829 = vpop.f32.mrb[0].mxu0
  %2830 = vdwg.mxu0
  %2831 = vmatprep.subr.bf16.mxu0 %v1783
  %2832 = vmatpush1.bf16.msra.mxu0 %v1782
  %2833 = vmatprep.subr.bf16.mxu0 %v1845
  %2834 = vmatpush1.bf16.msra.mxu0 %v1844
  %2835 = vmatprep.subr.bf16.mxu0 %v1907
  %2836 = vmatpush1.bf16.msra.mxu0 %v1906
  %2837 = vmatprep.subr.bf16.mxu0 %v1969
  %2838 = vmatpush1.bf16.msra.mxu0 %v1968
  %2839 = vmatprep.subr.bf16.mxu0 %v2031
  %2840 = vmatpush1.bf16.msra.mxu0 %v2030
  %2841 = vmatprep.subr.bf16.mxu0 %v2093
  %2842 = vmatpush1.bf16.msra.mxu0 %v2092
  %2843 = vmatprep.subr.bf16.mxu0 %v2604
  %2844 = vmatpush1.bf16.msra.mxu0 %v2601
  %2845 = vmatprep.subr.bf16.mxu0 0
  %2846 = vmatpush1.bf16.msra.mxu0 0
  %2847 = vmatprep.subr.bf16.mxu0 0
  %2848 = vmatpush1.bf16.msra.mxu0 0
  %2849 = vmatprep.subr.bf16.mxu0 0
  %2850 = vmatpush1.bf16.msra.mxu0 0
  %2851 = vmatprep.subr.bf16.mxu0 0
  %2852 = vmatpush1.bf16.msra.mxu0 0
  %2853 = vmatprep.subr.bf16.mxu0 0
  %2854 = vmatpush1.bf16.msra.mxu0 0
  %2855 = vmatprep.subr.bf16.mxu0 0
  %2856 = vmatpush1.bf16.msra.mxu0 0
  %2857 = vmatprep.subr.bf16.mxu0 0
  %2858 = vmatpush1.bf16.msra.mxu0 0
  %2859 = vmatprep.subr.bf16.mxu0 0
  %2860 = vmatpush1.bf16.msra.mxu0 0
  %2861 = vmatprep.subr.bf16.mxu0 0
  %2862 = vmatpush1.bf16.msra.mxu0 0
  %2863 = vmatprep.mubr.bf16.mxu0 0
  %2864 = vmatmul.mubr.bf16.gmra.mrb[0].mxu0 %v2588
  %v2865 = vpop.f32.mrb[0].mxu0
  %v2866 = vadd.f32 %v458, %v2865
  %v2867 = vpop.f32.mrb[0].mxu0
  %v2868 = vadd.f32 %v458, %v2867
  %v2869 = vpop.f32.mrb[0].mxu0
  %v2870 = vadd.f32 %v463, %v2869
  %v2871 = vpop.f32.mrb[0].mxu0
  %v2872 = vadd.f32 %v463, %v2871
  %2873 = vmatprep.mubr.bf16.mxu0 0
  %2874 = vmatmul.mubr.bf16.gmra.mrb[0].mxu0 %v2591
  %v2875 = vpop.f32.mrb[0].mxu0
  %v2876 = vadd.f32 %v468, %v2875
  %v2877 = vpop.f32.mrb[0].mxu0
  %v2878 = vadd.f32 %v468, %v2877
  %v2879 = vpop.f32.mrb[0].mxu0
  %v2880 = vpop.f32.mrb[0].mxu0
  %2881 = vdwg.mxu0
  %2882 = vmatprep.subr.bf16.mxu0 %v1785
  %2883 = vmatpush1.bf16.msra.mxu0 %v1784
  %2884 = vmatprep.subr.bf16.mxu0 %v1847
  %2885 = vmatpush1.bf16.msra.mxu0 %v1846
  %2886 = vmatprep.subr.bf16.mxu0 %v1909
  %2887 = vmatpush1.bf16.msra.mxu0 %v1908
  %2888 = vmatprep.subr.bf16.mxu0 %v1971
  %2889 = vmatpush1.bf16.msra.mxu0 %v1970
  %2890 = vmatprep.subr.bf16.mxu0 %v2033
  %2891 = vmatpush1.bf16.msra.mxu0 %v2032
  %2892 = vmatprep.subr.bf16.mxu0 %v2095
  %2893 = vmatpush1.bf16.msra.mxu0 %v2094
  %2894 = vmatprep.subr.bf16.mxu0 %v2610
  %2895 = vmatpush1.bf16.msra.mxu0 %v2607
  %2896 = vmatprep.subr.bf16.mxu0 0
  %2897 = vmatpush1.bf16.msra.mxu0 0
  %2898 = vmatprep.subr.bf16.mxu0 0
  %2899 = vmatpush1.bf16.msra.mxu0 0
  %2900 = vmatprep.subr.bf16.mxu0 0
  %2901 = vmatpush1.bf16.msra.mxu0 0
  %2902 = vmatprep.subr.bf16.mxu0 0
  %2903 = vmatpush1.bf16.msra.mxu0 0
  %2904 = vmatprep.subr.bf16.mxu0 0
  %2905 = vmatpush1.bf16.msra.mxu0 0
  %2906 = vmatprep.subr.bf16.mxu0 0
  %2907 = vmatpush1.bf16.msra.mxu0 0
  %2908 = vmatprep.subr.bf16.mxu0 0
  %2909 = vmatpush1.bf16.msra.mxu0 0
  %2910 = vmatprep.subr.bf16.mxu0 0
  %2911 = vmatpush1.bf16.msra.mxu0 0
  %2912 = vmatprep.subr.bf16.mxu0 0
  %2913 = vmatpush1.bf16.msra.mxu0 0
  %2914 = vmatprep.mubr.bf16.mxu0 0
  %2915 = vmatmul.mubr.bf16.gmra.mrb[0].mxu0 %v2588
  %v2916 = vpop.f32.mrb[0].mxu0
  %v2917 = vadd.f32 %v458, %v2916
  %v2918 = vpop.f32.mrb[0].mxu0
  %v2919 = vadd.f32 %v458, %v2918
  %v2920 = vpop.f32.mrb[0].mxu0
  %v2921 = vadd.f32 %v463, %v2920
  %v2922 = vpop.f32.mrb[0].mxu0
  %v2923 = vadd.f32 %v463, %v2922
  %2924 = vmatprep.mubr.bf16.mxu0 0
  %2925 = vmatmul.mubr.bf16.gmra.mrb[0].mxu0 %v2591
  %v2926 = vpop.f32.mrb[0].mxu0
  %v2927 = vadd.f32 %v468, %v2926
  %v2928 = vpop.f32.mrb[0].mxu0
  %v2929 = vadd.f32 %v468, %v2928
  %v2930 = vpop.f32.mrb[0].mxu0
  %v2931 = vpop.f32.mrb[0].mxu0
  %2932 = vdwg.mxu0
  %2933 = vmatprep.subr.bf16.mxu0 %v1787
  %2934 = vmatpush1.bf16.msra.mxu0 %v1786
  %2935 = vmatprep.subr.bf16.mxu0 %v1849
  %2936 = vmatpush1.bf16.msra.mxu0 %v1848
  %2937 = vmatprep.subr.bf16.mxu0 %v1911
  %2938 = vmatpush1.bf16.msra.mxu0 %v1910
  %2939 = vmatprep.subr.bf16.mxu0 %v1973
  %2940 = vmatpush1.bf16.msra.mxu0 %v1972
  %2941 = vmatprep.subr.bf16.mxu0 %v2035
  %2942 = vmatpush1.bf16.msra.mxu0 %v2034
  %2943 = vmatprep.subr.bf16.mxu0 %v2097
  %2944 = vmatpush1.bf16.msra.mxu0 %v2096
  %2945 = vmatprep.subr.bf16.mxu0 %v2616
  %2946 = vmatpush1.bf16.msra.mxu0 %v2613
  %2947 = vmatprep.subr.bf16.mxu0 0
  %2948 = vmatpush1.bf16.msra.mxu0 0
  %2949 = vmatprep.subr.bf16.mxu0 0
  %2950 = vmatpush1.bf16.msra.mxu0 0
  %2951 = vmatprep.subr.bf16.mxu0 0
  %2952 = vmatpush1.bf16.msra.mxu0 0
  %2953 = vmatprep.subr.bf16.mxu0 0
  %2954 = vmatpush1.bf16.msra.mxu0 0
  %2955 = vmatprep.subr.bf16.mxu0 0
  %2956 = vmatpush1.bf16.msra.mxu0 0
  %2957 = vmatprep.subr.bf16.mxu0 0
  %2958 = vmatpush1.bf16.msra.mxu0 0
  %2959 = vmatprep.subr.bf16.mxu0 0
  %2960 = vmatpush1.bf16.msra.mxu0 0
  %2961 = vmatprep.subr.bf16.mxu0 0
  %2962 = vmatpush1.bf16.msra.mxu0 0
  %2963 = vmatprep.subr.bf16.mxu0 0
  %2964 = vmatpush1.bf16.msra.mxu0 0
  %2965 = vmatprep.mubr.bf16.mxu0 0
  %2966 = vmatmul.mubr.bf16.gmra.mrb[0].mxu0 %v2588
  %v2967 = vpop.f32.mrb[0].mxu0
  %v2968 = vadd.f32 %v458, %v2967
  %v2969 = vpop.f32.mrb[0].mxu0
  %v2970 = vadd.f32 %v458, %v2969
  %v2971 = vpop.f32.mrb[0].mxu0
  %v2972 = vadd.f32 %v463, %v2971
  %v2973 = vpop.f32.mrb[0].mxu0
  %v2974 = vadd.f32 %v463, %v2973
  %2975 = vmatprep.mubr.bf16.mxu0 0
  %2976 = vmatmul.mubr.bf16.gmra.mrb[0].mxu0 %v2591
  %v2977 = vpop.f32.mrb[0].mxu0
  %v2978 = vadd.f32 %v468, %v2977
  %v2979 = vpop.f32.mrb[0].mxu0
  %v2980 = vadd.f32 %v468, %v2979
  %v2981 = vpop.f32.mrb[0].mxu0
  %v2982 = vpop.f32.mrb[0].mxu0
  %2983 = vdwg.mxu0
  %2984 = vmatprep.subr.bf16.mxu0 %v1789
  %2985 = vmatpush1.bf16.msra.mxu0 %v1788
  %2986 = vmatprep.subr.bf16.mxu0 %v1851
  %2987 = vmatpush1.bf16.msra.mxu0 %v1850
  %2988 = vmatprep.subr.bf16.mxu0 %v1913
  %2989 = vmatpush1.bf16.msra.mxu0 %v1912
  %2990 = vmatprep.subr.bf16.mxu0 %v1975
  %2991 = vmatpush1.bf16.msra.mxu0 %v1974
  %2992 = vmatprep.subr.bf16.mxu0 %v2037
  %2993 = vmatpush1.bf16.msra.mxu0 %v2036
  %2994 = vmatprep.subr.bf16.mxu0 %v2099
  %2995 = vmatpush1.bf16.msra.mxu0 %v2098
  %2996 = vmatprep.subr.bf16.mxu0 %v2622
  %2997 = vmatpush1.bf16.msra.mxu0 %v2619
  %2998 = vmatprep.subr.bf16.mxu0 0
  %2999 = vmatpush1.bf16.msra.mxu0 0
  %3000 = vmatprep.subr.bf16.mxu0 0
  %3001 = vmatpush1.bf16.msra.mxu0 0
  %3002 = vmatprep.subr.bf16.mxu0 0
  %3003 = vmatpush1.bf16.msra.mxu0 0
  %3004 = vmatprep.subr.bf16.mxu0 0
  %3005 = vmatpush1.bf16.msra.mxu0 0
  %3006 = vmatprep.subr.bf16.mxu0 0
  %3007 = vmatpush1.bf16.msra.mxu0 0
  %3008 = vmatprep.subr.bf16.mxu0 0
  %3009 = vmatpush1.bf16.msra.mxu0 0
  %3010 = vmatprep.subr.bf16.mxu0 0
  %3011 = vmatpush1.bf16.msra.mxu0 0
  %3012 = vmatprep.subr.bf16.mxu0 0
  %3013 = vmatpush1.bf16.msra.mxu0 0
  %3014 = vmatprep.subr.bf16.mxu0 0
  %3015 = vmatpush1.bf16.msra.mxu0 0
  %3016 = vmatprep.mubr.bf16.mxu0 0
  %3017 = vmatmul.mubr.bf16.gmra.mrb[0].mxu0 %v2588
  %v3018 = vpop.f32.mrb[0].mxu0
  %v3019 = vadd.f32 %v458, %v3018
  %v3020 = vpop.f32.mrb[0].mxu0
  %v3021 = vadd.f32 %v458, %v3020
  %v3022 = vpop.f32.mrb[0].mxu0
  %v3023 = vadd.f32 %v463, %v3022
  %v3024 = vpop.f32.mrb[0].mxu0
  %v3025 = vadd.f32 %v463, %v3024
  %3026 = vmatprep.mubr.bf16.mxu0 0
  %3027 = vmatmul.mubr.bf16.gmra.mrb[0].mxu0 %v2591
  %v3028 = vpop.f32.mrb[0].mxu0
  %v3029 = vadd.f32 %v468, %v3028
  %v3030 = vpop.f32.mrb[0].mxu0
  %v3031 = vadd.f32 %v468, %v3030
  %v3032 = vpop.f32.mrb[0].mxu0
  %v3033 = vpop.f32.mrb[0].mxu0
  %3034 = vdwg.mxu0
  %3035 = vmatprep.subr.bf16.mxu0 %v1791
  %3036 = vmatpush1.bf16.msra.mxu0 %v1790
  %3037 = vmatprep.subr.bf16.mxu0 %v1853
  %3038 = vmatpush1.bf16.msra.mxu0 %v1852
  %3039 = vmatprep.subr.bf16.mxu0 %v1915
  %3040 = vmatpush1.bf16.msra.mxu0 %v1914
  %3041 = vmatprep.subr.bf16.mxu0 %v1977
  %3042 = vmatpush1.bf16.msra.mxu0 %v1976
  %3043 = vmatprep.subr.bf16.mxu0 %v2039
  %3044 = vmatpush1.bf16.msra.mxu0 %v2038
  %3045 = vmatprep.subr.bf16.mxu0 %v2101
  %3046 = vmatpush1.bf16.msra.mxu0 %v2100
  %3047 = vmatprep.subr.bf16.mxu0 %v2628
  %3048 = vmatpush1.bf16.msra.mxu0 %v2625
  %3049 = vmatprep.subr.bf16.mxu0 0
  %3050 = vmatpush1.bf16.msra.mxu0 0
  %3051 = vmatprep.subr.bf16.mxu0 0
  %3052 = vmatpush1.bf16.msra.mxu0 0
  %3053 = vmatprep.subr.bf16.mxu0 0
  %3054 = vmatpush1.bf16.msra.mxu0 0
  %3055 = vmatprep.subr.bf16.mxu0 0
  %3056 = vmatpush1.bf16.msra.mxu0 0
  %3057 = vmatprep.subr.bf16.mxu0 0
  %3058 = vmatpush1.bf16.msra.mxu0 0
  %3059 = vmatprep.subr.bf16.mxu0 0
  %3060 = vmatpush1.bf16.msra.mxu0 0
  %3061 = vmatprep.subr.bf16.mxu0 0
  %3062 = vmatpush1.bf16.msra.mxu0 0
  %3063 = vmatprep.subr.bf16.mxu0 0
  %3064 = vmatpush1.bf16.msra.mxu0 0
  %3065 = vmatprep.subr.bf16.mxu0 0
  %3066 = vmatpush1.bf16.msra.mxu0 0
  %3067 = vmatprep.mubr.bf16.mxu0 0
  %3068 = vmatmul.mubr.bf16.gmra.mrb[0].mxu0 %v2588
  %v3069 = vpop.f32.mrb[0].mxu0
  %v3070 = vadd.f32 %v458, %v3069
  %v3071 = vpop.f32.mrb[0].mxu0
  %v3072 = vadd.f32 %v458, %v3071
  %v3073 = vpop.f32.mrb[0].mxu0
  %v3074 = vadd.f32 %v463, %v3073
  %v3075 = vpop.f32.mrb[0].mxu0
  %v3076 = vadd.f32 %v463, %v3075
  %3077 = vmatprep.mubr.bf16.mxu0 0
  %3078 = vmatmul.mubr.bf16.gmra.mrb[0].mxu0 %v2591
  %v3079 = vpop.f32.mrb[0].mxu0
  %v3080 = vadd.f32 %v468, %v3079
  %v3081 = vpop.f32.mrb[0].mxu0
  %v3082 = vadd.f32 %v468, %v3081
  %v3083 = vpop.f32.mrb[0].mxu0
  %v3084 = vpop.f32.mrb[0].mxu0
  %3085 = vdwg.mxu0
  %3086 = vmatprep.subr.bf16.mxu0 %v1793
  %3087 = vmatpush1.bf16.msra.mxu0 %v1792
  %3088 = vmatprep.subr.bf16.mxu0 %v1855
  %3089 = vmatpush1.bf16.msra.mxu0 %v1854
  %3090 = vmatprep.subr.bf16.mxu0 %v1917
  %3091 = vmatpush1.bf16.msra.mxu0 %v1916
  %3092 = vmatprep.subr.bf16.mxu0 %v1979
  %3093 = vmatpush1.bf16.msra.mxu0 %v1978
  %3094 = vmatprep.subr.bf16.mxu0 %v2041
  %3095 = vmatpush1.bf16.msra.mxu0 %v2040
  %3096 = vmatprep.subr.bf16.mxu0 %v2103
  %3097 = vmatpush1.bf16.msra.mxu0 %v2102
  %3098 = vmatprep.subr.bf16.mxu0 %v2634
  %3099 = vmatpush1.bf16.msra.mxu0 %v2631
  %3100 = vmatprep.subr.bf16.mxu0 0
  %3101 = vmatpush1.bf16.msra.mxu0 0
  %3102 = vmatprep.subr.bf16.mxu0 0
  %3103 = vmatpush1.bf16.msra.mxu0 0
  %3104 = vmatprep.subr.bf16.mxu0 0
  %3105 = vmatpush1.bf16.msra.mxu0 0
  %3106 = vmatprep.subr.bf16.mxu0 0
  %3107 = vmatpush1.bf16.msra.mxu0 0
  %3108 = vmatprep.subr.bf16.mxu0 0
  %3109 = vmatpush1.bf16.msra.mxu0 0
  %3110 = vmatprep.subr.bf16.mxu0 0
  %3111 = vmatpush1.bf16.msra.mxu0 0
  %3112 = vmatprep.subr.bf16.mxu0 0
  %3113 = vmatpush1.bf16.msra.mxu0 0
  %3114 = vmatprep.subr.bf16.mxu0 0
  %3115 = vmatpush1.bf16.msra.mxu0 0
  %3116 = vmatprep.subr.bf16.mxu0 0
  %3117 = vmatpush1.bf16.msra.mxu0 0
  %3118 = vmatprep.mubr.bf16.mxu0 0
  %3119 = vmatmul.mubr.bf16.gmra.mrb[0].mxu0 %v2588
  %v3120 = vpop.f32.mrb[0].mxu0
  %v3121 = vadd.f32 %v458, %v3120
  %v3122 = vpop.f32.mrb[0].mxu0
  %v3123 = vadd.f32 %v458, %v3122
  %v3124 = vpop.f32.mrb[0].mxu0
  %v3125 = vadd.f32 %v463, %v3124
  %v3126 = vpop.f32.mrb[0].mxu0
  %v3127 = vadd.f32 %v463, %v3126
  %3128 = vmatprep.mubr.bf16.mxu0 0
  %3129 = vmatmul.mubr.bf16.gmra.mrb[0].mxu0 %v2591
  %v3130 = vpop.f32.mrb[0].mxu0
  %v3131 = vadd.f32 %v468, %v3130
  %v3132 = vpop.f32.mrb[0].mxu0
  %v3133 = vadd.f32 %v468, %v3132
  %v3134 = vpop.f32.mrb[0].mxu0
  %v3135 = vpop.f32.mrb[0].mxu0
  %3136 = vdwg.mxu0
  %3137 = vmatprep.subr.bf16.mxu0 %v1795
  %3138 = vmatpush1.bf16.msra.mxu0 %v1794
  %3139 = vmatprep.subr.bf16.mxu0 %v1857
  %3140 = vmatpush1.bf16.msra.mxu0 %v1856
  %3141 = vmatprep.subr.bf16.mxu0 %v1919
  %3142 = vmatpush1.bf16.msra.mxu0 %v1918
  %3143 = vmatprep.subr.bf16.mxu0 %v1981
  %3144 = vmatpush1.bf16.msra.mxu0 %v1980
  %3145 = vmatprep.subr.bf16.mxu0 %v2043
  %3146 = vmatpush1.bf16.msra.mxu0 %v2042
  %3147 = vmatprep.subr.bf16.mxu0 %v2105
  %3148 = vmatpush1.bf16.msra.mxu0 %v2104
  %3149 = vmatprep.subr.bf16.mxu0 %v2640
  %3150 = vmatpush1.bf16.msra.mxu0 %v2637
  %3151 = vmatprep.subr.bf16.mxu0 0
  %3152 = vmatpush1.bf16.msra.mxu0 0
  %3153 = vmatprep.subr.bf16.mxu0 0
  %3154 = vmatpush1.bf16.msra.mxu0 0
  %3155 = vmatprep.subr.bf16.mxu0 0
  %3156 = vmatpush1.bf16.msra.mxu0 0
  %3157 = vmatprep.subr.bf16.mxu0 0
  %3158 = vmatpush1.bf16.msra.mxu0 0
  %3159 = vmatprep.subr.bf16.mxu0 0
  %3160 = vmatpush1.bf16.msra.mxu0 0
  %3161 = vmatprep.subr.bf16.mxu0 0
  %3162 = vmatpush1.bf16.msra.mxu0 0
  %3163 = vmatprep.subr.bf16.mxu0 0
  %3164 = vmatpush1.bf16.msra.mxu0 0
  %3165 = vmatprep.subr.bf16.mxu0 0
  %3166 = vmatpush1.bf16.msra.mxu0 0
  %3167 = vmatprep.subr.bf16.mxu0 0
  %3168 = vmatpush1.bf16.msra.mxu0 0
  %3169 = vmatprep.mubr.bf16.mxu0 0
  %3170 = vmatmul.mubr.bf16.gmra.mrb[0].mxu0 %v2588
  %v3171 = vpop.f32.mrb[0].mxu0
  %v3172 = vadd.f32 %v458, %v3171
  %v3173 = vpop.f32.mrb[0].mxu0
  %v3174 = vadd.f32 %v458, %v3173
  %v3175 = vpop.f32.mrb[0].mxu0
  %v3176 = vadd.f32 %v463, %v3175
  %v3177 = vpop.f32.mrb[0].mxu0
  %v3178 = vadd.f32 %v463, %v3177
  %3179 = vmatprep.mubr.bf16.mxu0 0
  %3180 = vmatmul.mubr.bf16.gmra.mrb[0].mxu0 %v2591
  %v3181 = vpop.f32.mrb[0].mxu0
  %v3182 = vadd.f32 %v468, %v3181
  %v3183 = vpop.f32.mrb[0].mxu0
  %v3184 = vadd.f32 %v468, %v3183
  %v3185 = vpop.f32.mrb[0].mxu0
  %v3186 = vpop.f32.mrb[0].mxu0
  %3187 = vdwg.mxu0
  %3188 = vmatprep.subr.bf16.mxu0 %v1797
  %3189 = vmatpush1.bf16.msra.mxu0 %v1796
  %3190 = vmatprep.subr.bf16.mxu0 %v1859
  %3191 = vmatpush1.bf16.msra.mxu0 %v1858
  %3192 = vmatprep.subr.bf16.mxu0 %v1921
  %3193 = vmatpush1.bf16.msra.mxu0 %v1920
  %3194 = vmatprep.subr.bf16.mxu0 %v1983
  %3195 = vmatpush1.bf16.msra.mxu0 %v1982
  %3196 = vmatprep.subr.bf16.mxu0 %v2045
  %3197 = vmatpush1.bf16.msra.mxu0 %v2044
  %3198 = vmatprep.subr.bf16.mxu0 %v2107
  %3199 = vmatpush1.bf16.msra.mxu0 %v2106
  %3200 = vmatprep.subr.bf16.mxu0 %v2646
  %3201 = vmatpush1.bf16.msra.mxu0 %v2643
  %3202 = vmatprep.subr.bf16.mxu0 0
  %3203 = vmatpush1.bf16.msra.mxu0 0
  %3204 = vmatprep.subr.bf16.mxu0 0
  %3205 = vmatpush1.bf16.msra.mxu0 0
  %3206 = vmatprep.subr.bf16.mxu0 0
  %3207 = vmatpush1.bf16.msra.mxu0 0
  %3208 = vmatprep.subr.bf16.mxu0 0
  %3209 = vmatpush1.bf16.msra.mxu0 0
  %3210 = vmatprep.subr.bf16.mxu0 0
  %3211 = vmatpush1.bf16.msra.mxu0 0
  %3212 = vmatprep.subr.bf16.mxu0 0
  %3213 = vmatpush1.bf16.msra.mxu0 0
  %3214 = vmatprep.subr.bf16.mxu0 0
  %3215 = vmatpush1.bf16.msra.mxu0 0
  %3216 = vmatprep.subr.bf16.mxu0 0
  %3217 = vmatpush1.bf16.msra.mxu0 0
  %3218 = vmatprep.subr.bf16.mxu0 0
  %3219 = vmatpush1.bf16.msra.mxu0 0
  %3220 = vmatprep.mubr.bf16.mxu0 0
  %3221 = vmatmul.mubr.bf16.gmra.mrb[0].mxu0 %v2588
  %v3222 = vpop.f32.mrb[0].mxu0
  %v3223 = vadd.f32 %v458, %v3222
  %v3224 = vpop.f32.mrb[0].mxu0
  %v3225 = vadd.f32 %v458, %v3224
  %v3226 = vpop.f32.mrb[0].mxu0
  %v3227 = vadd.f32 %v463, %v3226
  %v3228 = vpop.f32.mrb[0].mxu0
  %v3229 = vadd.f32 %v463, %v3228
  %3230 = vmatprep.mubr.bf16.mxu0 0
  %3231 = vmatmul.mubr.bf16.gmra.mrb[0].mxu0 %v2591
  %v3232 = vpop.f32.mrb[0].mxu0
  %v3233 = vadd.f32 %v468, %v3232
  %v3234 = vpop.f32.mrb[0].mxu0
  %v3235 = vadd.f32 %v468, %v3234
  %v3236 = vpop.f32.mrb[0].mxu0
  %v3237 = vpop.f32.mrb[0].mxu0
  %3238 = vdwg.mxu0
  %3239 = vmatprep.subr.bf16.mxu0 %v1799
  %3240 = vmatpush1.bf16.msra.mxu0 %v1798
  %3241 = vmatprep.subr.bf16.mxu0 %v1861
  %3242 = vmatpush1.bf16.msra.mxu0 %v1860
  %3243 = vmatprep.subr.bf16.mxu0 %v1923
  %3244 = vmatpush1.bf16.msra.mxu0 %v1922
  %3245 = vmatprep.subr.bf16.mxu0 %v1985
  %3246 = vmatpush1.bf16.msra.mxu0 %v1984
  %3247 = vmatprep.subr.bf16.mxu0 %v2047
  %3248 = vmatpush1.bf16.msra.mxu0 %v2046
  %3249 = vmatprep.subr.bf16.mxu0 %v2109
  %3250 = vmatpush1.bf16.msra.mxu0 %v2108
  %3251 = vmatprep.subr.bf16.mxu0 %v2652
  %3252 = vmatpush1.bf16.msra.mxu0 %v2649
  %3253 = vmatprep.subr.bf16.mxu0 0
  %3254 = vmatpush1.bf16.msra.mxu0 0
  %3255 = vmatprep.subr.bf16.mxu0 0
  %3256 = vmatpush1.bf16.msra.mxu0 0
  %3257 = vmatprep.subr.bf16.mxu0 0
  %3258 = vmatpush1.bf16.msra.mxu0 0
  %3259 = vmatprep.subr.bf16.mxu0 0
  %3260 = vmatpush1.bf16.msra.mxu0 0
  %3261 = vmatprep.subr.bf16.mxu0 0
  %3262 = vmatpush1.bf16.msra.mxu0 0
  %3263 = vmatprep.subr.bf16.mxu0 0
  %3264 = vmatpush1.bf16.msra.mxu0 0
  %3265 = vmatprep.subr.bf16.mxu0 0
  %3266 = vmatpush1.bf16.msra.mxu0 0
  %3267 = vmatprep.subr.bf16.mxu0 0
  %3268 = vmatpush1.bf16.msra.mxu0 0
  %3269 = vmatprep.subr.bf16.mxu0 0
  %3270 = vmatpush1.bf16.msra.mxu0 0
  %3271 = vmatprep.mubr.bf16.mxu0 0
  %3272 = vmatmul.mubr.bf16.gmra.mrb[0].mxu0 %v2588
  %v3273 = vpop.f32.mrb[0].mxu0
  %v3274 = vadd.f32 %v458, %v3273
  %v3275 = vpop.f32.mrb[0].mxu0
  %v3276 = vadd.f32 %v458, %v3275
  %v3277 = vpop.f32.mrb[0].mxu0
  %v3278 = vadd.f32 %v463, %v3277
  %v3279 = vpop.f32.mrb[0].mxu0
  %v3280 = vadd.f32 %v463, %v3279
  %3281 = vmatprep.mubr.bf16.mxu0 0
  %3282 = vmatmul.mubr.bf16.gmra.mrb[0].mxu0 %v2591
  %v3283 = vpop.f32.mrb[0].mxu0
  %v3284 = vadd.f32 %v468, %v3283
  %v3285 = vpop.f32.mrb[0].mxu0
  %v3286 = vadd.f32 %v468, %v3285
  %v3287 = vpop.f32.mrb[0].mxu0
  %v3288 = vpop.f32.mrb[0].mxu0
  %3289 = vdwg.mxu0
  %3290 = vmatprep.subr.bf16.mxu0 %v1801
  %3291 = vmatpush1.bf16.msra.mxu0 %v1800
  %3292 = vmatprep.subr.bf16.mxu0 %v1863
  %3293 = vmatpush1.bf16.msra.mxu0 %v1862
  %3294 = vmatprep.subr.bf16.mxu0 %v1925
  %3295 = vmatpush1.bf16.msra.mxu0 %v1924
  %3296 = vmatprep.subr.bf16.mxu0 %v1987
  %3297 = vmatpush1.bf16.msra.mxu0 %v1986
  %3298 = vmatprep.subr.bf16.mxu0 %v2049
  %3299 = vmatpush1.bf16.msra.mxu0 %v2048
  %3300 = vmatprep.subr.bf16.mxu0 %v2111
  %3301 = vmatpush1.bf16.msra.mxu0 %v2110
  %3302 = vmatprep.subr.bf16.mxu0 %v2658
  %3303 = vmatpush1.bf16.msra.mxu0 %v2655
  %3304 = vmatprep.subr.bf16.mxu0 0
  %3305 = vmatpush1.bf16.msra.mxu0 0
  %3306 = vmatprep.subr.bf16.mxu0 0
  %3307 = vmatpush1.bf16.msra.mxu0 0
  %3308 = vmatprep.subr.bf16.mxu0 0
  %3309 = vmatpush1.bf16.msra.mxu0 0
  %3310 = vmatprep.subr.bf16.mxu0 0
  %3311 = vmatpush1.bf16.msra.mxu0 0
  %3312 = vmatprep.subr.bf16.mxu0 0
  %3313 = vmatpush1.bf16.msra.mxu0 0
  %3314 = vmatprep.subr.bf16.mxu0 0
  %3315 = vmatpush1.bf16.msra.mxu0 0
  %3316 = vmatprep.subr.bf16.mxu0 0
  %3317 = vmatpush1.bf16.msra.mxu0 0
  %3318 = vmatprep.subr.bf16.mxu0 0
  %3319 = vmatpush1.bf16.msra.mxu0 0
  %3320 = vmatprep.subr.bf16.mxu0 0
  %3321 = vmatpush1.bf16.msra.mxu0 0
  %3322 = vmatprep.mubr.bf16.mxu0 0
  %3323 = vmatmul.mubr.bf16.gmra.mrb[0].mxu0 %v2588
  %v3324 = vpop.f32.mrb[0].mxu0
  %v3325 = vadd.f32 %v458, %v3324
  %v3326 = vpop.f32.mrb[0].mxu0
  %v3327 = vadd.f32 %v458, %v3326
  %v3328 = vpop.f32.mrb[0].mxu0
  %v3329 = vadd.f32 %v463, %v3328
  %v3330 = vpop.f32.mrb[0].mxu0
  %v3331 = vadd.f32 %v463, %v3330
  %3332 = vmatprep.mubr.bf16.mxu0 0
  %3333 = vmatmul.mubr.bf16.gmra.mrb[0].mxu0 %v2591
  %v3334 = vpop.f32.mrb[0].mxu0
  %v3335 = vadd.f32 %v468, %v3334
  %v3336 = vpop.f32.mrb[0].mxu0
  %v3337 = vadd.f32 %v468, %v3336
  %v3338 = vpop.f32.mrb[0].mxu0
  %v3339 = vpop.f32.mrb[0].mxu0
  %3340 = vdwg.mxu0
  %3341 = vmatprep.subr.bf16.mxu0 %v1803
  %3342 = vmatpush1.bf16.msra.mxu0 %v1802
  %3343 = vmatprep.subr.bf16.mxu0 %v1865
  %3344 = vmatpush1.bf16.msra.mxu0 %v1864
  %3345 = vmatprep.subr.bf16.mxu0 %v1927
  %3346 = vmatpush1.bf16.msra.mxu0 %v1926
  %3347 = vmatprep.subr.bf16.mxu0 %v1989
  %3348 = vmatpush1.bf16.msra.mxu0 %v1988
  %3349 = vmatprep.subr.bf16.mxu0 %v2051
  %3350 = vmatpush1.bf16.msra.mxu0 %v2050
  %3351 = vmatprep.subr.bf16.mxu0 %v2113
  %3352 = vmatpush1.bf16.msra.mxu0 %v2112
  %3353 = vmatprep.subr.bf16.mxu0 %v2664
  %3354 = vmatpush1.bf16.msra.mxu0 %v2661
  %3355 = vmatprep.subr.bf16.mxu0 0
  %3356 = vmatpush1.bf16.msra.mxu0 0
  %3357 = vmatprep.subr.bf16.mxu0 0
  %3358 = vmatpush1.bf16.msra.mxu0 0
  %3359 = vmatprep.subr.bf16.mxu0 0
  %3360 = vmatpush1.bf16.msra.mxu0 0
  %3361 = vmatprep.subr.bf16.mxu0 0
  %3362 = vmatpush1.bf16.msra.mxu0 0
  %3363 = vmatprep.subr.bf16.mxu0 0
  %3364 = vmatpush1.bf16.msra.mxu0 0
  %3365 = vmatprep.subr.bf16.mxu0 0
  %3366 = vmatpush1.bf16.msra.mxu0 0
  %3367 = vmatprep.subr.bf16.mxu0 0
  %3368 = vmatpush1.bf16.msra.mxu0 0
  %3369 = vmatprep.subr.bf16.mxu0 0
  %3370 = vmatpush1.bf16.msra.mxu0 0
  %3371 = vmatprep.subr.bf16.mxu0 0
  %3372 = vmatpush1.bf16.msra.mxu0 0
  %3373 = vmatprep.mubr.bf16.mxu0 0
  %3374 = vmatmul.mubr.bf16.gmra.mrb[0].mxu0 %v2588
  %v3375 = vpop.f32.mrb[0].mxu0
  %v3376 = vadd.f32 %v458, %v3375
  %v3377 = vpop.f32.mrb[0].mxu0
  %v3378 = vadd.f32 %v458, %v3377
  %v3379 = vpop.f32.mrb[0].mxu0
  %v3380 = vadd.f32 %v463, %v3379
  %v3381 = vpop.f32.mrb[0].mxu0
  %v3382 = vadd.f32 %v463, %v3381
  %3383 = vmatprep.mubr.bf16.mxu0 0
  %3384 = vmatmul.mubr.bf16.gmra.mrb[0].mxu0 %v2591
  %v3385 = vpop.f32.mrb[0].mxu0
  %v3386 = vadd.f32 %v468, %v3385
  %v3387 = vpop.f32.mrb[0].mxu0
  %v3388 = vadd.f32 %v468, %v3387
  %v3389 = vpop.f32.mrb[0].mxu0
  %v3390 = vpop.f32.mrb[0].mxu0
  %3391 = vdwg.mxu0
  %3392 = vmatprep.subr.bf16.mxu0 %v1805
  %3393 = vmatpush1.bf16.msra.mxu0 %v1804
  %3394 = vmatprep.subr.bf16.mxu0 %v1867
  %3395 = vmatpush1.bf16.msra.mxu0 %v1866
  %3396 = vmatprep.subr.bf16.mxu0 %v1929
  %3397 = vmatpush1.bf16.msra.mxu0 %v1928
  %3398 = vmatprep.subr.bf16.mxu0 %v1991
  %3399 = vmatpush1.bf16.msra.mxu0 %v1990
  %3400 = vmatprep.subr.bf16.mxu0 %v2053
  %3401 = vmatpush1.bf16.msra.mxu0 %v2052
  %3402 = vmatprep.subr.bf16.mxu0 %v2115
  %3403 = vmatpush1.bf16.msra.mxu0 %v2114
  %3404 = vmatprep.subr.bf16.mxu0 %v2670
  %3405 = vmatpush1.bf16.msra.mxu0 %v2667
  %3406 = vmatprep.subr.bf16.mxu0 0
  %3407 = vmatpush1.bf16.msra.mxu0 0
  %3408 = vmatprep.subr.bf16.mxu0 0
  %3409 = vmatpush1.bf16.msra.mxu0 0
  %3410 = vmatprep.subr.bf16.mxu0 0
  %3411 = vmatpush1.bf16.msra.mxu0 0
  %3412 = vmatprep.subr.bf16.mxu0 0
  %3413 = vmatpush1.bf16.msra.mxu0 0
  %3414 = vmatprep.subr.bf16.mxu0 0
  %3415 = vmatpush1.bf16.msra.mxu0 0
  %3416 = vmatprep.subr.bf16.mxu0 0
  %3417 = vmatpush1.bf16.msra.mxu0 0
  %3418 = vmatprep.subr.bf16.mxu0 0
  %3419 = vmatpush1.bf16.msra.mxu0 0
  %3420 = vmatprep.subr.bf16.mxu0 0
  %3421 = vmatpush1.bf16.msra.mxu0 0
  %3422 = vmatprep.subr.bf16.mxu0 0
  %3423 = vmatpush1.bf16.msra.mxu0 0
  %3424 = vmatprep.mubr.bf16.mxu0 0
  %3425 = vmatmul.mubr.bf16.gmra.mrb[0].mxu0 %v2588
  %v3426 = vpop.f32.mrb[0].mxu0
  %v3427 = vadd.f32 %v458, %v3426
  %v3428 = vpop.f32.mrb[0].mxu0
  %v3429 = vadd.f32 %v458, %v3428
  %v3430 = vpop.f32.mrb[0].mxu0
  %v3431 = vadd.f32 %v463, %v3430
  %v3432 = vpop.f32.mrb[0].mxu0
  %v3433 = vadd.f32 %v463, %v3432
  %3434 = vmatprep.mubr.bf16.mxu0 0
  %3435 = vmatmul.mubr.bf16.gmra.mrb[0].mxu0 %v2591
  %v3436 = vpop.f32.mrb[0].mxu0
  %v3437 = vadd.f32 %v468, %v3436
  %v3438 = vpop.f32.mrb[0].mxu0
  %v3439 = vadd.f32 %v468, %v3438
  %v3440 = vpop.f32.mrb[0].mxu0
  %v3441 = vpop.f32.mrb[0].mxu0
  %3442 = vdwg.mxu0
  %3443 = vmatprep.subr.bf16.mxu0 %v1807
  %3444 = vmatpush1.bf16.msra.mxu0 %v1806
  %3445 = vmatprep.subr.bf16.mxu0 %v1869
  %3446 = vmatpush1.bf16.msra.mxu0 %v1868
  %3447 = vmatprep.subr.bf16.mxu0 %v1931
  %3448 = vmatpush1.bf16.msra.mxu0 %v1930
  %3449 = vmatprep.subr.bf16.mxu0 %v1993
  %3450 = vmatpush1.bf16.msra.mxu0 %v1992
  %3451 = vmatprep.subr.bf16.mxu0 %v2055
  %3452 = vmatpush1.bf16.msra.mxu0 %v2054
  %3453 = vmatprep.subr.bf16.mxu0 %v2117
  %3454 = vmatpush1.bf16.msra.mxu0 %v2116
  %3455 = vmatprep.subr.bf16.mxu0 %v2676
  %3456 = vmatpush1.bf16.msra.mxu0 %v2673
  %3457 = vmatprep.subr.bf16.mxu0 0
  %3458 = vmatpush1.bf16.msra.mxu0 0
  %3459 = vmatprep.subr.bf16.mxu0 0
  %3460 = vmatpush1.bf16.msra.mxu0 0
  %3461 = vmatprep.subr.bf16.mxu0 0
  %3462 = vmatpush1.bf16.msra.mxu0 0
  %3463 = vmatprep.subr.bf16.mxu0 0
  %3464 = vmatpush1.bf16.msra.mxu0 0
  %3465 = vmatprep.subr.bf16.mxu0 0
  %3466 = vmatpush1.bf16.msra.mxu0 0
  %3467 = vmatprep.subr.bf16.mxu0 0
  %3468 = vmatpush1.bf16.msra.mxu0 0
  %3469 = vmatprep.subr.bf16.mxu0 0
  %3470 = vmatpush1.bf16.msra.mxu0 0
  %3471 = vmatprep.subr.bf16.mxu0 0
  %3472 = vmatpush1.bf16.msra.mxu0 0
  %3473 = vmatprep.subr.bf16.mxu0 0
  %3474 = vmatpush1.bf16.msra.mxu0 0
  %3475 = vmatprep.mubr.bf16.mxu0 0
  %3476 = vmatmul.mubr.bf16.gmra.mrb[0].mxu0 %v2588
  %v3477 = vpop.f32.mrb[0].mxu0
  %v3478 = vadd.f32 %v458, %v3477
  %v3479 = vpop.f32.mrb[0].mxu0
  %v3480 = vadd.f32 %v458, %v3479
  %v3481 = vpop.f32.mrb[0].mxu0
  %v3482 = vadd.f32 %v463, %v3481
  %v3483 = vpop.f32.mrb[0].mxu0
  %v3484 = vadd.f32 %v463, %v3483
  %3485 = vmatprep.mubr.bf16.mxu0 0
  %3486 = vmatmul.mubr.bf16.gmra.mrb[0].mxu0 %v2591
  %v3487 = vpop.f32.mrb[0].mxu0
  %v3488 = vadd.f32 %v468, %v3487
  %v3489 = vpop.f32.mrb[0].mxu0
  %v3490 = vadd.f32 %v468, %v3489
  %v3491 = vpop.f32.mrb[0].mxu0
  %v3492 = vpop.f32.mrb[0].mxu0
  %3493 = vdwg.mxu0
  %3494 = vmatprep.subr.bf16.mxu0 %v1809
  %3495 = vmatpush1.bf16.msra.mxu0 %v1808
  %3496 = vmatprep.subr.bf16.mxu0 %v1871
  %3497 = vmatpush1.bf16.msra.mxu0 %v1870
  %3498 = vmatprep.subr.bf16.mxu0 %v1933
  %3499 = vmatpush1.bf16.msra.mxu0 %v1932
  %3500 = vmatprep.subr.bf16.mxu0 %v1995
  %3501 = vmatpush1.bf16.msra.mxu0 %v1994
  %3502 = vmatprep.subr.bf16.mxu0 %v2057
  %3503 = vmatpush1.bf16.msra.mxu0 %v2056
  %3504 = vmatprep.subr.bf16.mxu0 %v2119
  %3505 = vmatpush1.bf16.msra.mxu0 %v2118
  %3506 = vmatprep.subr.bf16.mxu0 %v2682
  %3507 = vmatpush1.bf16.msra.mxu0 %v2679
  %3508 = vmatprep.subr.bf16.mxu0 0
  %3509 = vmatpush1.bf16.msra.mxu0 0
  %3510 = vmatprep.subr.bf16.mxu0 0
  %3511 = vmatpush1.bf16.msra.mxu0 0
  %3512 = vmatprep.subr.bf16.mxu0 0
  %3513 = vmatpush1.bf16.msra.mxu0 0
  %3514 = vmatprep.subr.bf16.mxu0 0
  %3515 = vmatpush1.bf16.msra.mxu0 0
  %3516 = vmatprep.subr.bf16.mxu0 0
  %3517 = vmatpush1.bf16.msra.mxu0 0
  %3518 = vmatprep.subr.bf16.mxu0 0
  %3519 = vmatpush1.bf16.msra.mxu0 0
  %3520 = vmatprep.subr.bf16.mxu0 0
  %3521 = vmatpush1.bf16.msra.mxu0 0
  %3522 = vmatprep.subr.bf16.mxu0 0
  %3523 = vmatpush1.bf16.msra.mxu0 0
  %3524 = vmatprep.subr.bf16.mxu0 0
  %3525 = vmatpush1.bf16.msra.mxu0 0
  %3526 = vmatprep.mubr.bf16.mxu0 0
  %3527 = vmatmul.mubr.bf16.gmra.mrb[0].mxu0 %v2588
  %v3528 = vpop.f32.mrb[0].mxu0
  %v3529 = vadd.f32 %v458, %v3528
  %v3530 = vpop.f32.mrb[0].mxu0
  %v3531 = vadd.f32 %v458, %v3530
  %v3532 = vpop.f32.mrb[0].mxu0
  %v3533 = vadd.f32 %v463, %v3532
  %v3534 = vpop.f32.mrb[0].mxu0
  %v3535 = vadd.f32 %v463, %v3534
  %3536 = vmatprep.mubr.bf16.mxu0 0
  %3537 = vmatmul.mubr.bf16.gmra.mrb[0].mxu0 %v2591
  %v3538 = vpop.f32.mrb[0].mxu0
  %v3539 = vadd.f32 %v468, %v3538
  %v3540 = vpop.f32.mrb[0].mxu0
  %v3541 = vadd.f32 %v468, %v3540
  %v3542 = vpop.f32.mrb[0].mxu0
  %v3543 = vpop.f32.mrb[0].mxu0
  %3544 = vdwg.mxu0
  %3545 = vmatprep.subr.bf16.mxu0 %v1811
  %3546 = vmatpush1.bf16.msra.mxu0 %v1810
  %3547 = vmatprep.subr.bf16.mxu0 %v1873
  %3548 = vmatpush1.bf16.msra.mxu0 %v1872
  %3549 = vmatprep.subr.bf16.mxu0 %v1935
  %3550 = vmatpush1.bf16.msra.mxu0 %v1934
  %3551 = vmatprep.subr.bf16.mxu0 %v1997
  %3552 = vmatpush1.bf16.msra.mxu0 %v1996
  %3553 = vmatprep.subr.bf16.mxu0 %v2059
  %3554 = vmatpush1.bf16.msra.mxu0 %v2058
  %3555 = vmatprep.subr.bf16.mxu0 %v2121
  %3556 = vmatpush1.bf16.msra.mxu0 %v2120
  %3557 = vmatprep.subr.bf16.mxu0 %v2688
  %3558 = vmatpush1.bf16.msra.mxu0 %v2685
  %3559 = vmatprep.subr.bf16.mxu0 0
  %3560 = vmatpush1.bf16.msra.mxu0 0
  %3561 = vmatprep.subr.bf16.mxu0 0
  %3562 = vmatpush1.bf16.msra.mxu0 0
  %3563 = vmatprep.subr.bf16.mxu0 0
  %3564 = vmatpush1.bf16.msra.mxu0 0
  %3565 = vmatprep.subr.bf16.mxu0 0
  %3566 = vmatpush1.bf16.msra.mxu0 0
  %3567 = vmatprep.subr.bf16.mxu0 0
  %3568 = vmatpush1.bf16.msra.mxu0 0
  %3569 = vmatprep.subr.bf16.mxu0 0
  %3570 = vmatpush1.bf16.msra.mxu0 0
  %3571 = vmatprep.subr.bf16.mxu0 0
  %3572 = vmatpush1.bf16.msra.mxu0 0
  %3573 = vmatprep.subr.bf16.mxu0 0
  %3574 = vmatpush1.bf16.msra.mxu0 0
  %3575 = vmatprep.subr.bf16.mxu0 0
  %3576 = vmatpush1.bf16.msra.mxu0 0
  %3577 = vmatprep.mubr.bf16.mxu0 0
  %3578 = vmatmul.mubr.bf16.gmra.mrb[0].mxu0 %v2588
  %v3579 = vpop.f32.mrb[0].mxu0
  %v3580 = vadd.f32 %v458, %v3579
  %v3581 = vpop.f32.mrb[0].mxu0
  %v3582 = vadd.f32 %v458, %v3581
  %v3583 = vpop.f32.mrb[0].mxu0
  %v3584 = vadd.f32 %v463, %v3583
  %v3585 = vpop.f32.mrb[0].mxu0
  %v3586 = vadd.f32 %v463, %v3585
  %3587 = vmatprep.mubr.bf16.mxu0 0
  %3588 = vmatmul.mubr.bf16.gmra.mrb[0].mxu0 %v2591
  %v3589 = vpop.f32.mrb[0].mxu0
  %v3590 = vadd.f32 %v468, %v3589
  %v3591 = vpop.f32.mrb[0].mxu0
  %v3592 = vadd.f32 %v468, %v3591
  %v3593 = vpop.f32.mrb[0].mxu0
  %v3594 = vpop.f32.mrb[0].mxu0
  %3595 = vdwg.mxu0
  %3596 = vmatprep.subr.bf16.mxu0 %v1813
  %3597 = vmatpush1.bf16.msra.mxu0 %v1812
  %3598 = vmatprep.subr.bf16.mxu0 %v1875
  %3599 = vmatpush1.bf16.msra.mxu0 %v1874
  %3600 = vmatprep.subr.bf16.mxu0 %v1937
  %3601 = vmatpush1.bf16.msra.mxu0 %v1936
  %3602 = vmatprep.subr.bf16.mxu0 %v1999
  %3603 = vmatpush1.bf16.msra.mxu0 %v1998
  %3604 = vmatprep.subr.bf16.mxu0 %v2061
  %3605 = vmatpush1.bf16.msra.mxu0 %v2060
  %3606 = vmatprep.subr.bf16.mxu0 %v2123
  %3607 = vmatpush1.bf16.msra.mxu0 %v2122
  %3608 = vmatprep.subr.bf16.mxu0 %v2694
  %3609 = vmatpush1.bf16.msra.mxu0 %v2691
  %3610 = vmatprep.subr.bf16.mxu0 0
  %3611 = vmatpush1.bf16.msra.mxu0 0
  %3612 = vmatprep.subr.bf16.mxu0 0
  %3613 = vmatpush1.bf16.msra.mxu0 0
  %3614 = vmatprep.subr.bf16.mxu0 0
  %3615 = vmatpush1.bf16.msra.mxu0 0
  %3616 = vmatprep.subr.bf16.mxu0 0
  %3617 = vmatpush1.bf16.msra.mxu0 0
  %3618 = vmatprep.subr.bf16.mxu0 0
  %3619 = vmatpush1.bf16.msra.mxu0 0
  %3620 = vmatprep.subr.bf16.mxu0 0
  %3621 = vmatpush1.bf16.msra.mxu0 0
  %3622 = vmatprep.subr.bf16.mxu0 0
  %3623 = vmatpush1.bf16.msra.mxu0 0
  %3624 = vmatprep.subr.bf16.mxu0 0
  %3625 = vmatpush1.bf16.msra.mxu0 0
  %3626 = vmatprep.subr.bf16.mxu0 0
  %3627 = vmatpush1.bf16.msra.mxu0 0
  %3628 = vmatprep.mubr.bf16.mxu0 0
  %3629 = vmatmul.mubr.bf16.gmra.mrb[0].mxu0 %v2588
  %v3630 = vpop.f32.mrb[0].mxu0
  %v3631 = vadd.f32 %v458, %v3630
  %v3632 = vpop.f32.mrb[0].mxu0
  %v3633 = vadd.f32 %v458, %v3632
  %v3634 = vpop.f32.mrb[0].mxu0
  %v3635 = vadd.f32 %v463, %v3634
  %v3636 = vpop.f32.mrb[0].mxu0
  %v3637 = vadd.f32 %v463, %v3636
  %3638 = vmatprep.mubr.bf16.mxu0 0
  %3639 = vmatmul.mubr.bf16.gmra.mrb[0].mxu0 %v2591
  %v3640 = vpop.f32.mrb[0].mxu0
  %v3641 = vadd.f32 %v468, %v3640
  %v3642 = vpop.f32.mrb[0].mxu0
  %v3643 = vadd.f32 %v468, %v3642
  %v3644 = vpop.f32.mrb[0].mxu0
  %v3645 = vpop.f32.mrb[0].mxu0
  %3646 = vdwg.mxu0
  %3647 = vmatprep.subr.bf16.mxu0 %v1815
  %3648 = vmatpush1.bf16.msra.mxu0 %v1814
  %3649 = vmatprep.subr.bf16.mxu0 %v1877
  %3650 = vmatpush1.bf16.msra.mxu0 %v1876
  %3651 = vmatprep.subr.bf16.mxu0 %v1939
  %3652 = vmatpush1.bf16.msra.mxu0 %v1938
  %3653 = vmatprep.subr.bf16.mxu0 %v2001
  %3654 = vmatpush1.bf16.msra.mxu0 %v2000
  %3655 = vmatprep.subr.bf16.mxu0 %v2063
  %3656 = vmatpush1.bf16.msra.mxu0 %v2062
  %3657 = vmatprep.subr.bf16.mxu0 %v2125
  %3658 = vmatpush1.bf16.msra.mxu0 %v2124
  %3659 = vmatprep.subr.bf16.mxu0 %v2700
  %3660 = vmatpush1.bf16.msra.mxu0 %v2697
  %3661 = vmatprep.subr.bf16.mxu0 0
  %3662 = vmatpush1.bf16.msra.mxu0 0
  %3663 = vmatprep.subr.bf16.mxu0 0
  %3664 = vmatpush1.bf16.msra.mxu0 0
  %3665 = vmatprep.subr.bf16.mxu0 0
  %3666 = vmatpush1.bf16.msra.mxu0 0
  %3667 = vmatprep.subr.bf16.mxu0 0
  %3668 = vmatpush1.bf16.msra.mxu0 0
  %3669 = vmatprep.subr.bf16.mxu0 0
  %3670 = vmatpush1.bf16.msra.mxu0 0
  %3671 = vmatprep.subr.bf16.mxu0 0
  %3672 = vmatpush1.bf16.msra.mxu0 0
  %3673 = vmatprep.subr.bf16.mxu0 0
  %3674 = vmatpush1.bf16.msra.mxu0 0
  %3675 = vmatprep.subr.bf16.mxu0 0
  %3676 = vmatpush1.bf16.msra.mxu0 0
  %3677 = vmatprep.subr.bf16.mxu0 0
  %3678 = vmatpush1.bf16.msra.mxu0 0
  %3679 = vmatprep.mubr.bf16.mxu0 0
  %3680 = vmatmul.mubr.bf16.gmra.mrb[0].mxu0 %v2588
  %v3681 = vpop.f32.mrb[0].mxu0
  %v3682 = vadd.f32 %v458, %v3681
  %v3683 = vpop.f32.mrb[0].mxu0
  %v3684 = vadd.f32 %v458, %v3683
  %v3685 = vpop.f32.mrb[0].mxu0
  %v3686 = vadd.f32 %v463, %v3685
  %v3687 = vpop.f32.mrb[0].mxu0
  %v3688 = vadd.f32 %v463, %v3687
  %3689 = vmatprep.mubr.bf16.mxu0 0
  %3690 = vmatmul.mubr.bf16.gmra.mrb[0].mxu0 %v2591
  %v3691 = vpop.f32.mrb[0].mxu0
  %v3692 = vadd.f32 %v468, %v3691
  %v3693 = vpop.f32.mrb[0].mxu0
  %v3694 = vadd.f32 %v468, %v3693
  %v3695 = vpop.f32.mrb[0].mxu0
  %v3696 = vpop.f32.mrb[0].mxu0
  %3697 = vdwg.mxu0
  %3698 = vmatprep.subr.bf16.mxu0 %v1817
  %3699 = vmatpush1.bf16.msra.mxu0 %v1816
  %3700 = vmatprep.subr.bf16.mxu0 %v1879
  %3701 = vmatpush1.bf16.msra.mxu0 %v1878
  %3702 = vmatprep.subr.bf16.mxu0 %v1941
  %3703 = vmatpush1.bf16.msra.mxu0 %v1940
  %3704 = vmatprep.subr.bf16.mxu0 %v2003
  %3705 = vmatpush1.bf16.msra.mxu0 %v2002
  %3706 = vmatprep.subr.bf16.mxu0 %v2065
  %3707 = vmatpush1.bf16.msra.mxu0 %v2064
  %3708 = vmatprep.subr.bf16.mxu0 %v2127
  %3709 = vmatpush1.bf16.msra.mxu0 %v2126
  %3710 = vmatprep.subr.bf16.mxu0 %v2706
  %3711 = vmatpush1.bf16.msra.mxu0 %v2703
  %3712 = vmatprep.subr.bf16.mxu0 0
  %3713 = vmatpush1.bf16.msra.mxu0 0
  %3714 = vmatprep.subr.bf16.mxu0 0
  %3715 = vmatpush1.bf16.msra.mxu0 0
  %3716 = vmatprep.subr.bf16.mxu0 0
  %3717 = vmatpush1.bf16.msra.mxu0 0
  %3718 = vmatprep.subr.bf16.mxu0 0
  %3719 = vmatpush1.bf16.msra.mxu0 0
  %3720 = vmatprep.subr.bf16.mxu0 0
  %3721 = vmatpush1.bf16.msra.mxu0 0
  %3722 = vmatprep.subr.bf16.mxu0 0
  %3723 = vmatpush1.bf16.msra.mxu0 0
  %3724 = vmatprep.subr.bf16.mxu0 0
  %3725 = vmatpush1.bf16.msra.mxu0 0
  %3726 = vmatprep.subr.bf16.mxu0 0
  %3727 = vmatpush1.bf16.msra.mxu0 0
  %3728 = vmatprep.subr.bf16.mxu0 0
  %3729 = vmatpush1.bf16.msra.mxu0 0
  %3730 = vmatprep.mubr.bf16.mxu0 0
  %3731 = vmatmul.mubr.bf16.gmra.mrb[0].mxu0 %v2588
  %v3732 = vpop.f32.mrb[0].mxu0
  %v3733 = vadd.f32 %v458, %v3732
  %v3734 = vpop.f32.mrb[0].mxu0
  %v3735 = vadd.f32 %v458, %v3734
  %v3736 = vpop.f32.mrb[0].mxu0
  %v3737 = vadd.f32 %v463, %v3736
  %v3738 = vpop.f32.mrb[0].mxu0
  %v3739 = vadd.f32 %v463, %v3738
  %3740 = vmatprep.mubr.bf16.mxu0 0
  %3741 = vmatmul.mubr.bf16.gmra.mrb[0].mxu0 %v2591
  %v3742 = vpop.f32.mrb[0].mxu0
  %v3743 = vadd.f32 %v468, %v3742
  %v3744 = vpop.f32.mrb[0].mxu0
  %v3745 = vadd.f32 %v468, %v3744
  %v3746 = vpop.f32.mrb[0].mxu0
  %v3747 = vpop.f32.mrb[0].mxu0
  %3748 = vdwg.mxu0
  %3749 = vmatprep.subr.bf16.mxu0 %v1819
  %3750 = vmatpush1.bf16.msra.mxu0 %v1818
  %3751 = vmatprep.subr.bf16.mxu0 %v1881
  %3752 = vmatpush1.bf16.msra.mxu0 %v1880
  %3753 = vmatprep.subr.bf16.mxu0 %v1943
  %3754 = vmatpush1.bf16.msra.mxu0 %v1942
  %3755 = vmatprep.subr.bf16.mxu0 %v2005
  %3756 = vmatpush1.bf16.msra.mxu0 %v2004
  %3757 = vmatprep.subr.bf16.mxu0 %v2067
  %3758 = vmatpush1.bf16.msra.mxu0 %v2066
  %3759 = vmatprep.subr.bf16.mxu0 %v2129
  %3760 = vmatpush1.bf16.msra.mxu0 %v2128
  %3761 = vmatprep.subr.bf16.mxu0 %v2712
  %3762 = vmatpush1.bf16.msra.mxu0 %v2709
  %3763 = vmatprep.subr.bf16.mxu0 0
  %3764 = vmatpush1.bf16.msra.mxu0 0
  %3765 = vmatprep.subr.bf16.mxu0 0
  %3766 = vmatpush1.bf16.msra.mxu0 0
  %3767 = vmatprep.subr.bf16.mxu0 0
  %3768 = vmatpush1.bf16.msra.mxu0 0
  %3769 = vmatprep.subr.bf16.mxu0 0
  %3770 = vmatpush1.bf16.msra.mxu0 0
  %3771 = vmatprep.subr.bf16.mxu0 0
  %3772 = vmatpush1.bf16.msra.mxu0 0
  %3773 = vmatprep.subr.bf16.mxu0 0
  %3774 = vmatpush1.bf16.msra.mxu0 0
  %3775 = vmatprep.subr.bf16.mxu0 0
  %3776 = vmatpush1.bf16.msra.mxu0 0
  %3777 = vmatprep.subr.bf16.mxu0 0
  %3778 = vmatpush1.bf16.msra.mxu0 0
  %3779 = vmatprep.subr.bf16.mxu0 0
  %3780 = vmatpush1.bf16.msra.mxu0 0
  %3781 = vmatprep.mubr.bf16.mxu0 0
  %3782 = vmatmul.mubr.bf16.gmra.mrb[0].mxu0 %v2588
  %v3783 = vpop.f32.mrb[0].mxu0
  %v3784 = vadd.f32 %v458, %v3783
  %v3785 = vpop.f32.mrb[0].mxu0
  %v3786 = vadd.f32 %v458, %v3785
  %v3787 = vpop.f32.mrb[0].mxu0
  %v3788 = vadd.f32 %v463, %v3787
  %v3789 = vpop.f32.mrb[0].mxu0
  %v3790 = vadd.f32 %v463, %v3789
  %3791 = vmatprep.mubr.bf16.mxu0 0
  %3792 = vmatmul.mubr.bf16.gmra.mrb[0].mxu0 %v2591
  %v3793 = vpop.f32.mrb[0].mxu0
  %v3794 = vadd.f32 %v468, %v3793
  %v3795 = vpop.f32.mrb[0].mxu0
  %v3796 = vadd.f32 %v468, %v3795
  %v3797 = vpop.f32.mrb[0].mxu0
  %v3798 = vpop.f32.mrb[0].mxu0
  %3799 = vdwg.mxu0
  %3800 = vmatprep.subr.bf16.mxu0 %v1821
  %3801 = vmatpush1.bf16.msra.mxu0 %v1820
  %3802 = vmatprep.subr.bf16.mxu0 %v1883
  %3803 = vmatpush1.bf16.msra.mxu0 %v1882
  %3804 = vmatprep.subr.bf16.mxu0 %v1945
  %3805 = vmatpush1.bf16.msra.mxu0 %v1944
  %3806 = vmatprep.subr.bf16.mxu0 %v2007
  %3807 = vmatpush1.bf16.msra.mxu0 %v2006
  %3808 = vmatprep.subr.bf16.mxu0 %v2069
  %3809 = vmatpush1.bf16.msra.mxu0 %v2068
  %3810 = vmatprep.subr.bf16.mxu0 %v2131
  %3811 = vmatpush1.bf16.msra.mxu0 %v2130
  %3812 = vmatprep.subr.bf16.mxu0 %v2718
  %3813 = vmatpush1.bf16.msra.mxu0 %v2715
  %3814 = vmatprep.subr.bf16.mxu0 0
  %3815 = vmatpush1.bf16.msra.mxu0 0
  %3816 = vmatprep.subr.bf16.mxu0 0
  %3817 = vmatpush1.bf16.msra.mxu0 0
  %3818 = vmatprep.subr.bf16.mxu0 0
  %3819 = vmatpush1.bf16.msra.mxu0 0
  %3820 = vmatprep.subr.bf16.mxu0 0
  %3821 = vmatpush1.bf16.msra.mxu0 0
  %3822 = vmatprep.subr.bf16.mxu0 0
  %3823 = vmatpush1.bf16.msra.mxu0 0
  %3824 = vmatprep.subr.bf16.mxu0 0
  %3825 = vmatpush1.bf16.msra.mxu0 0
  %3826 = vmatprep.subr.bf16.mxu0 0
  %3827 = vmatpush1.bf16.msra.mxu0 0
  %3828 = vmatprep.subr.bf16.mxu0 0
  %3829 = vmatpush1.bf16.msra.mxu0 0
  %3830 = vmatprep.subr.bf16.mxu0 0
  %3831 = vmatpush1.bf16.msra.mxu0 0
  %3832 = vmatprep.mubr.bf16.mxu0 0
  %3833 = vmatmul.mubr.bf16.gmra.mrb[0].mxu0 %v2588
  %v3834 = vpop.f32.mrb[0].mxu0
  %v3835 = vadd.f32 %v458, %v3834
  %v3836 = vpop.f32.mrb[0].mxu0
  %v3837 = vadd.f32 %v458, %v3836
  %v3838 = vpop.f32.mrb[0].mxu0
  %v3839 = vadd.f32 %v463, %v3838
  %v3840 = vpop.f32.mrb[0].mxu0
  %v3841 = vadd.f32 %v463, %v3840
  %3842 = vmatprep.mubr.bf16.mxu0 0
  %3843 = vmatmul.mubr.bf16.gmra.mrb[0].mxu0 %v2591
  %v3844 = vpop.f32.mrb[0].mxu0
  %v3845 = vadd.f32 %v468, %v3844
  %v3846 = vpop.f32.mrb[0].mxu0
  %v3847 = vadd.f32 %v468, %v3846
  %v3848 = vpop.f32.mrb[0].mxu0
  %v3849 = vpop.f32.mrb[0].mxu0
  %3850 = vdwg.mxu0
  %3851 = vmatprep.subr.bf16.mxu0 %v1823
  %3852 = vmatpush1.bf16.msra.mxu0 %v1822
  %3853 = vmatprep.subr.bf16.mxu0 %v1885
  %3854 = vmatpush1.bf16.msra.mxu0 %v1884
  %3855 = vmatprep.subr.bf16.mxu0 %v1947
  %3856 = vmatpush1.bf16.msra.mxu0 %v1946
  %3857 = vmatprep.subr.bf16.mxu0 %v2009
  %3858 = vmatpush1.bf16.msra.mxu0 %v2008
  %3859 = vmatprep.subr.bf16.mxu0 %v2071
  %3860 = vmatpush1.bf16.msra.mxu0 %v2070
  %3861 = vmatprep.subr.bf16.mxu0 %v2133
  %3862 = vmatpush1.bf16.msra.mxu0 %v2132
  %3863 = vmatprep.subr.bf16.mxu0 %v2724
  %3864 = vmatpush1.bf16.msra.mxu0 %v2721
  %3865 = vmatprep.subr.bf16.mxu0 0
  %3866 = vmatpush1.bf16.msra.mxu0 0
  %3867 = vmatprep.subr.bf16.mxu0 0
  %3868 = vmatpush1.bf16.msra.mxu0 0
  %3869 = vmatprep.subr.bf16.mxu0 0
  %3870 = vmatpush1.bf16.msra.mxu0 0
  %3871 = vmatprep.subr.bf16.mxu0 0
  %3872 = vmatpush1.bf16.msra.mxu0 0
  %3873 = vmatprep.subr.bf16.mxu0 0
  %3874 = vmatpush1.bf16.msra.mxu0 0
  %3875 = vmatprep.subr.bf16.mxu0 0
  %3876 = vmatpush1.bf16.msra.mxu0 0
  %3877 = vmatprep.subr.bf16.mxu0 0
  %3878 = vmatpush1.bf16.msra.mxu0 0
  %3879 = vmatprep.subr.bf16.mxu0 0
  %3880 = vmatpush1.bf16.msra.mxu0 0
  %3881 = vmatprep.subr.bf16.mxu0 0
  %3882 = vmatpush1.bf16.msra.mxu0 0
  %3883 = vmatprep.mubr.bf16.mxu0 0
  %3884 = vmatmul.mubr.bf16.gmra.mrb[0].mxu0 %v2588
  %v3885 = vpop.f32.mrb[0].mxu0
  %v3886 = vadd.f32 %v458, %v3885
  %v3887 = vpop.f32.mrb[0].mxu0
  %v3888 = vadd.f32 %v458, %v3887
  %v3889 = vpop.f32.mrb[0].mxu0
  %v3890 = vadd.f32 %v463, %v3889
  %v3891 = vpop.f32.mrb[0].mxu0
  %v3892 = vadd.f32 %v463, %v3891
  %3893 = vmatprep.mubr.bf16.mxu0 0
  %3894 = vmatmul.mubr.bf16.gmra.mrb[0].mxu0 %v2591
  %v3895 = vpop.f32.mrb[0].mxu0
  %v3896 = vadd.f32 %v468, %v3895
  %v3897 = vpop.f32.mrb[0].mxu0
  %v3898 = vadd.f32 %v468, %v3897
  %v3899 = vpop.f32.mrb[0].mxu0
  %v3900 = vpop.f32.mrb[0].mxu0
  %3901 = vdwg.mxu0
  %3902 = vmatprep.subr.bf16.mxu0 %v1825
  %3903 = vmatpush1.bf16.msra.mxu0 %v1824
  %3904 = vmatprep.subr.bf16.mxu0 %v1887
  %3905 = vmatpush1.bf16.msra.mxu0 %v1886
  %3906 = vmatprep.subr.bf16.mxu0 %v1949
  %3907 = vmatpush1.bf16.msra.mxu0 %v1948
  %3908 = vmatprep.subr.bf16.mxu0 %v2011
  %3909 = vmatpush1.bf16.msra.mxu0 %v2010
  %3910 = vmatprep.subr.bf16.mxu0 %v2073
  %3911 = vmatpush1.bf16.msra.mxu0 %v2072
  %3912 = vmatprep.subr.bf16.mxu0 %v2135
  %3913 = vmatpush1.bf16.msra.mxu0 %v2134
  %3914 = vmatprep.subr.bf16.mxu0 %v2730
  %3915 = vmatpush1.bf16.msra.mxu0 %v2727
  %3916 = vmatprep.subr.bf16.mxu0 0
  %3917 = vmatpush1.bf16.msra.mxu0 0
  %3918 = vmatprep.subr.bf16.mxu0 0
  %3919 = vmatpush1.bf16.msra.mxu0 0
  %3920 = vmatprep.subr.bf16.mxu0 0
  %3921 = vmatpush1.bf16.msra.mxu0 0
  %3922 = vmatprep.subr.bf16.mxu0 0
  %3923 = vmatpush1.bf16.msra.mxu0 0
  %3924 = vmatprep.subr.bf16.mxu0 0
  %3925 = vmatpush1.bf16.msra.mxu0 0
  %3926 = vmatprep.subr.bf16.mxu0 0
  %3927 = vmatpush1.bf16.msra.mxu0 0
  %3928 = vmatprep.subr.bf16.mxu0 0
  %3929 = vmatpush1.bf16.msra.mxu0 0
  %3930 = vmatprep.subr.bf16.mxu0 0
  %3931 = vmatpush1.bf16.msra.mxu0 0
  %3932 = vmatprep.subr.bf16.mxu0 0
  %3933 = vmatpush1.bf16.msra.mxu0 0
  %3934 = vmatprep.mubr.bf16.mxu0 0
  %3935 = vmatmul.mubr.bf16.gmra.mrb[0].mxu0 %v2588
  %v3936 = vpop.f32.mrb[0].mxu0
  %v3937 = vadd.f32 %v458, %v3936
  %v3938 = vpop.f32.mrb[0].mxu0
  %v3939 = vadd.f32 %v458, %v3938
  %v3940 = vpop.f32.mrb[0].mxu0
  %v3941 = vadd.f32 %v463, %v3940
  %v3942 = vpop.f32.mrb[0].mxu0
  %v3943 = vadd.f32 %v463, %v3942
  %3944 = vmatprep.mubr.bf16.mxu0 0
  %3945 = vmatmul.mubr.bf16.gmra.mrb[0].mxu0 %v2591
  %v3946 = vpop.f32.mrb[0].mxu0
  %v3947 = vadd.f32 %v468, %v3946
  %v3948 = vpop.f32.mrb[0].mxu0
  %v3949 = vadd.f32 %v468, %v3948
  %v3950 = vpop.f32.mrb[0].mxu0
  %v3951 = vpop.f32.mrb[0].mxu0
  %3952 = vdwg.mxu0
  %3953 = vmatprep.subr.bf16.mxu0 %v1827
  %3954 = vmatpush1.bf16.msra.mxu0 %v1826
  %3955 = vmatprep.subr.bf16.mxu0 %v1889
  %3956 = vmatpush1.bf16.msra.mxu0 %v1888
  %3957 = vmatprep.subr.bf16.mxu0 %v1951
  %3958 = vmatpush1.bf16.msra.mxu0 %v1950
  %3959 = vmatprep.subr.bf16.mxu0 %v2013
  %3960 = vmatpush1.bf16.msra.mxu0 %v2012
  %3961 = vmatprep.subr.bf16.mxu0 %v2075
  %3962 = vmatpush1.bf16.msra.mxu0 %v2074
  %3963 = vmatprep.subr.bf16.mxu0 %v2137
  %3964 = vmatpush1.bf16.msra.mxu0 %v2136
  %3965 = vmatprep.subr.bf16.mxu0 %v2736
  %3966 = vmatpush1.bf16.msra.mxu0 %v2733
  %3967 = vmatprep.subr.bf16.mxu0 0
  %3968 = vmatpush1.bf16.msra.mxu0 0
  %3969 = vmatprep.subr.bf16.mxu0 0
  %3970 = vmatpush1.bf16.msra.mxu0 0
  %3971 = vmatprep.subr.bf16.mxu0 0
  %3972 = vmatpush1.bf16.msra.mxu0 0
  %3973 = vmatprep.subr.bf16.mxu0 0
  %3974 = vmatpush1.bf16.msra.mxu0 0
  %3975 = vmatprep.subr.bf16.mxu0 0
  %3976 = vmatpush1.bf16.msra.mxu0 0
  %3977 = vmatprep.subr.bf16.mxu0 0
  %3978 = vmatpush1.bf16.msra.mxu0 0
  %3979 = vmatprep.subr.bf16.mxu0 0
  %3980 = vmatpush1.bf16.msra.mxu0 0
  %3981 = vmatprep.subr.bf16.mxu0 0
  %3982 = vmatpush1.bf16.msra.mxu0 0
  %3983 = vmatprep.subr.bf16.mxu0 0
  %3984 = vmatpush1.bf16.msra.mxu0 0
  %3985 = vmatprep.mubr.bf16.mxu0 0
  %3986 = vmatmul.mubr.bf16.gmra.mrb[0].mxu0 %v2588
  %v3987 = vpop.f32.mrb[0].mxu0
  %v3988 = vadd.f32 %v458, %v3987
  %v3989 = vpop.f32.mrb[0].mxu0
  %v3990 = vadd.f32 %v458, %v3989
  %v3991 = vpop.f32.mrb[0].mxu0
  %v3992 = vadd.f32 %v463, %v3991
  %v3993 = vpop.f32.mrb[0].mxu0
  %v3994 = vadd.f32 %v463, %v3993
  %3995 = vmatprep.mubr.bf16.mxu0 0
  %3996 = vmatmul.mubr.bf16.gmra.mrb[0].mxu0 %v2591
  %v3997 = vpop.f32.mrb[0].mxu0
  %v3998 = vadd.f32 %v468, %v3997
  %v3999 = vpop.f32.mrb[0].mxu0
  %v4000 = vadd.f32 %v468, %v3999
  %v4001 = vpop.f32.mrb[0].mxu0
  %v4002 = vpop.f32.mrb[0].mxu0
  %4003 = vdwg.mxu0
  %4004 = vmatprep.subr.bf16.mxu0 %v1829
  %4005 = vmatpush1.bf16.msra.mxu0 %v1828
  %4006 = vmatprep.subr.bf16.mxu0 %v1891
  %4007 = vmatpush1.bf16.msra.mxu0 %v1890
  %4008 = vmatprep.subr.bf16.mxu0 %v1953
  %4009 = vmatpush1.bf16.msra.mxu0 %v1952
  %4010 = vmatprep.subr.bf16.mxu0 %v2015
  %4011 = vmatpush1.bf16.msra.mxu0 %v2014
  %4012 = vmatprep.subr.bf16.mxu0 %v2077
  %4013 = vmatpush1.bf16.msra.mxu0 %v2076
  %4014 = vmatprep.subr.bf16.mxu0 %v2139
  %4015 = vmatpush1.bf16.msra.mxu0 %v2138
  %4016 = vmatprep.subr.bf16.mxu0 %v2742
  %4017 = vmatpush1.bf16.msra.mxu0 %v2739
  %4018 = vmatprep.subr.bf16.mxu0 0
  %4019 = vmatpush1.bf16.msra.mxu0 0
  %4020 = vmatprep.subr.bf16.mxu0 0
  %4021 = vmatpush1.bf16.msra.mxu0 0
  %4022 = vmatprep.subr.bf16.mxu0 0
  %4023 = vmatpush1.bf16.msra.mxu0 0
  %4024 = vmatprep.subr.bf16.mxu0 0
  %4025 = vmatpush1.bf16.msra.mxu0 0
  %4026 = vmatprep.subr.bf16.mxu0 0
  %4027 = vmatpush1.bf16.msra.mxu0 0
  %4028 = vmatprep.subr.bf16.mxu0 0
  %4029 = vmatpush1.bf16.msra.mxu0 0
  %4030 = vmatprep.subr.bf16.mxu0 0
  %4031 = vmatpush1.bf16.msra.mxu0 0
  %4032 = vmatprep.subr.bf16.mxu0 0
  %4033 = vmatpush1.bf16.msra.mxu0 0
  %4034 = vmatprep.subr.bf16.mxu0 0
  %4035 = vmatpush1.bf16.msra.mxu0 0
  %4036 = vmatprep.mubr.bf16.mxu0 0
  %4037 = vmatmul.mubr.bf16.gmra.mrb[0].mxu0 %v2588
  %v4038 = vpop.f32.mrb[0].mxu0
  %v4039 = vadd.f32 %v458, %v4038
  %v4040 = vpop.f32.mrb[0].mxu0
  %v4041 = vadd.f32 %v458, %v4040
  %v4042 = vpop.f32.mrb[0].mxu0
  %v4043 = vadd.f32 %v463, %v4042
  %v4044 = vpop.f32.mrb[0].mxu0
  %v4045 = vadd.f32 %v463, %v4044
  %4046 = vmatprep.mubr.bf16.mxu0 0
  %4047 = vmatmul.mubr.bf16.gmra.mrb[0].mxu0 %v2591
  %v4048 = vpop.f32.mrb[0].mxu0
  %v4049 = vadd.f32 %v468, %v4048
  %v4050 = vpop.f32.mrb[0].mxu0
  %v4051 = vadd.f32 %v468, %v4050
  %v4052 = vpop.f32.mrb[0].mxu0
  %v4053 = vpop.f32.mrb[0].mxu0
  %4054 = vdwg.mxu0
  %4055 = vmatprep.subr.bf16.mxu0 %v1831
  %4056 = vmatpush1.bf16.msra.mxu0 %v1830
  %4057 = vmatprep.subr.bf16.mxu0 %v1893
  %4058 = vmatpush1.bf16.msra.mxu0 %v1892
  %4059 = vmatprep.subr.bf16.mxu0 %v1955
  %4060 = vmatpush1.bf16.msra.mxu0 %v1954
  %4061 = vmatprep.subr.bf16.mxu0 %v2017
  %4062 = vmatpush1.bf16.msra.mxu0 %v2016
  %4063 = vmatprep.subr.bf16.mxu0 %v2079
  %4064 = vmatpush1.bf16.msra.mxu0 %v2078
  %4065 = vmatprep.subr.bf16.mxu0 %v2141
  %4066 = vmatpush1.bf16.msra.mxu0 %v2140
  %4067 = vmatprep.subr.bf16.mxu0 %v2748
  %4068 = vmatpush1.bf16.msra.mxu0 %v2745
  %4069 = vmatprep.subr.bf16.mxu0 0
  %4070 = vmatpush1.bf16.msra.mxu0 0
  %4071 = vmatprep.subr.bf16.mxu0 0
  %4072 = vmatpush1.bf16.msra.mxu0 0
  %4073 = vmatprep.subr.bf16.mxu0 0
  %4074 = vmatpush1.bf16.msra.mxu0 0
  %4075 = vmatprep.subr.bf16.mxu0 0
  %4076 = vmatpush1.bf16.msra.mxu0 0
  %4077 = vmatprep.subr.bf16.mxu0 0
  %4078 = vmatpush1.bf16.msra.mxu0 0
  %4079 = vmatprep.subr.bf16.mxu0 0
  %4080 = vmatpush1.bf16.msra.mxu0 0
  %4081 = vmatprep.subr.bf16.mxu0 0
  %4082 = vmatpush1.bf16.msra.mxu0 0
  %4083 = vmatprep.subr.bf16.mxu0 0
  %4084 = vmatpush1.bf16.msra.mxu0 0
  %4085 = vmatprep.subr.bf16.mxu0 0
  %4086 = vmatpush1.bf16.msra.mxu0 0
  %4087 = vmatprep.mubr.bf16.mxu0 0
  %4088 = vmatmul.mubr.bf16.gmra.mrb[0].mxu0 %v2588
  %v4089 = vpop.f32.mrb[0].mxu0
  %v4090 = vadd.f32 %v458, %v4089
  %v4091 = vpop.f32.mrb[0].mxu0
  %v4092 = vadd.f32 %v458, %v4091
  %v4093 = vpop.f32.mrb[0].mxu0
  %v4094 = vadd.f32 %v463, %v4093
  %v4095 = vpop.f32.mrb[0].mxu0
  %v4096 = vadd.f32 %v463, %v4095
  %4097 = vmatprep.mubr.bf16.mxu0 0
  %4098 = vmatmul.mubr.bf16.gmra.mrb[0].mxu0 %v2591
  %v4099 = vpop.f32.mrb[0].mxu0
  %v4100 = vadd.f32 %v468, %v4099
  %v4101 = vpop.f32.mrb[0].mxu0
  %v4102 = vadd.f32 %v468, %v4101
  %v4103 = vpop.f32.mrb[0].mxu0
  %v4104 = vpop.f32.mrb[0].mxu0
  %4105 = vdwg.mxu0
  %4106 = vmatprep.subr.bf16.mxu0 %v1833
  %4107 = vmatpush1.bf16.msra.mxu0 %v1832
  %4108 = vmatprep.subr.bf16.mxu0 %v1895
  %4109 = vmatpush1.bf16.msra.mxu0 %v1894
  %4110 = vmatprep.subr.bf16.mxu0 %v1957
  %4111 = vmatpush1.bf16.msra.mxu0 %v1956
  %4112 = vmatprep.subr.bf16.mxu0 %v2019
  %4113 = vmatpush1.bf16.msra.mxu0 %v2018
  %4114 = vmatprep.subr.bf16.mxu0 %v2081
  %4115 = vmatpush1.bf16.msra.mxu0 %v2080
  %4116 = vmatprep.subr.bf16.mxu0 %v2143
  %4117 = vmatpush1.bf16.msra.mxu0 %v2142
  %4118 = vmatprep.subr.bf16.mxu0 %v2754
  %4119 = vmatpush1.bf16.msra.mxu0 %v2751
  %4120 = vmatprep.subr.bf16.mxu0 0
  %4121 = vmatpush1.bf16.msra.mxu0 0
  %4122 = vmatprep.subr.bf16.mxu0 0
  %4123 = vmatpush1.bf16.msra.mxu0 0
  %4124 = vmatprep.subr.bf16.mxu0 0
  %4125 = vmatpush1.bf16.msra.mxu0 0
  %4126 = vmatprep.subr.bf16.mxu0 0
  %4127 = vmatpush1.bf16.msra.mxu0 0
  %4128 = vmatprep.subr.bf16.mxu0 0
  %4129 = vmatpush1.bf16.msra.mxu0 0
  %4130 = vmatprep.subr.bf16.mxu0 0
  %4131 = vmatpush1.bf16.msra.mxu0 0
  %4132 = vmatprep.subr.bf16.mxu0 0
  %4133 = vmatpush1.bf16.msra.mxu0 0
  %4134 = vmatprep.subr.bf16.mxu0 0
  %4135 = vmatpush1.bf16.msra.mxu0 0
  %4136 = vmatprep.subr.bf16.mxu0 0
  %4137 = vmatpush1.bf16.msra.mxu0 0
  %4138 = vmatprep.mubr.bf16.mxu0 0
  %4139 = vmatmul.mubr.bf16.gmra.mrb[0].mxu0 %v2588
  %v4140 = vpop.f32.mrb[0].mxu0
  %v4141 = vadd.f32 %v458, %v4140
  %v4142 = vpop.f32.mrb[0].mxu0
  %v4143 = vadd.f32 %v458, %v4142
  %v4144 = vpop.f32.mrb[0].mxu0
  %v4145 = vadd.f32 %v463, %v4144
  %v4146 = vpop.f32.mrb[0].mxu0
  %v4147 = vadd.f32 %v463, %v4146
  %4148 = vmatprep.mubr.bf16.mxu0 0
  %4149 = vmatmul.mubr.bf16.gmra.mrb[0].mxu0 %v2591
  %v4150 = vpop.f32.mrb[0].mxu0
  %v4151 = vadd.f32 %v468, %v4150
  %v4152 = vpop.f32.mrb[0].mxu0
  %v4153 = vadd.f32 %v468, %v4152
  %v4154 = vpop.f32.mrb[0].mxu0
  %v4155 = vpop.f32.mrb[0].mxu0
  %4156 = vdwg.mxu0
  %4157 = vmatprep.subr.bf16.mxu0 %v1835
  %4158 = vmatpush1.bf16.msra.mxu0 %v1834
  %4159 = vmatprep.subr.bf16.mxu0 %v1897
  %4160 = vmatpush1.bf16.msra.mxu0 %v1896
  %4161 = vmatprep.subr.bf16.mxu0 %v1959
  %4162 = vmatpush1.bf16.msra.mxu0 %v1958
  %4163 = vmatprep.subr.bf16.mxu0 %v2021
  %4164 = vmatpush1.bf16.msra.mxu0 %v2020
  %4165 = vmatprep.subr.bf16.mxu0 %v2083
  %4166 = vmatpush1.bf16.msra.mxu0 %v2082
  %4167 = vmatprep.subr.bf16.mxu0 %v2145
  %4168 = vmatpush1.bf16.msra.mxu0 %v2144
  %4169 = vmatprep.subr.bf16.mxu0 %v2760
  %4170 = vmatpush1.bf16.msra.mxu0 %v2757
  %4171 = vmatprep.subr.bf16.mxu0 0
  %4172 = vmatpush1.bf16.msra.mxu0 0
  %4173 = vmatprep.subr.bf16.mxu0 0
  %4174 = vmatpush1.bf16.msra.mxu0 0
  %4175 = vmatprep.subr.bf16.mxu0 0
  %4176 = vmatpush1.bf16.msra.mxu0 0
  %4177 = vmatprep.subr.bf16.mxu0 0
  %4178 = vmatpush1.bf16.msra.mxu0 0
  %4179 = vmatprep.subr.bf16.mxu0 0
  %4180 = vmatpush1.bf16.msra.mxu0 0
  %4181 = vmatprep.subr.bf16.mxu0 0
  %4182 = vmatpush1.bf16.msra.mxu0 0
  %4183 = vmatprep.subr.bf16.mxu0 0
  %4184 = vmatpush1.bf16.msra.mxu0 0
  %4185 = vmatprep.subr.bf16.mxu0 0
  %4186 = vmatpush1.bf16.msra.mxu0 0
  %4187 = vmatprep.subr.bf16.mxu0 0
  %4188 = vmatpush1.bf16.msra.mxu0 0
  %4189 = vmatprep.mubr.bf16.mxu0 0
  %4190 = vmatmul.mubr.bf16.gmra.mrb[0].mxu0 %v2588
  %v4191 = vpop.f32.mrb[0].mxu0
  %v4192 = vadd.f32 %v458, %v4191
  %v4193 = vpop.f32.mrb[0].mxu0
  %v4194 = vadd.f32 %v458, %v4193
  %v4195 = vpop.f32.mrb[0].mxu0
  %v4196 = vadd.f32 %v463, %v4195
  %v4197 = vpop.f32.mrb[0].mxu0
  %v4198 = vadd.f32 %v463, %v4197
  %4199 = vmatprep.mubr.bf16.mxu0 0
  %4200 = vmatmul.mubr.bf16.gmra.mrb[0].mxu0 %v2591
  %v4201 = vpop.f32.mrb[0].mxu0
  %v4202 = vadd.f32 %v468, %v4201
  %v4203 = vpop.f32.mrb[0].mxu0
  %v4204 = vadd.f32 %v468, %v4203
  %v4205 = vpop.f32.mrb[0].mxu0
  %v4206 = vpop.f32.mrb[0].mxu0
  %4207 = vdwg.mxu0
  %4208 = vmatprep.subr.bf16.mxu0 %v1837
  %4209 = vmatpush1.bf16.msra.mxu0 %v1836
  %4210 = vmatprep.subr.bf16.mxu0 %v1899
  %4211 = vmatpush1.bf16.msra.mxu0 %v1898
  %4212 = vmatprep.subr.bf16.mxu0 %v1961
  %4213 = vmatpush1.bf16.msra.mxu0 %v1960
  %4214 = vmatprep.subr.bf16.mxu0 %v2023
  %4215 = vmatpush1.bf16.msra.mxu0 %v2022
  %4216 = vmatprep.subr.bf16.mxu0 %v2085
  %4217 = vmatpush1.bf16.msra.mxu0 %v2084
  %4218 = vmatprep.subr.bf16.mxu0 %v2147
  %4219 = vmatpush1.bf16.msra.mxu0 %v2146
  %4220 = vmatprep.subr.bf16.mxu0 %v2766
  %4221 = vmatpush1.bf16.msra.mxu0 %v2763
  %4222 = vmatprep.subr.bf16.mxu0 0
  %4223 = vmatpush1.bf16.msra.mxu0 0
  %4224 = vmatprep.subr.bf16.mxu0 0
  %4225 = vmatpush1.bf16.msra.mxu0 0
  %4226 = vmatprep.subr.bf16.mxu0 0
  %4227 = vmatpush1.bf16.msra.mxu0 0
  %4228 = vmatprep.subr.bf16.mxu0 0
  %4229 = vmatpush1.bf16.msra.mxu0 0
  %4230 = vmatprep.subr.bf16.mxu0 0
  %4231 = vmatpush1.bf16.msra.mxu0 0
  %4232 = vmatprep.subr.bf16.mxu0 0
  %4233 = vmatpush1.bf16.msra.mxu0 0
  %4234 = vmatprep.subr.bf16.mxu0 0
  %4235 = vmatpush1.bf16.msra.mxu0 0
  %4236 = vmatprep.subr.bf16.mxu0 0
  %4237 = vmatpush1.bf16.msra.mxu0 0
  %4238 = vmatprep.subr.bf16.mxu0 0
  %4239 = vmatpush1.bf16.msra.mxu0 0
  %4240 = vmatprep.mubr.bf16.mxu0 0
  %4241 = vmatmul.mubr.bf16.gmra.mrb[0].mxu0 %v2588
  %v4242 = vpop.f32.mrb[0].mxu0
  %v4243 = vadd.f32 %v458, %v4242
  %v4244 = vpop.f32.mrb[0].mxu0
  %v4245 = vadd.f32 %v458, %v4244
  %v4246 = vpop.f32.mrb[0].mxu0
  %v4247 = vadd.f32 %v463, %v4246
  %v4248 = vpop.f32.mrb[0].mxu0
  %v4249 = vadd.f32 %v463, %v4248
  %4250 = vmatprep.mubr.bf16.mxu0 0
  %4251 = vmatmul.mubr.bf16.gmra.mrb[0].mxu0 %v2591
  %v4252 = vpop.f32.mrb[0].mxu0
  %v4253 = vadd.f32 %v468, %v4252
  %v4254 = vpop.f32.mrb[0].mxu0
  %v4255 = vadd.f32 %v468, %v4254
  %v4256 = vpop.f32.mrb[0].mxu0
  %v4257 = vpop.f32.mrb[0].mxu0
  %4258 = vdwg.mxu0
  %4259 = vmatprep.subr.bf16.mxu0 %v1839
  %4260 = vmatpush1.bf16.msra.mxu0 %v1838
  %4261 = vmatprep.subr.bf16.mxu0 %v1901
  %4262 = vmatpush1.bf16.msra.mxu0 %v1900
  %4263 = vmatprep.subr.bf16.mxu0 %v1963
  %4264 = vmatpush1.bf16.msra.mxu0 %v1962
  %4265 = vmatprep.subr.bf16.mxu0 %v2025
  %4266 = vmatpush1.bf16.msra.mxu0 %v2024
  %4267 = vmatprep.subr.bf16.mxu0 %v2087
  %4268 = vmatpush1.bf16.msra.mxu0 %v2086
  %4269 = vmatprep.subr.bf16.mxu0 %v2149
  %4270 = vmatpush1.bf16.msra.mxu0 %v2148
  %4271 = vmatprep.subr.bf16.mxu0 %v2772
  %4272 = vmatpush1.bf16.msra.mxu0 %v2769
  %4273 = vmatprep.subr.bf16.mxu0 0
  %4274 = vmatpush1.bf16.msra.mxu0 0
  %4275 = vmatprep.subr.bf16.mxu0 0
  %4276 = vmatpush1.bf16.msra.mxu0 0
  %4277 = vmatprep.subr.bf16.mxu0 0
  %4278 = vmatpush1.bf16.msra.mxu0 0
  %4279 = vmatprep.subr.bf16.mxu0 0
  %4280 = vmatpush1.bf16.msra.mxu0 0
  %4281 = vmatprep.subr.bf16.mxu0 0
  %4282 = vmatpush1.bf16.msra.mxu0 0
  %4283 = vmatprep.subr.bf16.mxu0 0
  %4284 = vmatpush1.bf16.msra.mxu0 0
  %4285 = vmatprep.subr.bf16.mxu0 0
  %4286 = vmatpush1.bf16.msra.mxu0 0
  %4287 = vmatprep.subr.bf16.mxu0 0
  %4288 = vmatpush1.bf16.msra.mxu0 0
  %4289 = vmatprep.subr.bf16.mxu0 0
  %4290 = vmatpush1.bf16.msra.mxu0 0
  %4291 = vmatprep.mubr.bf16.mxu0 0
  %4292 = vmatmul.mubr.bf16.gmra.mrb[0].mxu0 %v2588
  %v4293 = vpop.f32.mrb[0].mxu0
  %v4294 = vadd.f32 %v458, %v4293
  %v4295 = vpop.f32.mrb[0].mxu0
  %v4296 = vadd.f32 %v458, %v4295
  %v4297 = vpop.f32.mrb[0].mxu0
  %v4298 = vadd.f32 %v463, %v4297
  %v4299 = vpop.f32.mrb[0].mxu0
  %v4300 = vadd.f32 %v463, %v4299
  %4301 = vmatprep.mubr.bf16.mxu0 0
  %4302 = vmatmul.mubr.bf16.gmra.mrb[0].mxu0 %v2591
  %v4303 = vpop.f32.mrb[0].mxu0
  %v4304 = vadd.f32 %v468, %v4303
  %v4305 = vpop.f32.mrb[0].mxu0
  %v4306 = vadd.f32 %v468, %v4305
  %v4307 = vpop.f32.mrb[0].mxu0
  %v4308 = vpop.f32.mrb[0].mxu0
  %4309 = vdwg.mxu0
  %4310 = vmatprep.subr.bf16.mxu0 %v1841
  %4311 = vmatpush1.bf16.msra.mxu0 %v1840
  %4312 = vmatprep.subr.bf16.mxu0 %v1903
  %4313 = vmatpush1.bf16.msra.mxu0 %v1902
  %4314 = vmatprep.subr.bf16.mxu0 %v1965
  %4315 = vmatpush1.bf16.msra.mxu0 %v1964
  %4316 = vmatprep.subr.bf16.mxu0 %v2027
  %4317 = vmatpush1.bf16.msra.mxu0 %v2026
  %4318 = vmatprep.subr.bf16.mxu0 %v2089
  %4319 = vmatpush1.bf16.msra.mxu0 %v2088
  %4320 = vmatprep.subr.bf16.mxu0 %v2151
  %4321 = vmatpush1.bf16.msra.mxu0 %v2150
  %4322 = vmatprep.subr.bf16.mxu0 %v2778
  %4323 = vmatpush1.bf16.msra.mxu0 %v2775
  %4324 = vmatprep.subr.bf16.mxu0 0
  %4325 = vmatpush1.bf16.msra.mxu0 0
  %4326 = vmatprep.subr.bf16.mxu0 0
  %4327 = vmatpush1.bf16.msra.mxu0 0
  %4328 = vmatprep.subr.bf16.mxu0 0
  %4329 = vmatpush1.bf16.msra.mxu0 0
  %4330 = vmatprep.subr.bf16.mxu0 0
  %4331 = vmatpush1.bf16.msra.mxu0 0
  %4332 = vmatprep.subr.bf16.mxu0 0
  %4333 = vmatpush1.bf16.msra.mxu0 0
  %4334 = vmatprep.subr.bf16.mxu0 0
  %4335 = vmatpush1.bf16.msra.mxu0 0
  %4336 = vmatprep.subr.bf16.mxu0 0
  %4337 = vmatpush1.bf16.msra.mxu0 0
  %4338 = vmatprep.subr.bf16.mxu0 0
  %4339 = vmatpush1.bf16.msra.mxu0 0
  %4340 = vmatprep.subr.bf16.mxu0 0
  %4341 = vmatpush1.bf16.msra.mxu0 0
  %4342 = vmatprep.mubr.bf16.mxu0 0
  %4343 = vmatmul.mubr.bf16.gmra.mrb[0].mxu0 %v2588
  %v4344 = vpop.f32.mrb[0].mxu0
  %v4345 = vadd.f32 %v458, %v4344
  %v4346 = vpop.f32.mrb[0].mxu0
  %v4347 = vadd.f32 %v458, %v4346
  %v4348 = vpop.f32.mrb[0].mxu0
  %v4349 = vadd.f32 %v463, %v4348
  %v4350 = vpop.f32.mrb[0].mxu0
  %v4351 = vadd.f32 %v463, %v4350
  %4352 = vmatprep.mubr.bf16.mxu0 0
  %4353 = vmatmul.mubr.bf16.gmra.mrb[0].mxu0 %v2591
  %v4354 = vpop.f32.mrb[0].mxu0
  %v4355 = vadd.f32 %v468, %v4354
  %v4356 = vpop.f32.mrb[0].mxu0
  %v4357 = vadd.f32 %v468, %v4356
  %v4358 = vpop.f32.mrb[0].mxu0
  %v4359 = vpop.f32.mrb[0].mxu0
  %4360 = vdwg.mxu0
  %v4361 = vmax.f32 %v2815, 0.0
  %v4362 = vmax.f32 %v2817, 0.0
  %v4363 = vmax.f32 %v2866, 0.0
  %v4364 = vmax.f32 %v2868, 0.0
  %v4365 = vmax.f32 %v2917, 0.0
  %v4366 = vmax.f32 %v2919, 0.0
  %v4367 = vmax.f32 %v2968, 0.0
  %v4368 = vmax.f32 %v2970, 0.0
  %v4369 = vmax.f32 %v3019, 0.0
  %v4370 = vmax.f32 %v3021, 0.0
  %v4371 = vmax.f32 %v3070, 0.0
  %v4372 = vmax.f32 %v3072, 0.0
  %v4373 = vmax.f32 %v3121, 0.0
  %v4374 = vmax.f32 %v3123, 0.0
  %v4375 = vmax.f32 %v3172, 0.0
  %v4376 = vmax.f32 %v3174, 0.0
  %v4377 = vmax.f32 %v3223, 0.0
  %v4378 = vmax.f32 %v3225, 0.0
  %v4379 = vmax.f32 %v3274, 0.0
  %v4380 = vmax.f32 %v3276, 0.0
  %v4381 = vmax.f32 %v3325, 0.0
  %v4382 = vmax.f32 %v3327, 0.0
  %v4383 = vmax.f32 %v3376, 0.0
  %v4384 = vmax.f32 %v3378, 0.0
  %v4385 = vmax.f32 %v3427, 0.0
  %v4386 = vmax.f32 %v3429, 0.0
  %v4387 = vmax.f32 %v3478, 0.0
  %v4388 = vmax.f32 %v3480, 0.0
  %v4389 = vmax.f32 %v3529, 0.0
  %v4390 = vmax.f32 %v3531, 0.0
  %v4391 = vmax.f32 %v3580, 0.0
  %v4392 = vmax.f32 %v3582, 0.0
  %v4393 = vmax.f32 %v3631, 0.0
  %v4394 = vmax.f32 %v3633, 0.0
  %v4395 = vmax.f32 %v3682, 0.0
  %v4396 = vmax.f32 %v3684, 0.0
  %v4397 = vmax.f32 %v3733, 0.0
  %v4398 = vmax.f32 %v3735, 0.0
  %v4399 = vmax.f32 %v3784, 0.0
  %v4400 = vmax.f32 %v3786, 0.0
  %v4401 = vmax.f32 %v3835, 0.0
  %v4402 = vmax.f32 %v3837, 0.0
  %v4403 = vmax.f32 %v3886, 0.0
  %v4404 = vmax.f32 %v3888, 0.0
  %v4405 = vmax.f32 %v3937, 0.0
  %v4406 = vmax.f32 %v3939, 0.0
  %v4407 = vmax.f32 %v3988, 0.0
  %v4408 = vmax.f32 %v3990, 0.0
  %v4409 = vmax.f32 %v4039, 0.0
  %v4410 = vmax.f32 %v4041, 0.0
  %v4411 = vmax.f32 %v4090, 0.0
  %v4412 = vmax.f32 %v4092, 0.0
  %v4413 = vmax.f32 %v4141, 0.0
  %v4414 = vmax.f32 %v4143, 0.0
  %v4415 = vmax.f32 %v4192, 0.0
  %v4416 = vmax.f32 %v4194, 0.0
  %v4417 = vmax.f32 %v4243, 0.0
  %v4418 = vmax.f32 %v4245, 0.0
  %v4419 = vmax.f32 %v4294, 0.0
  %v4420 = vmax.f32 %v4296, 0.0
  %v4421 = vmax.f32 %v4345, 0.0
  %v4422 = vmax.f32 %v4347, 0.0
  %v4423 = vmax.f32 %v2819, 0.0
  %v4424 = vmax.f32 %v2821, 0.0
  %v4425 = vmax.f32 %v2870, 0.0
  %v4426 = vmax.f32 %v2872, 0.0
  %v4427 = vmax.f32 %v2921, 0.0
  %v4428 = vmax.f32 %v2923, 0.0
  %v4429 = vmax.f32 %v2972, 0.0
  %v4430 = vmax.f32 %v2974, 0.0
  %v4431 = vmax.f32 %v3023, 0.0
  %v4432 = vmax.f32 %v3025, 0.0
  %v4433 = vmax.f32 %v3074, 0.0
  %v4434 = vmax.f32 %v3076, 0.0
  %v4435 = vmax.f32 %v3125, 0.0
  %v4436 = vmax.f32 %v3127, 0.0
  %v4437 = vmax.f32 %v3176, 0.0
  %v4438 = vmax.f32 %v3178, 0.0
  %v4439 = vmax.f32 %v3227, 0.0
  %v4440 = vmax.f32 %v3229, 0.0
  %v4441 = vmax.f32 %v3278, 0.0
  %v4442 = vmax.f32 %v3280, 0.0
  %v4443 = vmax.f32 %v3329, 0.0
  %v4444 = vmax.f32 %v3331, 0.0
  %v4445 = vmax.f32 %v3380, 0.0
  %v4446 = vmax.f32 %v3382, 0.0
  %v4447 = vmax.f32 %v3431, 0.0
  %v4448 = vmax.f32 %v3433, 0.0
  %v4449 = vmax.f32 %v3482, 0.0
  %v4450 = vmax.f32 %v3484, 0.0
  %v4451 = vmax.f32 %v3533, 0.0
  %v4452 = vmax.f32 %v3535, 0.0
  %v4453 = vmax.f32 %v3584, 0.0
  %v4454 = vmax.f32 %v3586, 0.0
  %v4455 = vmax.f32 %v3635, 0.0
  %v4456 = vmax.f32 %v3637, 0.0
  %v4457 = vmax.f32 %v3686, 0.0
  %v4458 = vmax.f32 %v3688, 0.0
  %v4459 = vmax.f32 %v3737, 0.0
  %v4460 = vmax.f32 %v3739, 0.0
  %v4461 = vmax.f32 %v3788, 0.0
  %v4462 = vmax.f32 %v3790, 0.0
  %v4463 = vmax.f32 %v3839, 0.0
  %v4464 = vmax.f32 %v3841, 0.0
  %v4465 = vmax.f32 %v3890, 0.0
  %v4466 = vmax.f32 %v3892, 0.0
  %v4467 = vmax.f32 %v3941, 0.0
  %v4468 = vmax.f32 %v3943, 0.0
  %v4469 = vmax.f32 %v3992, 0.0
  %v4470 = vmax.f32 %v3994, 0.0
  %v4471 = vmax.f32 %v4043, 0.0
  %v4472 = vmax.f32 %v4045, 0.0
  %v4473 = vmax.f32 %v4094, 0.0
  %v4474 = vmax.f32 %v4096, 0.0
  %v4475 = vmax.f32 %v4145, 0.0
  %v4476 = vmax.f32 %v4147, 0.0
  %v4477 = vmax.f32 %v4196, 0.0
  %v4478 = vmax.f32 %v4198, 0.0
  %v4479 = vmax.f32 %v4247, 0.0
  %v4480 = vmax.f32 %v4249, 0.0
  %v4481 = vmax.f32 %v4298, 0.0
  %v4482 = vmax.f32 %v4300, 0.0
  %v4483 = vmax.f32 %v4349, 0.0
  %v4484 = vmax.f32 %v4351, 0.0
  %v4485 = vmax.f32 %v2825, 0.0
  %v4486 = vmax.f32 %v2827, 0.0
  %v4487 = vmax.f32 %v2876, 0.0
  %v4488 = vmax.f32 %v2878, 0.0
  %v4489 = vmax.f32 %v2927, 0.0
  %v4490 = vmax.f32 %v2929, 0.0
  %v4491 = vmax.f32 %v2978, 0.0
  %v4492 = vmax.f32 %v2980, 0.0
  %v4493 = vmax.f32 %v3029, 0.0
  %v4494 = vmax.f32 %v3031, 0.0
  %v4495 = vmax.f32 %v3080, 0.0
  %v4496 = vmax.f32 %v3082, 0.0
  %v4497 = vmax.f32 %v3131, 0.0
  %v4498 = vmax.f32 %v3133, 0.0
  %v4499 = vmax.f32 %v3182, 0.0
  %v4500 = vmax.f32 %v3184, 0.0
  %v4501 = vmax.f32 %v3233, 0.0
  %v4502 = vmax.f32 %v3235, 0.0
  %v4503 = vmax.f32 %v3284, 0.0
  %v4504 = vmax.f32 %v3286, 0.0
  %v4505 = vmax.f32 %v3335, 0.0
  %v4506 = vmax.f32 %v3337, 0.0
  %v4507 = vmax.f32 %v3386, 0.0
  %v4508 = vmax.f32 %v3388, 0.0
  %v4509 = vmax.f32 %v3437, 0.0
  %v4510 = vmax.f32 %v3439, 0.0
  %v4511 = vmax.f32 %v3488, 0.0
  %v4512 = vmax.f32 %v3490, 0.0
  %v4513 = vmax.f32 %v3539, 0.0
  %v4514 = vmax.f32 %v3541, 0.0
  %v4515 = vmax.f32 %v3590, 0.0
  %v4516 = vmax.f32 %v3592, 0.0
  %v4517 = vmax.f32 %v3641, 0.0
  %v4518 = vmax.f32 %v3643, 0.0
  %v4519 = vmax.f32 %v3692, 0.0
  %v4520 = vmax.f32 %v3694, 0.0
  %v4521 = vmax.f32 %v3743, 0.0
  %v4522 = vmax.f32 %v3745, 0.0
  %v4523 = vmax.f32 %v3794, 0.0
  %v4524 = vmax.f32 %v3796, 0.0
  %v4525 = vmax.f32 %v3845, 0.0
  %v4526 = vmax.f32 %v3847, 0.0
  %v4527 = vmax.f32 %v3896, 0.0
  %v4528 = vmax.f32 %v3898, 0.0
  %v4529 = vmax.f32 %v3947, 0.0
  %v4530 = vmax.f32 %v3949, 0.0
  %v4531 = vmax.f32 %v3998, 0.0
  %v4532 = vmax.f32 %v4000, 0.0
  %v4533 = vmax.f32 %v4049, 0.0
  %v4534 = vmax.f32 %v4051, 0.0
  %v4535 = vmax.f32 %v4100, 0.0
  %v4536 = vmax.f32 %v4102, 0.0
  %v4537 = vmax.f32 %v4151, 0.0
  %v4538 = vmax.f32 %v4153, 0.0
  %v4539 = vmax.f32 %v4202, 0.0
  %v4540 = vmax.f32 %v4204, 0.0
  %v4541 = vmax.f32 %v4253, 0.0
  %v4542 = vmax.f32 %v4255, 0.0
  %v4543 = vmax.f32 %v4304, 0.0
  %v4544 = vmax.f32 %v4306, 0.0
  %v4545 = vmax.f32 %v4355, 0.0
  %v4546 = vmax.f32 %v4357, 0.0
  %v4547 = vpack.c.bf16 %v4423, %v4361
  %v4548 = vpack.c.bf16 %v4424, %v4362
  %v4549 = vpack.c.bf16 %v4425, %v4363
  %v4550 = vpack.c.bf16 %v4426, %v4364
  %v4551 = vpack.c.bf16 %v4427, %v4365
  %v4552 = vpack.c.bf16 %v4428, %v4366
  %v4553 = vpack.c.bf16 %v4429, %v4367
  %v4554 = vpack.c.bf16 %v4430, %v4368
  %v4555 = vpack.c.bf16 %v4431, %v4369
  %v4556 = vpack.c.bf16 %v4432, %v4370
  %v4557 = vpack.c.bf16 %v4433, %v4371
  %v4558 = vpack.c.bf16 %v4434, %v4372
  %v4559 = vpack.c.bf16 %v4435, %v4373
  %v4560 = vpack.c.bf16 %v4436, %v4374
  %v4561 = vpack.c.bf16 %v4437, %v4375
  %v4562 = vpack.c.bf16 %v4438, %v4376
  %v4563 = vpack.c.bf16 %v4439, %v4377
  %v4564 = vpack.c.bf16 %v4440, %v4378
  %v4565 = vpack.c.bf16 %v4441, %v4379
  %v4566 = vpack.c.bf16 %v4442, %v4380
  %v4567 = vpack.c.bf16 %v4443, %v4381
  %v4568 = vpack.c.bf16 %v4444, %v4382
  %v4569 = vpack.c.bf16 %v4445, %v4383
  %v4570 = vpack.c.bf16 %v4446, %v4384
  %v4571 = vpack.c.bf16 %v4447, %v4385
  %v4572 = vpack.c.bf16 %v4448, %v4386
  %v4573 = vpack.c.bf16 %v4449, %v4387
  %v4574 = vpack.c.bf16 %v4450, %v4388
  %v4575 = vpack.c.bf16 %v4451, %v4389
  %v4576 = vpack.c.bf16 %v4452, %v4390
  %v4577 = vpack.c.bf16 %v4453, %v4391
  %v4578 = vpack.c.bf16 %v4454, %v4392
  %v4579 = vpack.c.bf16 %v4455, %v4393
  %v4580 = vpack.c.bf16 %v4456, %v4394
  %v4581 = vpack.c.bf16 %v4457, %v4395
  %v4582 = vpack.c.bf16 %v4458, %v4396
  %v4583 = vpack.c.bf16 %v4459, %v4397
  %v4584 = vpack.c.bf16 %v4460, %v4398
  %v4585 = vpack.c.bf16 %v4461, %v4399
  %v4586 = vpack.c.bf16 %v4462, %v4400
  %v4587 = vpack.c.bf16 %v4463, %v4401
  %v4588 = vpack.c.bf16 %v4464, %v4402
  %v4589 = vpack.c.bf16 %v4465, %v4403
  %v4590 = vpack.c.bf16 %v4466, %v4404
  %v4591 = vpack.c.bf16 %v4467, %v4405
  %v4592 = vpack.c.bf16 %v4468, %v4406
  %v4593 = vpack.c.bf16 %v4469, %v4407
  %v4594 = vpack.c.bf16 %v4470, %v4408
  %v4595 = vpack.c.bf16 %v4471, %v4409
  %v4596 = vpack.c.bf16 %v4472, %v4410
  %v4597 = vpack.c.bf16 %v4473, %v4411
  %v4598 = vpack.c.bf16 %v4474, %v4412
  %v4599 = vpack.c.bf16 %v4475, %v4413
  %v4600 = vpack.c.bf16 %v4476, %v4414
  %v4601 = vpack.c.bf16 %v4477, %v4415
  %v4602 = vpack.c.bf16 %v4478, %v4416
  %v4603 = vpack.c.bf16 %v4479, %v4417
  %v4604 = vpack.c.bf16 %v4480, %v4418
  %v4605 = vpack.c.bf16 %v4481, %v4419
  %v4606 = vpack.c.bf16 %v4482, %v4420
  %v4607 = vpack.c.bf16 %v4483, %v4421
  %v4608 = vpack.c.bf16 %v4484, %v4422
  %v4609 = vpack.c.bf16 %v4485, %v4485
  %v4610 = vpack.c.bf16 %v4486, %v4486
  %v4611 = vpack.c.bf16 %v4487, %v4487
  %v4612 = vpack.c.bf16 %v4488, %v4488
  %v4613 = vpack.c.bf16 %v4489, %v4489
  %v4614 = vpack.c.bf16 %v4490, %v4490
  %v4615 = vpack.c.bf16 %v4491, %v4491
  %v4616 = vpack.c.bf16 %v4492, %v4492
  %v4617 = vpack.c.bf16 %v4493, %v4493
  %v4618 = vpack.c.bf16 %v4494, %v4494
  %v4619 = vpack.c.bf16 %v4495, %v4495
  %v4620 = vpack.c.bf16 %v4496, %v4496
  %v4621 = vpack.c.bf16 %v4497, %v4497
  %v4622 = vpack.c.bf16 %v4498, %v4498
  %v4623 = vpack.c.bf16 %v4499, %v4499
  %v4624 = vpack.c.bf16 %v4500, %v4500
  %v4625 = vpack.c.bf16 %v4501, %v4501
  %v4626 = vpack.c.bf16 %v4502, %v4502
  %v4627 = vpack.c.bf16 %v4503, %v4503
  %v4628 = vpack.c.bf16 %v4504, %v4504
  %v4629 = vpack.c.bf16 %v4505, %v4505
  %v4630 = vpack.c.bf16 %v4506, %v4506
  %v4631 = vpack.c.bf16 %v4507, %v4507
  %v4632 = vpack.c.bf16 %v4508, %v4508
  %v4633 = vpack.c.bf16 %v4509, %v4509
  %v4634 = vpack.c.bf16 %v4510, %v4510
  %v4635 = vpack.c.bf16 %v4511, %v4511
  %v4636 = vpack.c.bf16 %v4512, %v4512
  %v4637 = vpack.c.bf16 %v4513, %v4513
  %v4638 = vpack.c.bf16 %v4514, %v4514
  %v4639 = vpack.c.bf16 %v4515, %v4515
  %v4640 = vpack.c.bf16 %v4516, %v4516
  %v4641 = vpack.c.bf16 %v4517, %v4517
  %v4642 = vpack.c.bf16 %v4518, %v4518
  %v4643 = vpack.c.bf16 %v4519, %v4519
  %v4644 = vpack.c.bf16 %v4520, %v4520
  %v4645 = vpack.c.bf16 %v4521, %v4521
  %v4646 = vpack.c.bf16 %v4522, %v4522
  %v4647 = vpack.c.bf16 %v4523, %v4523
  %v4648 = vpack.c.bf16 %v4524, %v4524
  %v4649 = vpack.c.bf16 %v4525, %v4525
  %v4650 = vpack.c.bf16 %v4526, %v4526
  %v4651 = vpack.c.bf16 %v4527, %v4527
  %v4652 = vpack.c.bf16 %v4528, %v4528
  %v4653 = vpack.c.bf16 %v4529, %v4529
  %v4654 = vpack.c.bf16 %v4530, %v4530
  %v4655 = vpack.c.bf16 %v4531, %v4531
  %v4656 = vpack.c.bf16 %v4532, %v4532
  %v4657 = vpack.c.bf16 %v4533, %v4533
  %v4658 = vpack.c.bf16 %v4534, %v4534
  %v4659 = vpack.c.bf16 %v4535, %v4535
  %v4660 = vpack.c.bf16 %v4536, %v4536
  %v4661 = vpack.c.bf16 %v4537, %v4537
  %v4662 = vpack.c.bf16 %v4538, %v4538
  %v4663 = vpack.c.bf16 %v4539, %v4539
  %v4664 = vpack.c.bf16 %v4540, %v4540
  %v4665 = vpack.c.bf16 %v4541, %v4541
  %v4666 = vpack.c.bf16 %v4542, %v4542
  %v4667 = vpack.c.bf16 %v4543, %v4543
  %v4668 = vpack.c.bf16 %v4544, %v4544
  %v4669 = vpack.c.bf16 %v4545, %v4545
  %v4670 = vpack.c.bf16 %v4546, %v4546
  %v4795 = vunpack.c.l.b16 %v4547
  %v4796 = vunpack.c.l.b16 %v4548
  %v4797 = vunpack.c.l.b16 %v4549
  %v4798 = vunpack.c.l.b16 %v4550
  %v4799 = vunpack.c.l.b16 %v4551
  %v4800 = vunpack.c.l.b16 %v4552
  %v4801 = vunpack.c.l.b16 %v4553
  %v4802 = vunpack.c.l.b16 %v4554
  %v4803 = vunpack.c.l.b16 %v4555
  %v4804 = vunpack.c.l.b16 %v4556
  %v4805 = vunpack.c.l.b16 %v4557
  %v4806 = vunpack.c.l.b16 %v4558
  %v4807 = vunpack.c.l.b16 %v4559
  %v4808 = vunpack.c.l.b16 %v4560
  %v4809 = vunpack.c.l.b16 %v4561
  %v4810 = vunpack.c.l.b16 %v4562
  %v4811 = vunpack.c.l.b16 %v4563
  %v4812 = vunpack.c.l.b16 %v4564
  %v4813 = vunpack.c.l.b16 %v4565
  %v4814 = vunpack.c.l.b16 %v4566
  %v4815 = vunpack.c.l.b16 %v4567
  %v4816 = vunpack.c.l.b16 %v4568
  %v4817 = vunpack.c.l.b16 %v4569
  %v4818 = vunpack.c.l.b16 %v4570
  %v4819 = vunpack.c.l.b16 %v4571
  %v4820 = vunpack.c.l.b16 %v4572
  %v4821 = vunpack.c.l.b16 %v4573
  %v4822 = vunpack.c.l.b16 %v4574
  %v4823 = vunpack.c.l.b16 %v4575
  %v4824 = vunpack.c.l.b16 %v4576
  %v4825 = vunpack.c.l.b16 %v4577
  %v4826 = vunpack.c.l.b16 %v4578
  %v4827 = vunpack.c.l.b16 %v4579
  %v4828 = vunpack.c.l.b16 %v4580
  %v4829 = vunpack.c.l.b16 %v4581
  %v4830 = vunpack.c.l.b16 %v4582
  %v4831 = vunpack.c.l.b16 %v4583
  %v4832 = vunpack.c.l.b16 %v4584
  %v4833 = vunpack.c.l.b16 %v4585
  %v4834 = vunpack.c.l.b16 %v4586
  %v4835 = vunpack.c.l.b16 %v4587
  %v4836 = vunpack.c.l.b16 %v4588
  %v4837 = vunpack.c.l.b16 %v4589
  %v4838 = vunpack.c.l.b16 %v4590
  %v4839 = vunpack.c.l.b16 %v4591
  %v4840 = vunpack.c.l.b16 %v4592
  %v4841 = vunpack.c.l.b16 %v4593
  %v4842 = vunpack.c.l.b16 %v4594
  %v4843 = vunpack.c.l.b16 %v4595
  %v4844 = vunpack.c.l.b16 %v4596
  %v4845 = vunpack.c.l.b16 %v4597
  %v4846 = vunpack.c.l.b16 %v4598
  %v4847 = vunpack.c.l.b16 %v4599
  %v4848 = vunpack.c.l.b16 %v4600
  %v4849 = vunpack.c.l.b16 %v4601
  %v4850 = vunpack.c.l.b16 %v4602
  %v4851 = vunpack.c.l.b16 %v4603
  %v4852 = vunpack.c.l.b16 %v4604
  %v4853 = vunpack.c.l.b16 %v4605
  %v4854 = vunpack.c.l.b16 %v4606
  %v4855 = vunpack.c.l.b16 %v4607
  %v4856 = vunpack.c.l.b16 %v4608
  %v4857 = vunpack.c.h.b16 %v4547
  %v4858 = vunpack.c.h.b16 %v4548
  %v4859 = vunpack.c.h.b16 %v4549
  %v4860 = vunpack.c.h.b16 %v4550
  %v4861 = vunpack.c.h.b16 %v4551
  %v4862 = vunpack.c.h.b16 %v4552
  %v4863 = vunpack.c.h.b16 %v4553
  %v4864 = vunpack.c.h.b16 %v4554
  %v4865 = vunpack.c.h.b16 %v4555
  %v4866 = vunpack.c.h.b16 %v4556
  %v4867 = vunpack.c.h.b16 %v4557
  %v4868 = vunpack.c.h.b16 %v4558
  %v4869 = vunpack.c.h.b16 %v4559
  %v4870 = vunpack.c.h.b16 %v4560
  %v4871 = vunpack.c.h.b16 %v4561
  %v4872 = vunpack.c.h.b16 %v4562
  %v4873 = vunpack.c.h.b16 %v4563
  %v4874 = vunpack.c.h.b16 %v4564
  %v4875 = vunpack.c.h.b16 %v4565
  %v4876 = vunpack.c.h.b16 %v4566
  %v4877 = vunpack.c.h.b16 %v4567
  %v4878 = vunpack.c.h.b16 %v4568
  %v4879 = vunpack.c.h.b16 %v4569
  %v4880 = vunpack.c.h.b16 %v4570
  %v4881 = vunpack.c.h.b16 %v4571
  %v4882 = vunpack.c.h.b16 %v4572
  %v4883 = vunpack.c.h.b16 %v4573
  %v4884 = vunpack.c.h.b16 %v4574
  %v4885 = vunpack.c.h.b16 %v4575
  %v4886 = vunpack.c.h.b16 %v4576
  %v4887 = vunpack.c.h.b16 %v4577
  %v4888 = vunpack.c.h.b16 %v4578
  %v4889 = vunpack.c.h.b16 %v4579
  %v4890 = vunpack.c.h.b16 %v4580
  %v4891 = vunpack.c.h.b16 %v4581
  %v4892 = vunpack.c.h.b16 %v4582
  %v4893 = vunpack.c.h.b16 %v4583
  %v4894 = vunpack.c.h.b16 %v4584
  %v4895 = vunpack.c.h.b16 %v4585
  %v4896 = vunpack.c.h.b16 %v4586
  %v4897 = vunpack.c.h.b16 %v4587
  %v4898 = vunpack.c.h.b16 %v4588
  %v4899 = vunpack.c.h.b16 %v4589
  %v4900 = vunpack.c.h.b16 %v4590
  %v4901 = vunpack.c.h.b16 %v4591
  %v4902 = vunpack.c.h.b16 %v4592
  %v4903 = vunpack.c.h.b16 %v4593
  %v4904 = vunpack.c.h.b16 %v4594
  %v4905 = vunpack.c.h.b16 %v4595
  %v4906 = vunpack.c.h.b16 %v4596
  %v4907 = vunpack.c.h.b16 %v4597
  %v4908 = vunpack.c.h.b16 %v4598
  %v4909 = vunpack.c.h.b16 %v4599
  %v4910 = vunpack.c.h.b16 %v4600
  %v4911 = vunpack.c.h.b16 %v4601
  %v4912 = vunpack.c.h.b16 %v4602
  %v4913 = vunpack.c.h.b16 %v4603
  %v4914 = vunpack.c.h.b16 %v4604
  %v4915 = vunpack.c.h.b16 %v4605
  %v4916 = vunpack.c.h.b16 %v4606
  %v4917 = vunpack.c.h.b16 %v4607
  %v4918 = vunpack.c.h.b16 %v4608
  %v4919 = vunpack.c.l.b16 %v4609
  %v4920 = vunpack.c.l.b16 %v4610
  %v4921 = vunpack.c.l.b16 %v4611
  %v4922 = vunpack.c.l.b16 %v4612
  %v4923 = vunpack.c.l.b16 %v4613
  %v4924 = vunpack.c.l.b16 %v4614
  %v4925 = vunpack.c.l.b16 %v4615
  %v4926 = vunpack.c.l.b16 %v4616
  %v4927 = vunpack.c.l.b16 %v4617
  %v4928 = vunpack.c.l.b16 %v4618
  %v4929 = vunpack.c.l.b16 %v4619
  %v4930 = vunpack.c.l.b16 %v4620
  %v4931 = vunpack.c.l.b16 %v4621
  %v4932 = vunpack.c.l.b16 %v4622
  %v4933 = vunpack.c.l.b16 %v4623
  %v4934 = vunpack.c.l.b16 %v4624
  %v4935 = vunpack.c.l.b16 %v4625
  %v4936 = vunpack.c.l.b16 %v4626
  %v4937 = vunpack.c.l.b16 %v4627
  %v4938 = vunpack.c.l.b16 %v4628
  %v4939 = vunpack.c.l.b16 %v4629
  %v4940 = vunpack.c.l.b16 %v4630
  %v4941 = vunpack.c.l.b16 %v4631
  %v4942 = vunpack.c.l.b16 %v4632
  %v4943 = vunpack.c.l.b16 %v4633
  %v4944 = vunpack.c.l.b16 %v4634
  %v4945 = vunpack.c.l.b16 %v4635
  %v4946 = vunpack.c.l.b16 %v4636
  %v4947 = vunpack.c.l.b16 %v4637
  %v4948 = vunpack.c.l.b16 %v4638
  %v4949 = vunpack.c.l.b16 %v4639
  %v4950 = vunpack.c.l.b16 %v4640
  %v4951 = vunpack.c.l.b16 %v4641
  %v4952 = vunpack.c.l.b16 %v4642
  %v4953 = vunpack.c.l.b16 %v4643
  %v4954 = vunpack.c.l.b16 %v4644
  %v4955 = vunpack.c.l.b16 %v4645
  %v4956 = vunpack.c.l.b16 %v4646
  %v4957 = vunpack.c.l.b16 %v4647
  %v4958 = vunpack.c.l.b16 %v4648
  %v4959 = vunpack.c.l.b16 %v4649
  %v4960 = vunpack.c.l.b16 %v4650
  %v4961 = vunpack.c.l.b16 %v4651
  %v4962 = vunpack.c.l.b16 %v4652
  %v4963 = vunpack.c.l.b16 %v4653
  %v4964 = vunpack.c.l.b16 %v4654
  %v4965 = vunpack.c.l.b16 %v4655
  %v4966 = vunpack.c.l.b16 %v4656
  %v4967 = vunpack.c.l.b16 %v4657
  %v4968 = vunpack.c.l.b16 %v4658
  %v4969 = vunpack.c.l.b16 %v4659
  %v4970 = vunpack.c.l.b16 %v4660
  %v4971 = vunpack.c.l.b16 %v4661
  %v4972 = vunpack.c.l.b16 %v4662
  %v4973 = vunpack.c.l.b16 %v4663
  %v4974 = vunpack.c.l.b16 %v4664
  %v4975 = vunpack.c.l.b16 %v4665
  %v4976 = vunpack.c.l.b16 %v4666
  %v4977 = vunpack.c.l.b16 %v4667
  %v4978 = vunpack.c.l.b16 %v4668
  %v4979 = vunpack.c.l.b16 %v4669
  %v4980 = vunpack.c.l.b16 %v4670
  %v4981 = vpack.c.b16 %v4796, %v4795
  %v4982 = vpack.c.b16 %v4798, %v4797
  %v4983 = vpack.c.b16 %v4800, %v4799
  %v4984 = vpack.c.b16 %v4802, %v4801
  %v4985 = vpack.c.b16 %v4804, %v4803
  %v4986 = vpack.c.b16 %v4806, %v4805
  %v4987 = vpack.c.b16 %v4808, %v4807
  %v4988 = vpack.c.b16 %v4810, %v4809
  %v4989 = vpack.c.b16 %v4812, %v4811
  %v4990 = vpack.c.b16 %v4814, %v4813
  %v4991 = vpack.c.b16 %v4816, %v4815
  %v4992 = vpack.c.b16 %v4818, %v4817
  %v4993 = vpack.c.b16 %v4820, %v4819
  %v4994 = vpack.c.b16 %v4822, %v4821
  %v4995 = vpack.c.b16 %v4824, %v4823
  %v4996 = vpack.c.b16 %v4826, %v4825
  %v4997 = vpack.c.b16 %v4828, %v4827
  %v4998 = vpack.c.b16 %v4830, %v4829
  %v4999 = vpack.c.b16 %v4832, %v4831
  %v5000 = vpack.c.b16 %v4834, %v4833
  %v5001 = vpack.c.b16 %v4836, %v4835
  %v5002 = vpack.c.b16 %v4838, %v4837
  %v5003 = vpack.c.b16 %v4840, %v4839
  %v5004 = vpack.c.b16 %v4842, %v4841
  %v5005 = vpack.c.b16 %v4844, %v4843
  %v5006 = vpack.c.b16 %v4846, %v4845
  %v5007 = vpack.c.b16 %v4848, %v4847
  %v5008 = vpack.c.b16 %v4850, %v4849
  %v5009 = vpack.c.b16 %v4852, %v4851
  %v5010 = vpack.c.b16 %v4854, %v4853
  %v5011 = vpack.c.b16 %v4856, %v4855
  %v5012 = vpack.c.b16 %v4858, %v4857
  %v5013 = vpack.c.b16 %v4860, %v4859
  %v5014 = vpack.c.b16 %v4862, %v4861
  %v5015 = vpack.c.b16 %v4864, %v4863
  %v5016 = vpack.c.b16 %v4866, %v4865
  %v5017 = vpack.c.b16 %v4868, %v4867
  %v5018 = vpack.c.b16 %v4870, %v4869
  %v5019 = vpack.c.b16 %v4872, %v4871
  %v5020 = vpack.c.b16 %v4874, %v4873
  %v5021 = vpack.c.b16 %v4876, %v4875
  %v5022 = vpack.c.b16 %v4878, %v4877
  %v5023 = vpack.c.b16 %v4880, %v4879
  %v5024 = vpack.c.b16 %v4882, %v4881
  %v5025 = vpack.c.b16 %v4884, %v4883
  %v5026 = vpack.c.b16 %v4886, %v4885
  %v5027 = vpack.c.b16 %v4888, %v4887
  %v5028 = vpack.c.b16 %v4890, %v4889
  %v5029 = vpack.c.b16 %v4892, %v4891
  %v5030 = vpack.c.b16 %v4894, %v4893
  %v5031 = vpack.c.b16 %v4896, %v4895
  %v5032 = vpack.c.b16 %v4898, %v4897
  %v5033 = vpack.c.b16 %v4900, %v4899
  %v5034 = vpack.c.b16 %v4902, %v4901
  %v5035 = vpack.c.b16 %v4904, %v4903
  %v5036 = vpack.c.b16 %v4906, %v4905
  %v5037 = vpack.c.b16 %v4908, %v4907
  %v5038 = vpack.c.b16 %v4910, %v4909
  %v5039 = vpack.c.b16 %v4912, %v4911
  %v5040 = vpack.c.b16 %v4914, %v4913
  %v5041 = vpack.c.b16 %v4916, %v4915
  %v5042 = vpack.c.b16 %v4918, %v4917
  %v5043 = vpack.c.b16 %v4920, %v4919
  %v5044 = vpack.c.b16 %v4922, %v4921
  %v5045 = vpack.c.b16 %v4924, %v4923
  %v5046 = vpack.c.b16 %v4926, %v4925
  %v5047 = vpack.c.b16 %v4928, %v4927
  %v5048 = vpack.c.b16 %v4930, %v4929
  %v5049 = vpack.c.b16 %v4932, %v4931
  %v5050 = vpack.c.b16 %v4934, %v4933
  %v5051 = vpack.c.b16 %v4936, %v4935
  %v5052 = vpack.c.b16 %v4938, %v4937
  %v5053 = vpack.c.b16 %v4940, %v4939
  %v5054 = vpack.c.b16 %v4942, %v4941
  %v5055 = vpack.c.b16 %v4944, %v4943
  %v5056 = vpack.c.b16 %v4946, %v4945
  %v5057 = vpack.c.b16 %v4948, %v4947
  %v5058 = vpack.c.b16 %v4950, %v4949
  %v5059 = vpack.c.b16 %v4952, %v4951
  %v5060 = vpack.c.b16 %v4954, %v4953
  %v5061 = vpack.c.b16 %v4956, %v4955
  %v5062 = vpack.c.b16 %v4958, %v4957
  %v5063 = vpack.c.b16 %v4960, %v4959
  %v5064 = vpack.c.b16 %v4962, %v4961
  %v5065 = vpack.c.b16 %v4964, %v4963
  %v5066 = vpack.c.b16 %v4966, %v4965
  %v5067 = vpack.c.b16 %v4968, %v4967
  %v5068 = vpack.c.b16 %v4970, %v4969
  %v5069 = vpack.c.b16 %v4972, %v4971
  %v5070 = vpack.c.b16 %v4974, %v4973
  %v5071 = vpack.c.b16 %v4976, %v4975
  %v5072 = vpack.c.b16 %v4978, %v4977
  %v5073 = vpack.c.b16 %v4980, %v4979
  %5167 = vst [vmem:[%s3] sm:$0xff] %v4981
  %5168 = vst [vmem:[%s3 + $0x8] sm:$0xff] %v4982
  %5169 = vst [vmem:[%s3 + $0x10] sm:$0xff] %v4983
  %5170 = vst [vmem:[%s3 + $0x18] sm:$0xff] %v4984
  %5171 = vst [vmem:[%s3 + $0x20] sm:$0xff] %v4985
  %5172 = vst [vmem:[%s3 + $0x28] sm:$0xff] %v4986
  %5173 = vst [vmem:[%s3 + $0x30] sm:$0xff] %v4987
  %5174 = vst [vmem:[%s3 + $0x38] sm:$0xff] %v4988
  %5175 = vst [vmem:[%s3 + $0x40] sm:$0xff] %v4989
  %5176 = vst [vmem:[%s3 + $0x48] sm:$0xff] %v4990
  %5177 = vst [vmem:[%s3 + $0x50] sm:$0xff] %v4991
  %5178 = vst [vmem:[%s3 + $0x58] sm:$0xff] %v4992
  %5179 = vst [vmem:[%s3 + $0x60] sm:$0xff] %v4993
  %5180 = vst [vmem:[%s3 + $0x68] sm:$0xff] %v4994
  %5181 = vst [vmem:[%s3 + $0x70] sm:$0xff] %v4995
  %5182 = vst [vmem:[%s3 + $0x78] sm:$0xff] %v4996
  %5183 = vst [vmem:[%s3 + $0x80] sm:$0xff] %v4997
  %5184 = vst [vmem:[%s3 + $0x88] sm:$0xff] %v4998
  %5185 = vst [vmem:[%s3 + $0x90] sm:$0xff] %v4999
  %5186 = vst [vmem:[%s3 + $0x98] sm:$0xff] %v5000
  %5187 = vst [vmem:[%s3 + $0xa0] sm:$0xff] %v5001
  %5188 = vst [vmem:[%s3 + $0xa8] sm:$0xff] %v5002
  %5189 = vst [vmem:[%s3 + $0xb0] sm:$0xff] %v5003
  %5190 = vst [vmem:[%s3 + $0xb8] sm:$0xff] %v5004
  %5191 = vst [vmem:[%s3 + $0xc0] sm:$0xff] %v5005
  %5192 = vst [vmem:[%s3 + $0xc8] sm:$0xff] %v5006
  %5193 = vst [vmem:[%s3 + $0xd0] sm:$0xff] %v5007
  %5194 = vst [vmem:[%s3 + $0xd8] sm:$0xff] %v5008
  %5195 = vst [vmem:[%s3 + $0xe0] sm:$0xff] %v5009
  %5196 = vst [vmem:[%s3 + $0xe8] sm:$0xff] %v5010
  %vm5197 = vcmask 1043456
  %vm5198 = vcmask 261124
  %vm5199 = vmor %vm5198, %vm5197
  %5200 = vst.msk [vmem:[%s3 + $0xf0] sm:$0xff] %vm5199, %v5011
  %5201 = vst [vmem:[%s3 + $0xf8] sm:$0xff] %v5012
  %5202 = vst [vmem:[%s3 + $0x100] sm:$0xff] %v5013
  %5203 = vst [vmem:[%s3 + $0x108] sm:$0xff] %v5014
  %5204 = vst [vmem:[%s3 + $0x110] sm:$0xff] %v5015
  %5205 = vst [vmem:[%s3 + $0x118] sm:$0xff] %v5016
  %5206 = vst [vmem:[%s3 + $0x120] sm:$0xff] %v5017
  %5207 = vst [vmem:[%s3 + $0x128] sm:$0xff] %v5018
  %5208 = vst [vmem:[%s3 + $0x130] sm:$0xff] %v5019
  %5209 = vst [vmem:[%s3 + $0x138] sm:$0xff] %v5020
  %5210 = vst [vmem:[%s3 + $0x140] sm:$0xff] %v5021
  %5211 = vst [vmem:[%s3 + $0x148] sm:$0xff] %v5022
  %5212 = vst [vmem:[%s3 + $0x150] sm:$0xff] %v5023
  %5213 = vst [vmem:[%s3 + $0x158] sm:$0xff] %v5024
  %5214 = vst [vmem:[%s3 + $0x160] sm:$0xff] %v5025
  %5215 = vst [vmem:[%s3 + $0x168] sm:$0xff] %v5026
  %5216 = vst [vmem:[%s3 + $0x170] sm:$0xff] %v5027
  %5217 = vst [vmem:[%s3 + $0x178] sm:$0xff] %v5028
  %5218 = vst [vmem:[%s3 + $0x180] sm:$0xff] %v5029
  %5219 = vst [vmem:[%s3 + $0x188] sm:$0xff] %v5030
  %5220 = vst [vmem:[%s3 + $0x190] sm:$0xff] %v5031
  %5221 = vst [vmem:[%s3 + $0x198] sm:$0xff] %v5032
  %5222 = vst [vmem:[%s3 + $0x1a0] sm:$0xff] %v5033
  %5223 = vst [vmem:[%s3 + $0x1a8] sm:$0xff] %v5034
  %5224 = vst [vmem:[%s3 + $0x1b0] sm:$0xff] %v5035
  %5225 = vst [vmem:[%s3 + $0x1b8] sm:$0xff] %v5036
  %5226 = vst [vmem:[%s3 + $0x1c0] sm:$0xff] %v5037
  %5227 = vst [vmem:[%s3 + $0x1c8] sm:$0xff] %v5038
  %5228 = vst [vmem:[%s3 + $0x1d0] sm:$0xff] %v5039
  %5229 = vst [vmem:[%s3 + $0x1d8] sm:$0xff] %v5040
  %5230 = vst [vmem:[%s3 + $0x1e0] sm:$0xff] %v5041
  %5231 = vst.msk [vmem:[%s3 + $0x1e8] sm:$0xff] %vm5199, %v5042
  %5232 = vst [vmem:[%s3 + $0x1f0] sm:$0xff] %v5043
  %5233 = vst [vmem:[%s3 + $0x1f8] sm:$0xff] %v5044
  %5234 = vst [vmem:[%s3 + $0x200] sm:$0xff] %v5045
  %5235 = vst [vmem:[%s3 + $0x208] sm:$0xff] %v5046
  %5236 = vst [vmem:[%s3 + $0x210] sm:$0xff] %v5047
  %5237 = vst [vmem:[%s3 + $0x218] sm:$0xff] %v5048
  %5238 = vst [vmem:[%s3 + $0x220] sm:$0xff] %v5049
  %5239 = vst [vmem:[%s3 + $0x228] sm:$0xff] %v5050
  %5240 = vst [vmem:[%s3 + $0x230] sm:$0xff] %v5051
  %5241 = vst [vmem:[%s3 + $0x238] sm:$0xff] %v5052
  %5242 = vst [vmem:[%s3 + $0x240] sm:$0xff] %v5053
  %5243 = vst [vmem:[%s3 + $0x248] sm:$0xff] %v5054
  %5244 = vst [vmem:[%s3 + $0x250] sm:$0xff] %v5055
  %5245 = vst [vmem:[%s3 + $0x258] sm:$0xff] %v5056
  %5246 = vst [vmem:[%s3 + $0x260] sm:$0xff] %v5057
  %5247 = vst [vmem:[%s3 + $0x268] sm:$0xff] %v5058
  %5248 = vst [vmem:[%s3 + $0x270] sm:$0xff] %v5059
  %5249 = vst [vmem:[%s3 + $0x278] sm:$0xff] %v5060
  %5250 = vst [vmem:[%s3 + $0x280] sm:$0xff] %v5061
  %5251 = vst [vmem:[%s3 + $0x288] sm:$0xff] %v5062
  %5252 = vst [vmem:[%s3 + $0x290] sm:$0xff] %v5063
  %5253 = vst [vmem:[%s3 + $0x298] sm:$0xff] %v5064
  %5254 = vst [vmem:[%s3 + $0x2a0] sm:$0xff] %v5065
  %5255 = vst [vmem:[%s3 + $0x2a8] sm:$0xff] %v5066
  %5256 = vst [vmem:[%s3 + $0x2b0] sm:$0xff] %v5067
  %5257 = vst [vmem:[%s3 + $0x2b8] sm:$0xff] %v5068
  %5258 = vst [vmem:[%s3 + $0x2c0] sm:$0xff] %v5069
  %5259 = vst [vmem:[%s3 + $0x2c8] sm:$0xff] %v5070
  %5260 = vst [vmem:[%s3 + $0x2d0] sm:$0xff] %v5071
  %5261 = vst [vmem:[%s3 + $0x2d8] sm:$0xff] %v5072
  %5262 = vst.msk [vmem:[%s3 + $0x2e0] sm:$0xff] %vm5199, %v5073
  // Predicated region
  $region14: #{net_forward.6} parent=0 // pred_check
    _
  $region15: #{net_forward.6} parent=0 // pred_check_branch
    %5264 = sbr.rel (0) target = $region17
  $region16: #{net_forward.6} parent=0 // pred_region
    _
  $region17: #{net_forward.6} parent=0 // pred_fallthru
    _
  // Predicated region
  $region18: #{net_forward.6} parent=0 // pred_check
    _
  $region19: #{net_forward.6} parent=0 // pred_check_branch
    %5266 = sbr.rel (0) target = $region21
  $region20: #{net_forward.6} parent=0 // pred_region
    _
  $region21: #{net_forward.6} parent=0 // pred_fallthru
    _

// kernel: net_forward.7
$region0: #{net_forward.7}
  #allocation0 [shape = 'u32[]', space=smem, size = 0x4, offset = 0x4, fixed_abs, tag = 'smem constant byte address 0x4 - core index']
  #allocation1 [shape = 'u32[144,128]{1,0:T(1,128)}', space=vmem, size = 0x12000, scoped, tag = 'internal scratch']
  %s0 = inlined_call_operand.vmem [shape: bf16[48,648], index: 0, kind: input, shape index: {}]
  %s1 = inlined_call_operand.vmem [shape: bf16[648,864], index: 1, kind: input, shape index: {}]
  %s2 = inlined_call_operand.vmem [shape: f32[48,1], index: 2, kind: input, shape index: {}]
  %s3 = inlined_call_operand.vmem [shape: bf16[48,864], index: 3, kind: output, shape index: {}]
  %s4 = sld [smem:[#allocation0]]
  $region22: #{net_forward.7} parent=0
    _
  %s6 = ssub.s32 1, %s4
  %s7 = scalar_select 0, %s6, %s4
  // Predicated region
  $region2: #{net_forward.7} parent=0 // pred_check
    _
  $region3: #{net_forward.7} parent=0 // pred_check_branch
    %9 = sbr.rel (0) target = $region5
  $region4: #{net_forward.7} parent=0 // pred_region
    _
  $region5: #{net_forward.7} parent=0 // pred_fallthru
    _
  // Predicated region
  $region6: #{net_forward.7} parent=0 // pred_check
    _
  $region7: #{net_forward.7} parent=0 // pred_check_branch
    %11 = sbr.rel (0) target = $region9
  $region8: #{net_forward.7} parent=0 // pred_region
    _
  $region9: #{net_forward.7} parent=0 // pred_fallthru
    _
  // Predicated region
  $region10: #{net_forward.7} parent=0 // pred_check
    _
  $region11: #{net_forward.7} parent=0 // pred_check_branch
    %13 = sbr.rel (0) target = $region13
  $region12: #{net_forward.7} parent=0 // pred_region
    _
  $region13: #{net_forward.7} parent=0 // pred_fallthru
    _
  %v15 = vld [vmem:[%s0] sm:$0xff]
  %v16 = vld [vmem:[%s0 + $0x8] sm:$0xff]
  %v17 = vld [vmem:[%s0 + $0x10] sm:$0xff]
  %v18 = vld [vmem:[%s0 + $0x18] sm:$0xff]
  %v19 = vld [vmem:[%s0 + $0x20] sm:$0xff]
  %v20 = vld [vmem:[%s0 + $0x28] sm:$0xff]
  %v21 = vld [vmem:[%s0 + $0x30] sm:$0xff]
  %v22 = vld [vmem:[%s0 + $0x38] sm:$0xff]
  %v23 = vld [vmem:[%s0 + $0x40] sm:$0xff]
  %v24 = vld [vmem:[%s0 + $0x48] sm:$0xff]
  %v25 = vld [vmem:[%s0 + $0x50] sm:$0xff]
  %v26 = vld [vmem:[%s0 + $0x58] sm:$0xff]
  %v27 = vld [vmem:[%s0 + $0x60] sm:$0xff]
  %v28 = vld [vmem:[%s0 + $0x68] sm:$0xff]
  %v29 = vld [vmem:[%s0 + $0x70] sm:$0xff]
  %v30 = vld [vmem:[%s0 + $0x78] sm:$0xff]
  %v31 = vld [vmem:[%s0 + $0x80] sm:$0xff]
  %v32 = vld [vmem:[%s0 + $0x88] sm:$0xff]
  %v33 = vld [vmem:[%s1] sm:$0xff]
  %v34 = vld [vmem:[%s1 + $0x8] sm:$0xff]
  %v35 = vld [vmem:[%s1 + $0x10] sm:$0xff]
  %v36 = vld [vmem:[%s1 + $0x18] sm:$0xf]
  %v37 = vld [vmem:[%s1 + $0x1c] sm:$0xff]
  %v38 = vld [vmem:[%s1 + $0x24] sm:$0xff]
  %v39 = vld [vmem:[%s1 + $0x2c] sm:$0xff]
  %v40 = vld [vmem:[%s1 + $0x34] sm:$0xf]
  %v41 = vld [vmem:[%s1 + $0x38] sm:$0xff]
  %v42 = vld [vmem:[%s1 + $0x40] sm:$0xff]
  %v43 = vld [vmem:[%s1 + $0x48] sm:$0xff]
  %v44 = vld [vmem:[%s1 + $0x50] sm:$0xf]
  %v45 = vld [vmem:[%s1 + $0x54] sm:$0xff]
  %v46 = vld [vmem:[%s1 + $0x5c] sm:$0xff]
  %v47 = vld [vmem:[%s1 + $0x64] sm:$0xff]
  %v48 = vld [vmem:[%s1 + $0x6c] sm:$0xf]
  %v49 = vld [vmem:[%s1 + $0x70] sm:$0xff]
  %v50 = vld [vmem:[%s1 + $0x78] sm:$0xff]
  %v51 = vld [vmem:[%s1 + $0x80] sm:$0xff]
  %v52 = vld [vmem:[%s1 + $0x88] sm:$0xf]
  %v53 = vld [vmem:[%s1 + $0x8c] sm:$0xff]
  %v54 = vld [vmem:[%s1 + $0x94] sm:$0xff]
  %v55 = vld [vmem:[%s1 + $0x9c] sm:$0xff]
  %v56 = vld [vmem:[%s1 + $0xa4] sm:$0xf]
  %v57 = vld [vmem:[%s1 + $0xa8] sm:$0xff]
  %v58 = vld [vmem:[%s1 + $0xb0] sm:$0xff]
  %v59 = vld [vmem:[%s1 + $0xb8] sm:$0xff]
  %v60 = vld [vmem:[%s1 + $0xc0] sm:$0xf]
  %v61 = vld [vmem:[%s1 + $0xc4] sm:$0xff]
  %v62 = vld [vmem:[%s1 + $0xcc] sm:$0xff]
  %v63 = vld [vmem:[%s1 + $0xd4] sm:$0xff]
  %v64 = vld [vmem:[%s1 + $0xdc] sm:$0xf]
  %v65 = vld [vmem:[%s1 + $0xe0] sm:$0xff]
  %v66 = vld [vmem:[%s1 + $0xe8] sm:$0xff]
  %v67 = vld [vmem:[%s1 + $0xf0] sm:$0xff]
  %v68 = vld [vmem:[%s1 + $0xf8] sm:$0xf]
  %v69 = vld [vmem:[%s1 + $0xfc] sm:$0xff]
  %v70 = vld [vmem:[%s1 + $0x104] sm:$0xff]
  %v71 = vld [vmem:[%s1 + $0x10c] sm:$0xff]
  %v72 = vld [vmem:[%s1 + $0x114] sm:$0xf]
  %v73 = vld [vmem:[%s1 + $0x118] sm:$0xff]
  %v74 = vld [vmem:[%s1 + $0x120] sm:$0xff]
  %v75 = vld [vmem:[%s1 + $0x128] sm:$0xff]
  %v76 = vld [vmem:[%s1 + $0x130] sm:$0xf]
  %v77 = vld [vmem:[%s1 + $0x134] sm:$0xff]
  %v78 = vld [vmem:[%s1 + $0x13c] sm:$0xff]
  %v79 = vld [vmem:[%s1 + $0x144] sm:$0xff]
  %v80 = vld [vmem:[%s1 + $0x14c] sm:$0xf]
  %v81 = vld [vmem:[%s1 + $0x150] sm:$0xff]
  %v82 = vld [vmem:[%s1 + $0x158] sm:$0xff]
  %v83 = vld [vmem:[%s1 + $0x160] sm:$0xff]
  %v84 = vld [vmem:[%s1 + $0x168] sm:$0xf]
  %v85 = vld [vmem:[%s1 + $0x16c] sm:$0xff]
  %v86 = vld [vmem:[%s1 + $0x174] sm:$0xff]
  %v87 = vld [vmem:[%s1 + $0x17c] sm:$0xff]
  %v88 = vld [vmem:[%s1 + $0x184] sm:$0xf]
  %v89 = vld [vmem:[%s1 + $0x188] sm:$0xff]
  %v90 = vld [vmem:[%s1 + $0x190] sm:$0xff]
  %v91 = vld [vmem:[%s1 + $0x198] sm:$0xff]
  %v92 = vld [vmem:[%s1 + $0x1a0] sm:$0xf]
  %v93 = vld [vmem:[%s1 + $0x1a4] sm:$0xff]
  %v94 = vld [vmem:[%s1 + $0x1ac] sm:$0xff]
  %v95 = vld [vmem:[%s1 + $0x1b4] sm:$0xff]
  %v96 = vld [vmem:[%s1 + $0x1bc] sm:$0xf]
  %v97 = vld [vmem:[%s1 + $0x1c0] sm:$0xff]
  %v98 = vld [vmem:[%s1 + $0x1c8] sm:$0xff]
  %v99 = vld [vmem:[%s1 + $0x1d0] sm:$0xff]
  %v100 = vld [vmem:[%s1 + $0x1d8] sm:$0xf]
  %v101 = vld [vmem:[%s1 + $0x1dc] sm:$0xff]
  %v102 = vld [vmem:[%s1 + $0x1e4] sm:$0xff]
  %v103 = vld [vmem:[%s1 + $0x1ec] sm:$0xff]
  %v104 = vld [vmem:[%s1 + $0x1f4] sm:$0xf]
  %v105 = vld [vmem:[%s1 + $0x1f8] sm:$0xff]
  %v106 = vld [vmem:[%s1 + $0x200] sm:$0xff]
  %v107 = vld [vmem:[%s1 + $0x208] sm:$0xff]
  %v108 = vld [vmem:[%s1 + $0x210] sm:$0xf]
  %v109 = vld [vmem:[%s1 + $0x214] sm:$0xff]
  %v110 = vld [vmem:[%s1 + $0x21c] sm:$0xff]
  %v111 = vld [vmem:[%s1 + $0x224] sm:$0xff]
  %v112 = vld [vmem:[%s1 + $0x22c] sm:$0xf]
  %v113 = vld [vmem:[%s1 + $0x230] sm:$0xff]
  %v114 = vld [vmem:[%s1 + $0x238] sm:$0xff]
  %v115 = vld [vmem:[%s1 + $0x240] sm:$0xff]
  %v116 = vld [vmem:[%s1 + $0x248] sm:$0xf]
  %v117 = vld [vmem:[%s1 + $0x24c] sm:$0xff]
  %v118 = vld [vmem:[%s1 + $0x254] sm:$0xff]
  %v119 = vld [vmem:[%s1 + $0x25c] sm:$0xff]
  %v120 = vld [vmem:[%s1 + $0x264] sm:$0xf]
  %v121 = vld [vmem:[%s1 + $0x268] sm:$0xff]
  %v122 = vld [vmem:[%s1 + $0x270] sm:$0xff]
  %v123 = vld [vmem:[%s1 + $0x278] sm:$0xff]
  %v124 = vld [vmem:[%s1 + $0x280] sm:$0xf]
  %v125 = vld [vmem:[%s1 + $0x284] sm:$0xff]
  %v126 = vld [vmem:[%s1 + $0x28c] sm:$0xff]
  %v127 = vld [vmem:[%s1 + $0x294] sm:$0xff]
  %v128 = vld [vmem:[%s1 + $0x29c] sm:$0xf]
  %v129 = vld [vmem:[%s1 + $0x2a0] sm:$0xff]
  %v130 = vld [vmem:[%s1 + $0x2a8] sm:$0xff]
  %v131 = vld [vmem:[%s1 + $0x2b0] sm:$0xff]
  %v132 = vld [vmem:[%s1 + $0x2b8] sm:$0xf]
  %v133 = vld [vmem:[%s1 + $0x2bc] sm:$0xff]
  %v134 = vld [vmem:[%s1 + $0x2c4] sm:$0xff]
  %v135 = vld [vmem:[%s1 + $0x2cc] sm:$0xff]
  %v136 = vld [vmem:[%s1 + $0x2d4] sm:$0xf]
  %v137 = vld [vmem:[%s1 + $0x2d8] sm:$0xff]
  %v138 = vld [vmem:[%s1 + $0x2e0] sm:$0xff]
  %v139 = vld [vmem:[%s1 + $0x2e8] sm:$0xff]
  %v140 = vld [vmem:[%s1 + $0x2f0] sm:$0xf]
  %v141 = vld [vmem:[%s1 + $0x2f4] sm:$0xff]
  %v142 = vld [vmem:[%s1 + $0x2fc] sm:$0xff]
  %v143 = vld [vmem:[%s1 + $0x304] sm:$0xff]
  %v144 = vld [vmem:[%s1 + $0x30c] sm:$0xf]
  %v145 = vld [vmem:[%s1 + $0x310] sm:$0xff]
  %v146 = vld [vmem:[%s1 + $0x318] sm:$0xff]
  %v147 = vld [vmem:[%s1 + $0x320] sm:$0xff]
  %v148 = vld [vmem:[%s1 + $0x328] sm:$0xf]
  %v149 = vld [vmem:[%s1 + $0x32c] sm:$0xff]
  %v150 = vld [vmem:[%s1 + $0x334] sm:$0xff]
  %v151 = vld [vmem:[%s1 + $0x33c] sm:$0xff]
  %v152 = vld [vmem:[%s1 + $0x344] sm:$0xf]
  %v153 = vld [vmem:[%s1 + $0x348] sm:$0xff]
  %v154 = vld [vmem:[%s1 + $0x350] sm:$0xff]
  %v155 = vld [vmem:[%s1 + $0x358] sm:$0xff]
  %v156 = vld [vmem:[%s1 + $0x360] sm:$0xf]
  %v157 = vld [vmem:[%s1 + $0x364] sm:$0xff]
  %v158 = vld [vmem:[%s1 + $0x36c] sm:$0xff]
  %v159 = vld [vmem:[%s1 + $0x374] sm:$0xff]
  %v160 = vld [vmem:[%s1 + $0x37c] sm:$0xf]
  %v161 = vld [vmem:[%s1 + $0x380] sm:$0xff]
  %v162 = vld [vmem:[%s1 + $0x388] sm:$0xff]
  %v163 = vld [vmem:[%s1 + $0x390] sm:$0xff]
  %v164 = vld [vmem:[%s1 + $0x398] sm:$0xf]
  %v165 = vld [vmem:[%s1 + $0x39c] sm:$0xff]
  %v166 = vld [vmem:[%s1 + $0x3a4] sm:$0xff]
  %v167 = vld [vmem:[%s1 + $0x3ac] sm:$0xff]
  %v168 = vld [vmem:[%s1 + $0x3b4] sm:$0xf]
  %v169 = vld [vmem:[%s1 + $0x3b8] sm:$0xff]
  %v170 = vld [vmem:[%s1 + $0x3c0] sm:$0xff]
  %v171 = vld [vmem:[%s1 + $0x3c8] sm:$0xff]
  %v172 = vld [vmem:[%s1 + $0x3d0] sm:$0xf]
  %v173 = vld [vmem:[%s1 + $0x3d4] sm:$0xff]
  %v174 = vld [vmem:[%s1 + $0x3dc] sm:$0xff]
  %v175 = vld [vmem:[%s1 + $0x3e4] sm:$0xff]
  %v176 = vld [vmem:[%s1 + $0x3ec] sm:$0xf]
  %v177 = vld [vmem:[%s1 + $0x3f0] sm:$0xff]
  %v178 = vld [vmem:[%s1 + $0x3f8] sm:$0xff]
  %v179 = vld [vmem:[%s1 + $0x400] sm:$0xff]
  %v180 = vld [vmem:[%s1 + $0x408] sm:$0xf]
  %v181 = vld [vmem:[%s1 + $0x40c] sm:$0xff]
  %v182 = vld [vmem:[%s1 + $0x414] sm:$0xff]
  %v183 = vld [vmem:[%s1 + $0x41c] sm:$0xff]
  %v184 = vld [vmem:[%s1 + $0x424] sm:$0xf]
  %v185 = vld [vmem:[%s1 + $0x428] sm:$0xff]
  %v186 = vld [vmem:[%s1 + $0x430] sm:$0xff]
  %v187 = vld [vmem:[%s1 + $0x438] sm:$0xff]
  %v188 = vld [vmem:[%s1 + $0x440] sm:$0xf]
  %v189 = vld [vmem:[%s1 + $0x444] sm:$0xff]
  %v190 = vld [vmem:[%s1 + $0x44c] sm:$0xff]
  %v191 = vld [vmem:[%s1 + $0x454] sm:$0xff]
  %v192 = vld [vmem:[%s1 + $0x45c] sm:$0xf]
  %v193 = vld [vmem:[%s1 + $0x460] sm:$0xff]
  %v194 = vld [vmem:[%s1 + $0x468] sm:$0xff]
  %v195 = vld [vmem:[%s1 + $0x470] sm:$0xff]
  %v196 = vld [vmem:[%s1 + $0x478] sm:$0xf]
  %v197 = vld [vmem:[%s1 + $0x47c] sm:$0xff]
  %v198 = vld [vmem:[%s1 + $0x484] sm:$0xff]
  %v199 = vld [vmem:[%s1 + $0x48c] sm:$0xff]
  %v200 = vld [vmem:[%s1 + $0x494] sm:$0xf]
  %v201 = vld [vmem:[%s1 + $0x498] sm:$0xff]
  %v202 = vld [vmem:[%s1 + $0x4a0] sm:$0xff]
  %v203 = vld [vmem:[%s1 + $0x4a8] sm:$0xff]
  %v204 = vld [vmem:[%s1 + $0x4b0] sm:$0xf]
  %v205 = vld [vmem:[%s1 + $0x4b4] sm:$0xff]
  %v206 = vld [vmem:[%s1 + $0x4bc] sm:$0xff]
  %v207 = vld [vmem:[%s1 + $0x4c4] sm:$0xff]
  %v208 = vld [vmem:[%s1 + $0x4cc] sm:$0xf]
  %v209 = vld [vmem:[%s1 + $0x4d0] sm:$0xff]
  %v210 = vld [vmem:[%s1 + $0x4d8] sm:$0xff]
  %v211 = vld [vmem:[%s1 + $0x4e0] sm:$0xff]
  %v212 = vld [vmem:[%s1 + $0x4e8] sm:$0xf]
  %v213 = vld [vmem:[%s1 + $0x4ec] sm:$0xff]
  %v214 = vld [vmem:[%s1 + $0x4f4] sm:$0xff]
  %v215 = vld [vmem:[%s1 + $0x4fc] sm:$0xff]
  %v216 = vld [vmem:[%s1 + $0x504] sm:$0xf]
  %v217 = vld [vmem:[%s1 + $0x508] sm:$0xff]
  %v218 = vld [vmem:[%s1 + $0x510] sm:$0xff]
  %v219 = vld [vmem:[%s1 + $0x518] sm:$0xff]
  %v220 = vld [vmem:[%s1 + $0x520] sm:$0xf]
  %v221 = vld [vmem:[%s1 + $0x524] sm:$0xff]
  %v222 = vld [vmem:[%s1 + $0x52c] sm:$0xff]
  %v223 = vld [vmem:[%s1 + $0x534] sm:$0xff]
  %v224 = vld [vmem:[%s1 + $0x53c] sm:$0xf]
  %v225 = vld [vmem:[%s1 + $0x540] sm:$0xff]
  %v226 = vld [vmem:[%s1 + $0x548] sm:$0xff]
  %v227 = vld [vmem:[%s1 + $0x550] sm:$0xff]
  %v228 = vld [vmem:[%s1 + $0x558] sm:$0xf]
  %v229 = vld [vmem:[%s1 + $0x55c] sm:$0xff]
  %v230 = vld [vmem:[%s1 + $0x564] sm:$0xff]
  %v231 = vld [vmem:[%s1 + $0x56c] sm:$0xff]
  %v232 = vld [vmem:[%s1 + $0x574] sm:$0xf]
  %v233 = vld [vmem:[%s1 + $0x578] sm:$0xff]
  %v234 = vld [vmem:[%s1 + $0x580] sm:$0xff]
  %v235 = vld [vmem:[%s1 + $0x588] sm:$0xff]
  %v236 = vld [vmem:[%s1 + $0x590] sm:$0xf]
  %v237 = vld [vmem:[%s1 + $0x594] sm:$0xff]
  %v238 = vld [vmem:[%s1 + $0x59c] sm:$0xff]
  %v239 = vld [vmem:[%s1 + $0x5a4] sm:$0xff]
  %v240 = vld [vmem:[%s1 + $0x5ac] sm:$0xf]
  %v241 = vld [vmem:[%s1 + $0x5b0] sm:$0xff]
  %v242 = vld [vmem:[%s1 + $0x5b8] sm:$0xff]
  %v243 = vld [vmem:[%s1 + $0x5c0] sm:$0xff]
  %v244 = vld [vmem:[%s1 + $0x5c8] sm:$0xf]
  %v245 = vld [vmem:[%s1 + $0x5cc] sm:$0xff]
  %v246 = vld [vmem:[%s1 + $0x5d4] sm:$0xff]
  %v247 = vld [vmem:[%s1 + $0x5dc] sm:$0xff]
  %v248 = vld [vmem:[%s1 + $0x5e4] sm:$0xf]
  %v249 = vld [vmem:[%s1 + $0x5e8] sm:$0xff]
  %v250 = vld [vmem:[%s1 + $0x5f0] sm:$0xff]
  %v251 = vld [vmem:[%s1 + $0x5f8] sm:$0xff]
  %v252 = vld [vmem:[%s1 + $0x600] sm:$0xf]
  %v253 = vld [vmem:[%s1 + $0x604] sm:$0xff]
  %v254 = vld [vmem:[%s1 + $0x60c] sm:$0xff]
  %v255 = vld [vmem:[%s1 + $0x614] sm:$0xff]
  %v256 = vld [vmem:[%s1 + $0x61c] sm:$0xf]
  %v257 = vld [vmem:[%s1 + $0x620] sm:$0xff]
  %v258 = vld [vmem:[%s1 + $0x628] sm:$0xff]
  %v259 = vld [vmem:[%s1 + $0x630] sm:$0xff]
  %v260 = vld [vmem:[%s1 + $0x638] sm:$0xf]
  %v261 = vld [vmem:[%s1 + $0x63c] sm:$0xff]
  %v262 = vld [vmem:[%s1 + $0x644] sm:$0xff]
  %v263 = vld [vmem:[%s1 + $0x64c] sm:$0xff]
  %v264 = vld [vmem:[%s1 + $0x654] sm:$0xf]
  %v265 = vld [vmem:[%s1 + $0x658] sm:$0xff]
  %v266 = vld [vmem:[%s1 + $0x660] sm:$0xff]
  %v267 = vld [vmem:[%s1 + $0x668] sm:$0xff]
  %v268 = vld [vmem:[%s1 + $0x670] sm:$0xf]
  %v269 = vld [vmem:[%s1 + $0x674] sm:$0xff]
  %v270 = vld [vmem:[%s1 + $0x67c] sm:$0xff]
  %v271 = vld [vmem:[%s1 + $0x684] sm:$0xff]
  %v272 = vld [vmem:[%s1 + $0x68c] sm:$0xf]
  %v273 = vld [vmem:[%s1 + $0x690] sm:$0xff]
  %v274 = vld [vmem:[%s1 + $0x698] sm:$0xff]
  %v275 = vld [vmem:[%s1 + $0x6a0] sm:$0xff]
  %v276 = vld [vmem:[%s1 + $0x6a8] sm:$0xf]
  %v277 = vld [vmem:[%s1 + $0x6ac] sm:$0xff]
  %v278 = vld [vmem:[%s1 + $0x6b4] sm:$0xff]
  %v279 = vld [vmem:[%s1 + $0x6bc] sm:$0xff]
  %v280 = vld [vmem:[%s1 + $0x6c4] sm:$0xf]
  %v281 = vld [vmem:[%s1 + $0x6c8] sm:$0xff]
  %v282 = vld [vmem:[%s1 + $0x6d0] sm:$0xff]
  %v283 = vld [vmem:[%s1 + $0x6d8] sm:$0xff]
  %v284 = vld [vmem:[%s1 + $0x6e0] sm:$0xf]
  %v285 = vld [vmem:[%s1 + $0x6e4] sm:$0xff]
  %v286 = vld [vmem:[%s1 + $0x6ec] sm:$0xff]
  %v287 = vld [vmem:[%s1 + $0x6f4] sm:$0xff]
  %v288 = vld [vmem:[%s1 + $0x6fc] sm:$0xf]
  %v289 = vld [vmem:[%s1 + $0x700] sm:$0xff]
  %v290 = vld [vmem:[%s1 + $0x708] sm:$0xff]
  %v291 = vld [vmem:[%s1 + $0x710] sm:$0xff]
  %v292 = vld [vmem:[%s1 + $0x718] sm:$0xf]
  %v293 = vld [vmem:[%s1 + $0x71c] sm:$0xff]
  %v294 = vld [vmem:[%s1 + $0x724] sm:$0xff]
  %v295 = vld [vmem:[%s1 + $0x72c] sm:$0xff]
  %v296 = vld [vmem:[%s1 + $0x734] sm:$0xf]
  %v297 = vld [vmem:[%s1 + $0x738] sm:$0xff]
  %v298 = vld [vmem:[%s1 + $0x740] sm:$0xff]
  %v299 = vld [vmem:[%s1 + $0x748] sm:$0xff]
  %v300 = vld [vmem:[%s1 + $0x750] sm:$0xf]
  %v301 = vld [vmem:[%s1 + $0x754] sm:$0xff]
  %v302 = vld [vmem:[%s1 + $0x75c] sm:$0xff]
  %v303 = vld [vmem:[%s1 + $0x764] sm:$0xff]
  %v304 = vld [vmem:[%s1 + $0x76c] sm:$0xf]
  %v305 = vld [vmem:[%s1 + $0x770] sm:$0xff]
  %v306 = vld [vmem:[%s1 + $0x778] sm:$0xff]
  %v307 = vld [vmem:[%s1 + $0x780] sm:$0xff]
  %v308 = vld [vmem:[%s1 + $0x788] sm:$0xf]
  %v309 = vld [vmem:[%s1 + $0x78c] sm:$0xff]
  %v310 = vld [vmem:[%s1 + $0x794] sm:$0xff]
  %v311 = vld [vmem:[%s1 + $0x79c] sm:$0xff]
  %v312 = vld [vmem:[%s1 + $0x7a4] sm:$0xf]
  %v313 = vld [vmem:[%s1 + $0x7a8] sm:$0xff]
  %v314 = vld [vmem:[%s1 + $0x7b0] sm:$0xff]
  %v315 = vld [vmem:[%s1 + $0x7b8] sm:$0xff]
  %v316 = vld [vmem:[%s1 + $0x7c0] sm:$0xf]
  %v317 = vld [vmem:[%s1 + $0x7c4] sm:$0xff]
  %v318 = vld [vmem:[%s1 + $0x7cc] sm:$0xff]
  %v319 = vld [vmem:[%s1 + $0x7d4] sm:$0xff]
  %v320 = vld [vmem:[%s1 + $0x7dc] sm:$0xf]
  %v321 = vld [vmem:[%s1 + $0x7e0] sm:$0xff]
  %v322 = vld [vmem:[%s1 + $0x7e8] sm:$0xff]
  %v323 = vld [vmem:[%s1 + $0x7f0] sm:$0xff]
  %v324 = vld [vmem:[%s1 + $0x7f8] sm:$0xf]
  %v325 = vld [vmem:[%s1 + $0x7fc] sm:$0xff]
  %v326 = vld [vmem:[%s1 + $0x804] sm:$0xff]
  %v327 = vld [vmem:[%s1 + $0x80c] sm:$0xff]
  %v328 = vld [vmem:[%s1 + $0x814] sm:$0xf]
  %v329 = vld [vmem:[%s1 + $0x818] sm:$0xff]
  %v330 = vld [vmem:[%s1 + $0x820] sm:$0xff]
  %v331 = vld [vmem:[%s1 + $0x828] sm:$0xff]
  %v332 = vld [vmem:[%s1 + $0x830] sm:$0xf]
  %v333 = vld [vmem:[%s1 + $0x834] sm:$0xff]
  %v334 = vld [vmem:[%s1 + $0x83c] sm:$0xff]
  %v335 = vld [vmem:[%s1 + $0x844] sm:$0xff]
  %v336 = vld [vmem:[%s1 + $0x84c] sm:$0xf]
  %v337 = vld [vmem:[%s1 + $0x850] sm:$0xff]
  %v338 = vld [vmem:[%s1 + $0x858] sm:$0xff]
  %v339 = vld [vmem:[%s1 + $0x860] sm:$0xff]
  %v340 = vld [vmem:[%s1 + $0x868] sm:$0xf]
  %v341 = vld [vmem:[%s1 + $0x86c] sm:$0xff]
  %v342 = vld [vmem:[%s1 + $0x874] sm:$0xff]
  %v343 = vld [vmem:[%s1 + $0x87c] sm:$0xff]
  %v344 = vld [vmem:[%s1 + $0x884] sm:$0xf]
  %v345 = vld [vmem:[%s1 + $0x888] sm:$0xff]
  %v346 = vld [vmem:[%s1 + $0x890] sm:$0xff]
  %v347 = vld [vmem:[%s1 + $0x898] sm:$0xff]
  %v348 = vld [vmem:[%s1 + $0x8a0] sm:$0xf]
  %v349 = vld [vmem:[%s1 + $0x8a4] sm:$0xff]
  %v350 = vld [vmem:[%s1 + $0x8ac] sm:$0xff]
  %v351 = vld [vmem:[%s1 + $0x8b4] sm:$0xff]
  %v352 = vld [vmem:[%s1 + $0x8bc] sm:$0xf]
  %v353 = vld [vmem:[%s1 + $0x8c0] sm:$0xff]
  %v354 = vld [vmem:[%s1 + $0x8c8] sm:$0xff]
  %v355 = vld [vmem:[%s1 + $0x8d0] sm:$0xff]
  %v356 = vld [vmem:[%s1 + $0x8d8] sm:$0xf]
  %v357 = vld [vmem:[%s2] sm:$0xff]
  %v358 = vld [vmem:[%s2 + $0x8] sm:$0xff]
  %v359 = vld [vmem:[%s2 + $0x10] sm:$0xff]
  %v360 = vld [vmem:[%s2 + $0x18] sm:$0xff]
  %v361 = vld [vmem:[%s2 + $0x20] sm:$0xff]
  %v362 = vld [vmem:[%s2 + $0x28] sm:$0xff]
  %364 = vset.pattern.permute.xlu0 0
  %365 = vperm.xlu0 %364, %v357
  %v366 = vpop.permute.xlu0 %365
  %369 = vset.pattern.permute.xlu0 0
  %370 = vperm.xlu0 %369, %v358
  %v371 = vpop.permute.xlu0 %370
  %374 = vset.pattern.permute.xlu0 0
  %375 = vperm.xlu0 %374, %v359
  %v376 = vpop.permute.xlu0 %375
  %379 = vset.pattern.permute.xlu0 0
  %380 = vperm.xlu0 %379, %v360
  %v381 = vpop.permute.xlu0 %380
  %384 = vset.pattern.permute.xlu0 0
  %385 = vperm.xlu0 %384, %v361
  %v386 = vpop.permute.xlu0 %385
  %389 = vset.pattern.permute.xlu0 0
  %390 = vperm.xlu0 %389, %v362
  %v391 = vpop.permute.xlu0 %390
  %v411 = vunpack.c.l.b16 %v15
  %v412 = vunpack.c.h.b16 %v15
  %v413 = vunpack.c.l.b16 %v16
  %v414 = vunpack.c.h.b16 %v16
  %v415 = vunpack.c.l.b16 %v17
  %v416 = vunpack.c.h.b16 %v17
  %v417 = vunpack.c.l.b16 %v18
  %v418 = vunpack.c.h.b16 %v18
  %v419 = vunpack.c.l.b16 %v19
  %v420 = vunpack.c.h.b16 %v19
  %v421 = vunpack.c.l.b16 %v20
  %v422 = vunpack.c.h.b16 %v20
  %v423 = vunpack.c.l.b16 %v21
  %v424 = vunpack.c.h.b16 %v21
  %v425 = vunpack.c.l.b16 %v22
  %v426 = vunpack.c.h.b16 %v22
  %v427 = vunpack.c.l.b16 %v23
  %v428 = vunpack.c.h.b16 %v23
  %v429 = vunpack.c.l.b16 %v24
  %v430 = vunpack.c.h.b16 %v24
  %v431 = vunpack.c.l.b16 %v25
  %v432 = vunpack.c.h.b16 %v25
  %v433 = vunpack.c.l.b16 %v26
  %v434 = vunpack.c.h.b16 %v26
  %v435 = vunpack.c.l.b16 %v27
  %v436 = vunpack.c.h.b16 %v27
  %v437 = vunpack.c.l.b16 %v28
  %v438 = vunpack.c.h.b16 %v28
  %v439 = vunpack.c.l.b16 %v29
  %v440 = vunpack.c.h.b16 %v29
  %v441 = vunpack.c.l.b16 %v30
  %v442 = vunpack.c.h.b16 %v30
  %v443 = vunpack.c.l.b16 %v31
  %v444 = vunpack.c.h.b16 %v31
  %v445 = vunpack.c.l.b16 %v32
  %v446 = vunpack.c.h.b16 %v32
  %v447 = vpack.c.b16 %v417, %v411
  %v448 = vpack.c.b16 %v418, %v412
  %v449 = vpack.c.b16 %v419, %v413
  %v450 = vpack.c.b16 %v420, %v414
  %v451 = vpack.c.b16 %v421, %v415
  %v452 = vpack.c.b16 %v422, %v416
  %v453 = vpack.c.b16 %v429, %v423
  %v454 = vpack.c.b16 %v430, %v424
  %v455 = vpack.c.b16 %v431, %v425
  %v456 = vpack.c.b16 %v432, %v426
  %v457 = vpack.c.b16 %v433, %v427
  %v458 = vpack.c.b16 %v434, %v428
  %v459 = vpack.c.b16 %v441, %v435
  %v460 = vpack.c.b16 %v442, %v436
  %v461 = vpack.c.b16 %v443, %v437
  %v462 = vpack.c.b16 %v444, %v438
  %v463 = vpack.c.b16 %v445, %v439
  %v464 = vpack.c.b16 %v446, %v440
  %v804 = vunpack.c.l.b16 %v33
  %v805 = vunpack.c.h.b16 %v33
  %v806 = vunpack.c.l.b16 %v34
  %v807 = vunpack.c.h.b16 %v34
  %v808 = vunpack.c.l.b16 %v35
  %v809 = vunpack.c.h.b16 %v35
  %v810 = vunpack.c.l.b16 %v36
  %v811 = vunpack.c.l.b16 %v37
  %v812 = vunpack.c.h.b16 %v37
  %v813 = vunpack.c.l.b16 %v38
  %v814 = vunpack.c.h.b16 %v38
  %v815 = vunpack.c.l.b16 %v39
  %v816 = vunpack.c.h.b16 %v39
  %v817 = vunpack.c.l.b16 %v40
  %v818 = vunpack.c.l.b16 %v41
  %v819 = vunpack.c.h.b16 %v41
  %v820 = vunpack.c.l.b16 %v42
  %v821 = vunpack.c.h.b16 %v42
  %v822 = vunpack.c.l.b16 %v43
  %v823 = vunpack.c.h.b16 %v43
  %v824 = vunpack.c.l.b16 %v44
  %v825 = vunpack.c.l.b16 %v45
  %v826 = vunpack.c.h.b16 %v45
  %v827 = vunpack.c.l.b16 %v46
  %v828 = vunpack.c.h.b16 %v46
  %v829 = vunpack.c.l.b16 %v47
  %v830 = vunpack.c.h.b16 %v47
  %v831 = vunpack.c.l.b16 %v48
  %v832 = vunpack.c.l.b16 %v49
  %v833 = vunpack.c.h.b16 %v49
  %v834 = vunpack.c.l.b16 %v50
  %v835 = vunpack.c.h.b16 %v50
  %v836 = vunpack.c.l.b16 %v51
  %v837 = vunpack.c.h.b16 %v51
  %v838 = vunpack.c.l.b16 %v52
  %v839 = vunpack.c.l.b16 %v53
  %v840 = vunpack.c.h.b16 %v53
  %v841 = vunpack.c.l.b16 %v54
  %v842 = vunpack.c.h.b16 %v54
  %v843 = vunpack.c.l.b16 %v55
  %v844 = vunpack.c.h.b16 %v55
  %v845 = vunpack.c.l.b16 %v56
  %v846 = vunpack.c.l.b16 %v57
  %v847 = vunpack.c.h.b16 %v57
  %v848 = vunpack.c.l.b16 %v58
  %v849 = vunpack.c.h.b16 %v58
  %v850 = vunpack.c.l.b16 %v59
  %v851 = vunpack.c.h.b16 %v59
  %v852 = vunpack.c.l.b16 %v60
  %v853 = vunpack.c.l.b16 %v61
  %v854 = vunpack.c.h.b16 %v61
  %v855 = vunpack.c.l.b16 %v62
  %v856 = vunpack.c.h.b16 %v62
  %v857 = vunpack.c.l.b16 %v63
  %v858 = vunpack.c.h.b16 %v63
  %v859 = vunpack.c.l.b16 %v64
  %v860 = vunpack.c.l.b16 %v65
  %v861 = vunpack.c.h.b16 %v65
  %v862 = vunpack.c.l.b16 %v66
  %v863 = vunpack.c.h.b16 %v66
  %v864 = vunpack.c.l.b16 %v67
  %v865 = vunpack.c.h.b16 %v67
  %v866 = vunpack.c.l.b16 %v68
  %v867 = vunpack.c.l.b16 %v69
  %v868 = vunpack.c.h.b16 %v69
  %v869 = vunpack.c.l.b16 %v70
  %v870 = vunpack.c.h.b16 %v70
  %v871 = vunpack.c.l.b16 %v71
  %v872 = vunpack.c.h.b16 %v71
  %v873 = vunpack.c.l.b16 %v72
  %v874 = vunpack.c.l.b16 %v73
  %v875 = vunpack.c.h.b16 %v73
  %v876 = vunpack.c.l.b16 %v74
  %v877 = vunpack.c.h.b16 %v74
  %v878 = vunpack.c.l.b16 %v75
  %v879 = vunpack.c.h.b16 %v75
  %v880 = vunpack.c.l.b16 %v76
  %v881 = vunpack.c.l.b16 %v77
  %v882 = vunpack.c.h.b16 %v77
  %v883 = vunpack.c.l.b16 %v78
  %v884 = vunpack.c.h.b16 %v78
  %v885 = vunpack.c.l.b16 %v79
  %v886 = vunpack.c.h.b16 %v79
  %v887 = vunpack.c.l.b16 %v80
  %v888 = vunpack.c.l.b16 %v81
  %v889 = vunpack.c.h.b16 %v81
  %v890 = vunpack.c.l.b16 %v82
  %v891 = vunpack.c.h.b16 %v82
  %v892 = vunpack.c.l.b16 %v83
  %v893 = vunpack.c.h.b16 %v83
  %v894 = vunpack.c.l.b16 %v84
  %v895 = vunpack.c.l.b16 %v85
  %v896 = vunpack.c.h.b16 %v85
  %v897 = vunpack.c.l.b16 %v86
  %v898 = vunpack.c.h.b16 %v86
  %v899 = vunpack.c.l.b16 %v87
  %v900 = vunpack.c.h.b16 %v87
  %v901 = vunpack.c.l.b16 %v88
  %v902 = vunpack.c.l.b16 %v89
  %v903 = vunpack.c.h.b16 %v89
  %v904 = vunpack.c.l.b16 %v90
  %v905 = vunpack.c.h.b16 %v90
  %v906 = vunpack.c.l.b16 %v91
  %v907 = vunpack.c.h.b16 %v91
  %v908 = vunpack.c.l.b16 %v92
  %v909 = vunpack.c.l.b16 %v93
  %v910 = vunpack.c.h.b16 %v93
  %v911 = vunpack.c.l.b16 %v94
  %v912 = vunpack.c.h.b16 %v94
  %v913 = vunpack.c.l.b16 %v95
  %v914 = vunpack.c.h.b16 %v95
  %v915 = vunpack.c.l.b16 %v96
  %v916 = vunpack.c.l.b16 %v97
  %v917 = vunpack.c.h.b16 %v97
  %v918 = vunpack.c.l.b16 %v98
  %v919 = vunpack.c.h.b16 %v98
  %v920 = vunpack.c.l.b16 %v99
  %v921 = vunpack.c.h.b16 %v99
  %v922 = vunpack.c.l.b16 %v100
  %v923 = vunpack.c.l.b16 %v101
  %v924 = vunpack.c.h.b16 %v101
  %v925 = vunpack.c.l.b16 %v102
  %v926 = vunpack.c.h.b16 %v102
  %v927 = vunpack.c.l.b16 %v103
  %v928 = vunpack.c.h.b16 %v103
  %v929 = vunpack.c.l.b16 %v104
  %v930 = vunpack.c.l.b16 %v105
  %v931 = vunpack.c.h.b16 %v105
  %v932 = vunpack.c.l.b16 %v106
  %v933 = vunpack.c.h.b16 %v106
  %v934 = vunpack.c.l.b16 %v107
  %v935 = vunpack.c.h.b16 %v107
  %v936 = vunpack.c.l.b16 %v108
  %v937 = vunpack.c.l.b16 %v109
  %v938 = vunpack.c.h.b16 %v109
  %v939 = vunpack.c.l.b16 %v110
  %v940 = vunpack.c.h.b16 %v110
  %v941 = vunpack.c.l.b16 %v111
  %v942 = vunpack.c.h.b16 %v111
  %v943 = vunpack.c.l.b16 %v112
  %v944 = vunpack.c.l.b16 %v113
  %v945 = vunpack.c.h.b16 %v113
  %v946 = vunpack.c.l.b16 %v114
  %v947 = vunpack.c.h.b16 %v114
  %v948 = vunpack.c.l.b16 %v115
  %v949 = vunpack.c.h.b16 %v115
  %v950 = vunpack.c.l.b16 %v116
  %v951 = vunpack.c.l.b16 %v117
  %v952 = vunpack.c.h.b16 %v117
  %v953 = vunpack.c.l.b16 %v118
  %v954 = vunpack.c.h.b16 %v118
  %v955 = vunpack.c.l.b16 %v119
  %v956 = vunpack.c.h.b16 %v119
  %v957 = vunpack.c.l.b16 %v120
  %v958 = vunpack.c.l.b16 %v121
  %v959 = vunpack.c.h.b16 %v121
  %v960 = vunpack.c.l.b16 %v122
  %v961 = vunpack.c.h.b16 %v122
  %v962 = vunpack.c.l.b16 %v123
  %v963 = vunpack.c.h.b16 %v123
  %v964 = vunpack.c.l.b16 %v124
  %v965 = vunpack.c.l.b16 %v125
  %v966 = vunpack.c.h.b16 %v125
  %v967 = vunpack.c.l.b16 %v126
  %v968 = vunpack.c.h.b16 %v126
  %v969 = vunpack.c.l.b16 %v127
  %v970 = vunpack.c.h.b16 %v127
  %v971 = vunpack.c.l.b16 %v128
  %v972 = vunpack.c.l.b16 %v129
  %v973 = vunpack.c.h.b16 %v129
  %v974 = vunpack.c.l.b16 %v130
  %v975 = vunpack.c.h.b16 %v130
  %v976 = vunpack.c.l.b16 %v131
  %v977 = vunpack.c.h.b16 %v131
  %v978 = vunpack.c.l.b16 %v132
  %v979 = vunpack.c.l.b16 %v133
  %v980 = vunpack.c.h.b16 %v133
  %v981 = vunpack.c.l.b16 %v134
  %v982 = vunpack.c.h.b16 %v134
  %v983 = vunpack.c.l.b16 %v135
  %v984 = vunpack.c.h.b16 %v135
  %v985 = vunpack.c.l.b16 %v136
  %v986 = vunpack.c.l.b16 %v137
  %v987 = vunpack.c.h.b16 %v137
  %v988 = vunpack.c.l.b16 %v138
  %v989 = vunpack.c.h.b16 %v138
  %v990 = vunpack.c.l.b16 %v139
  %v991 = vunpack.c.h.b16 %v139
  %v992 = vunpack.c.l.b16 %v140
  %v993 = vunpack.c.l.b16 %v141
  %v994 = vunpack.c.h.b16 %v141
  %v995 = vunpack.c.l.b16 %v142
  %v996 = vunpack.c.h.b16 %v142
  %v997 = vunpack.c.l.b16 %v143
  %v998 = vunpack.c.h.b16 %v143
  %v999 = vunpack.c.l.b16 %v144
  %v1000 = vunpack.c.l.b16 %v145
  %v1001 = vunpack.c.h.b16 %v145
  %v1002 = vunpack.c.l.b16 %v146
  %v1003 = vunpack.c.h.b16 %v146
  %v1004 = vunpack.c.l.b16 %v147
  %v1005 = vunpack.c.h.b16 %v147
  %v1006 = vunpack.c.l.b16 %v148
  %v1007 = vunpack.c.l.b16 %v149
  %v1008 = vunpack.c.h.b16 %v149
  %v1009 = vunpack.c.l.b16 %v150
  %v1010 = vunpack.c.h.b16 %v150
  %v1011 = vunpack.c.l.b16 %v151
  %v1012 = vunpack.c.h.b16 %v151
  %v1013 = vunpack.c.l.b16 %v152
  %v1014 = vunpack.c.l.b16 %v153
  %v1015 = vunpack.c.h.b16 %v153
  %v1016 = vunpack.c.l.b16 %v154
  %v1017 = vunpack.c.h.b16 %v154
  %v1018 = vunpack.c.l.b16 %v155
  %v1019 = vunpack.c.h.b16 %v155
  %v1020 = vunpack.c.l.b16 %v156
  %v1021 = vunpack.c.l.b16 %v157
  %v1022 = vunpack.c.h.b16 %v157
  %v1023 = vunpack.c.l.b16 %v158
  %v1024 = vunpack.c.h.b16 %v158
  %v1025 = vunpack.c.l.b16 %v159
  %v1026 = vunpack.c.h.b16 %v159
  %v1027 = vunpack.c.l.b16 %v160
  %v1028 = vunpack.c.l.b16 %v161
  %v1029 = vunpack.c.h.b16 %v161
  %v1030 = vunpack.c.l.b16 %v162
  %v1031 = vunpack.c.h.b16 %v162
  %v1032 = vunpack.c.l.b16 %v163
  %v1033 = vunpack.c.h.b16 %v163
  %v1034 = vunpack.c.l.b16 %v164
  %v1035 = vunpack.c.l.b16 %v165
  %v1036 = vunpack.c.h.b16 %v165
  %v1037 = vunpack.c.l.b16 %v166
  %v1038 = vunpack.c.h.b16 %v166
  %v1039 = vunpack.c.l.b16 %v167
  %v1040 = vunpack.c.h.b16 %v167
  %v1041 = vunpack.c.l.b16 %v168
  %v1042 = vunpack.c.l.b16 %v169
  %v1043 = vunpack.c.h.b16 %v169
  %v1044 = vunpack.c.l.b16 %v170
  %v1045 = vunpack.c.h.b16 %v170
  %v1046 = vunpack.c.l.b16 %v171
  %v1047 = vunpack.c.h.b16 %v171
  %v1048 = vunpack.c.l.b16 %v172
  %v1049 = vunpack.c.l.b16 %v173
  %v1050 = vunpack.c.h.b16 %v173
  %v1051 = vunpack.c.l.b16 %v174
  %v1052 = vunpack.c.h.b16 %v174
  %v1053 = vunpack.c.l.b16 %v175
  %v1054 = vunpack.c.h.b16 %v175
  %v1055 = vunpack.c.l.b16 %v176
  %v1056 = vunpack.c.l.b16 %v177
  %v1057 = vunpack.c.h.b16 %v177
  %v1058 = vunpack.c.l.b16 %v178
  %v1059 = vunpack.c.h.b16 %v178
  %v1060 = vunpack.c.l.b16 %v179
  %v1061 = vunpack.c.h.b16 %v179
  %v1062 = vunpack.c.l.b16 %v180
  %v1063 = vunpack.c.l.b16 %v181
  %v1064 = vunpack.c.h.b16 %v181
  %v1065 = vunpack.c.l.b16 %v182
  %v1066 = vunpack.c.h.b16 %v182
  %v1067 = vunpack.c.l.b16 %v183
  %v1068 = vunpack.c.h.b16 %v183
  %v1069 = vunpack.c.l.b16 %v184
  %v1070 = vunpack.c.l.b16 %v185
  %v1071 = vunpack.c.h.b16 %v185
  %v1072 = vunpack.c.l.b16 %v186
  %v1073 = vunpack.c.h.b16 %v186
  %v1074 = vunpack.c.l.b16 %v187
  %v1075 = vunpack.c.h.b16 %v187
  %v1076 = vunpack.c.l.b16 %v188
  %v1077 = vunpack.c.l.b16 %v189
  %v1078 = vunpack.c.h.b16 %v189
  %v1079 = vunpack.c.l.b16 %v190
  %v1080 = vunpack.c.h.b16 %v190
  %v1081 = vunpack.c.l.b16 %v191
  %v1082 = vunpack.c.h.b16 %v191
  %v1083 = vunpack.c.l.b16 %v192
  %v1084 = vunpack.c.l.b16 %v193
  %v1085 = vunpack.c.h.b16 %v193
  %v1086 = vunpack.c.l.b16 %v194
  %v1087 = vunpack.c.h.b16 %v194
  %v1088 = vunpack.c.l.b16 %v195
  %v1089 = vunpack.c.h.b16 %v195
  %v1090 = vunpack.c.l.b16 %v196
  %v1091 = vunpack.c.l.b16 %v197
  %v1092 = vunpack.c.h.b16 %v197
  %v1093 = vunpack.c.l.b16 %v198
  %v1094 = vunpack.c.h.b16 %v198
  %v1095 = vunpack.c.l.b16 %v199
  %v1096 = vunpack.c.h.b16 %v199
  %v1097 = vunpack.c.l.b16 %v200
  %v1098 = vunpack.c.l.b16 %v201
  %v1099 = vunpack.c.h.b16 %v201
  %v1100 = vunpack.c.l.b16 %v202
  %v1101 = vunpack.c.h.b16 %v202
  %v1102 = vunpack.c.l.b16 %v203
  %v1103 = vunpack.c.h.b16 %v203
  %v1104 = vunpack.c.l.b16 %v204
  %v1105 = vunpack.c.l.b16 %v205
  %v1106 = vunpack.c.h.b16 %v205
  %v1107 = vunpack.c.l.b16 %v206
  %v1108 = vunpack.c.h.b16 %v206
  %v1109 = vunpack.c.l.b16 %v207
  %v1110 = vunpack.c.h.b16 %v207
  %v1111 = vunpack.c.l.b16 %v208
  %v1112 = vunpack.c.l.b16 %v209
  %v1113 = vunpack.c.h.b16 %v209
  %v1114 = vunpack.c.l.b16 %v210
  %v1115 = vunpack.c.h.b16 %v210
  %v1116 = vunpack.c.l.b16 %v211
  %v1117 = vunpack.c.h.b16 %v211
  %v1118 = vunpack.c.l.b16 %v212
  %v1119 = vunpack.c.l.b16 %v213
  %v1120 = vunpack.c.h.b16 %v213
  %v1121 = vunpack.c.l.b16 %v214
  %v1122 = vunpack.c.h.b16 %v214
  %v1123 = vunpack.c.l.b16 %v215
  %v1124 = vunpack.c.h.b16 %v215
  %v1125 = vunpack.c.l.b16 %v216
  %v1126 = vunpack.c.l.b16 %v217
  %v1127 = vunpack.c.h.b16 %v217
  %v1128 = vunpack.c.l.b16 %v218
  %v1129 = vunpack.c.h.b16 %v218
  %v1130 = vunpack.c.l.b16 %v219
  %v1131 = vunpack.c.h.b16 %v219
  %v1132 = vunpack.c.l.b16 %v220
  %v1133 = vunpack.c.l.b16 %v221
  %v1134 = vunpack.c.h.b16 %v221
  %v1135 = vunpack.c.l.b16 %v222
  %v1136 = vunpack.c.h.b16 %v222
  %v1137 = vunpack.c.l.b16 %v223
  %v1138 = vunpack.c.h.b16 %v223
  %v1139 = vunpack.c.l.b16 %v224
  %v1140 = vunpack.c.l.b16 %v225
  %v1141 = vunpack.c.h.b16 %v225
  %v1142 = vunpack.c.l.b16 %v226
  %v1143 = vunpack.c.h.b16 %v226
  %v1144 = vunpack.c.l.b16 %v227
  %v1145 = vunpack.c.h.b16 %v227
  %v1146 = vunpack.c.l.b16 %v228
  %v1147 = vunpack.c.l.b16 %v229
  %v1148 = vunpack.c.h.b16 %v229
  %v1149 = vunpack.c.l.b16 %v230
  %v1150 = vunpack.c.h.b16 %v230
  %v1151 = vunpack.c.l.b16 %v231
  %v1152 = vunpack.c.h.b16 %v231
  %v1153 = vunpack.c.l.b16 %v232
  %v1154 = vunpack.c.l.b16 %v233
  %v1155 = vunpack.c.h.b16 %v233
  %v1156 = vunpack.c.l.b16 %v234
  %v1157 = vunpack.c.h.b16 %v234
  %v1158 = vunpack.c.l.b16 %v235
  %v1159 = vunpack.c.h.b16 %v235
  %v1160 = vunpack.c.l.b16 %v236
  %v1161 = vunpack.c.l.b16 %v237
  %v1162 = vunpack.c.h.b16 %v237
  %v1163 = vunpack.c.l.b16 %v238
  %v1164 = vunpack.c.h.b16 %v238
  %v1165 = vunpack.c.l.b16 %v239
  %v1166 = vunpack.c.h.b16 %v239
  %v1167 = vunpack.c.l.b16 %v240
  %v1168 = vunpack.c.l.b16 %v241
  %v1169 = vunpack.c.h.b16 %v241
  %v1170 = vunpack.c.l.b16 %v242
  %v1171 = vunpack.c.h.b16 %v242
  %v1172 = vunpack.c.l.b16 %v243
  %v1173 = vunpack.c.h.b16 %v243
  %v1174 = vunpack.c.l.b16 %v244
  %v1175 = vunpack.c.l.b16 %v245
  %v1176 = vunpack.c.h.b16 %v245
  %v1177 = vunpack.c.l.b16 %v246
  %v1178 = vunpack.c.h.b16 %v246
  %v1179 = vunpack.c.l.b16 %v247
  %v1180 = vunpack.c.h.b16 %v247
  %v1181 = vunpack.c.l.b16 %v248
  %v1182 = vunpack.c.l.b16 %v249
  %v1183 = vunpack.c.h.b16 %v249
  %v1184 = vunpack.c.l.b16 %v250
  %v1185 = vunpack.c.h.b16 %v250
  %v1186 = vunpack.c.l.b16 %v251
  %v1187 = vunpack.c.h.b16 %v251
  %v1188 = vunpack.c.l.b16 %v252
  %v1189 = vunpack.c.l.b16 %v253
  %v1190 = vunpack.c.h.b16 %v253
  %v1191 = vunpack.c.l.b16 %v254
  %v1192 = vunpack.c.h.b16 %v254
  %v1193 = vunpack.c.l.b16 %v255
  %v1194 = vunpack.c.h.b16 %v255
  %v1195 = vunpack.c.l.b16 %v256
  %v1196 = vunpack.c.l.b16 %v257
  %v1197 = vunpack.c.h.b16 %v257
  %v1198 = vunpack.c.l.b16 %v258
  %v1199 = vunpack.c.h.b16 %v258
  %v1200 = vunpack.c.l.b16 %v259
  %v1201 = vunpack.c.h.b16 %v259
  %v1202 = vunpack.c.l.b16 %v260
  %v1203 = vunpack.c.l.b16 %v261
  %v1204 = vunpack.c.h.b16 %v261
  %v1205 = vunpack.c.l.b16 %v262
  %v1206 = vunpack.c.h.b16 %v262
  %v1207 = vunpack.c.l.b16 %v263
  %v1208 = vunpack.c.h.b16 %v263
  %v1209 = vunpack.c.l.b16 %v264
  %v1210 = vunpack.c.l.b16 %v265
  %v1211 = vunpack.c.h.b16 %v265
  %v1212 = vunpack.c.l.b16 %v266
  %v1213 = vunpack.c.h.b16 %v266
  %v1214 = vunpack.c.l.b16 %v267
  %v1215 = vunpack.c.h.b16 %v267
  %v1216 = vunpack.c.l.b16 %v268
  %v1217 = vunpack.c.l.b16 %v269
  %v1218 = vunpack.c.h.b16 %v269
  %v1219 = vunpack.c.l.b16 %v270
  %v1220 = vunpack.c.h.b16 %v270
  %v1221 = vunpack.c.l.b16 %v271
  %v1222 = vunpack.c.h.b16 %v271
  %v1223 = vunpack.c.l.b16 %v272
  %v1224 = vunpack.c.l.b16 %v273
  %v1225 = vunpack.c.h.b16 %v273
  %v1226 = vunpack.c.l.b16 %v274
  %v1227 = vunpack.c.h.b16 %v274
  %v1228 = vunpack.c.l.b16 %v275
  %v1229 = vunpack.c.h.b16 %v275
  %v1230 = vunpack.c.l.b16 %v276
  %v1231 = vunpack.c.l.b16 %v277
  %v1232 = vunpack.c.h.b16 %v277
  %v1233 = vunpack.c.l.b16 %v278
  %v1234 = vunpack.c.h.b16 %v278
  %v1235 = vunpack.c.l.b16 %v279
  %v1236 = vunpack.c.h.b16 %v279
  %v1237 = vunpack.c.l.b16 %v280
  %v1238 = vunpack.c.l.b16 %v281
  %v1239 = vunpack.c.h.b16 %v281
  %v1240 = vunpack.c.l.b16 %v282
  %v1241 = vunpack.c.h.b16 %v282
  %v1242 = vunpack.c.l.b16 %v283
  %v1243 = vunpack.c.h.b16 %v283
  %v1244 = vunpack.c.l.b16 %v284
  %v1245 = vunpack.c.l.b16 %v285
  %v1246 = vunpack.c.h.b16 %v285
  %v1247 = vunpack.c.l.b16 %v286
  %v1248 = vunpack.c.h.b16 %v286
  %v1249 = vunpack.c.l.b16 %v287
  %v1250 = vunpack.c.h.b16 %v287
  %v1251 = vunpack.c.l.b16 %v288
  %v1252 = vunpack.c.l.b16 %v289
  %v1253 = vunpack.c.h.b16 %v289
  %v1254 = vunpack.c.l.b16 %v290
  %v1255 = vunpack.c.h.b16 %v290
  %v1256 = vunpack.c.l.b16 %v291
  %v1257 = vunpack.c.h.b16 %v291
  %v1258 = vunpack.c.l.b16 %v292
  %v1259 = vunpack.c.l.b16 %v293
  %v1260 = vunpack.c.h.b16 %v293
  %v1261 = vunpack.c.l.b16 %v294
  %v1262 = vunpack.c.h.b16 %v294
  %v1263 = vunpack.c.l.b16 %v295
  %v1264 = vunpack.c.h.b16 %v295
  %v1265 = vunpack.c.l.b16 %v296
  %v1266 = vunpack.c.l.b16 %v297
  %v1267 = vunpack.c.h.b16 %v297
  %v1268 = vunpack.c.l.b16 %v298
  %v1269 = vunpack.c.h.b16 %v298
  %v1270 = vunpack.c.l.b16 %v299
  %v1271 = vunpack.c.h.b16 %v299
  %v1272 = vunpack.c.l.b16 %v300
  %v1273 = vunpack.c.l.b16 %v301
  %v1274 = vunpack.c.h.b16 %v301
  %v1275 = vunpack.c.l.b16 %v302
  %v1276 = vunpack.c.h.b16 %v302
  %v1277 = vunpack.c.l.b16 %v303
  %v1278 = vunpack.c.h.b16 %v303
  %v1279 = vunpack.c.l.b16 %v304
  %v1280 = vunpack.c.l.b16 %v305
  %v1281 = vunpack.c.h.b16 %v305
  %v1282 = vunpack.c.l.b16 %v306
  %v1283 = vunpack.c.h.b16 %v306
  %v1284 = vunpack.c.l.b16 %v307
  %v1285 = vunpack.c.h.b16 %v307
  %v1286 = vunpack.c.l.b16 %v308
  %v1287 = vunpack.c.l.b16 %v309
  %v1288 = vunpack.c.h.b16 %v309
  %v1289 = vunpack.c.l.b16 %v310
  %v1290 = vunpack.c.h.b16 %v310
  %v1291 = vunpack.c.l.b16 %v311
  %v1292 = vunpack.c.h.b16 %v311
  %v1293 = vunpack.c.l.b16 %v312
  %v1294 = vunpack.c.l.b16 %v313
  %v1295 = vunpack.c.h.b16 %v313
  %v1296 = vunpack.c.l.b16 %v314
  %v1297 = vunpack.c.h.b16 %v314
  %v1298 = vunpack.c.l.b16 %v315
  %v1299 = vunpack.c.h.b16 %v315
  %v1300 = vunpack.c.l.b16 %v316
  %v1301 = vunpack.c.l.b16 %v317
  %v1302 = vunpack.c.h.b16 %v317
  %v1303 = vunpack.c.l.b16 %v318
  %v1304 = vunpack.c.h.b16 %v318
  %v1305 = vunpack.c.l.b16 %v319
  %v1306 = vunpack.c.h.b16 %v319
  %v1307 = vunpack.c.l.b16 %v320
  %v1308 = vunpack.c.l.b16 %v321
  %v1309 = vunpack.c.h.b16 %v321
  %v1310 = vunpack.c.l.b16 %v322
  %v1311 = vunpack.c.h.b16 %v322
  %v1312 = vunpack.c.l.b16 %v323
  %v1313 = vunpack.c.h.b16 %v323
  %v1314 = vunpack.c.l.b16 %v324
  %v1315 = vunpack.c.l.b16 %v325
  %v1316 = vunpack.c.h.b16 %v325
  %v1317 = vunpack.c.l.b16 %v326
  %v1318 = vunpack.c.h.b16 %v326
  %v1319 = vunpack.c.l.b16 %v327
  %v1320 = vunpack.c.h.b16 %v327
  %v1321 = vunpack.c.l.b16 %v328
  %v1322 = vunpack.c.l.b16 %v329
  %v1323 = vunpack.c.h.b16 %v329
  %v1324 = vunpack.c.l.b16 %v330
  %v1325 = vunpack.c.h.b16 %v330
  %v1326 = vunpack.c.l.b16 %v331
  %v1327 = vunpack.c.h.b16 %v331
  %v1328 = vunpack.c.l.b16 %v332
  %v1329 = vunpack.c.l.b16 %v333
  %v1330 = vunpack.c.h.b16 %v333
  %v1331 = vunpack.c.l.b16 %v334
  %v1332 = vunpack.c.h.b16 %v334
  %v1333 = vunpack.c.l.b16 %v335
  %v1334 = vunpack.c.h.b16 %v335
  %v1335 = vunpack.c.l.b16 %v336
  %v1336 = vunpack.c.l.b16 %v337
  %v1337 = vunpack.c.h.b16 %v337
  %v1338 = vunpack.c.l.b16 %v338
  %v1339 = vunpack.c.h.b16 %v338
  %v1340 = vunpack.c.l.b16 %v339
  %v1341 = vunpack.c.h.b16 %v339
  %v1342 = vunpack.c.l.b16 %v340
  %v1343 = vunpack.c.l.b16 %v341
  %v1344 = vunpack.c.h.b16 %v341
  %v1345 = vunpack.c.l.b16 %v342
  %v1346 = vunpack.c.h.b16 %v342
  %v1347 = vunpack.c.l.b16 %v343
  %v1348 = vunpack.c.h.b16 %v343
  %v1349 = vunpack.c.l.b16 %v344
  %v1350 = vunpack.c.l.b16 %v345
  %v1351 = vunpack.c.h.b16 %v345
  %v1352 = vunpack.c.l.b16 %v346
  %v1353 = vunpack.c.h.b16 %v346
  %v1354 = vunpack.c.l.b16 %v347
  %v1355 = vunpack.c.h.b16 %v347
  %v1356 = vunpack.c.l.b16 %v348
  %v1357 = vunpack.c.l.b16 %v349
  %v1358 = vunpack.c.h.b16 %v349
  %v1359 = vunpack.c.l.b16 %v350
  %v1360 = vunpack.c.h.b16 %v350
  %v1361 = vunpack.c.l.b16 %v351
  %v1362 = vunpack.c.h.b16 %v351
  %v1363 = vunpack.c.l.b16 %v352
  %v1364 = vunpack.c.l.b16 %v353
  %v1365 = vunpack.c.h.b16 %v353
  %v1366 = vunpack.c.l.b16 %v354
  %v1367 = vunpack.c.h.b16 %v354
  %v1368 = vunpack.c.l.b16 %v355
  %v1369 = vunpack.c.h.b16 %v355
  %v1370 = vunpack.c.l.b16 %v356
  %v1371 = vpack.c.b16 %v811, %v804
  %v1372 = vpack.c.b16 %v812, %v805
  %v1373 = vpack.c.b16 %v813, %v806
  %v1374 = vpack.c.b16 %v814, %v807
  %v1375 = vpack.c.b16 %v815, %v808
  %v1376 = vpack.c.b16 %v816, %v809
  %v1377 = vpack.c.b16 %v817, %v810
  %v1378 = vpack.c.b16 %v825, %v818
  %v1379 = vpack.c.b16 %v826, %v819
  %v1380 = vpack.c.b16 %v827, %v820
  %v1381 = vpack.c.b16 %v828, %v821
  %v1382 = vpack.c.b16 %v829, %v822
  %v1383 = vpack.c.b16 %v830, %v823
  %v1384 = vpack.c.b16 %v831, %v824
  %v1385 = vpack.c.b16 %v839, %v832
  %v1386 = vpack.c.b16 %v840, %v833
  %v1387 = vpack.c.b16 %v841, %v834
  %v1388 = vpack.c.b16 %v842, %v835
  %v1389 = vpack.c.b16 %v843, %v836
  %v1390 = vpack.c.b16 %v844, %v837
  %v1391 = vpack.c.b16 %v845, %v838
  %v1392 = vpack.c.b16 %v853, %v846
  %v1393 = vpack.c.b16 %v854, %v847
  %v1394 = vpack.c.b16 %v855, %v848
  %v1395 = vpack.c.b16 %v856, %v849
  %v1396 = vpack.c.b16 %v857, %v850
  %v1397 = vpack.c.b16 %v858, %v851
  %v1398 = vpack.c.b16 %v859, %v852
  %v1399 = vpack.c.b16 %v867, %v860
  %v1400 = vpack.c.b16 %v868, %v861
  %v1401 = vpack.c.b16 %v869, %v862
  %v1402 = vpack.c.b16 %v870, %v863
  %v1403 = vpack.c.b16 %v871, %v864
  %v1404 = vpack.c.b16 %v872, %v865
  %v1405 = vpack.c.b16 %v873, %v866
  %v1406 = vpack.c.b16 %v881, %v874
  %v1407 = vpack.c.b16 %v882, %v875
  %v1408 = vpack.c.b16 %v883, %v876
  %v1409 = vpack.c.b16 %v884, %v877
  %v1410 = vpack.c.b16 %v885, %v878
  %v1411 = vpack.c.b16 %v886, %v879
  %v1412 = vpack.c.b16 %v887, %v880
  %v1413 = vpack.c.b16 %v895, %v888
  %v1414 = vpack.c.b16 %v896, %v889
  %v1415 = vpack.c.b16 %v897, %v890
  %v1416 = vpack.c.b16 %v898, %v891
  %v1417 = vpack.c.b16 %v899, %v892
  %v1418 = vpack.c.b16 %v900, %v893
  %v1419 = vpack.c.b16 %v901, %v894
  %v1420 = vpack.c.b16 %v909, %v902
  %v1421 = vpack.c.b16 %v910, %v903
  %v1422 = vpack.c.b16 %v911, %v904
  %v1423 = vpack.c.b16 %v912, %v905
  %v1424 = vpack.c.b16 %v913, %v906
  %v1425 = vpack.c.b16 %v914, %v907
  %v1426 = vpack.c.b16 %v915, %v908
  %v1427 = vpack.c.b16 %v923, %v916
  %v1428 = vpack.c.b16 %v924, %v917
  %v1429 = vpack.c.b16 %v925, %v918
  %v1430 = vpack.c.b16 %v926, %v919
  %v1431 = vpack.c.b16 %v927, %v920
  %v1432 = vpack.c.b16 %v928, %v921
  %v1433 = vpack.c.b16 %v929, %v922
  %v1434 = vpack.c.b16 %v937, %v930
  %v1435 = vpack.c.b16 %v938, %v931
  %v1436 = vpack.c.b16 %v939, %v932
  %v1437 = vpack.c.b16 %v940, %v933
  %v1438 = vpack.c.b16 %v941, %v934
  %v1439 = vpack.c.b16 %v942, %v935
  %v1440 = vpack.c.b16 %v943, %v936
  %v1441 = vpack.c.b16 %v951, %v944
  %v1442 = vpack.c.b16 %v952, %v945
  %v1443 = vpack.c.b16 %v953, %v946
  %v1444 = vpack.c.b16 %v954, %v947
  %v1445 = vpack.c.b16 %v955, %v948
  %v1446 = vpack.c.b16 %v956, %v949
  %v1447 = vpack.c.b16 %v957, %v950
  %v1448 = vpack.c.b16 %v965, %v958
  %v1449 = vpack.c.b16 %v966, %v959
  %v1450 = vpack.c.b16 %v967, %v960
  %v1451 = vpack.c.b16 %v968, %v961
  %v1452 = vpack.c.b16 %v969, %v962
  %v1453 = vpack.c.b16 %v970, %v963
  %v1454 = vpack.c.b16 %v971, %v964
  %v1455 = vpack.c.b16 %v979, %v972
  %v1456 = vpack.c.b16 %v980, %v973
  %v1457 = vpack.c.b16 %v981, %v974
  %v1458 = vpack.c.b16 %v982, %v975
  %v1459 = vpack.c.b16 %v983, %v976
  %v1460 = vpack.c.b16 %v984, %v977
  %v1461 = vpack.c.b16 %v985, %v978
  %v1462 = vpack.c.b16 %v993, %v986
  %v1463 = vpack.c.b16 %v994, %v987
  %v1464 = vpack.c.b16 %v995, %v988
  %v1465 = vpack.c.b16 %v996, %v989
  %v1466 = vpack.c.b16 %v997, %v990
  %v1467 = vpack.c.b16 %v998, %v991
  %v1468 = vpack.c.b16 %v999, %v992
  %v1469 = vpack.c.b16 %v1007, %v1000
  %v1470 = vpack.c.b16 %v1008, %v1001
  %v1471 = vpack.c.b16 %v1009, %v1002
  %v1472 = vpack.c.b16 %v1010, %v1003
  %v1473 = vpack.c.b16 %v1011, %v1004
  %v1474 = vpack.c.b16 %v1012, %v1005
  %v1475 = vpack.c.b16 %v1013, %v1006
  %v1476 = vpack.c.b16 %v1021, %v1014
  %v1477 = vpack.c.b16 %v1022, %v1015
  %v1478 = vpack.c.b16 %v1023, %v1016
  %v1479 = vpack.c.b16 %v1024, %v1017
  %v1480 = vpack.c.b16 %v1025, %v1018
  %v1481 = vpack.c.b16 %v1026, %v1019
  %v1482 = vpack.c.b16 %v1027, %v1020
  %v1483 = vpack.c.b16 %v1035, %v1028
  %v1484 = vpack.c.b16 %v1036, %v1029
  %v1485 = vpack.c.b16 %v1037, %v1030
  %v1486 = vpack.c.b16 %v1038, %v1031
  %v1487 = vpack.c.b16 %v1039, %v1032
  %v1488 = vpack.c.b16 %v1040, %v1033
  %v1489 = vpack.c.b16 %v1041, %v1034
  %v1490 = vpack.c.b16 %v1049, %v1042
  %v1491 = vpack.c.b16 %v1050, %v1043
  %v1492 = vpack.c.b16 %v1051, %v1044
  %v1493 = vpack.c.b16 %v1052, %v1045
  %v1494 = vpack.c.b16 %v1053, %v1046
  %v1495 = vpack.c.b16 %v1054, %v1047
  %v1496 = vpack.c.b16 %v1055, %v1048
  %v1497 = vpack.c.b16 %v1063, %v1056
  %v1498 = vpack.c.b16 %v1064, %v1057
  %v1499 = vpack.c.b16 %v1065, %v1058
  %v1500 = vpack.c.b16 %v1066, %v1059
  %v1501 = vpack.c.b16 %v1067, %v1060
  %v1502 = vpack.c.b16 %v1068, %v1061
  %v1503 = vpack.c.b16 %v1069, %v1062
  %v1504 = vpack.c.b16 %v1077, %v1070
  %v1505 = vpack.c.b16 %v1078, %v1071
  %v1506 = vpack.c.b16 %v1079, %v1072
  %v1507 = vpack.c.b16 %v1080, %v1073
  %v1508 = vpack.c.b16 %v1081, %v1074
  %v1509 = vpack.c.b16 %v1082, %v1075
  %v1510 = vpack.c.b16 %v1083, %v1076
  %v1511 = vpack.c.b16 %v1091, %v1084
  %v1512 = vpack.c.b16 %v1092, %v1085
  %v1513 = vpack.c.b16 %v1093, %v1086
  %v1514 = vpack.c.b16 %v1094, %v1087
  %v1515 = vpack.c.b16 %v1095, %v1088
  %v1516 = vpack.c.b16 %v1096, %v1089
  %v1517 = vpack.c.b16 %v1097, %v1090
  %v1518 = vpack.c.b16 %v1105, %v1098
  %v1519 = vpack.c.b16 %v1106, %v1099
  %v1520 = vpack.c.b16 %v1107, %v1100
  %v1521 = vpack.c.b16 %v1108, %v1101
  %v1522 = vpack.c.b16 %v1109, %v1102
  %v1523 = vpack.c.b16 %v1110, %v1103
  %v1524 = vpack.c.b16 %v1111, %v1104
  %v1525 = vpack.c.b16 %v1119, %v1112
  %v1526 = vpack.c.b16 %v1120, %v1113
  %v1527 = vpack.c.b16 %v1121, %v1114
  %v1528 = vpack.c.b16 %v1122, %v1115
  %v1529 = vpack.c.b16 %v1123, %v1116
  %v1530 = vpack.c.b16 %v1124, %v1117
  %v1531 = vpack.c.b16 %v1125, %v1118
  %v1532 = vpack.c.b16 %v1133, %v1126
  %v1533 = vpack.c.b16 %v1134, %v1127
  %v1534 = vpack.c.b16 %v1135, %v1128
  %v1535 = vpack.c.b16 %v1136, %v1129
  %v1536 = vpack.c.b16 %v1137, %v1130
  %v1537 = vpack.c.b16 %v1138, %v1131
  %v1538 = vpack.c.b16 %v1139, %v1132
  %v1539 = vpack.c.b16 %v1147, %v1140
  %v1540 = vpack.c.b16 %v1148, %v1141
  %v1541 = vpack.c.b16 %v1149, %v1142
  %v1542 = vpack.c.b16 %v1150, %v1143
  %v1543 = vpack.c.b16 %v1151, %v1144
  %v1544 = vpack.c.b16 %v1152, %v1145
  %v1545 = vpack.c.b16 %v1153, %v1146
  %v1546 = vpack.c.b16 %v1161, %v1154
  %v1547 = vpack.c.b16 %v1162, %v1155
  %v1548 = vpack.c.b16 %v1163, %v1156
  %v1549 = vpack.c.b16 %v1164, %v1157
  %v1550 = vpack.c.b16 %v1165, %v1158
  %v1551 = vpack.c.b16 %v1166, %v1159
  %v1552 = vpack.c.b16 %v1167, %v1160
  %v1553 = vpack.c.b16 %v1175, %v1168
  %v1554 = vpack.c.b16 %v1176, %v1169
  %v1555 = vpack.c.b16 %v1177, %v1170
  %v1556 = vpack.c.b16 %v1178, %v1171
  %v1557 = vpack.c.b16 %v1179, %v1172
  %v1558 = vpack.c.b16 %v1180, %v1173
  %v1559 = vpack.c.b16 %v1181, %v1174
  %v1560 = vpack.c.b16 %v1189, %v1182
  %v1561 = vpack.c.b16 %v1190, %v1183
  %v1562 = vpack.c.b16 %v1191, %v1184
  %v1563 = vpack.c.b16 %v1192, %v1185
  %v1564 = vpack.c.b16 %v1193, %v1186
  %v1565 = vpack.c.b16 %v1194, %v1187
  %v1566 = vpack.c.b16 %v1195, %v1188
  %v1567 = vpack.c.b16 %v1203, %v1196
  %v1568 = vpack.c.b16 %v1204, %v1197
  %v1569 = vpack.c.b16 %v1205, %v1198
  %v1570 = vpack.c.b16 %v1206, %v1199
  %v1571 = vpack.c.b16 %v1207, %v1200
  %v1572 = vpack.c.b16 %v1208, %v1201
  %v1573 = vpack.c.b16 %v1209, %v1202
  %v1574 = vpack.c.b16 %v1217, %v1210
  %v1575 = vpack.c.b16 %v1218, %v1211
  %v1576 = vpack.c.b16 %v1219, %v1212
  %v1577 = vpack.c.b16 %v1220, %v1213
  %v1578 = vpack.c.b16 %v1221, %v1214
  %v1579 = vpack.c.b16 %v1222, %v1215
  %v1580 = vpack.c.b16 %v1223, %v1216
  %v1581 = vpack.c.b16 %v1231, %v1224
  %v1582 = vpack.c.b16 %v1232, %v1225
  %v1583 = vpack.c.b16 %v1233, %v1226
  %v1584 = vpack.c.b16 %v1234, %v1227
  %v1585 = vpack.c.b16 %v1235, %v1228
  %v1586 = vpack.c.b16 %v1236, %v1229
  %v1587 = vpack.c.b16 %v1237, %v1230
  %v1588 = vpack.c.b16 %v1245, %v1238
  %v1589 = vpack.c.b16 %v1246, %v1239
  %v1590 = vpack.c.b16 %v1247, %v1240
  %v1591 = vpack.c.b16 %v1248, %v1241
  %v1592 = vpack.c.b16 %v1249, %v1242
  %v1593 = vpack.c.b16 %v1250, %v1243
  %v1594 = vpack.c.b16 %v1251, %v1244
  %v1595 = vpack.c.b16 %v1259, %v1252
  %v1596 = vpack.c.b16 %v1260, %v1253
  %v1597 = vpack.c.b16 %v1261, %v1254
  %v1598 = vpack.c.b16 %v1262, %v1255
  %v1599 = vpack.c.b16 %v1263, %v1256
  %v1600 = vpack.c.b16 %v1264, %v1257
  %v1601 = vpack.c.b16 %v1265, %v1258
  %v1602 = vpack.c.b16 %v1273, %v1266
  %v1603 = vpack.c.b16 %v1274, %v1267
  %v1604 = vpack.c.b16 %v1275, %v1268
  %v1605 = vpack.c.b16 %v1276, %v1269
  %v1606 = vpack.c.b16 %v1277, %v1270
  %v1607 = vpack.c.b16 %v1278, %v1271
  %v1608 = vpack.c.b16 %v1279, %v1272
  %v1609 = vpack.c.b16 %v1287, %v1280
  %v1610 = vpack.c.b16 %v1288, %v1281
  %v1611 = vpack.c.b16 %v1289, %v1282
  %v1612 = vpack.c.b16 %v1290, %v1283
  %v1613 = vpack.c.b16 %v1291, %v1284
  %v1614 = vpack.c.b16 %v1292, %v1285
  %v1615 = vpack.c.b16 %v1293, %v1286
  %v1616 = vpack.c.b16 %v1301, %v1294
  %v1617 = vpack.c.b16 %v1302, %v1295
  %v1618 = vpack.c.b16 %v1303, %v1296
  %v1619 = vpack.c.b16 %v1304, %v1297
  %v1620 = vpack.c.b16 %v1305, %v1298
  %v1621 = vpack.c.b16 %v1306, %v1299
  %v1622 = vpack.c.b16 %v1307, %v1300
  %v1623 = vpack.c.b16 %v1315, %v1308
  %v1624 = vpack.c.b16 %v1316, %v1309
  %v1625 = vpack.c.b16 %v1317, %v1310
  %v1626 = vpack.c.b16 %v1318, %v1311
  %v1627 = vpack.c.b16 %v1319, %v1312
  %v1628 = vpack.c.b16 %v1320, %v1313
  %v1629 = vpack.c.b16 %v1321, %v1314
  %v1630 = vpack.c.b16 %v1329, %v1322
  %v1631 = vpack.c.b16 %v1330, %v1323
  %v1632 = vpack.c.b16 %v1331, %v1324
  %v1633 = vpack.c.b16 %v1332, %v1325
  %v1634 = vpack.c.b16 %v1333, %v1326
  %v1635 = vpack.c.b16 %v1334, %v1327
  %v1636 = vpack.c.b16 %v1335, %v1328
  %v1637 = vpack.c.b16 %v1343, %v1336
  %v1638 = vpack.c.b16 %v1344, %v1337
  %v1639 = vpack.c.b16 %v1345, %v1338
  %v1640 = vpack.c.b16 %v1346, %v1339
  %v1641 = vpack.c.b16 %v1347, %v1340
  %v1642 = vpack.c.b16 %v1348, %v1341
  %v1643 = vpack.c.b16 %v1349, %v1342
  %v1644 = vpack.c.b16 %v1357, %v1350
  %v1645 = vpack.c.b16 %v1358, %v1351
  %v1646 = vpack.c.b16 %v1359, %v1352
  %v1647 = vpack.c.b16 %v1360, %v1353
  %v1648 = vpack.c.b16 %v1361, %v1354
  %v1649 = vpack.c.b16 %v1362, %v1355
  %v1650 = vpack.c.b16 %v1363, %v1356
  %v1651 = vpack.c.b16 %v1364, %v1364
  %v1652 = vpack.c.b16 %v1365, %v1365
  %v1653 = vpack.c.b16 %v1366, %v1366
  %v1654 = vpack.c.b16 %v1367, %v1367
  %v1655 = vpack.c.b16 %v1368, %v1368
  %v1656 = vpack.c.b16 %v1369, %v1369
  %v1657 = vpack.c.b16 %v1370, %v1370
  %vm1938 = vcmask 64512
  %v1940 = vsel %vm1938, %v452, 0
  %v1943 = vsel %vm1938, %v458, 0
  %v1946 = vsel %vm1938, %v464, 0
  %vm1948 = vcmask 1043456
  %v1950 = vsel %vm1948, %v1651, 0
  %v1953 = vsel %vm1948, %v1652, 0
  %v1956 = vsel %vm1948, %v1653, 0
  %v1959 = vsel %vm1948, %v1654, 0
  %v1962 = vsel %vm1948, %v1655, 0
  %v1965 = vsel %vm1948, %v1656, 0
  %v1968 = vsel %vm1948, %v1657, 0
  %1970 = vmatprep.subr.bf16.mxu0 %v1372
  %1971 = vmatpush1.bf16.msra.mxu0 %v1371
  %1972 = vmatprep.subr.bf16.mxu0 %v1379
  %1973 = vmatpush1.bf16.msra.mxu0 %v1378
  %1974 = vmatprep.subr.bf16.mxu0 %v1386
  %1975 = vmatpush1.bf16.msra.mxu0 %v1385
  %1976 = vmatprep.subr.bf16.mxu0 %v1393
  %1977 = vmatpush1.bf16.msra.mxu0 %v1392
  %1978 = vmatprep.subr.bf16.mxu0 %v1400
  %1979 = vmatpush1.bf16.msra.mxu0 %v1399
  %1980 = vmatprep.subr.bf16.mxu0 %v1407
  %1981 = vmatpush1.bf16.msra.mxu0 %v1406
  %1982 = vmatprep.subr.bf16.mxu0 %v1414
  %1983 = vmatpush1.bf16.msra.mxu0 %v1413
  %1984 = vmatprep.subr.bf16.mxu0 %v1421
  %1985 = vmatpush1.bf16.msra.mxu0 %v1420
  %1986 = vmatprep.subr.bf16.mxu0 %v1428
  %1987 = vmatpush1.bf16.msra.mxu0 %v1427
  %1988 = vmatprep.subr.bf16.mxu0 %v1435
  %1989 = vmatpush1.bf16.msra.mxu0 %v1434
  %1990 = vmatprep.subr.bf16.mxu0 %v1442
  %1991 = vmatpush1.bf16.msra.mxu0 %v1441
  %1992 = vmatprep.subr.bf16.mxu0 %v1449
  %1993 = vmatpush1.bf16.msra.mxu0 %v1448
  %1994 = vmatprep.subr.bf16.mxu0 %v1456
  %1995 = vmatpush1.bf16.msra.mxu0 %v1455
  %1996 = vmatprep.subr.bf16.mxu0 %v1463
  %1997 = vmatpush1.bf16.msra.mxu0 %v1462
  %1998 = vmatprep.subr.bf16.mxu0 %v1470
  %1999 = vmatpush1.bf16.msra.mxu0 %v1469
  %2000 = vmatprep.subr.bf16.mxu0 %v1477
  %2001 = vmatpush1.bf16.msra.mxu0 %v1476
  %2002 = vmatprep.mubr.bf16.mxu0 %v448
  %2003 = vmatmul.mubr.bf16.gmra.mrb[0].mxu0 %v447
  %v2004 = vpop.f32.mrb[0].mxu0
  %v2005 = vadd.f32 %v366, %v2004
  %v2006 = vpop.f32.mrb[0].mxu0
  %v2007 = vadd.f32 %v366, %v2006
  %v2008 = vpop.f32.mrb[0].mxu0
  %v2009 = vadd.f32 %v371, %v2008
  %v2010 = vpop.f32.mrb[0].mxu0
  %v2011 = vadd.f32 %v371, %v2010
  %2012 = vmatprep.mubr.bf16.mxu0 %v454
  %2013 = vmatmul.mubr.bf16.gmra.mrb[0].mxu0 %v453
  %v2014 = vpop.f32.mrb[0].mxu0
  %v2015 = vadd.f32 %v376, %v2014
  %v2016 = vpop.f32.mrb[0].mxu0
  %v2017 = vadd.f32 %v376, %v2016
  %v2018 = vpop.f32.mrb[0].mxu0
  %v2019 = vadd.f32 %v381, %v2018
  %v2020 = vpop.f32.mrb[0].mxu0
  %v2021 = vadd.f32 %v381, %v2020
  %2022 = vmatprep.mubr.bf16.mxu0 %v460
  %2023 = vmatmul.mubr.bf16.gmra.mrb[0].mxu0 %v459
  %v2024 = vpop.f32.mrb[0].mxu0
  %v2025 = vadd.f32 %v386, %v2024
  %v2026 = vpop.f32.mrb[0].mxu0
  %v2027 = vadd.f32 %v386, %v2026
  %v2028 = vpop.f32.mrb[0].mxu0
  %v2029 = vadd.f32 %v391, %v2028
  %v2030 = vpop.f32.mrb[0].mxu0
  %v2031 = vadd.f32 %v391, %v2030
  %2032 = vdwg.mxu0
  %2033 = vmatprep.subr.bf16.mxu0 %v1484
  %2034 = vmatpush1.bf16.msra.mxu0 %v1483
  %2035 = vmatprep.subr.bf16.mxu0 %v1491
  %2036 = vmatpush1.bf16.msra.mxu0 %v1490
  %2037 = vmatprep.subr.bf16.mxu0 %v1498
  %2038 = vmatpush1.bf16.msra.mxu0 %v1497
  %2039 = vmatprep.subr.bf16.mxu0 %v1505
  %2040 = vmatpush1.bf16.msra.mxu0 %v1504
  %2041 = vmatprep.subr.bf16.mxu0 %v1512
  %2042 = vmatpush1.bf16.msra.mxu0 %v1511
  %2043 = vmatprep.subr.bf16.mxu0 %v1519
  %2044 = vmatpush1.bf16.msra.mxu0 %v1518
  %2045 = vmatprep.subr.bf16.mxu0 %v1526
  %2046 = vmatpush1.bf16.msra.mxu0 %v1525
  %2047 = vmatprep.subr.bf16.mxu0 %v1533
  %2048 = vmatpush1.bf16.msra.mxu0 %v1532
  %2049 = vmatprep.subr.bf16.mxu0 %v1540
  %2050 = vmatpush1.bf16.msra.mxu0 %v1539
  %2051 = vmatprep.subr.bf16.mxu0 %v1547
  %2052 = vmatpush1.bf16.msra.mxu0 %v1546
  %2053 = vmatprep.subr.bf16.mxu0 %v1554
  %2054 = vmatpush1.bf16.msra.mxu0 %v1553
  %2055 = vmatprep.subr.bf16.mxu0 %v1561
  %2056 = vmatpush1.bf16.msra.mxu0 %v1560
  %2057 = vmatprep.subr.bf16.mxu0 %v1568
  %2058 = vmatpush1.bf16.msra.mxu0 %v1567
  %2059 = vmatprep.subr.bf16.mxu0 %v1575
  %2060 = vmatpush1.bf16.msra.mxu0 %v1574
  %2061 = vmatprep.subr.bf16.mxu0 %v1582
  %2062 = vmatpush1.bf16.msra.mxu0 %v1581
  %2063 = vmatprep.subr.bf16.mxu0 %v1589
  %2064 = vmatpush1.bf16.msra.mxu0 %v1588
  %2065 = vmatprep.mubr.bf16.mxu0 %v450
  %2066 = vmatmul.mubr.bf16.gmra.mrb[0].mxu0 %v449
  %v2067 = vpop.f32.mrb[0].mxu0
  %v2068 = vadd.f32 %v2005, %v2067
  %v2069 = vpop.f32.mrb[0].mxu0
  %v2070 = vadd.f32 %v2007, %v2069
  %v2071 = vpop.f32.mrb[0].mxu0
  %v2072 = vadd.f32 %v2009, %v2071
  %v2073 = vpop.f32.mrb[0].mxu0
  %v2074 = vadd.f32 %v2011, %v2073
  %2075 = vmatprep.mubr.bf16.mxu0 %v456
  %2076 = vmatmul.mubr.bf16.gmra.mrb[0].mxu0 %v455
  %v2077 = vpop.f32.mrb[0].mxu0
  %v2078 = vadd.f32 %v2015, %v2077
  %v2079 = vpop.f32.mrb[0].mxu0
  %v2080 = vadd.f32 %v2017, %v2079
  %v2081 = vpop.f32.mrb[0].mxu0
  %v2082 = vadd.f32 %v2019, %v2081
  %v2083 = vpop.f32.mrb[0].mxu0
  %v2084 = vadd.f32 %v2021, %v2083
  %2085 = vmatprep.mubr.bf16.mxu0 %v462
  %2086 = vmatmul.mubr.bf16.gmra.mrb[0].mxu0 %v461
  %v2087 = vpop.f32.mrb[0].mxu0
  %v2088 = vadd.f32 %v2025, %v2087
  %v2089 = vpop.f32.mrb[0].mxu0
  %v2090 = vadd.f32 %v2027, %v2089
  %v2091 = vpop.f32.mrb[0].mxu0
  %v2092 = vadd.f32 %v2029, %v2091
  %v2093 = vpop.f32.mrb[0].mxu0
  %v2094 = vadd.f32 %v2031, %v2093
  %2095 = vdwg.mxu0
  %2096 = vmatprep.subr.bf16.mxu0 %v1596
  %2097 = vmatpush1.bf16.msra.mxu0 %v1595
  %2098 = vmatprep.subr.bf16.mxu0 %v1603
  %2099 = vmatpush1.bf16.msra.mxu0 %v1602
  %2100 = vmatprep.subr.bf16.mxu0 %v1610
  %2101 = vmatpush1.bf16.msra.mxu0 %v1609
  %2102 = vmatprep.subr.bf16.mxu0 %v1617
  %2103 = vmatpush1.bf16.msra.mxu0 %v1616
  %2104 = vmatprep.subr.bf16.mxu0 %v1624
  %2105 = vmatpush1.bf16.msra.mxu0 %v1623
  %2106 = vmatprep.subr.bf16.mxu0 %v1631
  %2107 = vmatpush1.bf16.msra.mxu0 %v1630
  %2108 = vmatprep.subr.bf16.mxu0 %v1638
  %2109 = vmatpush1.bf16.msra.mxu0 %v1637
  %2110 = vmatprep.subr.bf16.mxu0 %v1645
  %2111 = vmatpush1.bf16.msra.mxu0 %v1644
  %2112 = vmatprep.subr.bf16.mxu0 %v1953
  %2113 = vmatpush1.bf16.msra.mxu0 %v1950
  %2114 = vmatprep.subr.bf16.mxu0 0
  %2115 = vmatpush1.bf16.msra.mxu0 0
  %2116 = vmatprep.subr.bf16.mxu0 0
  %2117 = vmatpush1.bf16.msra.mxu0 0
  %2118 = vmatprep.subr.bf16.mxu0 0
  %2119 = vmatpush1.bf16.msra.mxu0 0
  %2120 = vmatprep.subr.bf16.mxu0 0
  %2121 = vmatpush1.bf16.msra.mxu0 0
  %2122 = vmatprep.subr.bf16.mxu0 0
  %2123 = vmatpush1.bf16.msra.mxu0 0
  %2124 = vmatprep.subr.bf16.mxu0 0
  %2125 = vmatpush1.bf16.msra.mxu0 0
  %2126 = vmatprep.subr.bf16.mxu0 0
  %2127 = vmatpush1.bf16.msra.mxu0 0
  %2128 = vmatprep.mubr.bf16.mxu0 %v1940
  %2129 = vmatmul.mubr.bf16.gmra.mrb[0].mxu0 %v451
  %v2130 = vpop.f32.mrb[0].mxu0
  %v2131 = vadd.f32 %v2068, %v2130
  %v2132 = vpop.f32.mrb[0].mxu0
  %v2133 = vadd.f32 %v2070, %v2132
  %v2134 = vpop.f32.mrb[0].mxu0
  %v2135 = vadd.f32 %v2072, %v2134
  %v2136 = vpop.f32.mrb[0].mxu0
  %v2137 = vadd.f32 %v2074, %v2136
  %2138 = vmatprep.mubr.bf16.mxu0 %v1943
  %2139 = vmatmul.mubr.bf16.gmra.mrb[0].mxu0 %v457
  %v2140 = vpop.f32.mrb[0].mxu0
  %v2141 = vadd.f32 %v2078, %v2140
  %v2142 = vpop.f32.mrb[0].mxu0
  %v2143 = vadd.f32 %v2080, %v2142
  %v2144 = vpop.f32.mrb[0].mxu0
  %v2145 = vadd.f32 %v2082, %v2144
  %v2146 = vpop.f32.mrb[0].mxu0
  %v2147 = vadd.f32 %v2084, %v2146
  %2148 = vmatprep.mubr.bf16.mxu0 %v1946
  %2149 = vmatmul.mubr.bf16.gmra.mrb[0].mxu0 %v463
  %v2150 = vpop.f32.mrb[0].mxu0
  %v2151 = vadd.f32 %v2088, %v2150
  %v2152 = vpop.f32.mrb[0].mxu0
  %v2153 = vadd.f32 %v2090, %v2152
  %v2154 = vpop.f32.mrb[0].mxu0
  %v2155 = vadd.f32 %v2092, %v2154
  %v2156 = vpop.f32.mrb[0].mxu0
  %v2157 = vadd.f32 %v2094, %v2156
  %2158 = vdwg.mxu0
  %2159 = vmatprep.subr.bf16.mxu0 %v1374
  %2160 = vmatpush1.bf16.msra.mxu0 %v1373
  %2161 = vmatprep.subr.bf16.mxu0 %v1381
  %2162 = vmatpush1.bf16.msra.mxu0 %v1380
  %2163 = vmatprep.subr.bf16.mxu0 %v1388
  %2164 = vmatpush1.bf16.msra.mxu0 %v1387
  %2165 = vmatprep.subr.bf16.mxu0 %v1395
  %2166 = vmatpush1.bf16.msra.mxu0 %v1394
  %2167 = vmatprep.subr.bf16.mxu0 %v1402
  %2168 = vmatpush1.bf16.msra.mxu0 %v1401
  %2169 = vmatprep.subr.bf16.mxu0 %v1409
  %2170 = vmatpush1.bf16.msra.mxu0 %v1408
  %2171 = vmatprep.subr.bf16.mxu0 %v1416
  %2172 = vmatpush1.bf16.msra.mxu0 %v1415
  %2173 = vmatprep.subr.bf16.mxu0 %v1423
  %2174 = vmatpush1.bf16.msra.mxu0 %v1422
  %2175 = vmatprep.subr.bf16.mxu0 %v1430
  %2176 = vmatpush1.bf16.msra.mxu0 %v1429
  %2177 = vmatprep.subr.bf16.mxu0 %v1437
  %2178 = vmatpush1.bf16.msra.mxu0 %v1436
  %2179 = vmatprep.subr.bf16.mxu0 %v1444
  %2180 = vmatpush1.bf16.msra.mxu0 %v1443
  %2181 = vmatprep.subr.bf16.mxu0 %v1451
  %2182 = vmatpush1.bf16.msra.mxu0 %v1450
  %2183 = vmatprep.subr.bf16.mxu0 %v1458
  %2184 = vmatpush1.bf16.msra.mxu0 %v1457
  %2185 = vmatprep.subr.bf16.mxu0 %v1465
  %2186 = vmatpush1.bf16.msra.mxu0 %v1464
  %2187 = vmatprep.subr.bf16.mxu0 %v1472
  %2188 = vmatpush1.bf16.msra.mxu0 %v1471
  %2189 = vmatprep.subr.bf16.mxu0 %v1479
  %2190 = vmatpush1.bf16.msra.mxu0 %v1478
  %2191 = vmatprep.mubr.bf16.mxu0 %v448
  %2192 = vmatmul.mubr.bf16.gmra.mrb[0].mxu0 %v447
  %v2193 = vpop.f32.mrb[0].mxu0
  %v2194 = vadd.f32 %v366, %v2193
  %v2195 = vpop.f32.mrb[0].mxu0
  %v2196 = vadd.f32 %v366, %v2195
  %v2197 = vpop.f32.mrb[0].mxu0
  %v2198 = vadd.f32 %v371, %v2197
  %v2199 = vpop.f32.mrb[0].mxu0
  %v2200 = vadd.f32 %v371, %v2199
  %2201 = vmatprep.mubr.bf16.mxu0 %v454
  %2202 = vmatmul.mubr.bf16.gmra.mrb[0].mxu0 %v453
  %v2203 = vpop.f32.mrb[0].mxu0
  %v2204 = vadd.f32 %v376, %v2203
  %v2205 = vpop.f32.mrb[0].mxu0
  %v2206 = vadd.f32 %v376, %v2205
  %v2207 = vpop.f32.mrb[0].mxu0
  %v2208 = vadd.f32 %v381, %v2207
  %v2209 = vpop.f32.mrb[0].mxu0
  %v2210 = vadd.f32 %v381, %v2209
  %2211 = vmatprep.mubr.bf16.mxu0 %v460
  %2212 = vmatmul.mubr.bf16.gmra.mrb[0].mxu0 %v459
  %v2213 = vpop.f32.mrb[0].mxu0
  %v2214 = vadd.f32 %v386, %v2213
  %v2215 = vpop.f32.mrb[0].mxu0
  %v2216 = vadd.f32 %v386, %v2215
  %v2217 = vpop.f32.mrb[0].mxu0
  %v2218 = vadd.f32 %v391, %v2217
  %v2219 = vpop.f32.mrb[0].mxu0
  %v2220 = vadd.f32 %v391, %v2219
  %2221 = vdwg.mxu0
  %2222 = vmatprep.subr.bf16.mxu0 %v1486
  %2223 = vmatpush1.bf16.msra.mxu0 %v1485
  %2224 = vmatprep.subr.bf16.mxu0 %v1493
  %2225 = vmatpush1.bf16.msra.mxu0 %v1492
  %2226 = vmatprep.subr.bf16.mxu0 %v1500
  %2227 = vmatpush1.bf16.msra.mxu0 %v1499
  %2228 = vmatprep.subr.bf16.mxu0 %v1507
  %2229 = vmatpush1.bf16.msra.mxu0 %v1506
  %2230 = vmatprep.subr.bf16.mxu0 %v1514
  %2231 = vmatpush1.bf16.msra.mxu0 %v1513
  %2232 = vmatprep.subr.bf16.mxu0 %v1521
  %2233 = vmatpush1.bf16.msra.mxu0 %v1520
  %2234 = vmatprep.subr.bf16.mxu0 %v1528
  %2235 = vmatpush1.bf16.msra.mxu0 %v1527
  %2236 = vmatprep.subr.bf16.mxu0 %v1535
  %2237 = vmatpush1.bf16.msra.mxu0 %v1534
  %2238 = vmatprep.subr.bf16.mxu0 %v1542
  %2239 = vmatpush1.bf16.msra.mxu0 %v1541
  %2240 = vmatprep.subr.bf16.mxu0 %v1549
  %2241 = vmatpush1.bf16.msra.mxu0 %v1548
  %2242 = vmatprep.subr.bf16.mxu0 %v1556
  %2243 = vmatpush1.bf16.msra.mxu0 %v1555
  %2244 = vmatprep.subr.bf16.mxu0 %v1563
  %2245 = vmatpush1.bf16.msra.mxu0 %v1562
  %2246 = vmatprep.subr.bf16.mxu0 %v1570
  %2247 = vmatpush1.bf16.msra.mxu0 %v1569
  %2248 = vmatprep.subr.bf16.mxu0 %v1577
  %2249 = vmatpush1.bf16.msra.mxu0 %v1576
  %2250 = vmatprep.subr.bf16.mxu0 %v1584
  %2251 = vmatpush1.bf16.msra.mxu0 %v1583
  %2252 = vmatprep.subr.bf16.mxu0 %v1591
  %2253 = vmatpush1.bf16.msra.mxu0 %v1590
  %2254 = vmatprep.mubr.bf16.mxu0 %v450
  %2255 = vmatmul.mubr.bf16.gmra.mrb[0].mxu0 %v449
  %v2256 = vpop.f32.mrb[0].mxu0
  %v2257 = vadd.f32 %v2194, %v2256
  %v2258 = vpop.f32.mrb[0].mxu0
  %v2259 = vadd.f32 %v2196, %v2258
  %v2260 = vpop.f32.mrb[0].mxu0
  %v2261 = vadd.f32 %v2198, %v2260
  %v2262 = vpop.f32.mrb[0].mxu0
  %v2263 = vadd.f32 %v2200, %v2262
  %2264 = vmatprep.mubr.bf16.mxu0 %v456
  %2265 = vmatmul.mubr.bf16.gmra.mrb[0].mxu0 %v455
  %v2266 = vpop.f32.mrb[0].mxu0
  %v2267 = vadd.f32 %v2204, %v2266
  %v2268 = vpop.f32.mrb[0].mxu0
  %v2269 = vadd.f32 %v2206, %v2268
  %v2270 = vpop.f32.mrb[0].mxu0
  %v2271 = vadd.f32 %v2208, %v2270
  %v2272 = vpop.f32.mrb[0].mxu0
  %v2273 = vadd.f32 %v2210, %v2272
  %2274 = vmatprep.mubr.bf16.mxu0 %v462
  %2275 = vmatmul.mubr.bf16.gmra.mrb[0].mxu0 %v461
  %v2276 = vpop.f32.mrb[0].mxu0
  %v2277 = vadd.f32 %v2214, %v2276
  %v2278 = vpop.f32.mrb[0].mxu0
  %v2279 = vadd.f32 %v2216, %v2278
  %v2280 = vpop.f32.mrb[0].mxu0
  %v2281 = vadd.f32 %v2218, %v2280
  %v2282 = vpop.f32.mrb[0].mxu0
  %v2283 = vadd.f32 %v2220, %v2282
  %2284 = vdwg.mxu0
  %2285 = vmatprep.subr.bf16.mxu0 %v1598
  %2286 = vmatpush1.bf16.msra.mxu0 %v1597
  %2287 = vmatprep.subr.bf16.mxu0 %v1605
  %2288 = vmatpush1.bf16.msra.mxu0 %v1604
  %2289 = vmatprep.subr.bf16.mxu0 %v1612
  %2290 = vmatpush1.bf16.msra.mxu0 %v1611
  %2291 = vmatprep.subr.bf16.mxu0 %v1619
  %2292 = vmatpush1.bf16.msra.mxu0 %v1618
  %2293 = vmatprep.subr.bf16.mxu0 %v1626
  %2294 = vmatpush1.bf16.msra.mxu0 %v1625
  %2295 = vmatprep.subr.bf16.mxu0 %v1633
  %2296 = vmatpush1.bf16.msra.mxu0 %v1632
  %2297 = vmatprep.subr.bf16.mxu0 %v1640
  %2298 = vmatpush1.bf16.msra.mxu0 %v1639
  %2299 = vmatprep.subr.bf16.mxu0 %v1647
  %2300 = vmatpush1.bf16.msra.mxu0 %v1646
  %2301 = vmatprep.subr.bf16.mxu0 %v1959
  %2302 = vmatpush1.bf16.msra.mxu0 %v1956
  %2303 = vmatprep.subr.bf16.mxu0 0
  %2304 = vmatpush1.bf16.msra.mxu0 0
  %2305 = vmatprep.subr.bf16.mxu0 0
  %2306 = vmatpush1.bf16.msra.mxu0 0
  %2307 = vmatprep.subr.bf16.mxu0 0
  %2308 = vmatpush1.bf16.msra.mxu0 0
  %2309 = vmatprep.subr.bf16.mxu0 0
  %2310 = vmatpush1.bf16.msra.mxu0 0
  %2311 = vmatprep.subr.bf16.mxu0 0
  %2312 = vmatpush1.bf16.msra.mxu0 0
  %2313 = vmatprep.subr.bf16.mxu0 0
  %2314 = vmatpush1.bf16.msra.mxu0 0
  %2315 = vmatprep.subr.bf16.mxu0 0
  %2316 = vmatpush1.bf16.msra.mxu0 0
  %2317 = vmatprep.mubr.bf16.mxu0 %v1940
  %2318 = vmatmul.mubr.bf16.gmra.mrb[0].mxu0 %v451
  %v2319 = vpop.f32.mrb[0].mxu0
  %v2320 = vadd.f32 %v2257, %v2319
  %v2321 = vpop.f32.mrb[0].mxu0
  %v2322 = vadd.f32 %v2259, %v2321
  %v2323 = vpop.f32.mrb[0].mxu0
  %v2324 = vadd.f32 %v2261, %v2323
  %v2325 = vpop.f32.mrb[0].mxu0
  %v2326 = vadd.f32 %v2263, %v2325
  %2327 = vmatprep.mubr.bf16.mxu0 %v1943
  %2328 = vmatmul.mubr.bf16.gmra.mrb[0].mxu0 %v457
  %v2329 = vpop.f32.mrb[0].mxu0
  %v2330 = vadd.f32 %v2267, %v2329
  %v2331 = vpop.f32.mrb[0].mxu0
  %v2332 = vadd.f32 %v2269, %v2331
  %v2333 = vpop.f32.mrb[0].mxu0
  %v2334 = vadd.f32 %v2271, %v2333
  %v2335 = vpop.f32.mrb[0].mxu0
  %v2336 = vadd.f32 %v2273, %v2335
  %2337 = vmatprep.mubr.bf16.mxu0 %v1946
  %2338 = vmatmul.mubr.bf16.gmra.mrb[0].mxu0 %v463
  %v2339 = vpop.f32.mrb[0].mxu0
  %v2340 = vadd.f32 %v2277, %v2339
  %v2341 = vpop.f32.mrb[0].mxu0
  %v2342 = vadd.f32 %v2279, %v2341
  %v2343 = vpop.f32.mrb[0].mxu0
  %v2344 = vadd.f32 %v2281, %v2343
  %v2345 = vpop.f32.mrb[0].mxu0
  %v2346 = vadd.f32 %v2283, %v2345
  %2347 = vdwg.mxu0
  %2348 = vmatprep.subr.bf16.mxu0 %v1376
  %2349 = vmatpush1.bf16.msra.mxu0 %v1375
  %2350 = vmatprep.subr.bf16.mxu0 %v1383
  %2351 = vmatpush1.bf16.msra.mxu0 %v1382
  %2352 = vmatprep.subr.bf16.mxu0 %v1390
  %2353 = vmatpush1.bf16.msra.mxu0 %v1389
  %2354 = vmatprep.subr.bf16.mxu0 %v1397
  %2355 = vmatpush1.bf16.msra.mxu0 %v1396
  %2356 = vmatprep.subr.bf16.mxu0 %v1404
  %2357 = vmatpush1.bf16.msra.mxu0 %v1403
  %2358 = vmatprep.subr.bf16.mxu0 %v1411
  %2359 = vmatpush1.bf16.msra.mxu0 %v1410
  %2360 = vmatprep.subr.bf16.mxu0 %v1418
  %2361 = vmatpush1.bf16.msra.mxu0 %v1417
  %2362 = vmatprep.subr.bf16.mxu0 %v1425
  %2363 = vmatpush1.bf16.msra.mxu0 %v1424
  %2364 = vmatprep.subr.bf16.mxu0 %v1432
  %2365 = vmatpush1.bf16.msra.mxu0 %v1431
  %2366 = vmatprep.subr.bf16.mxu0 %v1439
  %2367 = vmatpush1.bf16.msra.mxu0 %v1438
  %2368 = vmatprep.subr.bf16.mxu0 %v1446
  %2369 = vmatpush1.bf16.msra.mxu0 %v1445
  %2370 = vmatprep.subr.bf16.mxu0 %v1453
  %2371 = vmatpush1.bf16.msra.mxu0 %v1452
  %2372 = vmatprep.subr.bf16.mxu0 %v1460
  %2373 = vmatpush1.bf16.msra.mxu0 %v1459
  %2374 = vmatprep.subr.bf16.mxu0 %v1467
  %2375 = vmatpush1.bf16.msra.mxu0 %v1466
  %2376 = vmatprep.subr.bf16.mxu0 %v1474
  %2377 = vmatpush1.bf16.msra.mxu0 %v1473
  %2378 = vmatprep.subr.bf16.mxu0 %v1481
  %2379 = vmatpush1.bf16.msra.mxu0 %v1480
  %2380 = vmatprep.mubr.bf16.mxu0 %v448
  %2381 = vmatmul.mubr.bf16.gmra.mrb[0].mxu0 %v447
  %v2382 = vpop.f32.mrb[0].mxu0
  %v2383 = vadd.f32 %v366, %v2382
  %v2384 = vpop.f32.mrb[0].mxu0
  %v2385 = vadd.f32 %v366, %v2384
  %v2386 = vpop.f32.mrb[0].mxu0
  %v2387 = vadd.f32 %v371, %v2386
  %v2388 = vpop.f32.mrb[0].mxu0
  %v2389 = vadd.f32 %v371, %v2388
  %2390 = vmatprep.mubr.bf16.mxu0 %v454
  %2391 = vmatmul.mubr.bf16.gmra.mrb[0].mxu0 %v453
  %v2392 = vpop.f32.mrb[0].mxu0
  %v2393 = vadd.f32 %v376, %v2392
  %v2394 = vpop.f32.mrb[0].mxu0
  %v2395 = vadd.f32 %v376, %v2394
  %v2396 = vpop.f32.mrb[0].mxu0
  %v2397 = vadd.f32 %v381, %v2396
  %v2398 = vpop.f32.mrb[0].mxu0
  %v2399 = vadd.f32 %v381, %v2398
  %2400 = vmatprep.mubr.bf16.mxu0 %v460
  %2401 = vmatmul.mubr.bf16.gmra.mrb[0].mxu0 %v459
  %v2402 = vpop.f32.mrb[0].mxu0
  %v2403 = vadd.f32 %v386, %v2402
  %v2404 = vpop.f32.mrb[0].mxu0
  %v2405 = vadd.f32 %v386, %v2404
  %v2406 = vpop.f32.mrb[0].mxu0
  %v2407 = vadd.f32 %v391, %v2406
  %v2408 = vpop.f32.mrb[0].mxu0
  %v2409 = vadd.f32 %v391, %v2408
  %2410 = vdwg.mxu0
  %2411 = vmatprep.subr.bf16.mxu0 %v1488
  %2412 = vmatpush1.bf16.msra.mxu0 %v1487
  %2413 = vmatprep.subr.bf16.mxu0 %v1495
  %2414 = vmatpush1.bf16.msra.mxu0 %v1494
  %2415 = vmatprep.subr.bf16.mxu0 %v1502
  %2416 = vmatpush1.bf16.msra.mxu0 %v1501
  %2417 = vmatprep.subr.bf16.mxu0 %v1509
  %2418 = vmatpush1.bf16.msra.mxu0 %v1508
  %2419 = vmatprep.subr.bf16.mxu0 %v1516
  %2420 = vmatpush1.bf16.msra.mxu0 %v1515
  %2421 = vmatprep.subr.bf16.mxu0 %v1523
  %2422 = vmatpush1.bf16.msra.mxu0 %v1522
  %2423 = vmatprep.subr.bf16.mxu0 %v1530
  %2424 = vmatpush1.bf16.msra.mxu0 %v1529
  %2425 = vmatprep.subr.bf16.mxu0 %v1537
  %2426 = vmatpush1.bf16.msra.mxu0 %v1536
  %2427 = vmatprep.subr.bf16.mxu0 %v1544
  %2428 = vmatpush1.bf16.msra.mxu0 %v1543
  %2429 = vmatprep.subr.bf16.mxu0 %v1551
  %2430 = vmatpush1.bf16.msra.mxu0 %v1550
  %2431 = vmatprep.subr.bf16.mxu0 %v1558
  %2432 = vmatpush1.bf16.msra.mxu0 %v1557
  %2433 = vmatprep.subr.bf16.mxu0 %v1565
  %2434 = vmatpush1.bf16.msra.mxu0 %v1564
  %2435 = vmatprep.subr.bf16.mxu0 %v1572
  %2436 = vmatpush1.bf16.msra.mxu0 %v1571
  %2437 = vmatprep.subr.bf16.mxu0 %v1579
  %2438 = vmatpush1.bf16.msra.mxu0 %v1578
  %2439 = vmatprep.subr.bf16.mxu0 %v1586
  %2440 = vmatpush1.bf16.msra.mxu0 %v1585
  %2441 = vmatprep.subr.bf16.mxu0 %v1593
  %2442 = vmatpush1.bf16.msra.mxu0 %v1592
  %2443 = vmatprep.mubr.bf16.mxu0 %v450
  %2444 = vmatmul.mubr.bf16.gmra.mrb[0].mxu0 %v449
  %v2445 = vpop.f32.mrb[0].mxu0
  %v2446 = vadd.f32 %v2383, %v2445
  %v2447 = vpop.f32.mrb[0].mxu0
  %v2448 = vadd.f32 %v2385, %v2447
  %v2449 = vpop.f32.mrb[0].mxu0
  %v2450 = vadd.f32 %v2387, %v2449
  %v2451 = vpop.f32.mrb[0].mxu0
  %v2452 = vadd.f32 %v2389, %v2451
  %2453 = vmatprep.mubr.bf16.mxu0 %v456
  %2454 = vmatmul.mubr.bf16.gmra.mrb[0].mxu0 %v455
  %v2455 = vpop.f32.mrb[0].mxu0
  %v2456 = vadd.f32 %v2393, %v2455
  %v2457 = vpop.f32.mrb[0].mxu0
  %v2458 = vadd.f32 %v2395, %v2457
  %v2459 = vpop.f32.mrb[0].mxu0
  %v2460 = vadd.f32 %v2397, %v2459
  %v2461 = vpop.f32.mrb[0].mxu0
  %v2462 = vadd.f32 %v2399, %v2461
  %2463 = vmatprep.mubr.bf16.mxu0 %v462
  %2464 = vmatmul.mubr.bf16.gmra.mrb[0].mxu0 %v461
  %v2465 = vpop.f32.mrb[0].mxu0
  %v2466 = vadd.f32 %v2403, %v2465
  %v2467 = vpop.f32.mrb[0].mxu0
  %v2468 = vadd.f32 %v2405, %v2467
  %v2469 = vpop.f32.mrb[0].mxu0
  %v2470 = vadd.f32 %v2407, %v2469
  %v2471 = vpop.f32.mrb[0].mxu0
  %v2472 = vadd.f32 %v2409, %v2471
  %2473 = vdwg.mxu0
  %2474 = vmatprep.subr.bf16.mxu0 %v1600
  %2475 = vmatpush1.bf16.msra.mxu0 %v1599
  %2476 = vmatprep.subr.bf16.mxu0 %v1607
  %2477 = vmatpush1.bf16.msra.mxu0 %v1606
  %2478 = vmatprep.subr.bf16.mxu0 %v1614
  %2479 = vmatpush1.bf16.msra.mxu0 %v1613
  %2480 = vmatprep.subr.bf16.mxu0 %v1621
  %2481 = vmatpush1.bf16.msra.mxu0 %v1620
  %2482 = vmatprep.subr.bf16.mxu0 %v1628
  %2483 = vmatpush1.bf16.msra.mxu0 %v1627
  %2484 = vmatprep.subr.bf16.mxu0 %v1635
  %2485 = vmatpush1.bf16.msra.mxu0 %v1634
  %2486 = vmatprep.subr.bf16.mxu0 %v1642
  %2487 = vmatpush1.bf16.msra.mxu0 %v1641
  %2488 = vmatprep.subr.bf16.mxu0 %v1649
  %2489 = vmatpush1.bf16.msra.mxu0 %v1648
  %2490 = vmatprep.subr.bf16.mxu0 %v1965
  %2491 = vmatpush1.bf16.msra.mxu0 %v1962
  %2492 = vmatprep.subr.bf16.mxu0 0
  %2493 = vmatpush1.bf16.msra.mxu0 0
  %2494 = vmatprep.subr.bf16.mxu0 0
  %2495 = vmatpush1.bf16.msra.mxu0 0
  %2496 = vmatprep.subr.bf16.mxu0 0
  %2497 = vmatpush1.bf16.msra.mxu0 0
  %2498 = vmatprep.subr.bf16.mxu0 0
  %2499 = vmatpush1.bf16.msra.mxu0 0
  %2500 = vmatprep.subr.bf16.mxu0 0
  %2501 = vmatpush1.bf16.msra.mxu0 0
  %2502 = vmatprep.subr.bf16.mxu0 0
  %2503 = vmatpush1.bf16.msra.mxu0 0
  %2504 = vmatprep.subr.bf16.mxu0 0
  %2505 = vmatpush1.bf16.msra.mxu0 0
  %2506 = vmatprep.mubr.bf16.mxu0 %v1940
  %2507 = vmatmul.mubr.bf16.gmra.mrb[0].mxu0 %v451
  %v2508 = vpop.f32.mrb[0].mxu0
  %v2509 = vadd.f32 %v2446, %v2508
  %v2510 = vpop.f32.mrb[0].mxu0
  %v2511 = vadd.f32 %v2448, %v2510
  %v2512 = vpop.f32.mrb[0].mxu0
  %v2513 = vadd.f32 %v2450, %v2512
  %v2514 = vpop.f32.mrb[0].mxu0
  %v2515 = vadd.f32 %v2452, %v2514
  %2516 = vmatprep.mubr.bf16.mxu0 %v1943
  %2517 = vmatmul.mubr.bf16.gmra.mrb[0].mxu0 %v457
  %v2518 = vpop.f32.mrb[0].mxu0
  %v2519 = vadd.f32 %v2456, %v2518
  %v2520 = vpop.f32.mrb[0].mxu0
  %v2521 = vadd.f32 %v2458, %v2520
  %v2522 = vpop.f32.mrb[0].mxu0
  %v2523 = vadd.f32 %v2460, %v2522
  %v2524 = vpop.f32.mrb[0].mxu0
  %v2525 = vadd.f32 %v2462, %v2524
  %2526 = vmatprep.mubr.bf16.mxu0 %v1946
  %2527 = vmatmul.mubr.bf16.gmra.mrb[0].mxu0 %v463
  %v2528 = vpop.f32.mrb[0].mxu0
  %v2529 = vadd.f32 %v2466, %v2528
  %v2530 = vpop.f32.mrb[0].mxu0
  %v2531 = vadd.f32 %v2468, %v2530
  %v2532 = vpop.f32.mrb[0].mxu0
  %v2533 = vadd.f32 %v2470, %v2532
  %v2534 = vpop.f32.mrb[0].mxu0
  %v2535 = vadd.f32 %v2472, %v2534
  %2536 = vdwg.mxu0
  %2537 = vmatprep.subr.bf16.mxu0 0
  %2538 = vmatpush1.bf16.msra.mxu0 %v1377
  %2539 = vmatprep.subr.bf16.mxu0 0
  %2540 = vmatpush1.bf16.msra.mxu0 %v1384
  %2541 = vmatprep.subr.bf16.mxu0 0
  %2542 = vmatpush1.bf16.msra.mxu0 %v1391
  %2543 = vmatprep.subr.bf16.mxu0 0
  %2544 = vmatpush1.bf16.msra.mxu0 %v1398
  %2545 = vmatprep.subr.bf16.mxu0 0
  %2546 = vmatpush1.bf16.msra.mxu0 %v1405
  %2547 = vmatprep.subr.bf16.mxu0 0
  %2548 = vmatpush1.bf16.msra.mxu0 %v1412
  %2549 = vmatprep.subr.bf16.mxu0 0
  %2550 = vmatpush1.bf16.msra.mxu0 %v1419
  %2551 = vmatprep.subr.bf16.mxu0 0
  %2552 = vmatpush1.bf16.msra.mxu0 %v1426
  %2553 = vmatprep.subr.bf16.mxu0 0
  %2554 = vmatpush1.bf16.msra.mxu0 %v1433
  %2555 = vmatprep.subr.bf16.mxu0 0
  %2556 = vmatpush1.bf16.msra.mxu0 %v1440
  %2557 = vmatprep.subr.bf16.mxu0 0
  %2558 = vmatpush1.bf16.msra.mxu0 %v1447
  %2559 = vmatprep.subr.bf16.mxu0 0
  %2560 = vmatpush1.bf16.msra.mxu0 %v1454
  %2561 = vmatprep.subr.bf16.mxu0 0
  %2562 = vmatpush1.bf16.msra.mxu0 %v1461
  %2563 = vmatprep.subr.bf16.mxu0 0
  %2564 = vmatpush1.bf16.msra.mxu0 %v1468
  %2565 = vmatprep.subr.bf16.mxu0 0
  %2566 = vmatpush1.bf16.msra.mxu0 %v1475
  %2567 = vmatprep.subr.bf16.mxu0 0
  %2568 = vmatpush1.bf16.msra.mxu0 %v1482
  %2569 = vmatprep.mubr.bf16.mxu0 %v448
  %2570 = vmatmul.mubr.bf16.gmra.mrb[0].mxu0 %v447
  %v2571 = vpop.f32.mrb[0].mxu0
  %v2572 = vadd.f32 %v366, %v2571
  %v2573 = vpop.f32.mrb[0].mxu0
  %v2574 = vpop.f32.mrb[0].mxu0
  %v2575 = vadd.f32 %v371, %v2574
  %v2576 = vpop.f32.mrb[0].mxu0
  %2577 = vmatprep.mubr.bf16.mxu0 %v454
  %2578 = vmatmul.mubr.bf16.gmra.mrb[0].mxu0 %v453
  %v2579 = vpop.f32.mrb[0].mxu0
  %v2580 = vadd.f32 %v376, %v2579
  %v2581 = vpop.f32.mrb[0].mxu0
  %v2582 = vpop.f32.mrb[0].mxu0
  %v2583 = vadd.f32 %v381, %v2582
  %v2584 = vpop.f32.mrb[0].mxu0
  %2585 = vmatprep.mubr.bf16.mxu0 %v460
  %2586 = vmatmul.mubr.bf16.gmra.mrb[0].mxu0 %v459
  %v2587 = vpop.f32.mrb[0].mxu0
  %v2588 = vadd.f32 %v386, %v2587
  %v2589 = vpop.f32.mrb[0].mxu0
  %v2590 = vpop.f32.mrb[0].mxu0
  %v2591 = vadd.f32 %v391, %v2590
  %v2592 = vpop.f32.mrb[0].mxu0
  %2593 = vdwg.mxu0
  %2594 = vmatprep.subr.bf16.mxu0 0
  %2595 = vmatpush1.bf16.msra.mxu0 %v1489
  %2596 = vmatprep.subr.bf16.mxu0 0
  %2597 = vmatpush1.bf16.msra.mxu0 %v1496
  %2598 = vmatprep.subr.bf16.mxu0 0
  %2599 = vmatpush1.bf16.msra.mxu0 %v1503
  %2600 = vmatprep.subr.bf16.mxu0 0
  %2601 = vmatpush1.bf16.msra.mxu0 %v1510
  %2602 = vmatprep.subr.bf16.mxu0 0
  %2603 = vmatpush1.bf16.msra.mxu0 %v1517
  %2604 = vmatprep.subr.bf16.mxu0 0
  %2605 = vmatpush1.bf16.msra.mxu0 %v1524
  %2606 = vmatprep.subr.bf16.mxu0 0
  %2607 = vmatpush1.bf16.msra.mxu0 %v1531
  %2608 = vmatprep.subr.bf16.mxu0 0
  %2609 = vmatpush1.bf16.msra.mxu0 %v1538
  %2610 = vmatprep.subr.bf16.mxu0 0
  %2611 = vmatpush1.bf16.msra.mxu0 %v1545
  %2612 = vmatprep.subr.bf16.mxu0 0
  %2613 = vmatpush1.bf16.msra.mxu0 %v1552
  %2614 = vmatprep.subr.bf16.mxu0 0
  %2615 = vmatpush1.bf16.msra.mxu0 %v1559
  %2616 = vmatprep.subr.bf16.mxu0 0
  %2617 = vmatpush1.bf16.msra.mxu0 %v1566
  %2618 = vmatprep.subr.bf16.mxu0 0
  %2619 = vmatpush1.bf16.msra.mxu0 %v1573
  %2620 = vmatprep.subr.bf16.mxu0 0
  %2621 = vmatpush1.bf16.msra.mxu0 %v1580
  %2622 = vmatprep.subr.bf16.mxu0 0
  %2623 = vmatpush1.bf16.msra.mxu0 %v1587
  %2624 = vmatprep.subr.bf16.mxu0 0
  %2625 = vmatpush1.bf16.msra.mxu0 %v1594
  %2626 = vmatprep.mubr.bf16.mxu0 %v450
  %2627 = vmatmul.mubr.bf16.gmra.mrb[0].mxu0 %v449
  %v2628 = vpop.f32.mrb[0].mxu0
  %v2629 = vadd.f32 %v2572, %v2628
  %v2630 = vpop.f32.mrb[0].mxu0
  %v2631 = vpop.f32.mrb[0].mxu0
  %v2632 = vadd.f32 %v2575, %v2631
  %v2633 = vpop.f32.mrb[0].mxu0
  %2634 = vmatprep.mubr.bf16.mxu0 %v456
  %2635 = vmatmul.mubr.bf16.gmra.mrb[0].mxu0 %v455
  %v2636 = vpop.f32.mrb[0].mxu0
  %v2637 = vadd.f32 %v2580, %v2636
  %v2638 = vpop.f32.mrb[0].mxu0
  %v2639 = vpop.f32.mrb[0].mxu0
  %v2640 = vadd.f32 %v2583, %v2639
  %v2641 = vpop.f32.mrb[0].mxu0
  %2642 = vmatprep.mubr.bf16.mxu0 %v462
  %2643 = vmatmul.mubr.bf16.gmra.mrb[0].mxu0 %v461
  %v2644 = vpop.f32.mrb[0].mxu0
  %v2645 = vadd.f32 %v2588, %v2644
  %v2646 = vpop.f32.mrb[0].mxu0
  %v2647 = vpop.f32.mrb[0].mxu0
  %v2648 = vadd.f32 %v2591, %v2647
  %v2649 = vpop.f32.mrb[0].mxu0
  %2650 = vdwg.mxu0
  %2651 = vmatprep.subr.bf16.mxu0 0
  %2652 = vmatpush1.bf16.msra.mxu0 %v1601
  %2653 = vmatprep.subr.bf16.mxu0 0
  %2654 = vmatpush1.bf16.msra.mxu0 %v1608
  %2655 = vmatprep.subr.bf16.mxu0 0
  %2656 = vmatpush1.bf16.msra.mxu0 %v1615
  %2657 = vmatprep.subr.bf16.mxu0 0
  %2658 = vmatpush1.bf16.msra.mxu0 %v1622
  %2659 = vmatprep.subr.bf16.mxu0 0
  %2660 = vmatpush1.bf16.msra.mxu0 %v1629
  %2661 = vmatprep.subr.bf16.mxu0 0
  %2662 = vmatpush1.bf16.msra.mxu0 %v1636
  %2663 = vmatprep.subr.bf16.mxu0 0
  %2664 = vmatpush1.bf16.msra.mxu0 %v1643
  %2665 = vmatprep.subr.bf16.mxu0 0
  %2666 = vmatpush1.bf16.msra.mxu0 %v1650
  %2667 = vmatprep.subr.bf16.mxu0 0
  %2668 = vmatpush1.bf16.msra.mxu0 %v1968
  %2669 = vmatprep.subr.bf16.mxu0 0
  %2670 = vmatpush1.bf16.msra.mxu0 0
  %2671 = vmatprep.subr.bf16.mxu0 0
  %2672 = vmatpush1.bf16.msra.mxu0 0
  %2673 = vmatprep.subr.bf16.mxu0 0
  %2674 = vmatpush1.bf16.msra.mxu0 0
  %2675 = vmatprep.subr.bf16.mxu0 0
  %2676 = vmatpush1.bf16.msra.mxu0 0
  %2677 = vmatprep.subr.bf16.mxu0 0
  %2678 = vmatpush1.bf16.msra.mxu0 0
  %2679 = vmatprep.subr.bf16.mxu0 0
  %2680 = vmatpush1.bf16.msra.mxu0 0
  %2681 = vmatprep.subr.bf16.mxu0 0
  %2682 = vmatpush1.bf16.msra.mxu0 0
  %2683 = vmatprep.mubr.bf16.mxu0 %v1940
  %2684 = vmatmul.mubr.bf16.gmra.mrb[0].mxu0 %v451
  %v2685 = vpop.f32.mrb[0].mxu0
  %v2686 = vadd.f32 %v2629, %v2685
  %v2687 = vpop.f32.mrb[0].mxu0
  %v2688 = vpop.f32.mrb[0].mxu0
  %v2689 = vadd.f32 %v2632, %v2688
  %v2690 = vpop.f32.mrb[0].mxu0
  %2691 = vmatprep.mubr.bf16.mxu0 %v1943
  %2692 = vmatmul.mubr.bf16.gmra.mrb[0].mxu0 %v457
  %v2693 = vpop.f32.mrb[0].mxu0
  %v2694 = vadd.f32 %v2637, %v2693
  %v2695 = vpop.f32.mrb[0].mxu0
  %v2696 = vpop.f32.mrb[0].mxu0
  %v2697 = vadd.f32 %v2640, %v2696
  %v2698 = vpop.f32.mrb[0].mxu0
  %2699 = vmatprep.mubr.bf16.mxu0 %v1946
  %2700 = vmatmul.mubr.bf16.gmra.mrb[0].mxu0 %v463
  %v2701 = vpop.f32.mrb[0].mxu0
  %v2702 = vadd.f32 %v2645, %v2701
  %v2703 = vpop.f32.mrb[0].mxu0
  %v2704 = vpop.f32.mrb[0].mxu0
  %v2705 = vadd.f32 %v2648, %v2704
  %v2706 = vpop.f32.mrb[0].mxu0
  %2707 = vdwg.mxu0
  %v2708 = vmax.f32 %v2131, 0.0
  %v2709 = vmax.f32 %v2133, 0.0
  %v2710 = vmax.f32 %v2320, 0.0
  %v2711 = vmax.f32 %v2322, 0.0
  %v2712 = vmax.f32 %v2509, 0.0
  %v2713 = vmax.f32 %v2511, 0.0
  %v2714 = vmax.f32 %v2686, 0.0
  %v2715 = vmax.f32 %v2135, 0.0
  %v2716 = vmax.f32 %v2137, 0.0
  %v2717 = vmax.f32 %v2324, 0.0
  %v2718 = vmax.f32 %v2326, 0.0
  %v2719 = vmax.f32 %v2513, 0.0
  %v2720 = vmax.f32 %v2515, 0.0
  %v2721 = vmax.f32 %v2689, 0.0
  %v2722 = vmax.f32 %v2141, 0.0
  %v2723 = vmax.f32 %v2143, 0.0
  %v2724 = vmax.f32 %v2330, 0.0
  %v2725 = vmax.f32 %v2332, 0.0
  %v2726 = vmax.f32 %v2519, 0.0
  %v2727 = vmax.f32 %v2521, 0.0
  %v2728 = vmax.f32 %v2694, 0.0
  %v2729 = vmax.f32 %v2145, 0.0
  %v2730 = vmax.f32 %v2147, 0.0
  %v2731 = vmax.f32 %v2334, 0.0
  %v2732 = vmax.f32 %v2336, 0.0
  %v2733 = vmax.f32 %v2523, 0.0
  %v2734 = vmax.f32 %v2525, 0.0
  %v2735 = vmax.f32 %v2697, 0.0
  %v2736 = vmax.f32 %v2151, 0.0
  %v2737 = vmax.f32 %v2153, 0.0
  %v2738 = vmax.f32 %v2340, 0.0
  %v2739 = vmax.f32 %v2342, 0.0
  %v2740 = vmax.f32 %v2529, 0.0
  %v2741 = vmax.f32 %v2531, 0.0
  %v2742 = vmax.f32 %v2702, 0.0
  %v2743 = vmax.f32 %v2155, 0.0
  %v2744 = vmax.f32 %v2157, 0.0
  %v2745 = vmax.f32 %v2344, 0.0
  %v2746 = vmax.f32 %v2346, 0.0
  %v2747 = vmax.f32 %v2533, 0.0
  %v2748 = vmax.f32 %v2535, 0.0
  %v2749 = vmax.f32 %v2705, 0.0
  %v2750 = vpack.c.bf16 %v2715, %v2708
  %v2751 = vpack.c.bf16 %v2716, %v2709
  %v2752 = vpack.c.bf16 %v2717, %v2710
  %v2753 = vpack.c.bf16 %v2718, %v2711
  %v2754 = vpack.c.bf16 %v2719, %v2712
  %v2755 = vpack.c.bf16 %v2720, %v2713
  %v2756 = vpack.c.bf16 %v2721, %v2714
  %v2757 = vpack.c.bf16 %v2729, %v2722
  %v2758 = vpack.c.bf16 %v2730, %v2723
  %v2759 = vpack.c.bf16 %v2731, %v2724
  %v2760 = vpack.c.bf16 %v2732, %v2725
  %v2761 = vpack.c.bf16 %v2733, %v2726
  %v2762 = vpack.c.bf16 %v2734, %v2727
  %v2763 = vpack.c.bf16 %v2735, %v2728
  %v2764 = vpack.c.bf16 %v2743, %v2736
  %v2765 = vpack.c.bf16 %v2744, %v2737
  %v2766 = vpack.c.bf16 %v2745, %v2738
  %v2767 = vpack.c.bf16 %v2746, %v2739
  %v2768 = vpack.c.bf16 %v2747, %v2740
  %v2769 = vpack.c.bf16 %v2748, %v2741
  %v2770 = vpack.c.bf16 %v2749, %v2742
  %v2792 = vunpack.c.l.b16 %v2750
  %v2793 = vunpack.c.l.b16 %v2751
  %v2794 = vunpack.c.l.b16 %v2752
  %v2795 = vunpack.c.l.b16 %v2753
  %v2796 = vunpack.c.l.b16 %v2754
  %v2797 = vunpack.c.l.b16 %v2755
  %v2798 = vunpack.c.l.b16 %v2756
  %v2799 = vunpack.c.h.b16 %v2750
  %v2800 = vunpack.c.h.b16 %v2751
  %v2801 = vunpack.c.h.b16 %v2752
  %v2802 = vunpack.c.h.b16 %v2753
  %v2803 = vunpack.c.h.b16 %v2754
  %v2804 = vunpack.c.h.b16 %v2755
  %v2805 = vunpack.c.h.b16 %v2756
  %v2806 = vunpack.c.l.b16 %v2757
  %v2807 = vunpack.c.l.b16 %v2758
  %v2808 = vunpack.c.l.b16 %v2759
  %v2809 = vunpack.c.l.b16 %v2760
  %v2810 = vunpack.c.l.b16 %v2761
  %v2811 = vunpack.c.l.b16 %v2762
  %v2812 = vunpack.c.l.b16 %v2763
  %v2813 = vunpack.c.h.b16 %v2757
  %v2814 = vunpack.c.h.b16 %v2758
  %v2815 = vunpack.c.h.b16 %v2759
  %v2816 = vunpack.c.h.b16 %v2760
  %v2817 = vunpack.c.h.b16 %v2761
  %v2818 = vunpack.c.h.b16 %v2762
  %v2819 = vunpack.c.h.b16 %v2763
  %v2820 = vunpack.c.l.b16 %v2764
  %v2821 = vunpack.c.l.b16 %v2765
  %v2822 = vunpack.c.l.b16 %v2766
  %v2823 = vunpack.c.l.b16 %v2767
  %v2824 = vunpack.c.l.b16 %v2768
  %v2825 = vunpack.c.l.b16 %v2769
  %v2826 = vunpack.c.l.b16 %v2770
  %v2827 = vunpack.c.h.b16 %v2764
  %v2828 = vunpack.c.h.b16 %v2765
  %v2829 = vunpack.c.h.b16 %v2766
  %v2830 = vunpack.c.h.b16 %v2767
  %v2831 = vunpack.c.h.b16 %v2768
  %v2832 = vunpack.c.h.b16 %v2769
  %v2833 = vunpack.c.h.b16 %v2770
  %v2834 = vpack.c.b16 %v2793, %v2792
  %v2835 = vpack.c.b16 %v2795, %v2794
  %v2836 = vpack.c.b16 %v2797, %v2796
  %v2837 = vpack.c.b16 %v2798, %v2798
  %v2838 = vpack.c.b16 %v2800, %v2799
  %v2839 = vpack.c.b16 %v2802, %v2801
  %v2840 = vpack.c.b16 %v2804, %v2803
  %v2841 = vpack.c.b16 %v2805, %v2805
  %v2842 = vpack.c.b16 %v2807, %v2806
  %v2843 = vpack.c.b16 %v2809, %v2808
  %v2844 = vpack.c.b16 %v2811, %v2810
  %v2845 = vpack.c.b16 %v2812, %v2812
  %v2846 = vpack.c.b16 %v2814, %v2813
  %v2847 = vpack.c.b16 %v2816, %v2815
  %v2848 = vpack.c.b16 %v2818, %v2817
  %v2849 = vpack.c.b16 %v2819, %v2819
  %v2850 = vpack.c.b16 %v2821, %v2820
  %v2851 = vpack.c.b16 %v2823, %v2822
  %v2852 = vpack.c.b16 %v2825, %v2824
  %v2853 = vpack.c.b16 %v2826, %v2826
  %v2854 = vpack.c.b16 %v2828, %v2827
  %v2855 = vpack.c.b16 %v2830, %v2829
  %v2856 = vpack.c.b16 %v2832, %v2831
  %v2857 = vpack.c.b16 %v2833, %v2833
  %2882 = vst [vmem:[%s3] sm:$0xff] %v2834
  %2883 = vst [vmem:[%s3 + $0x8] sm:$0xff] %v2835
  %2884 = vst [vmem:[%s3 + $0x10] sm:$0xff] %v2836
  %vm2885 = vcmask 781312
  %2886 = vst.msk [vmem:[%s3 + $0x18] sm:$0xf] %vm2885, %v2837
  %2887 = vst [vmem:[%s3 + $0x1c] sm:$0xff] %v2838
  %2888 = vst [vmem:[%s3 + $0x24] sm:$0xff] %v2839
  %2889 = vst [vmem:[%s3 + $0x2c] sm:$0xff] %v2840
  %2890 = vst.msk [vmem:[%s3 + $0x34] sm:$0xf] %vm2885, %v2841
  %2891 = vst [vmem:[%s3 + $0x38] sm:$0xff] %v2842
  %2892 = vst [vmem:[%s3 + $0x40] sm:$0xff] %v2843
  %2893 = vst [vmem:[%s3 + $0x48] sm:$0xff] %v2844
  %2894 = vst.msk [vmem:[%s3 + $0x50] sm:$0xf] %vm2885, %v2845
  %2895 = vst [vmem:[%s3 + $0x54] sm:$0xff] %v2846
  %2896 = vst [vmem:[%s3 + $0x5c] sm:$0xff] %v2847
  %2897 = vst [vmem:[%s3 + $0x64] sm:$0xff] %v2848
  %2898 = vst.msk [vmem:[%s3 + $0x6c] sm:$0xf] %vm2885, %v2849
  %2899 = vst [vmem:[%s3 + $0x70] sm:$0xff] %v2850
  %2900 = vst [vmem:[%s3 + $0x78] sm:$0xff] %v2851
  %2901 = vst [vmem:[%s3 + $0x80] sm:$0xff] %v2852
  %2902 = vst.msk [vmem:[%s3 + $0x88] sm:$0xf] %vm2885, %v2853
  %2903 = vst [vmem:[%s3 + $0x8c] sm:$0xff] %v2854
  %2904 = vst [vmem:[%s3 + $0x94] sm:$0xff] %v2855
  %2905 = vst [vmem:[%s3 + $0x9c] sm:$0xff] %v2856
  %2906 = vst.msk [vmem:[%s3 + $0xa4] sm:$0xf] %vm2885, %v2857
  // Predicated region
  $region14: #{net_forward.7} parent=0 // pred_check
    _
  $region15: #{net_forward.7} parent=0 // pred_check_branch
    %2908 = sbr.rel (0) target = $region17
  $region16: #{net_forward.7} parent=0 // pred_region
    _
  $region17: #{net_forward.7} parent=0 // pred_fallthru
    _
  // Predicated region
  $region18: #{net_forward.7} parent=0 // pred_check
    _
  $region19: #{net_forward.7} parent=0 // pred_check_branch
    %2910 = sbr.rel (0) target = $region21
  $region20: #{net_forward.7} parent=0 // pred_region
    _
  $region21: #{net_forward.7} parent=0 // pred_fallthru
    _

// kernel: net_forward.8
$region0: #{net_forward.8}
  #allocation0 [shape = 'u32[]', space=smem, size = 0x4, offset = 0x4, fixed_abs, tag = 'smem constant byte address 0x4 - core index']
  #allocation1 [shape = 'u32[144,128]{1,0:T(1,128)}', space=vmem, size = 0x12000, scoped, tag = 'internal scratch']
  %s0 = inlined_call_operand.vmem [shape: bf16[64,1296], index: 0, kind: input, shape index: {}]
  %s1 = inlined_call_operand.vmem [shape: bf16[1296,32], index: 1, kind: input, shape index: {}]
  %s2 = inlined_call_operand.vmem [shape: f32[64,1], index: 2, kind: input, shape index: {}]
  %s3 = inlined_call_operand.vmem [shape: bf16[64,32], index: 3, kind: output, shape index: {}]
  %s4 = sld [smem:[#allocation0]]
  $region22: #{net_forward.8} parent=0
    _
  %s6 = ssub.s32 1, %s4
  %s7 = scalar_select 0, %s6, %s4
  // Predicated region
  $region2: #{net_forward.8} parent=0 // pred_check
    _
  $region3: #{net_forward.8} parent=0 // pred_check_branch
    %9 = sbr.rel (0) target = $region5
  $region4: #{net_forward.8} parent=0 // pred_region
    _
  $region5: #{net_forward.8} parent=0 // pred_fallthru
    _
  // Predicated region
  $region6: #{net_forward.8} parent=0 // pred_check
    _
  $region7: #{net_forward.8} parent=0 // pred_check_branch
    %11 = sbr.rel (0) target = $region9
  $region8: #{net_forward.8} parent=0 // pred_region
    _
  $region9: #{net_forward.8} parent=0 // pred_fallthru
    _
  // Predicated region
  $region10: #{net_forward.8} parent=0 // pred_check
    _
  $region11: #{net_forward.8} parent=0 // pred_check_branch
    %13 = sbr.rel (0) target = $region13
  $region12: #{net_forward.8} parent=0 // pred_region
    _
  $region13: #{net_forward.8} parent=0 // pred_fallthru
    _
  %v15 = vld [vmem:[%s0] sm:$0xff]
  %v16 = vld [vmem:[%s0 + $0x8] sm:$0xff]
  %v17 = vld [vmem:[%s0 + $0x10] sm:$0xff]
  %v18 = vld [vmem:[%s0 + $0x18] sm:$0xff]
  %v19 = vld [vmem:[%s0 + $0x20] sm:$0xff]
  %v20 = vld [vmem:[%s0 + $0x28] sm:$0xf]
  %v21 = vld [vmem:[%s0 + $0x2c] sm:$0xff]
  %v22 = vld [vmem:[%s0 + $0x34] sm:$0xff]
  %v23 = vld [vmem:[%s0 + $0x3c] sm:$0xff]
  %v24 = vld [vmem:[%s0 + $0x44] sm:$0xff]
  %v25 = vld [vmem:[%s0 + $0x4c] sm:$0xff]
  %v26 = vld [vmem:[%s0 + $0x54] sm:$0xf]
  %v27 = vld [vmem:[%s0 + $0x58] sm:$0xff]
  %v28 = vld [vmem:[%s0 + $0x60] sm:$0xff]
  %v29 = vld [vmem:[%s0 + $0x68] sm:$0xff]
  %v30 = vld [vmem:[%s0 + $0x70] sm:$0xff]
  %v31 = vld [vmem:[%s0 + $0x78] sm:$0xff]
  %v32 = vld [vmem:[%s0 + $0x80] sm:$0xf]
  %v33 = vld [vmem:[%s0 + $0x84] sm:$0xff]
  %v34 = vld [vmem:[%s0 + $0x8c] sm:$0xff]
  %v35 = vld [vmem:[%s0 + $0x94] sm:$0xff]
  %v36 = vld [vmem:[%s0 + $0x9c] sm:$0xff]
  %v37 = vld [vmem:[%s0 + $0xa4] sm:$0xff]
  %v38 = vld [vmem:[%s0 + $0xac] sm:$0xf]
  %v39 = vld [vmem:[%s0 + $0xb0] sm:$0xff]
  %v40 = vld [vmem:[%s0 + $0xb8] sm:$0xff]
  %v41 = vld [vmem:[%s0 + $0xc0] sm:$0xff]
  %v42 = vld [vmem:[%s0 + $0xc8] sm:$0xff]
  %v43 = vld [vmem:[%s0 + $0xd0] sm:$0xff]
  %v44 = vld [vmem:[%s0 + $0xd8] sm:$0xf]
  %v45 = vld [vmem:[%s0 + $0xdc] sm:$0xff]
  %v46 = vld [vmem:[%s0 + $0xe4] sm:$0xff]
  %v47 = vld [vmem:[%s0 + $0xec] sm:$0xff]
  %v48 = vld [vmem:[%s0 + $0xf4] sm:$0xff]
  %v49 = vld [vmem:[%s0 + $0xfc] sm:$0xff]
  %v50 = vld [vmem:[%s0 + $0x104] sm:$0xf]
  %v51 = vld [vmem:[%s0 + $0x108] sm:$0xff]
  %v52 = vld [vmem:[%s0 + $0x110] sm:$0xff]
  %v53 = vld [vmem:[%s0 + $0x118] sm:$0xff]
  %v54 = vld [vmem:[%s0 + $0x120] sm:$0xff]
  %v55 = vld [vmem:[%s0 + $0x128] sm:$0xff]
  %v56 = vld [vmem:[%s0 + $0x130] sm:$0xf]
  %v57 = vld [vmem:[%s0 + $0x134] sm:$0xff]
  %v58 = vld [vmem:[%s0 + $0x13c] sm:$0xff]
  %v59 = vld [vmem:[%s0 + $0x144] sm:$0xff]
  %v60 = vld [vmem:[%s0 + $0x14c] sm:$0xff]
  %v61 = vld [vmem:[%s0 + $0x154] sm:$0xff]
  %v62 = vld [vmem:[%s0 + $0x15c] sm:$0xf]
  %v63 = vld [vmem:[%s1] sm:$0xf]
  %v64 = vld [vmem:[%s1 + $0x4] sm:$0xf]
  %v65 = vld [vmem:[%s1 + $0x8] sm:$0xf]
  %v66 = vld [vmem:[%s1 + $0xc] sm:$0xf]
  %v67 = vld [vmem:[%s1 + $0x10] sm:$0xf]
  %v68 = vld [vmem:[%s1 + $0x14] sm:$0xf]
  %v69 = vld [vmem:[%s1 + $0x18] sm:$0xf]
  %v70 = vld [vmem:[%s1 + $0x1c] sm:$0xf]
  %v71 = vld [vmem:[%s1 + $0x20] sm:$0xf]
  %v72 = vld [vmem:[%s1 + $0x24] sm:$0xf]
  %v73 = vld [vmem:[%s1 + $0x28] sm:$0xf]
  %v74 = vld [vmem:[%s1 + $0x2c] sm:$0xf]
  %v75 = vld [vmem:[%s1 + $0x30] sm:$0xf]
  %v76 = vld [vmem:[%s1 + $0x34] sm:$0xf]
  %v77 = vld [vmem:[%s1 + $0x38] sm:$0xf]
  %v78 = vld [vmem:[%s1 + $0x3c] sm:$0xf]
  %v79 = vld [vmem:[%s1 + $0x40] sm:$0xf]
  %v80 = vld [vmem:[%s1 + $0x44] sm:$0xf]
  %v81 = vld [vmem:[%s1 + $0x48] sm:$0xf]
  %v82 = vld [vmem:[%s1 + $0x4c] sm:$0xf]
  %v83 = vld [vmem:[%s1 + $0x50] sm:$0xf]
  %v84 = vld [vmem:[%s1 + $0x54] sm:$0xf]
  %v85 = vld [vmem:[%s1 + $0x58] sm:$0xf]
  %v86 = vld [vmem:[%s1 + $0x5c] sm:$0xf]
  %v87 = vld [vmem:[%s1 + $0x60] sm:$0xf]
  %v88 = vld [vmem:[%s1 + $0x64] sm:$0xf]
  %v89 = vld [vmem:[%s1 + $0x68] sm:$0xf]
  %v90 = vld [vmem:[%s1 + $0x6c] sm:$0xf]
  %v91 = vld [vmem:[%s1 + $0x70] sm:$0xf]
  %v92 = vld [vmem:[%s1 + $0x74] sm:$0xf]
  %v93 = vld [vmem:[%s1 + $0x78] sm:$0xf]
  %v94 = vld [vmem:[%s1 + $0x7c] sm:$0xf]
  %v95 = vld [vmem:[%s1 + $0x80] sm:$0xf]
  %v96 = vld [vmem:[%s1 + $0x84] sm:$0xf]
  %v97 = vld [vmem:[%s1 + $0x88] sm:$0xf]
  %v98 = vld [vmem:[%s1 + $0x8c] sm:$0xf]
  %v99 = vld [vmem:[%s1 + $0x90] sm:$0xf]
  %v100 = vld [vmem:[%s1 + $0x94] sm:$0xf]
  %v101 = vld [vmem:[%s1 + $0x98] sm:$0xf]
  %v102 = vld [vmem:[%s1 + $0x9c] sm:$0xf]
  %v103 = vld [vmem:[%s1 + $0xa0] sm:$0xf]
  %v104 = vld [vmem:[%s1 + $0xa4] sm:$0xf]
  %v105 = vld [vmem:[%s1 + $0xa8] sm:$0xf]
  %v106 = vld [vmem:[%s1 + $0xac] sm:$0xf]
  %v107 = vld [vmem:[%s1 + $0xb0] sm:$0xf]
  %v108 = vld [vmem:[%s1 + $0xb4] sm:$0xf]
  %v109 = vld [vmem:[%s1 + $0xb8] sm:$0xf]
  %v110 = vld [vmem:[%s1 + $0xbc] sm:$0xf]
  %v111 = vld [vmem:[%s1 + $0xc0] sm:$0xf]
  %v112 = vld [vmem:[%s1 + $0xc4] sm:$0xf]
  %v113 = vld [vmem:[%s1 + $0xc8] sm:$0xf]
  %v114 = vld [vmem:[%s1 + $0xcc] sm:$0xf]
  %v115 = vld [vmem:[%s1 + $0xd0] sm:$0xf]
  %v116 = vld [vmem:[%s1 + $0xd4] sm:$0xf]
  %v117 = vld [vmem:[%s1 + $0xd8] sm:$0xf]
  %v118 = vld [vmem:[%s1 + $0xdc] sm:$0xf]
  %v119 = vld [vmem:[%s1 + $0xe0] sm:$0xf]
  %v120 = vld [vmem:[%s1 + $0xe4] sm:$0xf]
  %v121 = vld [vmem:[%s1 + $0xe8] sm:$0xf]
  %v122 = vld [vmem:[%s1 + $0xec] sm:$0xf]
  %v123 = vld [vmem:[%s1 + $0xf0] sm:$0xf]
  %v124 = vld [vmem:[%s1 + $0xf4] sm:$0xf]
  %v125 = vld [vmem:[%s1 + $0xf8] sm:$0xf]
  %v126 = vld [vmem:[%s1 + $0xfc] sm:$0xf]
  %v127 = vld [vmem:[%s1 + $0x100] sm:$0xf]
  %v128 = vld [vmem:[%s1 + $0x104] sm:$0xf]
  %v129 = vld [vmem:[%s1 + $0x108] sm:$0xf]
  %v130 = vld [vmem:[%s1 + $0x10c] sm:$0xf]
  %v131 = vld [vmem:[%s1 + $0x110] sm:$0xf]
  %v132 = vld [vmem:[%s1 + $0x114] sm:$0xf]
  %v133 = vld [vmem:[%s1 + $0x118] sm:$0xf]
  %v134 = vld [vmem:[%s1 + $0x11c] sm:$0xf]
  %v135 = vld [vmem:[%s1 + $0x120] sm:$0xf]
  %v136 = vld [vmem:[%s1 + $0x124] sm:$0xf]
  %v137 = vld [vmem:[%s1 + $0x128] sm:$0xf]
  %v138 = vld [vmem:[%s1 + $0x12c] sm:$0xf]
  %v139 = vld [vmem:[%s1 + $0x130] sm:$0xf]
  %v140 = vld [vmem:[%s1 + $0x134] sm:$0xf]
  %v141 = vld [vmem:[%s1 + $0x138] sm:$0xf]
  %v142 = vld [vmem:[%s1 + $0x13c] sm:$0xf]
  %v143 = vld [vmem:[%s1 + $0x140] sm:$0xf]
  %v144 = vld [vmem:[%s1 + $0x144] sm:$0xf]
  %v145 = vld [vmem:[%s1 + $0x148] sm:$0xf]
  %v146 = vld [vmem:[%s1 + $0x14c] sm:$0xf]
  %v147 = vld [vmem:[%s1 + $0x150] sm:$0xf]
  %v148 = vld [vmem:[%s1 + $0x154] sm:$0xf]
  %v149 = vld [vmem:[%s1 + $0x158] sm:$0xf]
  %v150 = vld [vmem:[%s1 + $0x15c] sm:$0xf]
  %v151 = vld [vmem:[%s1 + $0x160] sm:$0xf]
  %v152 = vld [vmem:[%s1 + $0x164] sm:$0xf]
  %v153 = vld [vmem:[%s1 + $0x168] sm:$0xf]
  %v154 = vld [vmem:[%s1 + $0x16c] sm:$0xf]
  %v155 = vld [vmem:[%s1 + $0x170] sm:$0xf]
  %v156 = vld [vmem:[%s1 + $0x174] sm:$0xf]
  %v157 = vld [vmem:[%s1 + $0x178] sm:$0xf]
  %v158 = vld [vmem:[%s1 + $0x17c] sm:$0xf]
  %v159 = vld [vmem:[%s1 + $0x180] sm:$0xf]
  %v160 = vld [vmem:[%s1 + $0x184] sm:$0xf]
  %v161 = vld [vmem:[%s1 + $0x188] sm:$0xf]
  %v162 = vld [vmem:[%s1 + $0x18c] sm:$0xf]
  %v163 = vld [vmem:[%s1 + $0x190] sm:$0xf]
  %v164 = vld [vmem:[%s1 + $0x194] sm:$0xf]
  %v165 = vld [vmem:[%s1 + $0x198] sm:$0xf]
  %v166 = vld [vmem:[%s1 + $0x19c] sm:$0xf]
  %v167 = vld [vmem:[%s1 + $0x1a0] sm:$0xf]
  %v168 = vld [vmem:[%s1 + $0x1a4] sm:$0xf]
  %v169 = vld [vmem:[%s1 + $0x1a8] sm:$0xf]
  %v170 = vld [vmem:[%s1 + $0x1ac] sm:$0xf]
  %v171 = vld [vmem:[%s1 + $0x1b0] sm:$0xf]
  %v172 = vld [vmem:[%s1 + $0x1b4] sm:$0xf]
  %v173 = vld [vmem:[%s1 + $0x1b8] sm:$0xf]
  %v174 = vld [vmem:[%s1 + $0x1bc] sm:$0xf]
  %v175 = vld [vmem:[%s1 + $0x1c0] sm:$0xf]
  %v176 = vld [vmem:[%s1 + $0x1c4] sm:$0xf]
  %v177 = vld [vmem:[%s1 + $0x1c8] sm:$0xf]
  %v178 = vld [vmem:[%s1 + $0x1cc] sm:$0xf]
  %v179 = vld [vmem:[%s1 + $0x1d0] sm:$0xf]
  %v180 = vld [vmem:[%s1 + $0x1d4] sm:$0xf]
  %v181 = vld [vmem:[%s1 + $0x1d8] sm:$0xf]
  %v182 = vld [vmem:[%s1 + $0x1dc] sm:$0xf]
  %v183 = vld [vmem:[%s1 + $0x1e0] sm:$0xf]
  %v184 = vld [vmem:[%s1 + $0x1e4] sm:$0xf]
  %v185 = vld [vmem:[%s1 + $0x1e8] sm:$0xf]
  %v186 = vld [vmem:[%s1 + $0x1ec] sm:$0xf]
  %v187 = vld [vmem:[%s1 + $0x1f0] sm:$0xf]
  %v188 = vld [vmem:[%s1 + $0x1f4] sm:$0xf]
  %v189 = vld [vmem:[%s1 + $0x1f8] sm:$0xf]
  %v190 = vld [vmem:[%s1 + $0x1fc] sm:$0xf]
  %v191 = vld [vmem:[%s1 + $0x200] sm:$0xf]
  %v192 = vld [vmem:[%s1 + $0x204] sm:$0xf]
  %v193 = vld [vmem:[%s1 + $0x208] sm:$0xf]
  %v194 = vld [vmem:[%s1 + $0x20c] sm:$0xf]
  %v195 = vld [vmem:[%s1 + $0x210] sm:$0xf]
  %v196 = vld [vmem:[%s1 + $0x214] sm:$0xf]
  %v197 = vld [vmem:[%s1 + $0x218] sm:$0xf]
  %v198 = vld [vmem:[%s1 + $0x21c] sm:$0xf]
  %v199 = vld [vmem:[%s1 + $0x220] sm:$0xf]
  %v200 = vld [vmem:[%s1 + $0x224] sm:$0xf]
  %v201 = vld [vmem:[%s1 + $0x228] sm:$0xf]
  %v202 = vld [vmem:[%s1 + $0x22c] sm:$0xf]
  %v203 = vld [vmem:[%s1 + $0x230] sm:$0xf]
  %v204 = vld [vmem:[%s1 + $0x234] sm:$0xf]
  %v205 = vld [vmem:[%s1 + $0x238] sm:$0xf]
  %v206 = vld [vmem:[%s1 + $0x23c] sm:$0xf]
  %v207 = vld [vmem:[%s1 + $0x240] sm:$0xf]
  %v208 = vld [vmem:[%s1 + $0x244] sm:$0xf]
  %v209 = vld [vmem:[%s1 + $0x248] sm:$0xf]
  %v210 = vld [vmem:[%s1 + $0x24c] sm:$0xf]
  %v211 = vld [vmem:[%s1 + $0x250] sm:$0xf]
  %v212 = vld [vmem:[%s1 + $0x254] sm:$0xf]
  %v213 = vld [vmem:[%s1 + $0x258] sm:$0xf]
  %v214 = vld [vmem:[%s1 + $0x25c] sm:$0xf]
  %v215 = vld [vmem:[%s1 + $0x260] sm:$0xf]
  %v216 = vld [vmem:[%s1 + $0x264] sm:$0xf]
  %v217 = vld [vmem:[%s1 + $0x268] sm:$0xf]
  %v218 = vld [vmem:[%s1 + $0x26c] sm:$0xf]
  %v219 = vld [vmem:[%s1 + $0x270] sm:$0xf]
  %v220 = vld [vmem:[%s1 + $0x274] sm:$0xf]
  %v221 = vld [vmem:[%s1 + $0x278] sm:$0xf]
  %v222 = vld [vmem:[%s1 + $0x27c] sm:$0xf]
  %v223 = vld [vmem:[%s1 + $0x280] sm:$0xf]
  %v224 = vld [vmem:[%s1 + $0x284] sm:$0xf]
  %v225 = vld [vmem:[%s2] sm:$0xff]
  %v226 = vld [vmem:[%s2 + $0x8] sm:$0xff]
  %v227 = vld [vmem:[%s2 + $0x10] sm:$0xff]
  %v228 = vld [vmem:[%s2 + $0x18] sm:$0xff]
  %v229 = vld [vmem:[%s2 + $0x20] sm:$0xff]
  %v230 = vld [vmem:[%s2 + $0x28] sm:$0xff]
  %v231 = vld [vmem:[%s2 + $0x30] sm:$0xff]
  %v232 = vld [vmem:[%s2 + $0x38] sm:$0xff]
  %234 = vset.pattern.permute.xlu0 0
  %235 = vperm.xlu0 %234, %v225
  %v236 = vpop.permute.xlu0 %235
  %239 = vset.pattern.permute.xlu0 0
  %240 = vperm.xlu0 %239, %v226
  %v241 = vpop.permute.xlu0 %240
  %244 = vset.pattern.permute.xlu0 0
  %245 = vperm.xlu0 %244, %v227
  %v246 = vpop.permute.xlu0 %245
  %249 = vset.pattern.permute.xlu0 0
  %250 = vperm.xlu0 %249, %v228
  %v251 = vpop.permute.xlu0 %250
  %254 = vset.pattern.permute.xlu0 0
  %255 = vperm.xlu0 %254, %v229
  %v256 = vpop.permute.xlu0 %255
  %259 = vset.pattern.permute.xlu0 0
  %260 = vperm.xlu0 %259, %v230
  %v261 = vpop.permute.xlu0 %260
  %264 = vset.pattern.permute.xlu0 0
  %265 = vperm.xlu0 %264, %v231
  %v266 = vpop.permute.xlu0 %265
  %269 = vset.pattern.permute.xlu0 0
  %270 = vperm.xlu0 %269, %v232
  %v271 = vpop.permute.xlu0 %270
  %v321 = vunpack.c.l.b16 %v15
  %v322 = vunpack.c.h.b16 %v15
  %v323 = vunpack.c.l.b16 %v16
  %v324 = vunpack.c.h.b16 %v16
  %v325 = vunpack.c.l.b16 %v17
  %v326 = vunpack.c.h.b16 %v17
  %v327 = vunpack.c.l.b16 %v18
  %v328 = vunpack.c.h.b16 %v18
  %v329 = vunpack.c.l.b16 %v19
  %v330 = vunpack.c.h.b16 %v19
  %v331 = vunpack.c.l.b16 %v20
  %v332 = vunpack.c.l.b16 %v21
  %v333 = vunpack.c.h.b16 %v21
  %v334 = vunpack.c.l.b16 %v22
  %v335 = vunpack.c.h.b16 %v22
  %v336 = vunpack.c.l.b16 %v23
  %v337 = vunpack.c.h.b16 %v23
  %v338 = vunpack.c.l.b16 %v24
  %v339 = vunpack.c.h.b16 %v24
  %v340 = vunpack.c.l.b16 %v25
  %v341 = vunpack.c.h.b16 %v25
  %v342 = vunpack.c.l.b16 %v26
  %v343 = vunpack.c.l.b16 %v27
  %v344 = vunpack.c.h.b16 %v27
  %v345 = vunpack.c.l.b16 %v28
  %v346 = vunpack.c.h.b16 %v28
  %v347 = vunpack.c.l.b16 %v29
  %v348 = vunpack.c.h.b16 %v29
  %v349 = vunpack.c.l.b16 %v30
  %v350 = vunpack.c.h.b16 %v30
  %v351 = vunpack.c.l.b16 %v31
  %v352 = vunpack.c.h.b16 %v31
  %v353 = vunpack.c.l.b16 %v32
  %v354 = vunpack.c.l.b16 %v33
  %v355 = vunpack.c.h.b16 %v33
  %v356 = vunpack.c.l.b16 %v34
  %v357 = vunpack.c.h.b16 %v34
  %v358 = vunpack.c.l.b16 %v35
  %v359 = vunpack.c.h.b16 %v35
  %v360 = vunpack.c.l.b16 %v36
  %v361 = vunpack.c.h.b16 %v36
  %v362 = vunpack.c.l.b16 %v37
  %v363 = vunpack.c.h.b16 %v37
  %v364 = vunpack.c.l.b16 %v38
  %v365 = vunpack.c.l.b16 %v39
  %v366 = vunpack.c.h.b16 %v39
  %v367 = vunpack.c.l.b16 %v40
  %v368 = vunpack.c.h.b16 %v40
  %v369 = vunpack.c.l.b16 %v41
  %v370 = vunpack.c.h.b16 %v41
  %v371 = vunpack.c.l.b16 %v42
  %v372 = vunpack.c.h.b16 %v42
  %v373 = vunpack.c.l.b16 %v43
  %v374 = vunpack.c.h.b16 %v43
  %v375 = vunpack.c.l.b16 %v44
  %v376 = vunpack.c.l.b16 %v45
  %v377 = vunpack.c.h.b16 %v45
  %v378 = vunpack.c.l.b16 %v46
  %v379 = vunpack.c.h.b16 %v46
  %v380 = vunpack.c.l.b16 %v47
  %v381 = vunpack.c.h.b16 %v47
  %v382 = vunpack.c.l.b16 %v48
  %v383 = vunpack.c.h.b16 %v48
  %v384 = vunpack.c.l.b16 %v49
  %v385 = vunpack.c.h.b16 %v49
  %v386 = vunpack.c.l.b16 %v50
  %v387 = vunpack.c.l.b16 %v51
  %v388 = vunpack.c.h.b16 %v51
  %v389 = vunpack.c.l.b16 %v52
  %v390 = vunpack.c.h.b16 %v52
  %v391 = vunpack.c.l.b16 %v53
  %v392 = vunpack.c.h.b16 %v53
  %v393 = vunpack.c.l.b16 %v54
  %v394 = vunpack.c.h.b16 %v54
  %v395 = vunpack.c.l.b16 %v55
  %v396 = vunpack.c.h.b16 %v55
  %v397 = vunpack.c.l.b16 %v56
  %v398 = vunpack.c.l.b16 %v57
  %v399 = vunpack.c.h.b16 %v57
  %v400 = vunpack.c.l.b16 %v58
  %v401 = vunpack.c.h.b16 %v58
  %v402 = vunpack.c.l.b16 %v59
  %v403 = vunpack.c.h.b16 %v59
  %v404 = vunpack.c.l.b16 %v60
  %v405 = vunpack.c.h.b16 %v60
  %v406 = vunpack.c.l.b16 %v61
  %v407 = vunpack.c.h.b16 %v61
  %v408 = vunpack.c.l.b16 %v62
  %v409 = vpack.c.b16 %v332, %v321
  %v410 = vpack.c.b16 %v333, %v322
  %v411 = vpack.c.b16 %v334, %v323
  %v412 = vpack.c.b16 %v335, %v324
  %v413 = vpack.c.b16 %v336, %v325
  %v414 = vpack.c.b16 %v337, %v326
  %v415 = vpack.c.b16 %v338, %v327
  %v416 = vpack.c.b16 %v339, %v328
  %v417 = vpack.c.b16 %v340, %v329
  %v418 = vpack.c.b16 %v341, %v330
  %v419 = vpack.c.b16 %v342, %v331
  %v420 = vpack.c.b16 %v354, %v343
  %v421 = vpack.c.b16 %v355, %v344
  %v422 = vpack.c.b16 %v356, %v345
  %v423 = vpack.c.b16 %v357, %v346
  %v424 = vpack.c.b16 %v358, %v347
  %v425 = vpack.c.b16 %v359, %v348
  %v426 = vpack.c.b16 %v360, %v349
  %v427 = vpack.c.b16 %v361, %v350
  %v428 = vpack.c.b16 %v362, %v351
  %v429 = vpack.c.b16 %v363, %v352
  %v430 = vpack.c.b16 %v364, %v353
  %v431 = vpack.c.b16 %v376, %v365
  %v432 = vpack.c.b16 %v377, %v366
  %v433 = vpack.c.b16 %v378, %v367
  %v434 = vpack.c.b16 %v379, %v368
  %v435 = vpack.c.b16 %v380, %v369
  %v436 = vpack.c.b16 %v381, %v370
  %v437 = vpack.c.b16 %v382, %v371
  %v438 = vpack.c.b16 %v383, %v372
  %v439 = vpack.c.b16 %v384, %v373
  %v440 = vpack.c.b16 %v385, %v374
  %v441 = vpack.c.b16 %v386, %v375
  %v442 = vpack.c.b16 %v398, %v387
  %v443 = vpack.c.b16 %v399, %v388
  %v444 = vpack.c.b16 %v400, %v389
  %v445 = vpack.c.b16 %v401, %v390
  %v446 = vpack.c.b16 %v402, %v391
  %v447 = vpack.c.b16 %v403, %v392
  %v448 = vpack.c.b16 %v404, %v393
  %v449 = vpack.c.b16 %v405, %v394
  %v450 = vpack.c.b16 %v406, %v395
  %v451 = vpack.c.b16 %v407, %v396
  %v452 = vpack.c.b16 %v408, %v397
  %v655 = vunpack.c.l.b16 %v63
  %v656 = vunpack.c.l.b16 %v64
  %v657 = vunpack.c.l.b16 %v65
  %v658 = vunpack.c.l.b16 %v66
  %v659 = vunpack.c.l.b16 %v67
  %v660 = vunpack.c.l.b16 %v68
  %v661 = vunpack.c.l.b16 %v69
  %v662 = vunpack.c.l.b16 %v70
  %v663 = vunpack.c.l.b16 %v71
  %v664 = vunpack.c.l.b16 %v72
  %v665 = vunpack.c.l.b16 %v73
  %v666 = vunpack.c.l.b16 %v74
  %v667 = vunpack.c.l.b16 %v75
  %v668 = vunpack.c.l.b16 %v76
  %v669 = vunpack.c.l.b16 %v77
  %v670 = vunpack.c.l.b16 %v78
  %v671 = vunpack.c.l.b16 %v79
  %v672 = vunpack.c.l.b16 %v80
  %v673 = vunpack.c.l.b16 %v81
  %v674 = vunpack.c.l.b16 %v82
  %v675 = vunpack.c.l.b16 %v83
  %v676 = vunpack.c.l.b16 %v84
  %v677 = vunpack.c.l.b16 %v85
  %v678 = vunpack.c.l.b16 %v86
  %v679 = vunpack.c.l.b16 %v87
  %v680 = vunpack.c.l.b16 %v88
  %v681 = vunpack.c.l.b16 %v89
  %v682 = vunpack.c.l.b16 %v90
  %v683 = vunpack.c.l.b16 %v91
  %v684 = vunpack.c.l.b16 %v92
  %v685 = vunpack.c.l.b16 %v93
  %v686 = vunpack.c.l.b16 %v94
  %v687 = vunpack.c.l.b16 %v95
  %v688 = vunpack.c.l.b16 %v96
  %v689 = vunpack.c.l.b16 %v97
  %v690 = vunpack.c.l.b16 %v98
  %v691 = vunpack.c.l.b16 %v99
  %v692 = vunpack.c.l.b16 %v100
  %v693 = vunpack.c.l.b16 %v101
  %v694 = vunpack.c.l.b16 %v102
  %v695 = vunpack.c.l.b16 %v103
  %v696 = vunpack.c.l.b16 %v104
  %v697 = vunpack.c.l.b16 %v105
  %v698 = vunpack.c.l.b16 %v106
  %v699 = vunpack.c.l.b16 %v107
  %v700 = vunpack.c.l.b16 %v108
  %v701 = vunpack.c.l.b16 %v109
  %v702 = vunpack.c.l.b16 %v110
  %v703 = vunpack.c.l.b16 %v111
  %v704 = vunpack.c.l.b16 %v112
  %v705 = vunpack.c.l.b16 %v113
  %v706 = vunpack.c.l.b16 %v114
  %v707 = vunpack.c.l.b16 %v115
  %v708 = vunpack.c.l.b16 %v116
  %v709 = vunpack.c.l.b16 %v117
  %v710 = vunpack.c.l.b16 %v118
  %v711 = vunpack.c.l.b16 %v119
  %v712 = vunpack.c.l.b16 %v120
  %v713 = vunpack.c.l.b16 %v121
  %v714 = vunpack.c.l.b16 %v122
  %v715 = vunpack.c.l.b16 %v123
  %v716 = vunpack.c.l.b16 %v124
  %v717 = vunpack.c.l.b16 %v125
  %v718 = vunpack.c.l.b16 %v126
  %v719 = vunpack.c.l.b16 %v127
  %v720 = vunpack.c.l.b16 %v128
  %v721 = vunpack.c.l.b16 %v129
  %v722 = vunpack.c.l.b16 %v130
  %v723 = vunpack.c.l.b16 %v131
  %v724 = vunpack.c.l.b16 %v132
  %v725 = vunpack.c.l.b16 %v133
  %v726 = vunpack.c.l.b16 %v134
  %v727 = vunpack.c.l.b16 %v135
  %v728 = vunpack.c.l.b16 %v136
  %v729 = vunpack.c.l.b16 %v137
  %v730 = vunpack.c.l.b16 %v138
  %v731 = vunpack.c.l.b16 %v139
  %v732 = vunpack.c.l.b16 %v140
  %v733 = vunpack.c.l.b16 %v141
  %v734 = vunpack.c.l.b16 %v142
  %v735 = vunpack.c.l.b16 %v143
  %v736 = vunpack.c.l.b16 %v144
  %v737 = vunpack.c.l.b16 %v145
  %v738 = vunpack.c.l.b16 %v146
  %v739 = vunpack.c.l.b16 %v147
  %v740 = vunpack.c.l.b16 %v148
  %v741 = vunpack.c.l.b16 %v149
  %v742 = vunpack.c.l.b16 %v150
  %v743 = vunpack.c.l.b16 %v151
  %v744 = vunpack.c.l.b16 %v152
  %v745 = vunpack.c.l.b16 %v153
  %v746 = vunpack.c.l.b16 %v154
  %v747 = vunpack.c.l.b16 %v155
  %v748 = vunpack.c.l.b16 %v156
  %v749 = vunpack.c.l.b16 %v157
  %v750 = vunpack.c.l.b16 %v158
  %v751 = vunpack.c.l.b16 %v159
  %v752 = vunpack.c.l.b16 %v160
  %v753 = vunpack.c.l.b16 %v161
  %v754 = vunpack.c.l.b16 %v162
  %v755 = vunpack.c.l.b16 %v163
  %v756 = vunpack.c.l.b16 %v164
  %v757 = vunpack.c.l.b16 %v165
  %v758 = vunpack.c.l.b16 %v166
  %v759 = vunpack.c.l.b16 %v167
  %v760 = vunpack.c.l.b16 %v168
  %v761 = vunpack.c.l.b16 %v169
  %v762 = vunpack.c.l.b16 %v170
  %v763 = vunpack.c.l.b16 %v171
  %v764 = vunpack.c.l.b16 %v172
  %v765 = vunpack.c.l.b16 %v173
  %v766 = vunpack.c.l.b16 %v174
  %v767 = vunpack.c.l.b16 %v175
  %v768 = vunpack.c.l.b16 %v176
  %v769 = vunpack.c.l.b16 %v177
  %v770 = vunpack.c.l.b16 %v178
  %v771 = vunpack.c.l.b16 %v179
  %v772 = vunpack.c.l.b16 %v180
  %v773 = vunpack.c.l.b16 %v181
  %v774 = vunpack.c.l.b16 %v182
  %v775 = vunpack.c.l.b16 %v183
  %v776 = vunpack.c.l.b16 %v184
  %v777 = vunpack.c.l.b16 %v185
  %v778 = vunpack.c.l.b16 %v186
  %v779 = vunpack.c.l.b16 %v187
  %v780 = vunpack.c.l.b16 %v188
  %v781 = vunpack.c.l.b16 %v189
  %v782 = vunpack.c.l.b16 %v190
  %v783 = vunpack.c.l.b16 %v191
  %v784 = vunpack.c.l.b16 %v192
  %v785 = vunpack.c.l.b16 %v193
  %v786 = vunpack.c.l.b16 %v194
  %v787 = vunpack.c.l.b16 %v195
  %v788 = vunpack.c.l.b16 %v196
  %v789 = vunpack.c.l.b16 %v197
  %v790 = vunpack.c.l.b16 %v198
  %v791 = vunpack.c.l.b16 %v199
  %v792 = vunpack.c.l.b16 %v200
  %v793 = vunpack.c.l.b16 %v201
  %v794 = vunpack.c.l.b16 %v202
  %v795 = vunpack.c.l.b16 %v203
  %v796 = vunpack.c.l.b16 %v204
  %v797 = vunpack.c.l.b16 %v205
  %v798 = vunpack.c.l.b16 %v206
  %v799 = vunpack.c.l.b16 %v207
  %v800 = vunpack.c.l.b16 %v208
  %v801 = vunpack.c.l.b16 %v209
  %v802 = vunpack.c.l.b16 %v210
  %v803 = vunpack.c.l.b16 %v211
  %v804 = vunpack.c.l.b16 %v212
  %v805 = vunpack.c.l.b16 %v213
  %v806 = vunpack.c.l.b16 %v214
  %v807 = vunpack.c.l.b16 %v215
  %v808 = vunpack.c.l.b16 %v216
  %v809 = vunpack.c.l.b16 %v217
  %v810 = vunpack.c.l.b16 %v218
  %v811 = vunpack.c.l.b16 %v219
  %v812 = vunpack.c.l.b16 %v220
  %v813 = vunpack.c.l.b16 %v221
  %v814 = vunpack.c.l.b16 %v222
  %v815 = vunpack.c.l.b16 %v223
  %v816 = vunpack.c.l.b16 %v224
  %v817 = vpack.c.b16 %v656, %v655
  %v818 = vpack.c.b16 %v658, %v657
  %v819 = vpack.c.b16 %v660, %v659
  %v820 = vpack.c.b16 %v662, %v661
  %v821 = vpack.c.b16 %v664, %v663
  %v822 = vpack.c.b16 %v666, %v665
  %v823 = vpack.c.b16 %v668, %v667
  %v824 = vpack.c.b16 %v670, %v669
  %v825 = vpack.c.b16 %v672, %v671
  %v826 = vpack.c.b16 %v674, %v673
  %v827 = vpack.c.b16 %v676, %v675
  %v828 = vpack.c.b16 %v678, %v677
  %v829 = vpack.c.b16 %v680, %v679
  %v830 = vpack.c.b16 %v682, %v681
  %v831 = vpack.c.b16 %v684, %v683
  %v832 = vpack.c.b16 %v686, %v685
  %v833 = vpack.c.b16 %v688, %v687
  %v834 = vpack.c.b16 %v690, %v689
  %v835 = vpack.c.b16 %v692, %v691
  %v836 = vpack.c.b16 %v694, %v693
  %v837 = vpack.c.b16 %v696, %v695
  %v838 = vpack.c.b16 %v698, %v697
  %v839 = vpack.c.b16 %v700, %v699
  %v840 = vpack.c.b16 %v702, %v701
  %v841 = vpack.c.b16 %v704, %v703
  %v842 = vpack.c.b16 %v706, %v705
  %v843 = vpack.c.b16 %v708, %v707
  %v844 = vpack.c.b16 %v710, %v709
  %v845 = vpack.c.b16 %v712, %v711
  %v846 = vpack.c.b16 %v714, %v713
  %v847 = vpack.c.b16 %v716, %v715
  %v848 = vpack.c.b16 %v718, %v717
  %v849 = vpack.c.b16 %v720, %v719
  %v850 = vpack.c.b16 %v722, %v721
  %v851 = vpack.c.b16 %v724, %v723
  %v852 = vpack.c.b16 %v726, %v725
  %v853 = vpack.c.b16 %v728, %v727
  %v854 = vpack.c.b16 %v730, %v729
  %v855 = vpack.c.b16 %v732, %v731
  %v856 = vpack.c.b16 %v734, %v733
  %v857 = vpack.c.b16 %v736, %v735
  %v858 = vpack.c.b16 %v738, %v737
  %v859 = vpack.c.b16 %v740, %v739
  %v860 = vpack.c.b16 %v742, %v741
  %v861 = vpack.c.b16 %v744, %v743
  %v862 = vpack.c.b16 %v746, %v745
  %v863 = vpack.c.b16 %v748, %v747
  %v864 = vpack.c.b16 %v750, %v749
  %v865 = vpack.c.b16 %v752, %v751
  %v866 = vpack.c.b16 %v754, %v753
  %v867 = vpack.c.b16 %v756, %v755
  %v868 = vpack.c.b16 %v758, %v757
  %v869 = vpack.c.b16 %v760, %v759
  %v870 = vpack.c.b16 %v762, %v761
  %v871 = vpack.c.b16 %v764, %v763
  %v872 = vpack.c.b16 %v766, %v765
  %v873 = vpack.c.b16 %v768, %v767
  %v874 = vpack.c.b16 %v770, %v769
  %v875 = vpack.c.b16 %v772, %v771
  %v876 = vpack.c.b16 %v774, %v773
  %v877 = vpack.c.b16 %v776, %v775
  %v878 = vpack.c.b16 %v778, %v777
  %v879 = vpack.c.b16 %v780, %v779
  %v880 = vpack.c.b16 %v782, %v781
  %v881 = vpack.c.b16 %v784, %v783
  %v882 = vpack.c.b16 %v786, %v785
  %v883 = vpack.c.b16 %v788, %v787
  %v884 = vpack.c.b16 %v790, %v789
  %v885 = vpack.c.b16 %v792, %v791
  %v886 = vpack.c.b16 %v794, %v793
  %v887 = vpack.c.b16 %v796, %v795
  %v888 = vpack.c.b16 %v798, %v797
  %v889 = vpack.c.b16 %v800, %v799
  %v890 = vpack.c.b16 %v802, %v801
  %v891 = vpack.c.b16 %v804, %v803
  %v892 = vpack.c.b16 %v806, %v805
  %v893 = vpack.c.b16 %v808, %v807
  %v894 = vpack.c.b16 %v810, %v809
  %v895 = vpack.c.b16 %v812, %v811
  %v896 = vpack.c.b16 %v814, %v813
  %v897 = vpack.c.b16 %v816, %v815
  %vm979 = vcmask 130048
  %v981 = vsel %vm979, %v419, 0
  %v984 = vsel %vm979, %v430, 0
  %v987 = vsel %vm979, %v441, 0
  %v990 = vsel %vm979, %v452, 0
  %992 = vmatprep.subr.bf16.mxu0 0
  %993 = vmatpush1.bf16.msra.mxu0 %v817
  %994 = vmatprep.subr.bf16.mxu0 0
  %995 = vmatpush1.bf16.msra.mxu0 %v818
  %996 = vmatprep.subr.bf16.mxu0 0
  %997 = vmatpush1.bf16.msra.mxu0 %v819
  %998 = vmatprep.subr.bf16.mxu0 0
  %999 = vmatpush1.bf16.msra.mxu0 %v820
  %1000 = vmatprep.subr.bf16.mxu0 0
  %1001 = vmatpush1.bf16.msra.mxu0 %v821
  %1002 = vmatprep.subr.bf16.mxu0 0
  %1003 = vmatpush1.bf16.msra.mxu0 %v822
  %1004 = vmatprep.subr.bf16.mxu0 0
  %1005 = vmatpush1.bf16.msra.mxu0 %v823
  %1006 = vmatprep.subr.bf16.mxu0 0
  %1007 = vmatpush1.bf16.msra.mxu0 %v824
  %1008 = vmatprep.subr.bf16.mxu0 0
  %1009 = vmatpush1.bf16.msra.mxu0 %v825
  %1010 = vmatprep.subr.bf16.mxu0 0
  %1011 = vmatpush1.bf16.msra.mxu0 %v826
  %1012 = vmatprep.subr.bf16.mxu0 0
  %1013 = vmatpush1.bf16.msra.mxu0 %v827
  %1014 = vmatprep.subr.bf16.mxu0 0
  %1015 = vmatpush1.bf16.msra.mxu0 %v828
  %1016 = vmatprep.subr.bf16.mxu0 0
  %1017 = vmatpush1.bf16.msra.mxu0 %v829
  %1018 = vmatprep.subr.bf16.mxu0 0
  %1019 = vmatpush1.bf16.msra.mxu0 %v830
  %1020 = vmatprep.subr.bf16.mxu0 0
  %1021 = vmatpush1.bf16.msra.mxu0 %v831
  %1022 = vmatprep.subr.bf16.mxu0 0
  %1023 = vmatpush1.bf16.msra.mxu0 %v832
  %1024 = vmatprep.mubr.bf16.mxu0 %v410
  %1025 = vmatmul.mubr.bf16.gmra.mrb[0].mxu0 %v409
  %v1026 = vpop.f32.mrb[0].mxu0
  %v1027 = vadd.f32 %v236, %v1026
  %v1028 = vpop.f32.mrb[0].mxu0
  %v1029 = vpop.f32.mrb[0].mxu0
  %v1030 = vadd.f32 %v241, %v1029
  %v1031 = vpop.f32.mrb[0].mxu0
  %1032 = vmatprep.mubr.bf16.mxu0 %v421
  %1033 = vmatmul.mubr.bf16.gmra.mrb[0].mxu0 %v420
  %v1034 = vpop.f32.mrb[0].mxu0
  %v1035 = vadd.f32 %v246, %v1034
  %v1036 = vpop.f32.mrb[0].mxu0
  %v1037 = vpop.f32.mrb[0].mxu0
  %v1038 = vadd.f32 %v251, %v1037
  %v1039 = vpop.f32.mrb[0].mxu0
  %1040 = vmatprep.mubr.bf16.mxu0 %v432
  %1041 = vmatmul.mubr.bf16.gmra.mrb[0].mxu0 %v431
  %v1042 = vpop.f32.mrb[0].mxu0
  %v1043 = vadd.f32 %v256, %v1042
  %v1044 = vpop.f32.mrb[0].mxu0
  %v1045 = vpop.f32.mrb[0].mxu0
  %v1046 = vadd.f32 %v261, %v1045
  %v1047 = vpop.f32.mrb[0].mxu0
  %1048 = vmatprep.mubr.bf16.mxu0 %v443
  %1049 = vmatmul.mubr.bf16.gmra.mrb[0].mxu0 %v442
  %v1050 = vpop.f32.mrb[0].mxu0
  %v1051 = vadd.f32 %v266, %v1050
  %v1052 = vpop.f32.mrb[0].mxu0
  %v1053 = vpop.f32.mrb[0].mxu0
  %v1054 = vadd.f32 %v271, %v1053
  %v1055 = vpop.f32.mrb[0].mxu0
  %1056 = vdwg.mxu0
  %1057 = vmatprep.subr.bf16.mxu0 0
  %1058 = vmatpush1.bf16.msra.mxu0 %v833
  %1059 = vmatprep.subr.bf16.mxu0 0
  %1060 = vmatpush1.bf16.msra.mxu0 %v834
  %1061 = vmatprep.subr.bf16.mxu0 0
  %1062 = vmatpush1.bf16.msra.mxu0 %v835
  %1063 = vmatprep.subr.bf16.mxu0 0
  %1064 = vmatpush1.bf16.msra.mxu0 %v836
  %1065 = vmatprep.subr.bf16.mxu0 0
  %1066 = vmatpush1.bf16.msra.mxu0 %v837
  %1067 = vmatprep.subr.bf16.mxu0 0
  %1068 = vmatpush1.bf16.msra.mxu0 %v838
  %1069 = vmatprep.subr.bf16.mxu0 0
  %1070 = vmatpush1.bf16.msra.mxu0 %v839
  %1071 = vmatprep.subr.bf16.mxu0 0
  %1072 = vmatpush1.bf16.msra.mxu0 %v840
  %1073 = vmatprep.subr.bf16.mxu0 0
  %1074 = vmatpush1.bf16.msra.mxu0 %v841
  %1075 = vmatprep.subr.bf16.mxu0 0
  %1076 = vmatpush1.bf16.msra.mxu0 %v842
  %1077 = vmatprep.subr.bf16.mxu0 0
  %1078 = vmatpush1.bf16.msra.mxu0 %v843
  %1079 = vmatprep.subr.bf16.mxu0 0
  %1080 = vmatpush1.bf16.msra.mxu0 %v844
  %1081 = vmatprep.subr.bf16.mxu0 0
  %1082 = vmatpush1.bf16.msra.mxu0 %v845
  %1083 = vmatprep.subr.bf16.mxu0 0
  %1084 = vmatpush1.bf16.msra.mxu0 %v846
  %1085 = vmatprep.subr.bf16.mxu0 0
  %1086 = vmatpush1.bf16.msra.mxu0 %v847
  %1087 = vmatprep.subr.bf16.mxu0 0
  %1088 = vmatpush1.bf16.msra.mxu0 %v848
  %1089 = vmatprep.mubr.bf16.mxu0 %v412
  %1090 = vmatmul.mubr.bf16.gmra.mrb[0].mxu0 %v411
  %v1091 = vpop.f32.mrb[0].mxu0
  %v1092 = vadd.f32 %v1027, %v1091
  %v1093 = vpop.f32.mrb[0].mxu0
  %v1094 = vpop.f32.mrb[0].mxu0
  %v1095 = vadd.f32 %v1030, %v1094
  %v1096 = vpop.f32.mrb[0].mxu0
  %1097 = vmatprep.mubr.bf16.mxu0 %v423
  %1098 = vmatmul.mubr.bf16.gmra.mrb[0].mxu0 %v422
  %v1099 = vpop.f32.mrb[0].mxu0
  %v1100 = vadd.f32 %v1035, %v1099
  %v1101 = vpop.f32.mrb[0].mxu0
  %v1102 = vpop.f32.mrb[0].mxu0
  %v1103 = vadd.f32 %v1038, %v1102
  %v1104 = vpop.f32.mrb[0].mxu0
  %1105 = vmatprep.mubr.bf16.mxu0 %v434
  %1106 = vmatmul.mubr.bf16.gmra.mrb[0].mxu0 %v433
  %v1107 = vpop.f32.mrb[0].mxu0
  %v1108 = vadd.f32 %v1043, %v1107
  %v1109 = vpop.f32.mrb[0].mxu0
  %v1110 = vpop.f32.mrb[0].mxu0
  %v1111 = vadd.f32 %v1046, %v1110
  %v1112 = vpop.f32.mrb[0].mxu0
  %1113 = vmatprep.mubr.bf16.mxu0 %v445
  %1114 = vmatmul.mubr.bf16.gmra.mrb[0].mxu0 %v444
  %v1115 = vpop.f32.mrb[0].mxu0
  %v1116 = vadd.f32 %v1051, %v1115
  %v1117 = vpop.f32.mrb[0].mxu0
  %v1118 = vpop.f32.mrb[0].mxu0
  %v1119 = vadd.f32 %v1054, %v1118
  %v1120 = vpop.f32.mrb[0].mxu0
  %1121 = vdwg.mxu0
  %1122 = vmatprep.subr.bf16.mxu0 0
  %1123 = vmatpush1.bf16.msra.mxu0 %v849
  %1124 = vmatprep.subr.bf16.mxu0 0
  %1125 = vmatpush1.bf16.msra.mxu0 %v850
  %1126 = vmatprep.subr.bf16.mxu0 0
  %1127 = vmatpush1.bf16.msra.mxu0 %v851
  %1128 = vmatprep.subr.bf16.mxu0 0
  %1129 = vmatpush1.bf16.msra.mxu0 %v852
  %1130 = vmatprep.subr.bf16.mxu0 0
  %1131 = vmatpush1.bf16.msra.mxu0 %v853
  %1132 = vmatprep.subr.bf16.mxu0 0
  %1133 = vmatpush1.bf16.msra.mxu0 %v854
  %1134 = vmatprep.subr.bf16.mxu0 0
  %1135 = vmatpush1.bf16.msra.mxu0 %v855
  %1136 = vmatprep.subr.bf16.mxu0 0
  %1137 = vmatpush1.bf16.msra.mxu0 %v856
  %1138 = vmatprep.subr.bf16.mxu0 0
  %1139 = vmatpush1.bf16.msra.mxu0 %v857
  %1140 = vmatprep.subr.bf16.mxu0 0
  %1141 = vmatpush1.bf16.msra.mxu0 %v858
  %1142 = vmatprep.subr.bf16.mxu0 0
  %1143 = vmatpush1.bf16.msra.mxu0 %v859
  %1144 = vmatprep.subr.bf16.mxu0 0
  %1145 = vmatpush1.bf16.msra.mxu0 %v860
  %1146 = vmatprep.subr.bf16.mxu0 0
  %1147 = vmatpush1.bf16.msra.mxu0 %v861
  %1148 = vmatprep.subr.bf16.mxu0 0
  %1149 = vmatpush1.bf16.msra.mxu0 %v862
  %1150 = vmatprep.subr.bf16.mxu0 0
  %1151 = vmatpush1.bf16.msra.mxu0 %v863
  %1152 = vmatprep.subr.bf16.mxu0 0
  %1153 = vmatpush1.bf16.msra.mxu0 %v864
  %1154 = vmatprep.mubr.bf16.mxu0 %v414
  %1155 = vmatmul.mubr.bf16.gmra.mrb[0].mxu0 %v413
  %v1156 = vpop.f32.mrb[0].mxu0
  %v1157 = vadd.f32 %v1092, %v1156
  %v1158 = vpop.f32.mrb[0].mxu0
  %v1159 = vpop.f32.mrb[0].mxu0
  %v1160 = vadd.f32 %v1095, %v1159
  %v1161 = vpop.f32.mrb[0].mxu0
  %1162 = vmatprep.mubr.bf16.mxu0 %v425
  %1163 = vmatmul.mubr.bf16.gmra.mrb[0].mxu0 %v424
  %v1164 = vpop.f32.mrb[0].mxu0
  %v1165 = vadd.f32 %v1100, %v1164
  %v1166 = vpop.f32.mrb[0].mxu0
  %v1167 = vpop.f32.mrb[0].mxu0
  %v1168 = vadd.f32 %v1103, %v1167
  %v1169 = vpop.f32.mrb[0].mxu0
  %1170 = vmatprep.mubr.bf16.mxu0 %v436
  %1171 = vmatmul.mubr.bf16.gmra.mrb[0].mxu0 %v435
  %v1172 = vpop.f32.mrb[0].mxu0
  %v1173 = vadd.f32 %v1108, %v1172
  %v1174 = vpop.f32.mrb[0].mxu0
  %v1175 = vpop.f32.mrb[0].mxu0
  %v1176 = vadd.f32 %v1111, %v1175
  %v1177 = vpop.f32.mrb[0].mxu0
  %1178 = vmatprep.mubr.bf16.mxu0 %v447
  %1179 = vmatmul.mubr.bf16.gmra.mrb[0].mxu0 %v446
  %v1180 = vpop.f32.mrb[0].mxu0
  %v1181 = vadd.f32 %v1116, %v1180
  %v1182 = vpop.f32.mrb[0].mxu0
  %v1183 = vpop.f32.mrb[0].mxu0
  %v1184 = vadd.f32 %v1119, %v1183
  %v1185 = vpop.f32.mrb[0].mxu0
  %1186 = vdwg.mxu0
  %1187 = vmatprep.subr.bf16.mxu0 0
  %1188 = vmatpush1.bf16.msra.mxu0 %v865
  %1189 = vmatprep.subr.bf16.mxu0 0
  %1190 = vmatpush1.bf16.msra.mxu0 %v866
  %1191 = vmatprep.subr.bf16.mxu0 0
  %1192 = vmatpush1.bf16.msra.mxu0 %v867
  %1193 = vmatprep.subr.bf16.mxu0 0
  %1194 = vmatpush1.bf16.msra.mxu0 %v868
  %1195 = vmatprep.subr.bf16.mxu0 0
  %1196 = vmatpush1.bf16.msra.mxu0 %v869
  %1197 = vmatprep.subr.bf16.mxu0 0
  %1198 = vmatpush1.bf16.msra.mxu0 %v870
  %1199 = vmatprep.subr.bf16.mxu0 0
  %1200 = vmatpush1.bf16.msra.mxu0 %v871
  %1201 = vmatprep.subr.bf16.mxu0 0
  %1202 = vmatpush1.bf16.msra.mxu0 %v872
  %1203 = vmatprep.subr.bf16.mxu0 0
  %1204 = vmatpush1.bf16.msra.mxu0 %v873
  %1205 = vmatprep.subr.bf16.mxu0 0
  %1206 = vmatpush1.bf16.msra.mxu0 %v874
  %1207 = vmatprep.subr.bf16.mxu0 0
  %1208 = vmatpush1.bf16.msra.mxu0 %v875
  %1209 = vmatprep.subr.bf16.mxu0 0
  %1210 = vmatpush1.bf16.msra.mxu0 %v876
  %1211 = vmatprep.subr.bf16.mxu0 0
  %1212 = vmatpush1.bf16.msra.mxu0 %v877
  %1213 = vmatprep.subr.bf16.mxu0 0
  %1214 = vmatpush1.bf16.msra.mxu0 %v878
  %1215 = vmatprep.subr.bf16.mxu0 0
  %1216 = vmatpush1.bf16.msra.mxu0 %v879
  %1217 = vmatprep.subr.bf16.mxu0 0
  %1218 = vmatpush1.bf16.msra.mxu0 %v880
  %1219 = vmatprep.mubr.bf16.mxu0 %v416
  %1220 = vmatmul.mubr.bf16.gmra.mrb[0].mxu0 %v415
  %v1221 = vpop.f32.mrb[0].mxu0
  %v1222 = vadd.f32 %v1157, %v1221
  %v1223 = vpop.f32.mrb[0].mxu0
  %v1224 = vpop.f32.mrb[0].mxu0
  %v1225 = vadd.f32 %v1160, %v1224
  %v1226 = vpop.f32.mrb[0].mxu0
  %1227 = vmatprep.mubr.bf16.mxu0 %v427
  %1228 = vmatmul.mubr.bf16.gmra.mrb[0].mxu0 %v426
  %v1229 = vpop.f32.mrb[0].mxu0
  %v1230 = vadd.f32 %v1165, %v1229
  %v1231 = vpop.f32.mrb[0].mxu0
  %v1232 = vpop.f32.mrb[0].mxu0
  %v1233 = vadd.f32 %v1168, %v1232
  %v1234 = vpop.f32.mrb[0].mxu0
  %1235 = vmatprep.mubr.bf16.mxu0 %v438
  %1236 = vmatmul.mubr.bf16.gmra.mrb[0].mxu0 %v437
  %v1237 = vpop.f32.mrb[0].mxu0
  %v1238 = vadd.f32 %v1173, %v1237
  %v1239 = vpop.f32.mrb[0].mxu0
  %v1240 = vpop.f32.mrb[0].mxu0
  %v1241 = vadd.f32 %v1176, %v1240
  %v1242 = vpop.f32.mrb[0].mxu0
  %1243 = vmatprep.mubr.bf16.mxu0 %v449
  %1244 = vmatmul.mubr.bf16.gmra.mrb[0].mxu0 %v448
  %v1245 = vpop.f32.mrb[0].mxu0
  %v1246 = vadd.f32 %v1181, %v1245
  %v1247 = vpop.f32.mrb[0].mxu0
  %v1248 = vpop.f32.mrb[0].mxu0
  %v1249 = vadd.f32 %v1184, %v1248
  %v1250 = vpop.f32.mrb[0].mxu0
  %1251 = vdwg.mxu0
  %1252 = vmatprep.subr.bf16.mxu0 0
  %1253 = vmatpush1.bf16.msra.mxu0 %v881
  %1254 = vmatprep.subr.bf16.mxu0 0
  %1255 = vmatpush1.bf16.msra.mxu0 %v882
  %1256 = vmatprep.subr.bf16.mxu0 0
  %1257 = vmatpush1.bf16.msra.mxu0 %v883
  %1258 = vmatprep.subr.bf16.mxu0 0
  %1259 = vmatpush1.bf16.msra.mxu0 %v884
  %1260 = vmatprep.subr.bf16.mxu0 0
  %1261 = vmatpush1.bf16.msra.mxu0 %v885
  %1262 = vmatprep.subr.bf16.mxu0 0
  %1263 = vmatpush1.bf16.msra.mxu0 %v886
  %1264 = vmatprep.subr.bf16.mxu0 0
  %1265 = vmatpush1.bf16.msra.mxu0 %v887
  %1266 = vmatprep.subr.bf16.mxu0 0
  %1267 = vmatpush1.bf16.msra.mxu0 %v888
  %1268 = vmatprep.subr.bf16.mxu0 0
  %1269 = vmatpush1.bf16.msra.mxu0 %v889
  %1270 = vmatprep.subr.bf16.mxu0 0
  %1271 = vmatpush1.bf16.msra.mxu0 %v890
  %1272 = vmatprep.subr.bf16.mxu0 0
  %1273 = vmatpush1.bf16.msra.mxu0 %v891
  %1274 = vmatprep.subr.bf16.mxu0 0
  %1275 = vmatpush1.bf16.msra.mxu0 %v892
  %1276 = vmatprep.subr.bf16.mxu0 0
  %1277 = vmatpush1.bf16.msra.mxu0 %v893
  %1278 = vmatprep.subr.bf16.mxu0 0
  %1279 = vmatpush1.bf16.msra.mxu0 %v894
  %1280 = vmatprep.subr.bf16.mxu0 0
  %1281 = vmatpush1.bf16.msra.mxu0 %v895
  %1282 = vmatprep.subr.bf16.mxu0 0
  %1283 = vmatpush1.bf16.msra.mxu0 %v896
  %1284 = vmatprep.mubr.bf16.mxu0 %v418
  %1285 = vmatmul.mubr.bf16.gmra.mrb[0].mxu0 %v417
  %v1286 = vpop.f32.mrb[0].mxu0
  %v1287 = vadd.f32 %v1222, %v1286
  %v1288 = vpop.f32.mrb[0].mxu0
  %v1289 = vpop.f32.mrb[0].mxu0
  %v1290 = vadd.f32 %v1225, %v1289
  %v1291 = vpop.f32.mrb[0].mxu0
  %1292 = vmatprep.mubr.bf16.mxu0 %v429
  %1293 = vmatmul.mubr.bf16.gmra.mrb[0].mxu0 %v428
  %v1294 = vpop.f32.mrb[0].mxu0
  %v1295 = vadd.f32 %v1230, %v1294
  %v1296 = vpop.f32.mrb[0].mxu0
  %v1297 = vpop.f32.mrb[0].mxu0
  %v1298 = vadd.f32 %v1233, %v1297
  %v1299 = vpop.f32.mrb[0].mxu0
  %1300 = vmatprep.mubr.bf16.mxu0 %v440
  %1301 = vmatmul.mubr.bf16.gmra.mrb[0].mxu0 %v439
  %v1302 = vpop.f32.mrb[0].mxu0
  %v1303 = vadd.f32 %v1238, %v1302
  %v1304 = vpop.f32.mrb[0].mxu0
  %v1305 = vpop.f32.mrb[0].mxu0
  %v1306 = vadd.f32 %v1241, %v1305
  %v1307 = vpop.f32.mrb[0].mxu0
  %1308 = vmatprep.mubr.bf16.mxu0 %v451
  %1309 = vmatmul.mubr.bf16.gmra.mrb[0].mxu0 %v450
  %v1310 = vpop.f32.mrb[0].mxu0
  %v1311 = vadd.f32 %v1246, %v1310
  %v1312 = vpop.f32.mrb[0].mxu0
  %v1313 = vpop.f32.mrb[0].mxu0
  %v1314 = vadd.f32 %v1249, %v1313
  %v1315 = vpop.f32.mrb[0].mxu0
  %1316 = vdwg.mxu0
  %1317 = vmatprep.subr.bf16.mxu0 0
  %1318 = vmatpush1.bf16.msra.mxu0 %v897
  %1319 = vmatprep.subr.bf16.mxu0 0
  %1320 = vmatpush1.bf16.msra.mxu0 0
  %1321 = vmatprep.subr.bf16.mxu0 0
  %1322 = vmatpush1.bf16.msra.mxu0 0
  %1323 = vmatprep.subr.bf16.mxu0 0
  %1324 = vmatpush1.bf16.msra.mxu0 0
  %1325 = vmatprep.subr.bf16.mxu0 0
  %1326 = vmatpush1.bf16.msra.mxu0 0
  %1327 = vmatprep.subr.bf16.mxu0 0
  %1328 = vmatpush1.bf16.msra.mxu0 0
  %1329 = vmatprep.subr.bf16.mxu0 0
  %1330 = vmatpush1.bf16.msra.mxu0 0
  %1331 = vmatprep.subr.bf16.mxu0 0
  %1332 = vmatpush1.bf16.msra.mxu0 0
  %1333 = vmatprep.subr.bf16.mxu0 0
  %1334 = vmatpush1.bf16.msra.mxu0 0
  %1335 = vmatprep.subr.bf16.mxu0 0
  %1336 = vmatpush1.bf16.msra.mxu0 0
  %1337 = vmatprep.subr.bf16.mxu0 0
  %1338 = vmatpush1.bf16.msra.mxu0 0
  %1339 = vmatprep.subr.bf16.mxu0 0
  %1340 = vmatpush1.bf16.msra.mxu0 0
  %1341 = vmatprep.subr.bf16.mxu0 0
  %1342 = vmatpush1.bf16.msra.mxu0 0
  %1343 = vmatprep.subr.bf16.mxu0 0
  %1344 = vmatpush1.bf16.msra.mxu0 0
  %1345 = vmatprep.subr.bf16.mxu0 0
  %1346 = vmatpush1.bf16.msra.mxu0 0
  %1347 = vmatprep.subr.bf16.mxu0 0
  %1348 = vmatpush1.bf16.msra.mxu0 0
  %1349 = vmatprep.mubr.bf16.mxu0 0
  %1350 = vmatmul.mubr.bf16.gmra.mrb[0].mxu0 %v981
  %v1351 = vpop.f32.mrb[0].mxu0
  %v1352 = vadd.f32 %v1287, %v1351
  %v1353 = vpop.f32.mrb[0].mxu0
  %v1354 = vpop.f32.mrb[0].mxu0
  %v1355 = vadd.f32 %v1290, %v1354
  %v1356 = vpop.f32.mrb[0].mxu0
  %1357 = vmatprep.mubr.bf16.mxu0 0
  %1358 = vmatmul.mubr.bf16.gmra.mrb[0].mxu0 %v984
  %v1359 = vpop.f32.mrb[0].mxu0
  %v1360 = vadd.f32 %v1295, %v1359
  %v1361 = vpop.f32.mrb[0].mxu0
  %v1362 = vpop.f32.mrb[0].mxu0
  %v1363 = vadd.f32 %v1298, %v1362
  %v1364 = vpop.f32.mrb[0].mxu0
  %1365 = vmatprep.mubr.bf16.mxu0 0
  %1366 = vmatmul.mubr.bf16.gmra.mrb[0].mxu0 %v987
  %v1367 = vpop.f32.mrb[0].mxu0
  %v1368 = vadd.f32 %v1303, %v1367
  %v1369 = vpop.f32.mrb[0].mxu0
  %v1370 = vpop.f32.mrb[0].mxu0
  %v1371 = vadd.f32 %v1306, %v1370
  %v1372 = vpop.f32.mrb[0].mxu0
  %1373 = vmatprep.mubr.bf16.mxu0 0
  %1374 = vmatmul.mubr.bf16.gmra.mrb[0].mxu0 %v990
  %v1375 = vpop.f32.mrb[0].mxu0
  %v1376 = vadd.f32 %v1311, %v1375
  %v1377 = vpop.f32.mrb[0].mxu0
  %v1378 = vpop.f32.mrb[0].mxu0
  %v1379 = vadd.f32 %v1314, %v1378
  %v1380 = vpop.f32.mrb[0].mxu0
  %1381 = vdwg.mxu0
  %v1382 = vmax.f32 %v1352, 0.0
  %v1383 = vmax.f32 %v1355, 0.0
  %v1384 = vmax.f32 %v1360, 0.0
  %v1385 = vmax.f32 %v1363, 0.0
  %v1386 = vmax.f32 %v1368, 0.0
  %v1387 = vmax.f32 %v1371, 0.0
  %v1388 = vmax.f32 %v1376, 0.0
  %v1389 = vmax.f32 %v1379, 0.0
  %v1390 = vpack.c.bf16 %v1383, %v1382
  %v1391 = vpack.c.bf16 %v1385, %v1384
  %v1392 = vpack.c.bf16 %v1387, %v1386
  %v1393 = vpack.c.bf16 %v1389, %v1388
  %v1398 = vunpack.c.l.b16 %v1390
  %v1399 = vunpack.c.h.b16 %v1390
  %v1400 = vunpack.c.l.b16 %v1391
  %v1401 = vunpack.c.h.b16 %v1391
  %v1402 = vunpack.c.l.b16 %v1392
  %v1403 = vunpack.c.h.b16 %v1392
  %v1404 = vunpack.c.l.b16 %v1393
  %v1405 = vunpack.c.h.b16 %v1393
  %v1406 = vpack.c.b16 %v1398, %v1398
  %v1407 = vpack.c.b16 %v1399, %v1399
  %v1408 = vpack.c.b16 %v1400, %v1400
  %v1409 = vpack.c.b16 %v1401, %v1401
  %v1410 = vpack.c.b16 %v1402, %v1402
  %v1411 = vpack.c.b16 %v1403, %v1403
  %v1412 = vpack.c.b16 %v1404, %v1404
  %v1413 = vpack.c.b16 %v1405, %v1405
  %vm1422 = vcmask 257024
  %1423 = vst.msk [vmem:[%s3] sm:$0xf] %vm1422, %v1406
  %1424 = vst.msk [vmem:[%s3 + $0x4] sm:$0xf] %vm1422, %v1407
  %1425 = vst.msk [vmem:[%s3 + $0x8] sm:$0xf] %vm1422, %v1408
  %1426 = vst.msk [vmem:[%s3 + $0xc] sm:$0xf] %vm1422, %v1409
  %1427 = vst.msk [vmem:[%s3 + $0x10] sm:$0xf] %vm1422, %v1410
  %1428 = vst.msk [vmem:[%s3 + $0x14] sm:$0xf] %vm1422, %v1411
  %1429 = vst.msk [vmem:[%s3 + $0x18] sm:$0xf] %vm1422, %v1412
  %1430 = vst.msk [vmem:[%s3 + $0x1c] sm:$0xf] %vm1422, %v1413
  // Predicated region
  $region14: #{net_forward.8} parent=0 // pred_check
    _
  $region15: #{net_forward.8} parent=0 // pred_check_branch
    %1432 = sbr.rel (0) target = $region17
  $region16: #{net_forward.8} parent=0 // pred_region
    _
  $region17: #{net_forward.8} parent=0 // pred_fallthru
    _
  // Predicated region
  $region18: #{net_forward.8} parent=0 // pred_check
    _
  $region19: #{net_forward.8} parent=0 // pred_check_branch
    %1434 = sbr.rel (0) target = $region21
  $region20: #{net_forward.8} parent=0 // pred_region
    _
  $region21: #{net_forward.8} parent=0 // pred_fallthru
    _

// kernel: net_forward.9
$region0: #{net_forward.9}
  #allocation0 [shape = 'u32[]', space=smem, size = 0x4, offset = 0x4, fixed_abs, tag = 'smem constant byte address 0x4 - core index']
  #allocation1 [shape = 'u32[144,128]{1,0:T(1,128)}', space=vmem, size = 0x12000, scoped, tag = 'internal scratch']
  %s0 = inlined_call_operand.vmem [shape: f32[2,1024], index: 0, kind: input, shape index: {}]
  %s1 = inlined_call_operand.vmem [shape: f32[1024,64], index: 1, kind: input, shape index: {}]
  %s2 = inlined_call_operand.vmem [shape: f32[1,64], index: 2, kind: input, shape index: {}]
  %s3 = inlined_call_operand.vmem [shape: f32[64,128], index: 3, kind: input, shape index: {}]
  %s4 = inlined_call_operand.vmem [shape: f32[1,128], index: 4, kind: input, shape index: {}]
  %s5 = inlined_call_operand.vmem [shape: f32[128,2], index: 5, kind: input, shape index: {}]
  %s6 = inlined_call_operand.vmem [shape: f32[1,2], index: 6, kind: input, shape index: {}]
  %s7 = inlined_call_operand.hbm [shape: f32[2,2], index: 7, kind: output, shape index: {}]
  %s8 = sld [smem:[#allocation0]]
  $region38: #{net_forward.9} parent=0
    _
  %s10 = ssub.s32 1, %s8
  %s11 = scalar_select 0, %s10, %s8
  $region1: #{net_forward.9} parent=0
    #allocation2 [shape = 'u8[1024]{0}', space=vmem, size = 0x400, scoped, tag = 'output window, operand 0, single buffered']
    #allocation3 [shape = 's32[1]{0}', space=sflag, size = 0x4, scoped, tag = 'scoped memory for net_forward.9']
    %12 = vsyncpa [#allocation3], 0
    // Predicated region
    $region2: #{net_forward.9} parent=1 // pred_check
      _
    $region3: #{net_forward.9} parent=1 // pred_check_branch
      %14 = sbr.rel (0) target = $region5
    $region4: #{net_forward.9} parent=1 // pred_region
      _
    $region5: #{net_forward.9} parent=1 // pred_fallthru
      _
    // Predicated region
    $region6: #{net_forward.9} parent=1 // pred_check
      _
    $region7: #{net_forward.9} parent=1 // pred_check_branch
      %16 = sbr.rel (0) target = $region9
    $region8: #{net_forward.9} parent=1 // pred_region
      _
    $region9: #{net_forward.9} parent=1 // pred_fallthru
      _
    // Predicated region
    $region10: #{net_forward.9} parent=1 // pred_check
      _
    $region11: #{net_forward.9} parent=1 // pred_check_branch
      %18 = sbr.rel (0) target = $region13
    $region12: #{net_forward.9} parent=1 // pred_region
      _
    $region13: #{net_forward.9} parent=1 // pred_fallthru
      _
    // Predicated region
    $region14: #{net_forward.9} parent=1 // pred_check
      _
    $region15: #{net_forward.9} parent=1 // pred_check_branch
      %20 = sbr.rel (0) target = $region17
    $region16: #{net_forward.9} parent=1 // pred_region
      _
    $region17: #{net_forward.9} parent=1 // pred_fallthru
      _
    // Predicated region
    $region18: #{net_forward.9} parent=1 // pred_check
      _
    $region19: #{net_forward.9} parent=1 // pred_check_branch
      %22 = sbr.rel (0) target = $region21
    $region20: #{net_forward.9} parent=1 // pred_region
      _
    $region21: #{net_forward.9} parent=1 // pred_fallthru
      _
    // Predicated region
    $region22: #{net_forward.9} parent=1 // pred_check
      _
    $region23: #{net_forward.9} parent=1 // pred_check_branch
      %24 = sbr.rel (0) target = $region25
    $region24: #{net_forward.9} parent=1 // pred_region
      _
    $region25: #{net_forward.9} parent=1 // pred_fallthru
      _
    // Predicated region
    $region26: #{net_forward.9} parent=1 // pred_check
      _
    $region27: #{net_forward.9} parent=1 // pred_check_branch
      %26 = sbr.rel (0) target = $region29
    $region28: #{net_forward.9} parent=1 // pred_region
      _
    $region29: #{net_forward.9} parent=1 // pred_fallthru
      _
    %v27 = vld [vmem:[%s0] sm:$0xff]
    %v28 = vld [vmem:[%s0 + $0x8] sm:$0xff]
    %v29 = vld [vmem:[%s1] sm:$0xff]
    %v30 = vld [vmem:[%s1 + $0x8] sm:$0xff]
    %v31 = vld [vmem:[%s1 + $0x10] sm:$0xff]
    %v32 = vld [vmem:[%s1 + $0x18] sm:$0xff]
    %v33 = vld [vmem:[%s1 + $0x20] sm:$0xff]
    %v34 = vld [vmem:[%s1 + $0x28] sm:$0xff]
    %v35 = vld [vmem:[%s1 + $0x30] sm:$0xff]
    %v36 = vld [vmem:[%s1 + $0x38] sm:$0xff]
    %v37 = vld [vmem:[%s1 + $0x40] sm:$0xff]
    %v38 = vld [vmem:[%s1 + $0x48] sm:$0xff]
    %v39 = vld [vmem:[%s1 + $0x50] sm:$0xff]
    %v40 = vld [vmem:[%s1 + $0x58] sm:$0xff]
    %v41 = vld [vmem:[%s1 + $0x60] sm:$0xff]
    %v42 = vld [vmem:[%s1 + $0x68] sm:$0xff]
    %v43 = vld [vmem:[%s1 + $0x70] sm:$0xff]
    %v44 = vld [vmem:[%s1 + $0x78] sm:$0xff]
    %v45 = vld [vmem:[%s1 + $0x80] sm:$0xff]
    %v46 = vld [vmem:[%s1 + $0x88] sm:$0xff]
    %v47 = vld [vmem:[%s1 + $0x90] sm:$0xff]
    %v48 = vld [vmem:[%s1 + $0x98] sm:$0xff]
    %v49 = vld [vmem:[%s1 + $0xa0] sm:$0xff]
    %v50 = vld [vmem:[%s1 + $0xa8] sm:$0xff]
    %v51 = vld [vmem:[%s1 + $0xb0] sm:$0xff]
    %v52 = vld [vmem:[%s1 + $0xb8] sm:$0xff]
    %v53 = vld [vmem:[%s1 + $0xc0] sm:$0xff]
    %v54 = vld [vmem:[%s1 + $0xc8] sm:$0xff]
    %v55 = vld [vmem:[%s1 + $0xd0] sm:$0xff]
    %v56 = vld [vmem:[%s1 + $0xd8] sm:$0xff]
    %v57 = vld [vmem:[%s1 + $0xe0] sm:$0xff]
    %v58 = vld [vmem:[%s1 + $0xe8] sm:$0xff]
    %v59 = vld [vmem:[%s1 + $0xf0] sm:$0xff]
    %v60 = vld [vmem:[%s1 + $0xf8] sm:$0xff]
    %v61 = vld [vmem:[%s1 + $0x100] sm:$0xff]
    %v62 = vld [vmem:[%s1 + $0x108] sm:$0xff]
    %v63 = vld [vmem:[%s1 + $0x110] sm:$0xff]
    %v64 = vld [vmem:[%s1 + $0x118] sm:$0xff]
    %v65 = vld [vmem:[%s1 + $0x120] sm:$0xff]
    %v66 = vld [vmem:[%s1 + $0x128] sm:$0xff]
    %v67 = vld [vmem:[%s1 + $0x130] sm:$0xff]
    %v68 = vld [vmem:[%s1 + $0x138] sm:$0xff]
    %v69 = vld [vmem:[%s1 + $0x140] sm:$0xff]
    %v70 = vld [vmem:[%s1 + $0x148] sm:$0xff]
    %v71 = vld [vmem:[%s1 + $0x150] sm:$0xff]
    %v72 = vld [vmem:[%s1 + $0x158] sm:$0xff]
    %v73 = vld [vmem:[%s1 + $0x160] sm:$0xff]
    %v74 = vld [vmem:[%s1 + $0x168] sm:$0xff]
    %v75 = vld [vmem:[%s1 + $0x170] sm:$0xff]
    %v76 = vld [vmem:[%s1 + $0x178] sm:$0xff]
    %v77 = vld [vmem:[%s1 + $0x180] sm:$0xff]
    %v78 = vld [vmem:[%s1 + $0x188] sm:$0xff]
    %v79 = vld [vmem:[%s1 + $0x190] sm:$0xff]
    %v80 = vld [vmem:[%s1 + $0x198] sm:$0xff]
    %v81 = vld [vmem:[%s1 + $0x1a0] sm:$0xff]
    %v82 = vld [vmem:[%s1 + $0x1a8] sm:$0xff]
    %v83 = vld [vmem:[%s1 + $0x1b0] sm:$0xff]
    %v84 = vld [vmem:[%s1 + $0x1b8] sm:$0xff]
    %v85 = vld [vmem:[%s1 + $0x1c0] sm:$0xff]
    %v86 = vld [vmem:[%s1 + $0x1c8] sm:$0xff]
    %v87 = vld [vmem:[%s1 + $0x1d0] sm:$0xff]
    %v88 = vld [vmem:[%s1 + $0x1d8] sm:$0xff]
    %v89 = vld [vmem:[%s1 + $0x1e0] sm:$0xff]
    %v90 = vld [vmem:[%s1 + $0x1e8] sm:$0xff]
    %v91 = vld [vmem:[%s1 + $0x1f0] sm:$0xff]
    %v92 = vld [vmem:[%s1 + $0x1f8] sm:$0xff]
    %v93 = vld [vmem:[%s1 + $0x200] sm:$0xff]
    %v94 = vld [vmem:[%s1 + $0x208] sm:$0xff]
    %v95 = vld [vmem:[%s1 + $0x210] sm:$0xff]
    %v96 = vld [vmem:[%s1 + $0x218] sm:$0xff]
    %v97 = vld [vmem:[%s1 + $0x220] sm:$0xff]
    %v98 = vld [vmem:[%s1 + $0x228] sm:$0xff]
    %v99 = vld [vmem:[%s1 + $0x230] sm:$0xff]
    %v100 = vld [vmem:[%s1 + $0x238] sm:$0xff]
    %v101 = vld [vmem:[%s1 + $0x240] sm:$0xff]
    %v102 = vld [vmem:[%s1 + $0x248] sm:$0xff]
    %v103 = vld [vmem:[%s1 + $0x250] sm:$0xff]
    %v104 = vld [vmem:[%s1 + $0x258] sm:$0xff]
    %v105 = vld [vmem:[%s1 + $0x260] sm:$0xff]
    %v106 = vld [vmem:[%s1 + $0x268] sm:$0xff]
    %v107 = vld [vmem:[%s1 + $0x270] sm:$0xff]
    %v108 = vld [vmem:[%s1 + $0x278] sm:$0xff]
    %v109 = vld [vmem:[%s1 + $0x280] sm:$0xff]
    %v110 = vld [vmem:[%s1 + $0x288] sm:$0xff]
    %v111 = vld [vmem:[%s1 + $0x290] sm:$0xff]
    %v112 = vld [vmem:[%s1 + $0x298] sm:$0xff]
    %v113 = vld [vmem:[%s1 + $0x2a0] sm:$0xff]
    %v114 = vld [vmem:[%s1 + $0x2a8] sm:$0xff]
    %v115 = vld [vmem:[%s1 + $0x2b0] sm:$0xff]
    %v116 = vld [vmem:[%s1 + $0x2b8] sm:$0xff]
    %v117 = vld [vmem:[%s1 + $0x2c0] sm:$0xff]
    %v118 = vld [vmem:[%s1 + $0x2c8] sm:$0xff]
    %v119 = vld [vmem:[%s1 + $0x2d0] sm:$0xff]
    %v120 = vld [vmem:[%s1 + $0x2d8] sm:$0xff]
    %v121 = vld [vmem:[%s1 + $0x2e0] sm:$0xff]
    %v122 = vld [vmem:[%s1 + $0x2e8] sm:$0xff]
    %v123 = vld [vmem:[%s1 + $0x2f0] sm:$0xff]
    %v124 = vld [vmem:[%s1 + $0x2f8] sm:$0xff]
    %v125 = vld [vmem:[%s1 + $0x300] sm:$0xff]
    %v126 = vld [vmem:[%s1 + $0x308] sm:$0xff]
    %v127 = vld [vmem:[%s1 + $0x310] sm:$0xff]
    %v128 = vld [vmem:[%s1 + $0x318] sm:$0xff]
    %v129 = vld [vmem:[%s1 + $0x320] sm:$0xff]
    %v130 = vld [vmem:[%s1 + $0x328] sm:$0xff]
    %v131 = vld [vmem:[%s1 + $0x330] sm:$0xff]
    %v132 = vld [vmem:[%s1 + $0x338] sm:$0xff]
    %v133 = vld [vmem:[%s1 + $0x340] sm:$0xff]
    %v134 = vld [vmem:[%s1 + $0x348] sm:$0xff]
    %v135 = vld [vmem:[%s1 + $0x350] sm:$0xff]
    %v136 = vld [vmem:[%s1 + $0x358] sm:$0xff]
    %v137 = vld [vmem:[%s1 + $0x360] sm:$0xff]
    %v138 = vld [vmem:[%s1 + $0x368] sm:$0xff]
    %v139 = vld [vmem:[%s1 + $0x370] sm:$0xff]
    %v140 = vld [vmem:[%s1 + $0x378] sm:$0xff]
    %v141 = vld [vmem:[%s1 + $0x380] sm:$0xff]
    %v142 = vld [vmem:[%s1 + $0x388] sm:$0xff]
    %v143 = vld [vmem:[%s1 + $0x390] sm:$0xff]
    %v144 = vld [vmem:[%s1 + $0x398] sm:$0xff]
    %v145 = vld [vmem:[%s1 + $0x3a0] sm:$0xff]
    %v146 = vld [vmem:[%s1 + $0x3a8] sm:$0xff]
    %v147 = vld [vmem:[%s1 + $0x3b0] sm:$0xff]
    %v148 = vld [vmem:[%s1 + $0x3b8] sm:$0xff]
    %v149 = vld [vmem:[%s1 + $0x3c0] sm:$0xff]
    %v150 = vld [vmem:[%s1 + $0x3c8] sm:$0xff]
    %v151 = vld [vmem:[%s1 + $0x3d0] sm:$0xff]
    %v152 = vld [vmem:[%s1 + $0x3d8] sm:$0xff]
    %v153 = vld [vmem:[%s1 + $0x3e0] sm:$0xff]
    %v154 = vld [vmem:[%s1 + $0x3e8] sm:$0xff]
    %v155 = vld [vmem:[%s1 + $0x3f0] sm:$0xff]
    %v156 = vld [vmem:[%s1 + $0x3f8] sm:$0xff]
    %v157 = vld [vmem:[%s2] sm:$0x1]
    %v159 = vlaneseq
    %v160 = vshrl.u32 %v159, 7
    %v161 = vsub.s32 0, %v160
    %v162 = vrot.slane %v157, %v161
    %v166 = vcombine.high %v27, %v27
    %v168 = vunpack.c.l.s4 1983009808
    %v169 = vunpack.c.0.s8 %v168
    %v170 = vlaneseq
    %v171 = vshrl.u32 %v170, 7
    %v172 = vsub.s32 %v169, %v171
    %v173 = vrot.slane %v27, %v172
    %v175 = vunpack.c.l.s4 1983009808
    %v176 = vunpack.c.0.s8 %v175
    %v177 = vlaneseq
    %v178 = vshrl.u32 %v177, 7
    %v179 = vsub.s32 %v176, %v178
    %v180 = vrot.slane %v166, %v179
    %v181 = vcombine.high %v173, %v173
    %v182 = vcombine.high %v180, %v180
    %v183 = vcombine.high %v28, %v28
    %v185 = vunpack.c.l.s4 1983009808
    %v186 = vunpack.c.0.s8 %v185
    %v187 = vlaneseq
    %v188 = vshrl.u32 %v187, 7
    %v189 = vsub.s32 %v186, %v188
    %v190 = vrot.slane %v28, %v189
    %v192 = vunpack.c.l.s4 1983009808
    %v193 = vunpack.c.0.s8 %v192
    %v194 = vlaneseq
    %v195 = vshrl.u32 %v194, 7
    %v196 = vsub.s32 %v193, %v195
    %v197 = vrot.slane %v183, %v196
    %v198 = vcombine.high %v190, %v190
    %v199 = vcombine.high %v197, %v197
    %208 = vmatprep.subr.mxu0 0.0
    %209 = vmatpush1.msra.mxu0 %v29
    %210 = vmatprep.subr.mxu0 0.0
    %211 = vmatpush1.msra.mxu0 %v30
    %212 = vmatprep.subr.mxu0 0.0
    %213 = vmatpush1.msra.mxu0 %v31
    %214 = vmatprep.subr.mxu0 0.0
    %215 = vmatpush1.msra.mxu0 %v32
    %216 = vmatprep.subr.mxu0 0.0
    %217 = vmatpush1.msra.mxu0 %v33
    %218 = vmatprep.subr.mxu0 0.0
    %219 = vmatpush1.msra.mxu0 %v34
    %220 = vmatprep.subr.mxu0 0.0
    %221 = vmatpush1.msra.mxu0 %v35
    %222 = vmatprep.subr.mxu0 0.0
    %223 = vmatpush1.msra.mxu0 %v36
    %224 = vmatprep.subr.mxu0 0.0
    %225 = vmatpush1.msra.mxu0 %v37
    %226 = vmatprep.subr.mxu0 0.0
    %227 = vmatpush1.msra.mxu0 %v38
    %228 = vmatprep.subr.mxu0 0.0
    %229 = vmatpush1.msra.mxu0 %v39
    %230 = vmatprep.subr.mxu0 0.0
    %231 = vmatpush1.msra.mxu0 %v40
    %232 = vmatprep.subr.mxu0 0.0
    %233 = vmatpush1.msra.mxu0 %v41
    %234 = vmatprep.subr.mxu0 0.0
    %235 = vmatpush1.msra.mxu0 %v42
    %236 = vmatprep.subr.mxu0 0.0
    %237 = vmatpush1.msra.mxu0 %v43
    %238 = vmatprep.subr.mxu0 0.0
    %239 = vmatpush1.msra.mxu0 %v44
    %240 = vmatprep.subr.mxu0 0.0
    %241 = vmatpush1.msra.mxu0 %v45
    %242 = vmatprep.subr.mxu0 0.0
    %243 = vmatpush1.msra.mxu0 %v46
    %244 = vmatprep.subr.mxu0 0.0
    %245 = vmatpush1.msra.mxu0 %v47
    %246 = vmatprep.subr.mxu0 0.0
    %247 = vmatpush1.msra.mxu0 %v48
    %248 = vmatprep.subr.mxu0 0.0
    %249 = vmatpush1.msra.mxu0 %v49
    %250 = vmatprep.subr.mxu0 0.0
    %251 = vmatpush1.msra.mxu0 %v50
    %252 = vmatprep.subr.mxu0 0.0
    %253 = vmatpush1.msra.mxu0 %v51
    %254 = vmatprep.subr.mxu0 0.0
    %255 = vmatpush1.msra.mxu0 %v52
    %256 = vmatprep.subr.mxu0 0.0
    %257 = vmatpush1.msra.mxu0 %v53
    %258 = vmatprep.subr.mxu0 0.0
    %259 = vmatpush1.msra.mxu0 %v54
    %260 = vmatprep.subr.mxu0 0.0
    %261 = vmatpush1.msra.mxu0 %v55
    %262 = vmatprep.subr.mxu0 0.0
    %263 = vmatpush1.msra.mxu0 %v56
    %264 = vmatprep.subr.mxu0 0.0
    %265 = vmatpush1.msra.mxu0 %v57
    %266 = vmatprep.subr.mxu0 0.0
    %267 = vmatpush1.msra.mxu0 %v58
    %268 = vmatprep.subr.mxu0 0.0
    %269 = vmatpush1.msra.mxu0 %v59
    %270 = vmatprep.subr.mxu0 0.0
    %271 = vmatpush1.msra.mxu0 %v60
    %272 = vmatprep.mubr.f32.mxu0 %v181
    %273 = vmatmul.mubr.f32.gmra.mrb[0].mxu0 %v173
    %v274 = vpop.f32.mrb[0].mxu0
    %v275 = vadd.f32 %v162, %v274
    %v276 = vpop.f32.mrb[0].mxu0
    %277 = vdwg.mxu0
    %278 = vmatprep.subr.mxu0 0.0
    %279 = vmatpush1.msra.mxu0 %v61
    %280 = vmatprep.subr.mxu0 0.0
    %281 = vmatpush1.msra.mxu0 %v62
    %282 = vmatprep.subr.mxu0 0.0
    %283 = vmatpush1.msra.mxu0 %v63
    %284 = vmatprep.subr.mxu0 0.0
    %285 = vmatpush1.msra.mxu0 %v64
    %286 = vmatprep.subr.mxu0 0.0
    %287 = vmatpush1.msra.mxu0 %v65
    %288 = vmatprep.subr.mxu0 0.0
    %289 = vmatpush1.msra.mxu0 %v66
    %290 = vmatprep.subr.mxu0 0.0
    %291 = vmatpush1.msra.mxu0 %v67
    %292 = vmatprep.subr.mxu0 0.0
    %293 = vmatpush1.msra.mxu0 %v68
    %294 = vmatprep.subr.mxu0 0.0
    %295 = vmatpush1.msra.mxu0 %v69
    %296 = vmatprep.subr.mxu0 0.0
    %297 = vmatpush1.msra.mxu0 %v70
    %298 = vmatprep.subr.mxu0 0.0
    %299 = vmatpush1.msra.mxu0 %v71
    %300 = vmatprep.subr.mxu0 0.0
    %301 = vmatpush1.msra.mxu0 %v72
    %302 = vmatprep.subr.mxu0 0.0
    %303 = vmatpush1.msra.mxu0 %v73
    %304 = vmatprep.subr.mxu0 0.0
    %305 = vmatpush1.msra.mxu0 %v74
    %306 = vmatprep.subr.mxu0 0.0
    %307 = vmatpush1.msra.mxu0 %v75
    %308 = vmatprep.subr.mxu0 0.0
    %309 = vmatpush1.msra.mxu0 %v76
    %310 = vmatprep.subr.mxu0 0.0
    %311 = vmatpush1.msra.mxu0 %v77
    %312 = vmatprep.subr.mxu0 0.0
    %313 = vmatpush1.msra.mxu0 %v78
    %314 = vmatprep.subr.mxu0 0.0
    %315 = vmatpush1.msra.mxu0 %v79
    %316 = vmatprep.subr.mxu0 0.0
    %317 = vmatpush1.msra.mxu0 %v80
    %318 = vmatprep.subr.mxu0 0.0
    %319 = vmatpush1.msra.mxu0 %v81
    %320 = vmatprep.subr.mxu0 0.0
    %321 = vmatpush1.msra.mxu0 %v82
    %322 = vmatprep.subr.mxu0 0.0
    %323 = vmatpush1.msra.mxu0 %v83
    %324 = vmatprep.subr.mxu0 0.0
    %325 = vmatpush1.msra.mxu0 %v84
    %326 = vmatprep.subr.mxu0 0.0
    %327 = vmatpush1.msra.mxu0 %v85
    %328 = vmatprep.subr.mxu0 0.0
    %329 = vmatpush1.msra.mxu0 %v86
    %330 = vmatprep.subr.mxu0 0.0
    %331 = vmatpush1.msra.mxu0 %v87
    %332 = vmatprep.subr.mxu0 0.0
    %333 = vmatpush1.msra.mxu0 %v88
    %334 = vmatprep.subr.mxu0 0.0
    %335 = vmatpush1.msra.mxu0 %v89
    %336 = vmatprep.subr.mxu0 0.0
    %337 = vmatpush1.msra.mxu0 %v90
    %338 = vmatprep.subr.mxu0 0.0
    %339 = vmatpush1.msra.mxu0 %v91
    %340 = vmatprep.subr.mxu0 0.0
    %341 = vmatpush1.msra.mxu0 %v92
    %342 = vmatprep.mubr.f32.mxu0 %v182
    %343 = vmatmul.mubr.f32.gmra.mrb[0].mxu0 %v180
    %v344 = vpop.f32.mrb[0].mxu0
    %v345 = vadd.f32 %v275, %v344
    %v346 = vpop.f32.mrb[0].mxu0
    %347 = vdwg.mxu0
    %348 = vmatprep.subr.mxu0 0.0
    %349 = vmatpush1.msra.mxu0 %v93
    %350 = vmatprep.subr.mxu0 0.0
    %351 = vmatpush1.msra.mxu0 %v94
    %352 = vmatprep.subr.mxu0 0.0
    %353 = vmatpush1.msra.mxu0 %v95
    %354 = vmatprep.subr.mxu0 0.0
    %355 = vmatpush1.msra.mxu0 %v96
    %356 = vmatprep.subr.mxu0 0.0
    %357 = vmatpush1.msra.mxu0 %v97
    %358 = vmatprep.subr.mxu0 0.0
    %359 = vmatpush1.msra.mxu0 %v98
    %360 = vmatprep.subr.mxu0 0.0
    %361 = vmatpush1.msra.mxu0 %v99
    %362 = vmatprep.subr.mxu0 0.0
    %363 = vmatpush1.msra.mxu0 %v100
    %364 = vmatprep.subr.mxu0 0.0
    %365 = vmatpush1.msra.mxu0 %v101
    %366 = vmatprep.subr.mxu0 0.0
    %367 = vmatpush1.msra.mxu0 %v102
    %368 = vmatprep.subr.mxu0 0.0
    %369 = vmatpush1.msra.mxu0 %v103
    %370 = vmatprep.subr.mxu0 0.0
    %371 = vmatpush1.msra.mxu0 %v104
    %372 = vmatprep.subr.mxu0 0.0
    %373 = vmatpush1.msra.mxu0 %v105
    %374 = vmatprep.subr.mxu0 0.0
    %375 = vmatpush1.msra.mxu0 %v106
    %376 = vmatprep.subr.mxu0 0.0
    %377 = vmatpush1.msra.mxu0 %v107
    %378 = vmatprep.subr.mxu0 0.0
    %379 = vmatpush1.msra.mxu0 %v108
    %380 = vmatprep.subr.mxu0 0.0
    %381 = vmatpush1.msra.mxu0 %v109
    %382 = vmatprep.subr.mxu0 0.0
    %383 = vmatpush1.msra.mxu0 %v110
    %384 = vmatprep.subr.mxu0 0.0
    %385 = vmatpush1.msra.mxu0 %v111
    %386 = vmatprep.subr.mxu0 0.0
    %387 = vmatpush1.msra.mxu0 %v112
    %388 = vmatprep.subr.mxu0 0.0
    %389 = vmatpush1.msra.mxu0 %v113
    %390 = vmatprep.subr.mxu0 0.0
    %391 = vmatpush1.msra.mxu0 %v114
    %392 = vmatprep.subr.mxu0 0.0
    %393 = vmatpush1.msra.mxu0 %v115
    %394 = vmatprep.subr.mxu0 0.0
    %395 = vmatpush1.msra.mxu0 %v116
    %396 = vmatprep.subr.mxu0 0.0
    %397 = vmatpush1.msra.mxu0 %v117
    %398 = vmatprep.subr.mxu0 0.0
    %399 = vmatpush1.msra.mxu0 %v118
    %400 = vmatprep.subr.mxu0 0.0
    %401 = vmatpush1.msra.mxu0 %v119
    %402 = vmatprep.subr.mxu0 0.0
    %403 = vmatpush1.msra.mxu0 %v120
    %404 = vmatprep.subr.mxu0 0.0
    %405 = vmatpush1.msra.mxu0 %v121
    %406 = vmatprep.subr.mxu0 0.0
    %407 = vmatpush1.msra.mxu0 %v122
    %408 = vmatprep.subr.mxu0 0.0
    %409 = vmatpush1.msra.mxu0 %v123
    %410 = vmatprep.subr.mxu0 0.0
    %411 = vmatpush1.msra.mxu0 %v124
    %412 = vmatprep.mubr.f32.mxu0 %v198
    %413 = vmatmul.mubr.f32.gmra.mrb[0].mxu0 %v190
    %v414 = vpop.f32.mrb[0].mxu0
    %v415 = vadd.f32 %v345, %v414
    %v416 = vpop.f32.mrb[0].mxu0
    %417 = vdwg.mxu0
    %418 = vmatprep.subr.mxu0 0.0
    %419 = vmatpush1.msra.mxu0 %v125
    %420 = vmatprep.subr.mxu0 0.0
    %421 = vmatpush1.msra.mxu0 %v126
    %422 = vmatprep.subr.mxu0 0.0
    %423 = vmatpush1.msra.mxu0 %v127
    %424 = vmatprep.subr.mxu0 0.0
    %425 = vmatpush1.msra.mxu0 %v128
    %426 = vmatprep.subr.mxu0 0.0
    %427 = vmatpush1.msra.mxu0 %v129
    %428 = vmatprep.subr.mxu0 0.0
    %429 = vmatpush1.msra.mxu0 %v130
    %430 = vmatprep.subr.mxu0 0.0
    %431 = vmatpush1.msra.mxu0 %v131
    %432 = vmatprep.subr.mxu0 0.0
    %433 = vmatpush1.msra.mxu0 %v132
    %434 = vmatprep.subr.mxu0 0.0
    %435 = vmatpush1.msra.mxu0 %v133
    %436 = vmatprep.subr.mxu0 0.0
    %437 = vmatpush1.msra.mxu0 %v134
    %438 = vmatprep.subr.mxu0 0.0
    %439 = vmatpush1.msra.mxu0 %v135
    %440 = vmatprep.subr.mxu0 0.0
    %441 = vmatpush1.msra.mxu0 %v136
    %442 = vmatprep.subr.mxu0 0.0
    %443 = vmatpush1.msra.mxu0 %v137
    %444 = vmatprep.subr.mxu0 0.0
    %445 = vmatpush1.msra.mxu0 %v138
    %446 = vmatprep.subr.mxu0 0.0
    %447 = vmatpush1.msra.mxu0 %v139
    %448 = vmatprep.subr.mxu0 0.0
    %449 = vmatpush1.msra.mxu0 %v140
    %450 = vmatprep.subr.mxu0 0.0
    %451 = vmatpush1.msra.mxu0 %v141
    %452 = vmatprep.subr.mxu0 0.0
    %453 = vmatpush1.msra.mxu0 %v142
    %454 = vmatprep.subr.mxu0 0.0
    %455 = vmatpush1.msra.mxu0 %v143
    %456 = vmatprep.subr.mxu0 0.0
    %457 = vmatpush1.msra.mxu0 %v144
    %458 = vmatprep.subr.mxu0 0.0
    %459 = vmatpush1.msra.mxu0 %v145
    %460 = vmatprep.subr.mxu0 0.0
    %461 = vmatpush1.msra.mxu0 %v146
    %462 = vmatprep.subr.mxu0 0.0
    %463 = vmatpush1.msra.mxu0 %v147
    %464 = vmatprep.subr.mxu0 0.0
    %465 = vmatpush1.msra.mxu0 %v148
    %466 = vmatprep.subr.mxu0 0.0
    %467 = vmatpush1.msra.mxu0 %v149
    %468 = vmatprep.subr.mxu0 0.0
    %469 = vmatpush1.msra.mxu0 %v150
    %470 = vmatprep.subr.mxu0 0.0
    %471 = vmatpush1.msra.mxu0 %v151
    %472 = vmatprep.subr.mxu0 0.0
    %473 = vmatpush1.msra.mxu0 %v152
    %474 = vmatprep.subr.mxu0 0.0
    %475 = vmatpush1.msra.mxu0 %v153
    %476 = vmatprep.subr.mxu0 0.0
    %477 = vmatpush1.msra.mxu0 %v154
    %478 = vmatprep.subr.mxu0 0.0
    %479 = vmatpush1.msra.mxu0 %v155
    %480 = vmatprep.subr.mxu0 0.0
    %481 = vmatpush1.msra.mxu0 %v156
    %482 = vmatprep.mubr.f32.mxu0 %v199
    %483 = vmatmul.mubr.f32.gmra.mrb[0].mxu0 %v197
    %v484 = vpop.f32.mrb[0].mxu0
    %v485 = vadd.f32 %v415, %v484
    %v486 = vpop.f32.mrb[0].mxu0
    %487 = vdwg.mxu0
    %v488 = vmax.f32 %v485, 0.0
    %v489 = vld [vmem:[%s3] sm:$0xff]
    %v490 = vld [vmem:[%s3 + $0x8] sm:$0xff]
    %v491 = vld [vmem:[%s3 + $0x10] sm:$0xff]
    %v492 = vld [vmem:[%s3 + $0x18] sm:$0xff]
    %v493 = vld [vmem:[%s3 + $0x20] sm:$0xff]
    %v494 = vld [vmem:[%s3 + $0x28] sm:$0xff]
    %v495 = vld [vmem:[%s3 + $0x30] sm:$0xff]
    %v496 = vld [vmem:[%s3 + $0x38] sm:$0xff]
    %v497 = vld [vmem:[%s4] sm:$0x1]
    %v499 = vlaneseq
    %v500 = vshrl.u32 %v499, 7
    %v501 = vsub.s32 0, %v500
    %v502 = vrot.slane %v497, %v501
    %vm504 = vcmask 523264
    %v506 = vsel %vm504, %v488, 0
    %508 = vmatprep.subr.mxu0 0.0
    %509 = vmatpush1.msra.mxu0 %v489
    %510 = vmatprep.subr.mxu0 0.0
    %511 = vmatpush1.msra.mxu0 %v490
    %512 = vmatprep.subr.mxu0 0.0
    %513 = vmatpush1.msra.mxu0 %v491
    %514 = vmatprep.subr.mxu0 0.0
    %515 = vmatpush1.msra.mxu0 %v492
    %516 = vmatprep.subr.mxu0 0.0
    %517 = vmatpush1.msra.mxu0 %v493
    %518 = vmatprep.subr.mxu0 0.0
    %519 = vmatpush1.msra.mxu0 %v494
    %520 = vmatprep.subr.mxu0 0.0
    %521 = vmatpush1.msra.mxu0 %v495
    %522 = vmatprep.subr.mxu0 0.0
    %523 = vmatpush1.msra.mxu0 %v496
    %524 = vmatprep.subr.mxu0 0.0
    %525 = vmatpush1.msra.mxu0 0.0
    %526 = vmatprep.subr.mxu0 0.0
    %527 = vmatpush1.msra.mxu0 0.0
    %528 = vmatprep.subr.mxu0 0.0
    %529 = vmatpush1.msra.mxu0 0.0
    %530 = vmatprep.subr.mxu0 0.0
    %531 = vmatpush1.msra.mxu0 0.0
    %532 = vmatprep.subr.mxu0 0.0
    %533 = vmatpush1.msra.mxu0 0.0
    %534 = vmatprep.subr.mxu0 0.0
    %535 = vmatpush1.msra.mxu0 0.0
    %536 = vmatprep.subr.mxu0 0.0
    %537 = vmatpush1.msra.mxu0 0.0
    %538 = vmatprep.subr.mxu0 0.0
    %539 = vmatpush1.msra.mxu0 0.0
    %540 = vmatprep.subr.mxu0 0.0
    %541 = vmatpush1.msra.mxu0 0.0
    %542 = vmatprep.subr.mxu0 0.0
    %543 = vmatpush1.msra.mxu0 0.0
    %544 = vmatprep.subr.mxu0 0.0
    %545 = vmatpush1.msra.mxu0 0.0
    %546 = vmatprep.subr.mxu0 0.0
    %547 = vmatpush1.msra.mxu0 0.0
    %548 = vmatprep.subr.mxu0 0.0
    %549 = vmatpush1.msra.mxu0 0.0
    %550 = vmatprep.subr.mxu0 0.0
    %551 = vmatpush1.msra.mxu0 0.0
    %552 = vmatprep.subr.mxu0 0.0
    %553 = vmatpush1.msra.mxu0 0.0
    %554 = vmatprep.subr.mxu0 0.0
    %555 = vmatpush1.msra.mxu0 0.0
    %556 = vmatprep.subr.mxu0 0.0
    %557 = vmatpush1.msra.mxu0 0.0
    %558 = vmatprep.subr.mxu0 0.0
    %559 = vmatpush1.msra.mxu0 0.0
    %560 = vmatprep.subr.mxu0 0.0
    %561 = vmatpush1.msra.mxu0 0.0
    %562 = vmatprep.subr.mxu0 0.0
    %563 = vmatpush1.msra.mxu0 0.0
    %564 = vmatprep.subr.mxu0 0.0
    %565 = vmatpush1.msra.mxu0 0.0
    %566 = vmatprep.subr.mxu0 0.0
    %567 = vmatpush1.msra.mxu0 0.0
    %568 = vmatprep.subr.mxu0 0.0
    %569 = vmatpush1.msra.mxu0 0.0
    %570 = vmatprep.subr.mxu0 0.0
    %571 = vmatpush1.msra.mxu0 0.0
    %572 = vmatprep.mubr.f32.mxu0 0.0
    %573 = vmatmul.mubr.f32.gmra.mrb[0].mxu0 %v506
    %v574 = vpop.f32.mrb[0].mxu0
    %v575 = vadd.f32 %v502, %v574
    %v576 = vpop.f32.mrb[0].mxu0
    %577 = vdwg.mxu0
    %v578 = vld [vmem:[%s5] sm:$0xff]
    %v579 = vld [vmem:[%s5 + $0x8] sm:$0xff]
    %v580 = vld [vmem:[%s5 + $0x10] sm:$0xff]
    %v581 = vld [vmem:[%s5 + $0x18] sm:$0xff]
    %v582 = vld [vmem:[%s5 + $0x20] sm:$0xff]
    %v583 = vld [vmem:[%s5 + $0x28] sm:$0xff]
    %v584 = vld [vmem:[%s5 + $0x30] sm:$0xff]
    %v585 = vld [vmem:[%s5 + $0x38] sm:$0xff]
    %v586 = vld [vmem:[%s5 + $0x40] sm:$0xff]
    %v587 = vld [vmem:[%s5 + $0x48] sm:$0xff]
    %v588 = vld [vmem:[%s5 + $0x50] sm:$0xff]
    %v589 = vld [vmem:[%s5 + $0x58] sm:$0xff]
    %v590 = vld [vmem:[%s5 + $0x60] sm:$0xff]
    %v591 = vld [vmem:[%s5 + $0x68] sm:$0xff]
    %v592 = vld [vmem:[%s5 + $0x70] sm:$0xff]
    %v593 = vld [vmem:[%s5 + $0x78] sm:$0xff]
    %v594 = vld [vmem:[%s6] sm:$0x1]
    %v596 = vlaneseq
    %v597 = vshrl.u32 %v596, 7
    %v598 = vsub.s32 0, %v597
    %v599 = vrot.slane %v594, %v598
    %601 = vmatprep.subr.mxu0 0.0
    %602 = vmatpush1.msra.mxu0 %v578
    %603 = vmatprep.subr.mxu0 0.0
    %604 = vmatpush1.msra.mxu0 %v579
    %605 = vmatprep.subr.mxu0 0.0
    %606 = vmatpush1.msra.mxu0 %v580
    %607 = vmatprep.subr.mxu0 0.0
    %608 = vmatpush1.msra.mxu0 %v581
    %609 = vmatprep.subr.mxu0 0.0
    %610 = vmatpush1.msra.mxu0 %v582
    %611 = vmatprep.subr.mxu0 0.0
    %612 = vmatpush1.msra.mxu0 %v583
    %613 = vmatprep.subr.mxu0 0.0
    %614 = vmatpush1.msra.mxu0 %v584
    %615 = vmatprep.subr.mxu0 0.0
    %616 = vmatpush1.msra.mxu0 %v585
    %617 = vmatprep.subr.mxu0 0.0
    %618 = vmatpush1.msra.mxu0 %v586
    %619 = vmatprep.subr.mxu0 0.0
    %620 = vmatpush1.msra.mxu0 %v587
    %621 = vmatprep.subr.mxu0 0.0
    %622 = vmatpush1.msra.mxu0 %v588
    %623 = vmatprep.subr.mxu0 0.0
    %624 = vmatpush1.msra.mxu0 %v589
    %625 = vmatprep.subr.mxu0 0.0
    %626 = vmatpush1.msra.mxu0 %v590
    %627 = vmatprep.subr.mxu0 0.0
    %628 = vmatpush1.msra.mxu0 %v591
    %629 = vmatprep.subr.mxu0 0.0
    %630 = vmatpush1.msra.mxu0 %v592
    %631 = vmatprep.subr.mxu0 0.0
    %632 = vmatpush1.msra.mxu0 %v593
    %633 = vmatprep.subr.mxu0 0.0
    %634 = vmatpush1.msra.mxu0 0.0
    %635 = vmatprep.subr.mxu0 0.0
    %636 = vmatpush1.msra.mxu0 0.0
    %637 = vmatprep.subr.mxu0 0.0
    %638 = vmatpush1.msra.mxu0 0.0
    %639 = vmatprep.subr.mxu0 0.0
    %640 = vmatpush1.msra.mxu0 0.0
    %641 = vmatprep.subr.mxu0 0.0
    %642 = vmatpush1.msra.mxu0 0.0
    %643 = vmatprep.subr.mxu0 0.0
    %644 = vmatpush1.msra.mxu0 0.0
    %645 = vmatprep.subr.mxu0 0.0
    %646 = vmatpush1.msra.mxu0 0.0
    %647 = vmatprep.subr.mxu0 0.0
    %648 = vmatpush1.msra.mxu0 0.0
    %649 = vmatprep.subr.mxu0 0.0
    %650 = vmatpush1.msra.mxu0 0.0
    %651 = vmatprep.subr.mxu0 0.0
    %652 = vmatpush1.msra.mxu0 0.0
    %653 = vmatprep.subr.mxu0 0.0
    %654 = vmatpush1.msra.mxu0 0.0
    %655 = vmatprep.subr.mxu0 0.0
    %656 = vmatpush1.msra.mxu0 0.0
    %657 = vmatprep.subr.mxu0 0.0
    %658 = vmatpush1.msra.mxu0 0.0
    %659 = vmatprep.subr.mxu0 0.0
    %660 = vmatpush1.msra.mxu0 0.0
    %661 = vmatprep.subr.mxu0 0.0
    %662 = vmatpush1.msra.mxu0 0.0
    %663 = vmatprep.subr.mxu0 0.0
    %664 = vmatpush1.msra.mxu0 0.0
    %665 = vmatprep.mubr.f32.mxu0 0.0
    %666 = vmatmul.mubr.f32.gmra.mrb[0].mxu0 %v575
    %v667 = vpop.f32.mrb[0].mxu0
    %v668 = vadd.f32 %v599, %v667
    %v669 = vpop.f32.mrb[0].mxu0
    %670 = vdwg.mxu0
    %vm671 = vcmask 9216
    %672 = vst.msk [vmem:[#allocation2] sm:$0x3] %vm671, %v668
    // Predicated region
    $region30: #{net_forward.9} parent=1 // pred_check
      _
    $region31: #{net_forward.9} parent=1 // pred_check_branch
      %674 = sbr.rel (0) target = $region33
    $region32: #{net_forward.9} parent=1 // pred_region
      %s676 = ssub.s32 32, 32
      %677 = vsyncadd [#allocation3], %s676
      %s679 = sshll.u32 [#allocation2], 4
      %s680 = int_to_ptr.vmem [resolvable:$true] %s679
      %682 = dma.vmem_to_hbm [thread:$0]  %s680, 32, %s7, [#allocation3]
    $region33: #{net_forward.9} parent=1 // pred_fallthru
      _
    // Predicated region
    $region34: #{net_forward.9} parent=1 // pred_check
      _
    $region35: #{net_forward.9} parent=1 // pred_check_branch
      %684 = sbr.rel (0) target = $region37
    $region36: #{net_forward.9} parent=1 // pred_region
      %685 = dma.done [#allocation3], 32
    $region37: #{net_forward.9} parent=1 // pred_fallthru
      _
    %686 = vsyncpa [#allocation3], 1

</llo_original>
